<compile_context>
chip_gen: v5e
topology: v5e:2x2
jax: 0.10.0
libtpu: 0.0.40
codegen_flags: <defaults>
</compile_context>

<pallas_src>
import functools
import math

import jax
import jax.numpy as jnp
from jax.experimental import pallas as pl
from jax.experimental.pallas import tpu as pltpu


GEMM_DTYPE = jnp.bfloat16  # MXU-native input dtype; accumulation stays f32.


# -----------------------------------------------------------------------------
# Pallas kernels
# -----------------------------------------------------------------------------
def _mm_bias_act_kernel(x_ref, w_ref, b_ref, o_ref, *, act):
    """One-shot GEMM (single K block) with fused bias + optional ReLU."""
    r = jnp.dot(x_ref[...], w_ref[...], preferred_element_type=jnp.float32)
    r = r + b_ref[...]
    if act == "relu":
        r = jnp.maximum(r, 0.0)
    o_ref[...] = r.astype(o_ref.dtype)


def _encoder_head_kernel(x_ref, w_ref, b_ref, eps_ref, ml_ref, z_ref, *, lp):
    """Fused [mean|logvar] GEMM + reparameterize.

    w is [W_mean | W_logvar] (each head padded to `lp` lanes); epilogue computes
    z = mean + exp(0.5 * logvar) * eps entirely in f32 (exp goes to the EUP).
    """
    r = jnp.dot(x_ref[...], w_ref[...], preferred_element_type=jnp.float32)
    r = r + b_ref[...]
    ml_ref[...] = r
    mean = r[:, :lp]
    logvar = r[:, lp:]
    z_ref[...] = mean + jnp.exp(0.5 * logvar) * eps_ref[...]


# -----------------------------------------------------------------------------
# Wrappers
# -----------------------------------------------------------------------------
def _round_up(x, m):
    return ((x + m - 1) // m) * m


def pallas_linear(x, w, b, act=None):
    """y = act(x @ w + b) via the fused Pallas GEMM kernel.

    x: (M, K)  w: (K, N)  b: (N,).  Single K block; grid only over (M, N).
    """
    M, K = x.shape
    K2, N = w.shape
    assert K == K2

    Mp = _round_up(M, 16)
    tm = Mp if Mp <= 512 else 512
    Mp = _round_up(Mp, tm)

    Np = _round_up(N, 128)
    tn = Np if Np <= 2048 else 2048
    Np = _round_up(Np, tn)

    Kp = _round_up(K, 16)

    xp = jnp.pad(x, ((0, Mp - M), (0, Kp - K))).astype(GEMM_DTYPE)
    wp = jnp.pad(w, ((0, Kp - K), (0, Np - N))).astype(GEMM_DTYPE)
    bp = jnp.pad(b.reshape(1, -1), ((0, 0), (0, Np - N))).astype(jnp.float32)

    kernel = functools.partial(_mm_bias_act_kernel, act=act)
    out = pl.pallas_call(
        kernel,
        out_shape=jax.ShapeDtypeStruct((Mp, Np), jnp.float32),
        grid_spec=pltpu.PrefetchScalarGridSpec(
            num_scalar_prefetch=0,
            grid=(Mp // tm, Np // tn),
            in_specs=[
                pl.BlockSpec((tm, Kp), lambda i, j: (i, 0)),
                pl.BlockSpec((Kp, tn), lambda i, j: (0, j)),
                pl.BlockSpec((1, tn), lambda i, j: (0, j)),
            ],
            out_specs=pl.BlockSpec((tm, tn), lambda i, j: (i, j)),
        ),
        compiler_params=pltpu.CompilerParams(
            dimension_semantics=("parallel", "parallel")
        ),
    )(xp, wp, bp)
    return out[:M, :N]


def pallas_encoder_head(flat, mean_w, mean_b, logvar_w, logvar_b, eps):
    """Fused mean/logvar linears + reparameterize in one pallas_call.

    Returns (mean, logvar, z), each (M, latents) f32.
    """
    M, K = flat.shape
    L = mean_w.shape[1]
    Lp = _round_up(L, 128)
    Mp = _round_up(M, 16)
    Kp = _round_up(K, 16)

    w = jnp.concatenate(
        [
            jnp.pad(mean_w, ((0, Kp - K), (0, Lp - L))),
            jnp.pad(logvar_w, ((0, Kp - K), (0, Lp - L))),
        ],
        axis=1,
    ).astype(GEMM_DTYPE)  # (Kp, 2*Lp)
    bb = jnp.concatenate(
        [jnp.pad(mean_b, (0, Lp - L)), jnp.pad(logvar_b, (0, Lp - L))]
    ).reshape(1, -1).astype(jnp.float32)  # (1, 2*Lp)
    xp = jnp.pad(flat, ((0, Mp - M), (0, Kp - K))).astype(GEMM_DTYPE)
    ep = jnp.pad(eps, ((0, Mp - M), (0, Lp - L))).astype(jnp.float32)

    ml, z = pl.pallas_call(
        functools.partial(_encoder_head_kernel, lp=Lp),
        out_shape=(
            jax.ShapeDtypeStruct((Mp, 2 * Lp), jnp.float32),
            jax.ShapeDtypeStruct((Mp, Lp), jnp.float32),
        ),
    )(xp, w, bb, ep)
    return ml[:M, :L], ml[:M, Lp:Lp + L], z[:M, :L]


# -----------------------------------------------------------------------------
# Conv lowering (patch-gather glue in plain JAX, GEMM+bias+ReLU in Pallas)
# -----------------------------------------------------------------------------
# TODO(synk): the im2col / 2x2 patch gathers below are left to XLA fusion; they
# could be folded into the Pallas kernel (shifted-subview accumulating dots)
# to remove the remaining inter-layer HBM patch materialization.
def _im2col(x_nhwc, k, stride, pad):
    B, H, W, C = x_nhwc.shape
    xp = jnp.pad(x_nhwc, ((0, 0), (pad, pad), (pad, pad), (0, 0)))
    oh = (H + 2 * pad - k) // stride + 1
    ow = (W + 2 * pad - k) // stride + 1
    cols = []
    for kh in range(k):
        for kw in range(k):
            cols.append(
                xp[
                    :,
                    kh : kh + stride * (oh - 1) + 1 : stride,
                    kw : kw + stride * (ow - 1) + 1 : stride,
                    :,
                ]
            )
    patches = jnp.stack(cols, axis=3)  # (B, oh, ow, k*k, C)
    return patches.reshape(B * oh * ow, k * k * C), (B, oh, ow)


def conv2d(x_nhwc, w_oihw, b, stride, pad, act=None):
    """Regular conv (== PyTorch nn.Conv2d) in NHWC, as a single fused GEMM."""
    O, I, K, _ = w_oihw.shape
    cols, (B, oh, ow) = _im2col(x_nhwc, K, stride, pad)
    # patch flat index = (kh*K + kw)*I + i  ->  weight transposed to (kh,kw,i,o)
    wmat = jnp.transpose(w_oihw, (2, 3, 1, 0)).reshape(K * K * I, O)
    out = pallas_linear(cols, wmat, b, act=act)
    return out.reshape(B, oh, ow, O)


def conv_transpose2d(x_nhwc, w_iokk, b, stride, pad, out_pad, act=None):
    """nn.ConvTranspose2d (k=3, s=2, p=1, out_pad=1) via output-parity
    decomposition: one GEMM over 2x2 input neighborhoods (no zero-dilation).

    Output pixel (2i+dy, 2j+dx) gets contribution x[i+di, j+dj] @ w[:,:,kh,kw]
    with (kh, kw) = (dy+1-2*di, dx+1-2*dj) when in range.
    """
    I, O, K, _ = w_iokk.shape
    assert K == 3 and stride == 2 and pad == 1 and out_pad == 1
    B, H, W, C = x_nhwc.shape
    assert C == I

    # 2x2 neighborhood patches, zero-padded on the high side.
    xp = jnp.pad(x_nhwc, ((0, 0), (0, 1), (0, 1), (0, 0)))
    patches = jnp.stack(
        [xp[:, di : di + H, dj : dj + W, :] for di in (0, 1) for dj in (0, 1)],
        axis=3,
    )  # (B, H, W, 4, C); slot s = 2*di + dj
    cols = patches.reshape(B * H * W, 4 * C)

    # Effective weight (4*Cin, 4*Cout); output group g = 2*dy + dx.
    wt = jnp.zeros((4, C, 4, O), dtype=w_iokk.dtype)
    for dy in (0, 1):
        for dx in (0, 1):
            for di in (0, 1):
                for dj in (0, 1):
                    kh = dy + 1 - 2 * di
                    kw = dx + 1 - 2 * dj
                    if 0 <= kh < 3 and 0 <= kw < 3:
                        wt = wt.at[2 * di + dj, :, 2 * dy + dx, :].set(
                            w_iokk[:, :, kh, kw]
                        )
    wmat = wt.reshape(4 * C, 4 * O)
    bmat = jnp.tile(b, 4)  # bias per output group

    out = pallas_linear(cols, wmat, bmat, act=act)  # (B*H*W, 4*O)
    out = out.reshape(B, H, W, 2, 2, O)
    out = jnp.transpose(out, (0, 1, 3, 2, 4, 5)).reshape(B, 2 * H, 2 * W, O)
    return out


# -----------------------------------------------------------------------------
# Parameter init (deterministic, PyTorch-default-like uniform bounds)
# -----------------------------------------------------------------------------
def _uniform(key, shape, bound):
    return jax.random.uniform(
        key, shape, dtype=jnp.float32, minval=-bound, maxval=bound
    )


def init_params(key, data_ch=3, kernel=3, features=2048, latents=32):
    ks = jax.random.split(key, 20)
    p = {}

    def conv_p(kw, kb, o, i):
        bound = 1.0 / math.sqrt(i * kernel * kernel)
        return _uniform(kw, (o, i, kernel, kernel), bound), _uniform(kb, (o,), bound)

    def convT_p(kw, kb, i, o):
        bound = 1.0 / math.sqrt(o * kernel * kernel)
        return _uniform(kw, (i, o, kernel, kernel), bound), _uniform(kb, (o,), bound)

    def lin_p(kw, kb, i, o):
        bound = 1.0 / math.sqrt(i)
        return _uniform(kw, (i, o), bound), _uniform(kb, (o,), bound)

    # Encoder
    p["e1_w"], p["e1_b"] = conv_p(ks[0], ks[1], 32, data_ch)
    p["e2_w"], p["e2_b"] = conv_p(ks[2], ks[3], 64, 32)
    p["e3_w"], p["e3_b"] = conv_p(ks[4], ks[5], 128, 64)
    p["mean_w"], p["mean_b"] = lin_p(ks[6], ks[7], features, latents)
    p["logvar_w"], p["logvar_b"] = lin_p(ks[8], ks[9], features, latents)
    # Decoder
    p["fc_w"], p["fc_b"] = lin_p(ks[10], ks[11], latents, features)
    p["d1_w"], p["d1_b"] = convT_p(ks[12], ks[13], 128, 128)
    p["d2_w"], p["d2_b"] = convT_p(ks[14], ks[15], 128, 64)
    p["d3_w"], p["d3_b"] = convT_p(ks[16], ks[17], 64, 32)
    p["out_w"], p["out_b"] = conv_p(ks[18], ks[19], data_ch, 32)
    return p


# -----------------------------------------------------------------------------
# VAE forward
# -----------------------------------------------------------------------------
def vae_forward(x_nchw, params, eps):
    """Returns (recon_x [NCHW], mean, logvar, z) — same as VAE.forward."""
    x = jnp.transpose(x_nchw, (0, 2, 3, 1))  # NCHW -> NHWC

    # ---- Encoder ----
    h = conv2d(x, params["e1_w"], params["e1_b"], stride=2, pad=1, act="relu")
    h = conv2d(h, params["e2_w"], params["e2_b"], stride=2, pad=1, act="relu")
    h = conv2d(h, params["e3_w"], params["e3_b"], stride=2, pad=1, act="relu")
    B = h.shape[0]
    # PyTorch Flatten of NCHW flattens in (C, H, W) order:
    flat = jnp.transpose(h, (0, 3, 1, 2)).reshape(B, -1)  # (B, 2048)

    # ---- mean / logvar / reparameterize (fused into one kernel) ----
    mean, logvar, z = pallas_encoder_head(
        flat,
        params["mean_w"], params["mean_b"],
        params["logvar_w"], params["logvar_b"],
        eps,
    )

    # ---- Decoder ----
    d = pallas_linear(z, params["fc_w"], params["fc_b"])  # (B, 2048)
    d = d.reshape(B, 128, 4, 4)  # PyTorch reshape (C, H, W order)
    d = jnp.transpose(d, (0, 2, 3, 1))  # -> NHWC
    d = conv_transpose2d(d, params["d1_w"], params["d1_b"], 2, 1, 1, act="relu")
    d = conv_transpose2d(d, params["d2_w"], params["d2_b"], 2, 1, 1, act="relu")
    d = conv_transpose2d(d, params["d3_w"], params["d3_b"], 2, 1, 1, act="relu")
    d = conv2d(d, params["out_w"], params["out_b"], stride=1, pad=1, act=None)
    recon_x = jnp.transpose(d, (0, 3, 1, 2))  # NHWC -> NCHW
    return recon_x, mean, logvar, z


# -----------------------------------------------------------------------------
if __name__ == "__main__":
    key = jax.random.PRNGKey(0)
    k_x, k_p, k_eps = jax.random.split(key, 3)

    B, C, H, W = 2, 3, 32, 32  # 32x32 so FEATURES = 128*4*4 = 2048
    latents = 32

    x = jax.random.normal(k_x, (B, C, H, W), dtype=jnp.float32)
    params = init_params(k_p, data_ch=C, kernel=3, features=2048, latents=latents)
    eps = jax.random.normal(k_eps, (B, latents), dtype=jnp.float32)

    fwd = jax.jit(vae_forward)
    recon_x, mean, logvar, z = fwd(x, params, eps)
    jax.block_until_ready((recon_x, mean, logvar, z))

    assert recon_x.shape == (B, C, H, W)
    assert mean.shape == (B, latents)
    assert logvar.shape == (B, latents)
    assert z.shape == (B, latents)
    assert bool(jnp.all(jnp.isfinite(recon_x)))
    print("KERNEL_OK")
</pallas_src>

<mosaic_0001>
module attributes {stable_mosaic.version = 11 : i64} {
  func.func @_mm_bias_act_kernel(%arg0: i32, %arg1: i32, %arg2: memref<512x32xbf16, #tpu.memory_space<vmem>>, %arg3: memref<32x128xbf16, #tpu.memory_space<vmem>>, %arg4: memref<1x128xf32, #tpu.memory_space<vmem>>, %arg5: memref<512x128xf32, #tpu.memory_space<vmem>>) attributes {dimension_semantics = [#tpu.dimension_semantics<parallel>, #tpu.dimension_semantics<parallel>], iteration_bounds = array<i64: 1, 1>, scalar_prefetch = 0 : i64, scratch_operands = 0 : i64, tpu.core_type = #tpu.core_type<tc>, window_params = [{transform_indices = @transform_0, window_bounds = array<i64: 512, 32>}, {transform_indices = @transform_1, window_bounds = array<i64: 32, 128>}, {transform_indices = @transform_2, window_bounds = array<i64: 1, 128>}, {transform_indices = @transform_3, window_bounds = array<i64: 512, 128>}]} {
    %c0 = arith.constant 0 : index
    %c0_0 = arith.constant 0 : index
    %0 = vector.load %arg2[%c0, %c0_0] : memref<512x32xbf16, #tpu.memory_space<vmem>>, vector<512x32xbf16>
    %c0_1 = arith.constant 0 : index
    %c0_2 = arith.constant 0 : index
    %1 = vector.load %arg3[%c0_1, %c0_2] : memref<32x128xbf16, #tpu.memory_space<vmem>>, vector<32x128xbf16>
    %cst = arith.constant dense<0.000000e+00> : vector<512x128xf32>
    %2 = tpu.matmul %0, %1, %cst {dimension_numbers = #tpu.dot_dimension_numbers<[1], [0], [0], [1], [0, 0, 1, 1], [], []>} : vector<512x32xbf16>, vector<32x128xbf16>, vector<512x128xf32> -> vector<512x128xf32>
    %c0_3 = arith.constant 0 : index
    %c0_4 = arith.constant 0 : index
    %3 = vector.load %arg4[%c0_3, %c0_4] : memref<1x128xf32, #tpu.memory_space<vmem>>, vector<1x128xf32>
    %4 = vector.broadcast %3 : vector<1x128xf32> to vector<512x128xf32>
    %5 = arith.addf %2, %4 : vector<512x128xf32>
    %cst_5 = arith.constant 0.000000e+00 : f32
    %6 = vector.broadcast %cst_5 : f32 to vector<512x128xf32>
    %7 = arith.maximumf %5, %6 : vector<512x128xf32>
    %c0_6 = arith.constant 0 : index
    %c0_7 = arith.constant 0 : index
    %8 = vector.load %arg5[%c0_6, %c0_7] : memref<512x128xf32, #tpu.memory_space<vmem>>, vector<512x128xf32>
    tpu.vector_store %arg5[%c0_6, %c0_7], %7 {strides = array<i32>} : memref<512x128xf32, #tpu.memory_space<vmem>>, vector<512x128xf32>,
    return
  }
  func.func @transform_0(%arg0: i32, %arg1: i32) -> (i32, i32) {
    %c0_i32 = arith.constant 0 : i32
    %c0_i32_0 = arith.constant 0 : i32
    return %arg0, %c0_i32 : i32, i32
  }
  func.func @transform_1(%arg0: i32, %arg1: i32) -> (i32, i32) {
    %c0_i32 = arith.constant 0 : i32
    %c0_i32_0 = arith.constant 0 : i32
    return %c0_i32, %arg1 : i32, i32
  }
  func.func @transform_2(%arg0: i32, %arg1: i32) -> (i32, i32) {
    %c0_i32 = arith.constant 0 : i32
    %c0_i32_0 = arith.constant 0 : i32
    return %c0_i32, %arg1 : i32, i32
  }
  func.func @transform_3(%arg0: i32, %arg1: i32) -> (i32, i32) {
    %c0_i32 = arith.constant 0 : i32
    return %arg0, %arg1 : i32, i32
  }
}

module attributes {stable_mosaic.version = 11 : i64} {
  func.func @_mm_bias_act_kernel(%arg0: i32, %arg1: i32, %arg2: memref<128x288xbf16, #tpu.memory_space<vmem>>, %arg3: memref<288x128xbf16, #tpu.memory_space<vmem>>, %arg4: memref<1x128xf32, #tpu.memory_space<vmem>>, %arg5: memref<128x128xf32, #tpu.memory_space<vmem>>) attributes {dimension_semantics = [#tpu.dimension_semantics<parallel>, #tpu.dimension_semantics<parallel>], iteration_bounds = array<i64: 1, 1>, scalar_prefetch = 0 : i64, scratch_operands = 0 : i64, tpu.core_type = #tpu.core_type<tc>, window_params = [{transform_indices = @transform_0, window_bounds = array<i64: 128, 288>}, {transform_indices = @transform_1, window_bounds = array<i64: 288, 128>}, {transform_indices = @transform_2, window_bounds = array<i64: 1, 128>}, {transform_indices = @transform_3, window_bounds = array<i64: 128, 128>}]} {
    %c0 = arith.constant 0 : index
    %c0_0 = arith.constant 0 : index
    %0 = vector.load %arg2[%c0, %c0_0] : memref<128x288xbf16, #tpu.memory_space<vmem>>, vector<128x288xbf16>
    %c0_1 = arith.constant 0 : index
    %c0_2 = arith.constant 0 : index
    %1 = vector.load %arg3[%c0_1, %c0_2] : memref<288x128xbf16, #tpu.memory_space<vmem>>, vector<288x128xbf16>
    %cst = arith.constant dense<0.000000e+00> : vector<128x128xf32>
    %2 = tpu.matmul %0, %1, %cst {dimension_numbers = #tpu.dot_dimension_numbers<[1], [0], [0], [1], [0, 0, 1, 1], [], []>} : vector<128x288xbf16>, vector<288x128xbf16>, vector<128x128xf32> -> vector<128x128xf32>
    %c0_3 = arith.constant 0 : index
    %c0_4 = arith.constant 0 : index
    %3 = vector.load %arg4[%c0_3, %c0_4] : memref<1x128xf32, #tpu.memory_space<vmem>>, vector<1x128xf32>
    %4 = vector.broadcast %3 : vector<1x128xf32> to vector<128x128xf32>
    %5 = arith.addf %2, %4 : vector<128x128xf32>
    %cst_5 = arith.constant 0.000000e+00 : f32
    %6 = vector.broadcast %cst_5 : f32 to vector<128x128xf32>
    %7 = arith.maximumf %5, %6 : vector<128x128xf32>
    %c0_6 = arith.constant 0 : index
    %c0_7 = arith.constant 0 : index
    %8 = vector.load %arg5[%c0_6, %c0_7] : memref<128x128xf32, #tpu.memory_space<vmem>>, vector<128x128xf32>
    tpu.vector_store %arg5[%c0_6, %c0_7], %7 {strides = array<i32>} : memref<128x128xf32, #tpu.memory_space<vmem>>, vector<128x128xf32>,
    return
  }
  func.func @transform_0(%arg0: i32, %arg1: i32) -> (i32, i32) {
    %c0_i32 = arith.constant 0 : i32
    %c0_i32_0 = arith.constant 0 : i32
    return %arg0, %c0_i32 : i32, i32
  }
  func.func @transform_1(%arg0: i32, %arg1: i32) -> (i32, i32) {
    %c0_i32 = arith.constant 0 : i32
    %c0_i32_0 = arith.constant 0 : i32
    return %c0_i32, %arg1 : i32, i32
  }
  func.func @transform_2(%arg0: i32, %arg1: i32) -> (i32, i32) {
    %c0_i32 = arith.constant 0 : i32
    %c0_i32_0 = arith.constant 0 : i32
    return %c0_i32, %arg1 : i32, i32
  }
  func.func @transform_3(%arg0: i32, %arg1: i32) -> (i32, i32) {
    %c0_i32 = arith.constant 0 : i32
    return %arg0, %arg1 : i32, i32
  }
}

module attributes {stable_mosaic.version = 11 : i64} {
  func.func @_mm_bias_act_kernel(%arg0: i32, %arg1: i32, %arg2: memref<32x576xbf16, #tpu.memory_space<vmem>>, %arg3: memref<576x128xbf16, #tpu.memory_space<vmem>>, %arg4: memref<1x128xf32, #tpu.memory_space<vmem>>, %arg5: memref<32x128xf32, #tpu.memory_space<vmem>>) attributes {dimension_semantics = [#tpu.dimension_semantics<parallel>, #tpu.dimension_semantics<parallel>], iteration_bounds = array<i64: 1, 1>, scalar_prefetch = 0 : i64, scratch_operands = 0 : i64, tpu.core_type = #tpu.core_type<tc>, window_params = [{transform_indices = @transform_0, window_bounds = array<i64: 32, 576>}, {transform_indices = @transform_1, window_bounds = array<i64: 576, 128>}, {transform_indices = @transform_2, window_bounds = array<i64: 1, 128>}, {transform_indices = @transform_3, window_bounds = array<i64: 32, 128>}]} {
    %c0 = arith.constant 0 : index
    %c0_0 = arith.constant 0 : index
    %0 = vector.load %arg2[%c0, %c0_0] : memref<32x576xbf16, #tpu.memory_space<vmem>>, vector<32x576xbf16>
    %c0_1 = arith.constant 0 : index
    %c0_2 = arith.constant 0 : index
    %1 = vector.load %arg3[%c0_1, %c0_2] : memref<576x128xbf16, #tpu.memory_space<vmem>>, vector<576x128xbf16>
    %cst = arith.constant dense<0.000000e+00> : vector<32x128xf32>
    %2 = tpu.matmul %0, %1, %cst {dimension_numbers = #tpu.dot_dimension_numbers<[1], [0], [0], [1], [0, 0, 1, 1], [], []>} : vector<32x576xbf16>, vector<576x128xbf16>, vector<32x128xf32> -> vector<32x128xf32>
    %c0_3 = arith.constant 0 : index
    %c0_4 = arith.constant 0 : index
    %3 = vector.load %arg4[%c0_3, %c0_4] : memref<1x128xf32, #tpu.memory_space<vmem>>, vector<1x128xf32>
    %4 = vector.broadcast %3 : vector<1x128xf32> to vector<32x128xf32>
    %5 = arith.addf %2, %4 : vector<32x128xf32>
    %cst_5 = arith.constant 0.000000e+00 : f32
    %6 = vector.broadcast %cst_5 : f32 to vector<32x128xf32>
    %7 = arith.maximumf %5, %6 : vector<32x128xf32>
    %c0_6 = arith.constant 0 : index
    %c0_7 = arith.constant 0 : index
    %8 = vector.load %arg5[%c0_6, %c0_7] : memref<32x128xf32, #tpu.memory_space<vmem>>, vector<32x128xf32>
    tpu.vector_store %arg5[%c0_6, %c0_7], %7 {strides = array<i32>} : memref<32x128xf32, #tpu.memory_space<vmem>>, vector<32x128xf32>,
    return
  }
  func.func @transform_0(%arg0: i32, %arg1: i32) -> (i32, i32) {
    %c0_i32 = arith.constant 0 : i32
    %c0_i32_0 = arith.constant 0 : i32
    return %arg0, %c0_i32 : i32, i32
  }
  func.func @transform_1(%arg0: i32, %arg1: i32) -> (i32, i32) {
    %c0_i32 = arith.constant 0 : i32
    %c0_i32_0 = arith.constant 0 : i32
    return %c0_i32, %arg1 : i32, i32
  }
  func.func @transform_2(%arg0: i32, %arg1: i32) -> (i32, i32) {
    %c0_i32 = arith.constant 0 : i32
    %c0_i32_0 = arith.constant 0 : i32
    return %c0_i32, %arg1 : i32, i32
  }
  func.func @transform_3(%arg0: i32, %arg1: i32) -> (i32, i32) {
    %c0_i32 = arith.constant 0 : i32
    return %arg0, %arg1 : i32, i32
  }
}

module attributes {stable_mosaic.version = 11 : i64} {
  func.func @_encoder_head_kernel(%arg0: memref<16x2048xbf16, #tpu.memory_space<vmem>>, %arg1: memref<2048x256xbf16, #tpu.memory_space<vmem>>, %arg2: memref<1x256xf32, #tpu.memory_space<vmem>>, %arg3: memref<16x128xf32, #tpu.memory_space<vmem>>, %arg4: memref<16x256xf32, #tpu.memory_space<vmem>>, %arg5: memref<16x128xf32, #tpu.memory_space<vmem>>) attributes {dimension_semantics = [], scalar_prefetch = 0 : i64, scratch_operands = 0 : i64, tpu.core_type = #tpu.core_type<tc>} {
    %c0 = arith.constant 0 : index
    %c0_0 = arith.constant 0 : index
    %0 = vector.load %arg0[%c0, %c0_0] : memref<16x2048xbf16, #tpu.memory_space<vmem>>, vector<16x2048xbf16>
    %c0_1 = arith.constant 0 : index
    %c0_2 = arith.constant 0 : index
    %1 = vector.load %arg1[%c0_1, %c0_2] : memref<2048x256xbf16, #tpu.memory_space<vmem>>, vector<2048x256xbf16>
    %cst = arith.constant dense<0.000000e+00> : vector<16x256xf32>
    %2 = tpu.matmul %0, %1, %cst {dimension_numbers = #tpu.dot_dimension_numbers<[1], [0], [0], [1], [0, 0, 1, 1], [], []>} : vector<16x2048xbf16>, vector<2048x256xbf16>, vector<16x256xf32> -> vector<16x256xf32>
    %c0_3 = arith.constant 0 : index
    %c0_4 = arith.constant 0 : index
    %3 = vector.load %arg2[%c0_3, %c0_4] : memref<1x256xf32, #tpu.memory_space<vmem>>, vector<1x256xf32>
    %4 = vector.broadcast %3 : vector<1x256xf32> to vector<16x256xf32>
    %5 = arith.addf %2, %4 : vector<16x256xf32>
    %c0_5 = arith.constant 0 : index
    %c0_6 = arith.constant 0 : index
    %6 = vector.load %arg4[%c0_5, %c0_6] : memref<16x256xf32, #tpu.memory_space<vmem>>, vector<16x256xf32>
    tpu.vector_store %arg4[%c0_5, %c0_6], %5 {strides = array<i32>} : memref<16x256xf32, #tpu.memory_space<vmem>>, vector<16x256xf32>,
    %7 = vector.extract_strided_slice %5 {offsets = [0, 0], sizes = [16, 128], strides = [1, 1]} : vector<16x256xf32> to vector<16x128xf32>
    %8 = vector.extract_strided_slice %5 {offsets = [0, 128], sizes = [16, 128], strides = [1, 1]} : vector<16x256xf32> to vector<16x128xf32>
    %cst_7 = arith.constant 5.000000e-01 : f32
    %9 = vector.broadcast %cst_7 : f32 to vector<16x128xf32>
    %10 = arith.mulf %9, %8 : vector<16x128xf32>
    %11 = math.exp %10 : vector<16x128xf32>
    %c0_8 = arith.constant 0 : index
    %c0_9 = arith.constant 0 : index
    %12 = vector.load %arg3[%c0_8, %c0_9] : memref<16x128xf32, #tpu.memory_space<vmem>>, vector<16x128xf32>
    %13 = arith.mulf %11, %12 : vector<16x128xf32>
    %14 = arith.addf %7, %13 : vector<16x128xf32>
    %c0_10 = arith.constant 0 : index
    %c0_11 = arith.constant 0 : index
    %15 = vector.load %arg5[%c0_10, %c0_11] : memref<16x128xf32, #tpu.memory_space<vmem>>, vector<16x128xf32>
    tpu.vector_store %arg5[%c0_10, %c0_11], %14 {strides = array<i32>} : memref<16x128xf32, #tpu.memory_space<vmem>>, vector<16x128xf32>,
    return
  }
}

module attributes {stable_mosaic.version = 11 : i64} {
  func.func @_mm_bias_act_kernel(%arg0: i32, %arg1: i32, %arg2: memref<16x32xbf16, #tpu.memory_space<vmem>>, %arg3: memref<32x2048xbf16, #tpu.memory_space<vmem>>, %arg4: memref<1x2048xf32, #tpu.memory_space<vmem>>, %arg5: memref<16x2048xf32, #tpu.memory_space<vmem>>) attributes {dimension_semantics = [#tpu.dimension_semantics<parallel>, #tpu.dimension_semantics<parallel>], iteration_bounds = array<i64: 1, 1>, scalar_prefetch = 0 : i64, scratch_operands = 0 : i64, tpu.core_type = #tpu.core_type<tc>, window_params = [{transform_indices = @transform_0, window_bounds = array<i64: 16, 32>}, {transform_indices = @transform_1, window_bounds = array<i64: 32, 2048>}, {transform_indices = @transform_2, window_bounds = array<i64: 1, 2048>}, {transform_indices = @transform_3, window_bounds = array<i64: 16, 2048>}]} {
    %c0 = arith.constant 0 : index
    %c0_0 = arith.constant 0 : index
    %0 = vector.load %arg2[%c0, %c0_0] : memref<16x32xbf16, #tpu.memory_space<vmem>>, vector<16x32xbf16>
    %c0_1 = arith.constant 0 : index
    %c0_2 = arith.constant 0 : index
    %1 = vector.load %arg3[%c0_1, %c0_2] : memref<32x2048xbf16, #tpu.memory_space<vmem>>, vector<32x2048xbf16>
    %cst = arith.constant dense<0.000000e+00> : vector<16x2048xf32>
    %2 = tpu.matmul %0, %1, %cst {dimension_numbers = #tpu.dot_dimension_numbers<[1], [0], [0], [1], [0, 0, 1, 1], [], []>} : vector<16x32xbf16>, vector<32x2048xbf16>, vector<16x2048xf32> -> vector<16x2048xf32>
    %c0_3 = arith.constant 0 : index
    %c0_4 = arith.constant 0 : index
    %3 = vector.load %arg4[%c0_3, %c0_4] : memref<1x2048xf32, #tpu.memory_space<vmem>>, vector<1x2048xf32>
    %4 = vector.broadcast %3 : vector<1x2048xf32> to vector<16x2048xf32>
    %5 = arith.addf %2, %4 : vector<16x2048xf32>
    %c0_5 = arith.constant 0 : index
    %c0_6 = arith.constant 0 : index
    %6 = vector.load %arg5[%c0_5, %c0_6] : memref<16x2048xf32, #tpu.memory_space<vmem>>, vector<16x2048xf32>
    tpu.vector_store %arg5[%c0_5, %c0_6], %5 {strides = array<i32>} : memref<16x2048xf32, #tpu.memory_space<vmem>>, vector<16x2048xf32>,
    return
  }
  func.func @transform_0(%arg0: i32, %arg1: i32) -> (i32, i32) {
    %c0_i32 = arith.constant 0 : i32
    %c0_i32_0 = arith.constant 0 : i32
    return %arg0, %c0_i32 : i32, i32
  }
  func.func @transform_1(%arg0: i32, %arg1: i32) -> (i32, i32) {
    %c0_i32 = arith.constant 0 : i32
    %c0_i32_0 = arith.constant 0 : i32
    return %c0_i32, %arg1 : i32, i32
  }
  func.func @transform_2(%arg0: i32, %arg1: i32) -> (i32, i32) {
    %c0_i32 = arith.constant 0 : i32
    %c0_i32_0 = arith.constant 0 : i32
    return %c0_i32, %arg1 : i32, i32
  }
  func.func @transform_3(%arg0: i32, %arg1: i32) -> (i32, i32) {
    %c0_i32 = arith.constant 0 : i32
    return %arg0, %arg1 : i32, i32
  }
}

module attributes {stable_mosaic.version = 11 : i64} {
  func.func @_mm_bias_act_kernel(%arg0: i32, %arg1: i32, %arg2: memref<32x512xbf16, #tpu.memory_space<vmem>>, %arg3: memref<512x512xbf16, #tpu.memory_space<vmem>>, %arg4: memref<1x512xf32, #tpu.memory_space<vmem>>, %arg5: memref<32x512xf32, #tpu.memory_space<vmem>>) attributes {dimension_semantics = [#tpu.dimension_semantics<parallel>, #tpu.dimension_semantics<parallel>], iteration_bounds = array<i64: 1, 1>, scalar_prefetch = 0 : i64, scratch_operands = 0 : i64, tpu.core_type = #tpu.core_type<tc>, window_params = [{transform_indices = @transform_0, window_bounds = array<i64: 32, 512>}, {transform_indices = @transform_1, window_bounds = array<i64: 512, 512>}, {transform_indices = @transform_2, window_bounds = array<i64: 1, 512>}, {transform_indices = @transform_3, window_bounds = array<i64: 32, 512>}]} {
    %c0 = arith.constant 0 : index
    %c0_0 = arith.constant 0 : index
    %0 = vector.load %arg2[%c0, %c0_0] : memref<32x512xbf16, #tpu.memory_space<vmem>>, vector<32x512xbf16>
    %c0_1 = arith.constant 0 : index
    %c0_2 = arith.constant 0 : index
    %1 = vector.load %arg3[%c0_1, %c0_2] : memref<512x512xbf16, #tpu.memory_space<vmem>>, vector<512x512xbf16>
    %cst = arith.constant dense<0.000000e+00> : vector<32x512xf32>
    %2 = tpu.matmul %0, %1, %cst {dimension_numbers = #tpu.dot_dimension_numbers<[1], [0], [0], [1], [0, 0, 1, 1], [], []>} : vector<32x512xbf16>, vector<512x512xbf16>, vector<32x512xf32> -> vector<32x512xf32>
    %c0_3 = arith.constant 0 : index
    %c0_4 = arith.constant 0 : index
    %3 = vector.load %arg4[%c0_3, %c0_4] : memref<1x512xf32, #tpu.memory_space<vmem>>, vector<1x512xf32>
    %4 = vector.broadcast %3 : vector<1x512xf32> to vector<32x512xf32>
    %5 = arith.addf %2, %4 : vector<32x512xf32>
    %cst_5 = arith.constant 0.000000e+00 : f32
    %6 = vector.broadcast %cst_5 : f32 to vector<32x512xf32>
    %7 = arith.maximumf %5, %6 : vector<32x512xf32>
    %c0_6 = arith.constant 0 : index
    %c0_7 = arith.constant 0 : index
    %8 = vector.load %arg5[%c0_6, %c0_7] : memref<32x512xf32, #tpu.memory_space<vmem>>, vector<32x512xf32>
    tpu.vector_store %arg5[%c0_6, %c0_7], %7 {strides = array<i32>} : memref<32x512xf32, #tpu.memory_space<vmem>>, vector<32x512xf32>,
    return
  }
  func.func @transform_0(%arg0: i32, %arg1: i32) -> (i32, i32) {
    %c0_i32 = arith.constant 0 : i32
    %c0_i32_0 = arith.constant 0 : i32
    return %arg0, %c0_i32 : i32, i32
  }
  func.func @transform_1(%arg0: i32, %arg1: i32) -> (i32, i32) {
    %c0_i32 = arith.constant 0 : i32
    %c0_i32_0 = arith.constant 0 : i32
    return %c0_i32, %arg1 : i32, i32
  }
  func.func @transform_2(%arg0: i32, %arg1: i32) -> (i32, i32) {
    %c0_i32 = arith.constant 0 : i32
    %c0_i32_0 = arith.constant 0 : i32
    return %c0_i32, %arg1 : i32, i32
  }
  func.func @transform_3(%arg0: i32, %arg1: i32) -> (i32, i32) {
    %c0_i32 = arith.constant 0 : i32
    return %arg0, %arg1 : i32, i32
  }
}

module attributes {stable_mosaic.version = 11 : i64} {
  func.func @_mm_bias_act_kernel(%arg0: i32, %arg1: i32, %arg2: memref<128x512xbf16, #tpu.memory_space<vmem>>, %arg3: memref<512x256xbf16, #tpu.memory_space<vmem>>, %arg4: memref<1x256xf32, #tpu.memory_space<vmem>>, %arg5: memref<128x256xf32, #tpu.memory_space<vmem>>) attributes {dimension_semantics = [#tpu.dimension_semantics<parallel>, #tpu.dimension_semantics<parallel>], iteration_bounds = array<i64: 1, 1>, scalar_prefetch = 0 : i64, scratch_operands = 0 : i64, tpu.core_type = #tpu.core_type<tc>, window_params = [{transform_indices = @transform_0, window_bounds = array<i64: 128, 512>}, {transform_indices = @transform_1, window_bounds = array<i64: 512, 256>}, {transform_indices = @transform_2, window_bounds = array<i64: 1, 256>}, {transform_indices = @transform_3, window_bounds = array<i64: 128, 256>}]} {
    %c0 = arith.constant 0 : index
    %c0_0 = arith.constant 0 : index
    %0 = vector.load %arg2[%c0, %c0_0] : memref<128x512xbf16, #tpu.memory_space<vmem>>, vector<128x512xbf16>
    %c0_1 = arith.constant 0 : index
    %c0_2 = arith.constant 0 : index
    %1 = vector.load %arg3[%c0_1, %c0_2] : memref<512x256xbf16, #tpu.memory_space<vmem>>, vector<512x256xbf16>
    %cst = arith.constant dense<0.000000e+00> : vector<128x256xf32>
    %2 = tpu.matmul %0, %1, %cst {dimension_numbers = #tpu.dot_dimension_numbers<[1], [0], [0], [1], [0, 0, 1, 1], [], []>} : vector<128x512xbf16>, vector<512x256xbf16>, vector<128x256xf32> -> vector<128x256xf32>
    %c0_3 = arith.constant 0 : index
    %c0_4 = arith.constant 0 : index
    %3 = vector.load %arg4[%c0_3, %c0_4] : memref<1x256xf32, #tpu.memory_space<vmem>>, vector<1x256xf32>
    %4 = vector.broadcast %3 : vector<1x256xf32> to vector<128x256xf32>
    %5 = arith.addf %2, %4 : vector<128x256xf32>
    %cst_5 = arith.constant 0.000000e+00 : f32
    %6 = vector.broadcast %cst_5 : f32 to vector<128x256xf32>
    %7 = arith.maximumf %5, %6 : vector<128x256xf32>
    %c0_6 = arith.constant 0 : index
    %c0_7 = arith.constant 0 : index
    %8 = vector.load %arg5[%c0_6, %c0_7] : memref<128x256xf32, #tpu.memory_space<vmem>>, vector<128x256xf32>
    tpu.vector_store %arg5[%c0_6, %c0_7], %7 {strides = array<i32>} : memref<128x256xf32, #tpu.memory_space<vmem>>, vector<128x256xf32>,
    return
  }
  func.func @transform_0(%arg0: i32, %arg1: i32) -> (i32, i32) {
    %c0_i32 = arith.constant 0 : i32
    %c0_i32_0 = arith.constant 0 : i32
    return %arg0, %c0_i32 : i32, i32
  }
  func.func @transform_1(%arg0: i32, %arg1: i32) -> (i32, i32) {
    %c0_i32 = arith.constant 0 : i32
    %c0_i32_0 = arith.constant 0 : i32
    return %c0_i32, %arg1 : i32, i32
  }
  func.func @transform_2(%arg0: i32, %arg1: i32) -> (i32, i32) {
    %c0_i32 = arith.constant 0 : i32
    %c0_i32_0 = arith.constant 0 : i32
    return %c0_i32, %arg1 : i32, i32
  }
  func.func @transform_3(%arg0: i32, %arg1: i32) -> (i32, i32) {
    %c0_i32 = arith.constant 0 : i32
    return %arg0, %arg1 : i32, i32
  }
}

module attributes {stable_mosaic.version = 11 : i64} {
  func.func @_mm_bias_act_kernel(%arg0: i32, %arg1: i32, %arg2: memref<512x256xbf16, #tpu.memory_space<vmem>>, %arg3: memref<256x128xbf16, #tpu.memory_space<vmem>>, %arg4: memref<1x128xf32, #tpu.memory_space<vmem>>, %arg5: memref<512x128xf32, #tpu.memory_space<vmem>>) attributes {dimension_semantics = [#tpu.dimension_semantics<parallel>, #tpu.dimension_semantics<parallel>], iteration_bounds = array<i64: 1, 1>, scalar_prefetch = 0 : i64, scratch_operands = 0 : i64, tpu.core_type = #tpu.core_type<tc>, window_params = [{transform_indices = @transform_0, window_bounds = array<i64: 512, 256>}, {transform_indices = @transform_1, window_bounds = array<i64: 256, 128>}, {transform_indices = @transform_2, window_bounds = array<i64: 1, 128>}, {transform_indices = @transform_3, window_bounds = array<i64: 512, 128>}]} {
    %c0 = arith.constant 0 : index
    %c0_0 = arith.constant 0 : index
    %0 = vector.load %arg2[%c0, %c0_0] : memref<512x256xbf16, #tpu.memory_space<vmem>>, vector<512x256xbf16>
    %c0_1 = arith.constant 0 : index
    %c0_2 = arith.constant 0 : index
    %1 = vector.load %arg3[%c0_1, %c0_2] : memref<256x128xbf16, #tpu.memory_space<vmem>>, vector<256x128xbf16>
    %cst = arith.constant dense<0.000000e+00> : vector<512x128xf32>
    %2 = tpu.matmul %0, %1, %cst {dimension_numbers = #tpu.dot_dimension_numbers<[1], [0], [0], [1], [0, 0, 1, 1], [], []>} : vector<512x256xbf16>, vector<256x128xbf16>, vector<512x128xf32> -> vector<512x128xf32>
    %c0_3 = arith.constant 0 : index
    %c0_4 = arith.constant 0 : index
    %3 = vector.load %arg4[%c0_3, %c0_4] : memref<1x128xf32, #tpu.memory_space<vmem>>, vector<1x128xf32>
    %4 = vector.broadcast %3 : vector<1x128xf32> to vector<512x128xf32>
    %5 = arith.addf %2, %4 : vector<512x128xf32>
    %cst_5 = arith.constant 0.000000e+00 : f32
    %6 = vector.broadcast %cst_5 : f32 to vector<512x128xf32>
    %7 = arith.maximumf %5, %6 : vector<512x128xf32>
    %c0_6 = arith.constant 0 : index
    %c0_7 = arith.constant 0 : index
    %8 = vector.load %arg5[%c0_6, %c0_7] : memref<512x128xf32, #tpu.memory_space<vmem>>, vector<512x128xf32>
    tpu.vector_store %arg5[%c0_6, %c0_7], %7 {strides = array<i32>} : memref<512x128xf32, #tpu.memory_space<vmem>>, vector<512x128xf32>,
    return
  }
  func.func @transform_0(%arg0: i32, %arg1: i32) -> (i32, i32) {
    %c0_i32 = arith.constant 0 : i32
    %c0_i32_0 = arith.constant 0 : i32
    return %arg0, %c0_i32 : i32, i32
  }
  func.func @transform_1(%arg0: i32, %arg1: i32) -> (i32, i32) {
    %c0_i32 = arith.constant 0 : i32
    %c0_i32_0 = arith.constant 0 : i32
    return %c0_i32, %arg1 : i32, i32
  }
  func.func @transform_2(%arg0: i32, %arg1: i32) -> (i32, i32) {
    %c0_i32 = arith.constant 0 : i32
    %c0_i32_0 = arith.constant 0 : i32
    return %c0_i32, %arg1 : i32, i32
  }
  func.func @transform_3(%arg0: i32, %arg1: i32) -> (i32, i32) {
    %c0_i32 = arith.constant 0 : i32
    return %arg0, %arg1 : i32, i32
  }
}

module attributes {stable_mosaic.version = 11 : i64} {
  func.func @_mm_bias_act_kernel(%arg0: i32, %arg1: i32, %arg2: memref<512x288xbf16, #tpu.memory_space<vmem>>, %arg3: memref<288x128xbf16, #tpu.memory_space<vmem>>, %arg4: memref<1x128xf32, #tpu.memory_space<vmem>>, %arg5: memref<512x128xf32, #tpu.memory_space<vmem>>) attributes {dimension_semantics = [#tpu.dimension_semantics<parallel>, #tpu.dimension_semantics<parallel>], iteration_bounds = array<i64: 4, 1>, scalar_prefetch = 0 : i64, scratch_operands = 0 : i64, tpu.core_type = #tpu.core_type<tc>, window_params = [{transform_indices = @transform_0, window_bounds = array<i64: 512, 288>}, {transform_indices = @transform_1, window_bounds = array<i64: 288, 128>}, {transform_indices = @transform_2, window_bounds = array<i64: 1, 128>}, {transform_indices = @transform_3, window_bounds = array<i64: 512, 128>}]} {
    %c0 = arith.constant 0 : index
    %c0_0 = arith.constant 0 : index
    %0 = vector.load %arg2[%c0, %c0_0] : memref<512x288xbf16, #tpu.memory_space<vmem>>, vector<512x288xbf16>
    %c0_1 = arith.constant 0 : index
    %c0_2 = arith.constant 0 : index
    %1 = vector.load %arg3[%c0_1, %c0_2] : memref<288x128xbf16, #tpu.memory_space<vmem>>, vector<288x128xbf16>
    %cst = arith.constant dense<0.000000e+00> : vector<512x128xf32>
    %2 = tpu.matmul %0, %1, %cst {dimension_numbers = #tpu.dot_dimension_numbers<[1], [0], [0], [1], [0, 0, 1, 1], [], []>} : vector<512x288xbf16>, vector<288x128xbf16>, vector<512x128xf32> -> vector<512x128xf32>
    %c0_3 = arith.constant 0 : index
    %c0_4 = arith.constant 0 : index
    %3 = vector.load %arg4[%c0_3, %c0_4] : memref<1x128xf32, #tpu.memory_space<vmem>>, vector<1x128xf32>
    %4 = vector.broadcast %3 : vector<1x128xf32> to vector<512x128xf32>
    %5 = arith.addf %2, %4 : vector<512x128xf32>
    %c0_5 = arith.constant 0 : index
    %c0_6 = arith.constant 0 : index
    %6 = vector.load %arg5[%c0_5, %c0_6] : memref<512x128xf32, #tpu.memory_space<vmem>>, vector<512x128xf32>
    tpu.vector_store %arg5[%c0_5, %c0_6], %5 {strides = array<i32>} : memref<512x128xf32, #tpu.memory_space<vmem>>, vector<512x128xf32>,
    return
  }
  func.func @transform_0(%arg0: i32, %arg1: i32) -> (i32, i32) {
    %c0_i32 = arith.constant 0 : i32
    %c0_i32_0 = arith.constant 0 : i32
    return %arg0, %c0_i32 : i32, i32
  }
  func.func @transform_1(%arg0: i32, %arg1: i32) -> (i32, i32) {
    %c0_i32 = arith.constant 0 : i32
    %c0_i32_0 = arith.constant 0 : i32
    return %c0_i32, %arg1 : i32, i32
  }
  func.func @transform_2(%arg0: i32, %arg1: i32) -> (i32, i32) {
    %c0_i32 = arith.constant 0 : i32
    %c0_i32_0 = arith.constant 0 : i32
    return %c0_i32, %arg1 : i32, i32
  }
  func.func @transform_3(%arg0: i32, %arg1: i32) -> (i32, i32) {
    %c0_i32 = arith.constant 0 : i32
    return %arg0, %arg1 : i32, i32
  }
}

</mosaic_0001>

<llo_original>
// kernel: vae_forward.9
$region0: #{vae_forward.9}
  #allocation0 [shape = 'u32[]', space=smem, size = 0x4, offset = 0x4, fixed_abs, tag = 'smem constant byte address 0x4 - core index']
  #allocation1 [shape = 'u32[72,128]{1,0:T(1,128)}', space=vmem, size = 0x9000, scoped, tag = 'internal scratch']
  %s0 = inlined_call_operand.vmem [shape: bf16[512,32], index: 0, kind: input, shape index: {}]
  %s1 = inlined_call_operand.vmem [shape: bf16[32,128], index: 1, kind: input, shape index: {}]
  %s2 = inlined_call_operand.vmem [shape: f32[1,128], index: 2, kind: input, shape index: {}]
  %s3 = inlined_call_operand.vmem [shape: f32[512,128], index: 3, kind: output, shape index: {}]
  %s4 = sld [smem:[#allocation0]]
  $region22: #{vae_forward.9} parent=0
    _
  %s6 = ssub.s32 1, %s4
  %s7 = scalar_select 0, %s6, %s4
  // Predicated region
  $region2: #{vae_forward.9} parent=0 // pred_check
    _
  $region3: #{vae_forward.9} parent=0 // pred_check_branch
    %9 = sbr.rel (0) target = $region5
  $region4: #{vae_forward.9} parent=0 // pred_region
    _
  $region5: #{vae_forward.9} parent=0 // pred_fallthru
    _
  // Predicated region
  $region6: #{vae_forward.9} parent=0 // pred_check
    _
  $region7: #{vae_forward.9} parent=0 // pred_check_branch
    %11 = sbr.rel (0) target = $region9
  $region8: #{vae_forward.9} parent=0 // pred_region
    _
  $region9: #{vae_forward.9} parent=0 // pred_fallthru
    _
  // Predicated region
  $region10: #{vae_forward.9} parent=0 // pred_check
    _
  $region11: #{vae_forward.9} parent=0 // pred_check_branch
    %13 = sbr.rel (0) target = $region13
  $region12: #{vae_forward.9} parent=0 // pred_region
    _
  $region13: #{vae_forward.9} parent=0 // pred_fallthru
    _
  %v15 = vld [vmem:[%s0] sm:$0xf]
  %v16 = vld [vmem:[%s0 + $0x4] sm:$0xf]
  %v17 = vld [vmem:[%s0 + $0x8] sm:$0xf]
  %v18 = vld [vmem:[%s0 + $0xc] sm:$0xf]
  %v19 = vld [vmem:[%s0 + $0x10] sm:$0xf]
  %v20 = vld [vmem:[%s0 + $0x14] sm:$0xf]
  %v21 = vld [vmem:[%s0 + $0x18] sm:$0xf]
  %v22 = vld [vmem:[%s0 + $0x1c] sm:$0xf]
  %v23 = vld [vmem:[%s0 + $0x20] sm:$0xf]
  %v24 = vld [vmem:[%s0 + $0x24] sm:$0xf]
  %v25 = vld [vmem:[%s0 + $0x28] sm:$0xf]
  %v26 = vld [vmem:[%s0 + $0x2c] sm:$0xf]
  %v27 = vld [vmem:[%s0 + $0x30] sm:$0xf]
  %v28 = vld [vmem:[%s0 + $0x34] sm:$0xf]
  %v29 = vld [vmem:[%s0 + $0x38] sm:$0xf]
  %v30 = vld [vmem:[%s0 + $0x3c] sm:$0xf]
  %v31 = vld [vmem:[%s0 + $0x40] sm:$0xf]
  %v32 = vld [vmem:[%s0 + $0x44] sm:$0xf]
  %v33 = vld [vmem:[%s0 + $0x48] sm:$0xf]
  %v34 = vld [vmem:[%s0 + $0x4c] sm:$0xf]
  %v35 = vld [vmem:[%s0 + $0x50] sm:$0xf]
  %v36 = vld [vmem:[%s0 + $0x54] sm:$0xf]
  %v37 = vld [vmem:[%s0 + $0x58] sm:$0xf]
  %v38 = vld [vmem:[%s0 + $0x5c] sm:$0xf]
  %v39 = vld [vmem:[%s0 + $0x60] sm:$0xf]
  %v40 = vld [vmem:[%s0 + $0x64] sm:$0xf]
  %v41 = vld [vmem:[%s0 + $0x68] sm:$0xf]
  %v42 = vld [vmem:[%s0 + $0x6c] sm:$0xf]
  %v43 = vld [vmem:[%s0 + $0x70] sm:$0xf]
  %v44 = vld [vmem:[%s0 + $0x74] sm:$0xf]
  %v45 = vld [vmem:[%s0 + $0x78] sm:$0xf]
  %v46 = vld [vmem:[%s0 + $0x7c] sm:$0xf]
  %v47 = vld [vmem:[%s0 + $0x80] sm:$0xf]
  %v48 = vld [vmem:[%s0 + $0x84] sm:$0xf]
  %v49 = vld [vmem:[%s0 + $0x88] sm:$0xf]
  %v50 = vld [vmem:[%s0 + $0x8c] sm:$0xf]
  %v51 = vld [vmem:[%s0 + $0x90] sm:$0xf]
  %v52 = vld [vmem:[%s0 + $0x94] sm:$0xf]
  %v53 = vld [vmem:[%s0 + $0x98] sm:$0xf]
  %v54 = vld [vmem:[%s0 + $0x9c] sm:$0xf]
  %v55 = vld [vmem:[%s0 + $0xa0] sm:$0xf]
  %v56 = vld [vmem:[%s0 + $0xa4] sm:$0xf]
  %v57 = vld [vmem:[%s0 + $0xa8] sm:$0xf]
  %v58 = vld [vmem:[%s0 + $0xac] sm:$0xf]
  %v59 = vld [vmem:[%s0 + $0xb0] sm:$0xf]
  %v60 = vld [vmem:[%s0 + $0xb4] sm:$0xf]
  %v61 = vld [vmem:[%s0 + $0xb8] sm:$0xf]
  %v62 = vld [vmem:[%s0 + $0xbc] sm:$0xf]
  %v63 = vld [vmem:[%s0 + $0xc0] sm:$0xf]
  %v64 = vld [vmem:[%s0 + $0xc4] sm:$0xf]
  %v65 = vld [vmem:[%s0 + $0xc8] sm:$0xf]
  %v66 = vld [vmem:[%s0 + $0xcc] sm:$0xf]
  %v67 = vld [vmem:[%s0 + $0xd0] sm:$0xf]
  %v68 = vld [vmem:[%s0 + $0xd4] sm:$0xf]
  %v69 = vld [vmem:[%s0 + $0xd8] sm:$0xf]
  %v70 = vld [vmem:[%s0 + $0xdc] sm:$0xf]
  %v71 = vld [vmem:[%s0 + $0xe0] sm:$0xf]
  %v72 = vld [vmem:[%s0 + $0xe4] sm:$0xf]
  %v73 = vld [vmem:[%s0 + $0xe8] sm:$0xf]
  %v74 = vld [vmem:[%s0 + $0xec] sm:$0xf]
  %v75 = vld [vmem:[%s0 + $0xf0] sm:$0xf]
  %v76 = vld [vmem:[%s0 + $0xf4] sm:$0xf]
  %v77 = vld [vmem:[%s0 + $0xf8] sm:$0xf]
  %v78 = vld [vmem:[%s0 + $0xfc] sm:$0xf]
  %v79 = vld [vmem:[%s1] sm:$0xf]
  %v80 = vld [vmem:[%s1 + $0x4] sm:$0xf]
  %v81 = vld [vmem:[%s1 + $0x8] sm:$0xf]
  %v82 = vld [vmem:[%s1 + $0xc] sm:$0xf]
  %v83 = vld [vmem:[%s2] sm:$0x1]
  %v85 = vperm.slane %v83, 0
  %v151 = vunpack.c.l.b16 %v15
  %v152 = vunpack.c.l.b16 %v16
  %v153 = vunpack.c.l.b16 %v17
  %v154 = vunpack.c.l.b16 %v18
  %v155 = vunpack.c.l.b16 %v19
  %v156 = vunpack.c.l.b16 %v20
  %v157 = vunpack.c.l.b16 %v21
  %v158 = vunpack.c.l.b16 %v22
  %v159 = vunpack.c.l.b16 %v23
  %v160 = vunpack.c.l.b16 %v24
  %v161 = vunpack.c.l.b16 %v25
  %v162 = vunpack.c.l.b16 %v26
  %v163 = vunpack.c.l.b16 %v27
  %v164 = vunpack.c.l.b16 %v28
  %v165 = vunpack.c.l.b16 %v29
  %v166 = vunpack.c.l.b16 %v30
  %v167 = vunpack.c.l.b16 %v31
  %v168 = vunpack.c.l.b16 %v32
  %v169 = vunpack.c.l.b16 %v33
  %v170 = vunpack.c.l.b16 %v34
  %v171 = vunpack.c.l.b16 %v35
  %v172 = vunpack.c.l.b16 %v36
  %v173 = vunpack.c.l.b16 %v37
  %v174 = vunpack.c.l.b16 %v38
  %v175 = vunpack.c.l.b16 %v39
  %v176 = vunpack.c.l.b16 %v40
  %v177 = vunpack.c.l.b16 %v41
  %v178 = vunpack.c.l.b16 %v42
  %v179 = vunpack.c.l.b16 %v43
  %v180 = vunpack.c.l.b16 %v44
  %v181 = vunpack.c.l.b16 %v45
  %v182 = vunpack.c.l.b16 %v46
  %v183 = vunpack.c.l.b16 %v47
  %v184 = vunpack.c.l.b16 %v48
  %v185 = vunpack.c.l.b16 %v49
  %v186 = vunpack.c.l.b16 %v50
  %v187 = vunpack.c.l.b16 %v51
  %v188 = vunpack.c.l.b16 %v52
  %v189 = vunpack.c.l.b16 %v53
  %v190 = vunpack.c.l.b16 %v54
  %v191 = vunpack.c.l.b16 %v55
  %v192 = vunpack.c.l.b16 %v56
  %v193 = vunpack.c.l.b16 %v57
  %v194 = vunpack.c.l.b16 %v58
  %v195 = vunpack.c.l.b16 %v59
  %v196 = vunpack.c.l.b16 %v60
  %v197 = vunpack.c.l.b16 %v61
  %v198 = vunpack.c.l.b16 %v62
  %v199 = vunpack.c.l.b16 %v63
  %v200 = vunpack.c.l.b16 %v64
  %v201 = vunpack.c.l.b16 %v65
  %v202 = vunpack.c.l.b16 %v66
  %v203 = vunpack.c.l.b16 %v67
  %v204 = vunpack.c.l.b16 %v68
  %v205 = vunpack.c.l.b16 %v69
  %v206 = vunpack.c.l.b16 %v70
  %v207 = vunpack.c.l.b16 %v71
  %v208 = vunpack.c.l.b16 %v72
  %v209 = vunpack.c.l.b16 %v73
  %v210 = vunpack.c.l.b16 %v74
  %v211 = vunpack.c.l.b16 %v75
  %v212 = vunpack.c.l.b16 %v76
  %v213 = vunpack.c.l.b16 %v77
  %v214 = vunpack.c.l.b16 %v78
  %v215 = vpack.c.b16 %v152, %v151
  %v216 = vpack.c.b16 %v154, %v153
  %v217 = vpack.c.b16 %v156, %v155
  %v218 = vpack.c.b16 %v158, %v157
  %v219 = vpack.c.b16 %v160, %v159
  %v220 = vpack.c.b16 %v162, %v161
  %v221 = vpack.c.b16 %v164, %v163
  %v222 = vpack.c.b16 %v166, %v165
  %v223 = vpack.c.b16 %v168, %v167
  %v224 = vpack.c.b16 %v170, %v169
  %v225 = vpack.c.b16 %v172, %v171
  %v226 = vpack.c.b16 %v174, %v173
  %v227 = vpack.c.b16 %v176, %v175
  %v228 = vpack.c.b16 %v178, %v177
  %v229 = vpack.c.b16 %v180, %v179
  %v230 = vpack.c.b16 %v182, %v181
  %v231 = vpack.c.b16 %v184, %v183
  %v232 = vpack.c.b16 %v186, %v185
  %v233 = vpack.c.b16 %v188, %v187
  %v234 = vpack.c.b16 %v190, %v189
  %v235 = vpack.c.b16 %v192, %v191
  %v236 = vpack.c.b16 %v194, %v193
  %v237 = vpack.c.b16 %v196, %v195
  %v238 = vpack.c.b16 %v198, %v197
  %v239 = vpack.c.b16 %v200, %v199
  %v240 = vpack.c.b16 %v202, %v201
  %v241 = vpack.c.b16 %v204, %v203
  %v242 = vpack.c.b16 %v206, %v205
  %v243 = vpack.c.b16 %v208, %v207
  %v244 = vpack.c.b16 %v210, %v209
  %v245 = vpack.c.b16 %v212, %v211
  %v246 = vpack.c.b16 %v214, %v213
  %v251 = vunpack.c.l.b16 %v79
  %v252 = vunpack.c.l.b16 %v80
  %v253 = vunpack.c.l.b16 %v81
  %v254 = vunpack.c.l.b16 %v82
  %v255 = vpack.c.b16 %v252, %v251
  %v256 = vpack.c.b16 %v254, %v253
  %vm259 = vcmask 261120
  %v261 = vsel %vm259, %v215, 0
  %v264 = vsel %vm259, %v216, 0
  %v267 = vsel %vm259, %v217, 0
  %v270 = vsel %vm259, %v218, 0
  %v273 = vsel %vm259, %v219, 0
  %v276 = vsel %vm259, %v220, 0
  %v279 = vsel %vm259, %v221, 0
  %v282 = vsel %vm259, %v222, 0
  %v285 = vsel %vm259, %v223, 0
  %v288 = vsel %vm259, %v224, 0
  %v291 = vsel %vm259, %v225, 0
  %v294 = vsel %vm259, %v226, 0
  %v297 = vsel %vm259, %v227, 0
  %v300 = vsel %vm259, %v228, 0
  %v303 = vsel %vm259, %v229, 0
  %v306 = vsel %vm259, %v230, 0
  %v309 = vsel %vm259, %v231, 0
  %v312 = vsel %vm259, %v232, 0
  %v315 = vsel %vm259, %v233, 0
  %v318 = vsel %vm259, %v234, 0
  %v321 = vsel %vm259, %v235, 0
  %v324 = vsel %vm259, %v236, 0
  %v327 = vsel %vm259, %v237, 0
  %v330 = vsel %vm259, %v238, 0
  %v333 = vsel %vm259, %v239, 0
  %v336 = vsel %vm259, %v240, 0
  %v339 = vsel %vm259, %v241, 0
  %v342 = vsel %vm259, %v242, 0
  %v345 = vsel %vm259, %v243, 0
  %v348 = vsel %vm259, %v244, 0
  %v351 = vsel %vm259, %v245, 0
  %v354 = vsel %vm259, %v246, 0
  %356 = vmatpush.bf16.msra.mxu0 0
  %357 = vmatpush.bf16.msra.mxu0 0
  %358 = vmatpush.bf16.msra.mxu0 0
  %359 = vmatpush.bf16.msra.mxu0 0
  %360 = vmatpush.bf16.msra.mxu0 0
  %361 = vmatpush.bf16.msra.mxu0 0
  %362 = vmatpush.bf16.msra.mxu0 %v256
  %363 = vmatpush.bf16.msra.mxu0 %v255
  %364 = vmatmul.bf16.gmra.mxu0 %v261
  %v365 = vpop.f32.mrf.mxu0
  %v366 = vadd.f32 %v85, %v365
  %v367 = vpop.f32.mrf.mxu0
  %v368 = vadd.f32 %v85, %v367
  %369 = vmatmul.bf16.gmra.mxu0 %v264
  %v370 = vpop.f32.mrf.mxu0
  %v371 = vadd.f32 %v85, %v370
  %v372 = vpop.f32.mrf.mxu0
  %v373 = vadd.f32 %v85, %v372
  %374 = vmatmul.bf16.gmra.mxu0 %v267
  %v375 = vpop.f32.mrf.mxu0
  %v376 = vadd.f32 %v85, %v375
  %v377 = vpop.f32.mrf.mxu0
  %v378 = vadd.f32 %v85, %v377
  %379 = vmatmul.bf16.gmra.mxu0 %v270
  %v380 = vpop.f32.mrf.mxu0
  %v381 = vadd.f32 %v85, %v380
  %v382 = vpop.f32.mrf.mxu0
  %v383 = vadd.f32 %v85, %v382
  %384 = vmatmul.bf16.gmra.mxu0 %v273
  %v385 = vpop.f32.mrf.mxu0
  %v386 = vadd.f32 %v85, %v385
  %v387 = vpop.f32.mrf.mxu0
  %v388 = vadd.f32 %v85, %v387
  %389 = vmatmul.bf16.gmra.mxu0 %v276
  %v390 = vpop.f32.mrf.mxu0
  %v391 = vadd.f32 %v85, %v390
  %v392 = vpop.f32.mrf.mxu0
  %v393 = vadd.f32 %v85, %v392
  %394 = vmatmul.bf16.gmra.mxu0 %v279
  %v395 = vpop.f32.mrf.mxu0
  %v396 = vadd.f32 %v85, %v395
  %v397 = vpop.f32.mrf.mxu0
  %v398 = vadd.f32 %v85, %v397
  %399 = vmatmul.bf16.gmra.mxu0 %v282
  %v400 = vpop.f32.mrf.mxu0
  %v401 = vadd.f32 %v85, %v400
  %v402 = vpop.f32.mrf.mxu0
  %v403 = vadd.f32 %v85, %v402
  %404 = vmatmul.bf16.gmra.mxu0 %v285
  %v405 = vpop.f32.mrf.mxu0
  %v406 = vadd.f32 %v85, %v405
  %v407 = vpop.f32.mrf.mxu0
  %v408 = vadd.f32 %v85, %v407
  %409 = vmatmul.bf16.gmra.mxu0 %v288
  %v410 = vpop.f32.mrf.mxu0
  %v411 = vadd.f32 %v85, %v410
  %v412 = vpop.f32.mrf.mxu0
  %v413 = vadd.f32 %v85, %v412
  %414 = vmatmul.bf16.gmra.mxu0 %v291
  %v415 = vpop.f32.mrf.mxu0
  %v416 = vadd.f32 %v85, %v415
  %v417 = vpop.f32.mrf.mxu0
  %v418 = vadd.f32 %v85, %v417
  %419 = vmatmul.bf16.gmra.mxu0 %v294
  %v420 = vpop.f32.mrf.mxu0
  %v421 = vadd.f32 %v85, %v420
  %v422 = vpop.f32.mrf.mxu0
  %v423 = vadd.f32 %v85, %v422
  %424 = vmatmul.bf16.gmra.mxu0 %v297
  %v425 = vpop.f32.mrf.mxu0
  %v426 = vadd.f32 %v85, %v425
  %v427 = vpop.f32.mrf.mxu0
  %v428 = vadd.f32 %v85, %v427
  %429 = vmatmul.bf16.gmra.mxu0 %v300
  %v430 = vpop.f32.mrf.mxu0
  %v431 = vadd.f32 %v85, %v430
  %v432 = vpop.f32.mrf.mxu0
  %v433 = vadd.f32 %v85, %v432
  %434 = vmatmul.bf16.gmra.mxu0 %v303
  %v435 = vpop.f32.mrf.mxu0
  %v436 = vadd.f32 %v85, %v435
  %v437 = vpop.f32.mrf.mxu0
  %v438 = vadd.f32 %v85, %v437
  %439 = vmatmul.bf16.gmra.mxu0 %v306
  %v440 = vpop.f32.mrf.mxu0
  %v441 = vadd.f32 %v85, %v440
  %v442 = vpop.f32.mrf.mxu0
  %v443 = vadd.f32 %v85, %v442
  %444 = vmatmul.bf16.gmra.mxu0 %v309
  %v445 = vpop.f32.mrf.mxu0
  %v446 = vadd.f32 %v85, %v445
  %v447 = vpop.f32.mrf.mxu0
  %v448 = vadd.f32 %v85, %v447
  %449 = vmatmul.bf16.gmra.mxu0 %v312
  %v450 = vpop.f32.mrf.mxu0
  %v451 = vadd.f32 %v85, %v450
  %v452 = vpop.f32.mrf.mxu0
  %v453 = vadd.f32 %v85, %v452
  %454 = vmatmul.bf16.gmra.mxu0 %v315
  %v455 = vpop.f32.mrf.mxu0
  %v456 = vadd.f32 %v85, %v455
  %v457 = vpop.f32.mrf.mxu0
  %v458 = vadd.f32 %v85, %v457
  %459 = vmatmul.bf16.gmra.mxu0 %v318
  %v460 = vpop.f32.mrf.mxu0
  %v461 = vadd.f32 %v85, %v460
  %v462 = vpop.f32.mrf.mxu0
  %v463 = vadd.f32 %v85, %v462
  %464 = vmatmul.bf16.gmra.mxu0 %v321
  %v465 = vpop.f32.mrf.mxu0
  %v466 = vadd.f32 %v85, %v465
  %v467 = vpop.f32.mrf.mxu0
  %v468 = vadd.f32 %v85, %v467
  %469 = vmatmul.bf16.gmra.mxu0 %v324
  %v470 = vpop.f32.mrf.mxu0
  %v471 = vadd.f32 %v85, %v470
  %v472 = vpop.f32.mrf.mxu0
  %v473 = vadd.f32 %v85, %v472
  %474 = vmatmul.bf16.gmra.mxu0 %v327
  %v475 = vpop.f32.mrf.mxu0
  %v476 = vadd.f32 %v85, %v475
  %v477 = vpop.f32.mrf.mxu0
  %v478 = vadd.f32 %v85, %v477
  %479 = vmatmul.bf16.gmra.mxu0 %v330
  %v480 = vpop.f32.mrf.mxu0
  %v481 = vadd.f32 %v85, %v480
  %v482 = vpop.f32.mrf.mxu0
  %v483 = vadd.f32 %v85, %v482
  %484 = vmatmul.bf16.gmra.mxu0 %v333
  %v485 = vpop.f32.mrf.mxu0
  %v486 = vadd.f32 %v85, %v485
  %v487 = vpop.f32.mrf.mxu0
  %v488 = vadd.f32 %v85, %v487
  %489 = vmatmul.bf16.gmra.mxu0 %v336
  %v490 = vpop.f32.mrf.mxu0
  %v491 = vadd.f32 %v85, %v490
  %v492 = vpop.f32.mrf.mxu0
  %v493 = vadd.f32 %v85, %v492
  %494 = vmatmul.bf16.gmra.mxu0 %v339
  %v495 = vpop.f32.mrf.mxu0
  %v496 = vadd.f32 %v85, %v495
  %v497 = vpop.f32.mrf.mxu0
  %v498 = vadd.f32 %v85, %v497
  %499 = vmatmul.bf16.gmra.mxu0 %v342
  %v500 = vpop.f32.mrf.mxu0
  %v501 = vadd.f32 %v85, %v500
  %v502 = vpop.f32.mrf.mxu0
  %v503 = vadd.f32 %v85, %v502
  %504 = vmatmul.bf16.gmra.mxu0 %v345
  %v505 = vpop.f32.mrf.mxu0
  %v506 = vadd.f32 %v85, %v505
  %v507 = vpop.f32.mrf.mxu0
  %v508 = vadd.f32 %v85, %v507
  %509 = vmatmul.bf16.gmra.mxu0 %v348
  %v510 = vpop.f32.mrf.mxu0
  %v511 = vadd.f32 %v85, %v510
  %v512 = vpop.f32.mrf.mxu0
  %v513 = vadd.f32 %v85, %v512
  %514 = vmatmul.bf16.gmra.mxu0 %v351
  %v515 = vpop.f32.mrf.mxu0
  %v516 = vadd.f32 %v85, %v515
  %v517 = vpop.f32.mrf.mxu0
  %v518 = vadd.f32 %v85, %v517
  %519 = vmatmul.bf16.gmra.mxu0 %v354
  %v520 = vpop.f32.mrf.mxu0
  %v521 = vadd.f32 %v85, %v520
  %v522 = vpop.f32.mrf.mxu0
  %v523 = vadd.f32 %v85, %v522
  %524 = vdwg.mxu0
  %v525 = vmax.f32 %v366, 0.0
  %v526 = vmax.f32 %v368, 0.0
  %v527 = vmax.f32 %v371, 0.0
  %v528 = vmax.f32 %v373, 0.0
  %v529 = vmax.f32 %v376, 0.0
  %v530 = vmax.f32 %v378, 0.0
  %v531 = vmax.f32 %v381, 0.0
  %v532 = vmax.f32 %v383, 0.0
  %v533 = vmax.f32 %v386, 0.0
  %v534 = vmax.f32 %v388, 0.0
  %v535 = vmax.f32 %v391, 0.0
  %v536 = vmax.f32 %v393, 0.0
  %v537 = vmax.f32 %v396, 0.0
  %v538 = vmax.f32 %v398, 0.0
  %v539 = vmax.f32 %v401, 0.0
  %v540 = vmax.f32 %v403, 0.0
  %v541 = vmax.f32 %v406, 0.0
  %v542 = vmax.f32 %v408, 0.0
  %v543 = vmax.f32 %v411, 0.0
  %v544 = vmax.f32 %v413, 0.0
  %v545 = vmax.f32 %v416, 0.0
  %v546 = vmax.f32 %v418, 0.0
  %v547 = vmax.f32 %v421, 0.0
  %v548 = vmax.f32 %v423, 0.0
  %v549 = vmax.f32 %v426, 0.0
  %v550 = vmax.f32 %v428, 0.0
  %v551 = vmax.f32 %v431, 0.0
  %v552 = vmax.f32 %v433, 0.0
  %v553 = vmax.f32 %v436, 0.0
  %v554 = vmax.f32 %v438, 0.0
  %v555 = vmax.f32 %v441, 0.0
  %v556 = vmax.f32 %v443, 0.0
  %v557 = vmax.f32 %v446, 0.0
  %v558 = vmax.f32 %v448, 0.0
  %v559 = vmax.f32 %v451, 0.0
  %v560 = vmax.f32 %v453, 0.0
  %v561 = vmax.f32 %v456, 0.0
  %v562 = vmax.f32 %v458, 0.0
  %v563 = vmax.f32 %v461, 0.0
  %v564 = vmax.f32 %v463, 0.0
  %v565 = vmax.f32 %v466, 0.0
  %v566 = vmax.f32 %v468, 0.0
  %v567 = vmax.f32 %v471, 0.0
  %v568 = vmax.f32 %v473, 0.0
  %v569 = vmax.f32 %v476, 0.0
  %v570 = vmax.f32 %v478, 0.0
  %v571 = vmax.f32 %v481, 0.0
  %v572 = vmax.f32 %v483, 0.0
  %v573 = vmax.f32 %v486, 0.0
  %v574 = vmax.f32 %v488, 0.0
  %v575 = vmax.f32 %v491, 0.0
  %v576 = vmax.f32 %v493, 0.0
  %v577 = vmax.f32 %v496, 0.0
  %v578 = vmax.f32 %v498, 0.0
  %v579 = vmax.f32 %v501, 0.0
  %v580 = vmax.f32 %v503, 0.0
  %v581 = vmax.f32 %v506, 0.0
  %v582 = vmax.f32 %v508, 0.0
  %v583 = vmax.f32 %v511, 0.0
  %v584 = vmax.f32 %v513, 0.0
  %v585 = vmax.f32 %v516, 0.0
  %v586 = vmax.f32 %v518, 0.0
  %v587 = vmax.f32 %v521, 0.0
  %v588 = vmax.f32 %v523, 0.0
  %589 = vst [vmem:[%s3] sm:$0xff] %v525
  %590 = vst [vmem:[%s3 + $0x8] sm:$0xff] %v526
  %591 = vst [vmem:[%s3 + $0x10] sm:$0xff] %v527
  %592 = vst [vmem:[%s3 + $0x18] sm:$0xff] %v528
  %593 = vst [vmem:[%s3 + $0x20] sm:$0xff] %v529
  %594 = vst [vmem:[%s3 + $0x28] sm:$0xff] %v530
  %595 = vst [vmem:[%s3 + $0x30] sm:$0xff] %v531
  %596 = vst [vmem:[%s3 + $0x38] sm:$0xff] %v532
  %597 = vst [vmem:[%s3 + $0x40] sm:$0xff] %v533
  %598 = vst [vmem:[%s3 + $0x48] sm:$0xff] %v534
  %599 = vst [vmem:[%s3 + $0x50] sm:$0xff] %v535
  %600 = vst [vmem:[%s3 + $0x58] sm:$0xff] %v536
  %601 = vst [vmem:[%s3 + $0x60] sm:$0xff] %v537
  %602 = vst [vmem:[%s3 + $0x68] sm:$0xff] %v538
  %603 = vst [vmem:[%s3 + $0x70] sm:$0xff] %v539
  %604 = vst [vmem:[%s3 + $0x78] sm:$0xff] %v540
  %605 = vst [vmem:[%s3 + $0x80] sm:$0xff] %v541
  %606 = vst [vmem:[%s3 + $0x88] sm:$0xff] %v542
  %607 = vst [vmem:[%s3 + $0x90] sm:$0xff] %v543
  %608 = vst [vmem:[%s3 + $0x98] sm:$0xff] %v544
  %609 = vst [vmem:[%s3 + $0xa0] sm:$0xff] %v545
  %610 = vst [vmem:[%s3 + $0xa8] sm:$0xff] %v546
  %611 = vst [vmem:[%s3 + $0xb0] sm:$0xff] %v547
  %612 = vst [vmem:[%s3 + $0xb8] sm:$0xff] %v548
  %613 = vst [vmem:[%s3 + $0xc0] sm:$0xff] %v549
  %614 = vst [vmem:[%s3 + $0xc8] sm:$0xff] %v550
  %615 = vst [vmem:[%s3 + $0xd0] sm:$0xff] %v551
  %616 = vst [vmem:[%s3 + $0xd8] sm:$0xff] %v552
  %617 = vst [vmem:[%s3 + $0xe0] sm:$0xff] %v553
  %618 = vst [vmem:[%s3 + $0xe8] sm:$0xff] %v554
  %619 = vst [vmem:[%s3 + $0xf0] sm:$0xff] %v555
  %620 = vst [vmem:[%s3 + $0xf8] sm:$0xff] %v556
  %621 = vst [vmem:[%s3 + $0x100] sm:$0xff] %v557
  %622 = vst [vmem:[%s3 + $0x108] sm:$0xff] %v558
  %623 = vst [vmem:[%s3 + $0x110] sm:$0xff] %v559
  %624 = vst [vmem:[%s3 + $0x118] sm:$0xff] %v560
  %625 = vst [vmem:[%s3 + $0x120] sm:$0xff] %v561
  %626 = vst [vmem:[%s3 + $0x128] sm:$0xff] %v562
  %627 = vst [vmem:[%s3 + $0x130] sm:$0xff] %v563
  %628 = vst [vmem:[%s3 + $0x138] sm:$0xff] %v564
  %629 = vst [vmem:[%s3 + $0x140] sm:$0xff] %v565
  %630 = vst [vmem:[%s3 + $0x148] sm:$0xff] %v566
  %631 = vst [vmem:[%s3 + $0x150] sm:$0xff] %v567
  %632 = vst [vmem:[%s3 + $0x158] sm:$0xff] %v568
  %633 = vst [vmem:[%s3 + $0x160] sm:$0xff] %v569
  %634 = vst [vmem:[%s3 + $0x168] sm:$0xff] %v570
  %635 = vst [vmem:[%s3 + $0x170] sm:$0xff] %v571
  %636 = vst [vmem:[%s3 + $0x178] sm:$0xff] %v572
  %637 = vst [vmem:[%s3 + $0x180] sm:$0xff] %v573
  %638 = vst [vmem:[%s3 + $0x188] sm:$0xff] %v574
  %639 = vst [vmem:[%s3 + $0x190] sm:$0xff] %v575
  %640 = vst [vmem:[%s3 + $0x198] sm:$0xff] %v576
  %641 = vst [vmem:[%s3 + $0x1a0] sm:$0xff] %v577
  %642 = vst [vmem:[%s3 + $0x1a8] sm:$0xff] %v578
  %643 = vst [vmem:[%s3 + $0x1b0] sm:$0xff] %v579
  %644 = vst [vmem:[%s3 + $0x1b8] sm:$0xff] %v580
  %645 = vst [vmem:[%s3 + $0x1c0] sm:$0xff] %v581
  %646 = vst [vmem:[%s3 + $0x1c8] sm:$0xff] %v582
  %647 = vst [vmem:[%s3 + $0x1d0] sm:$0xff] %v583
  %648 = vst [vmem:[%s3 + $0x1d8] sm:$0xff] %v584
  %649 = vst [vmem:[%s3 + $0x1e0] sm:$0xff] %v585
  %650 = vst [vmem:[%s3 + $0x1e8] sm:$0xff] %v586
  %651 = vst [vmem:[%s3 + $0x1f0] sm:$0xff] %v587
  %652 = vst [vmem:[%s3 + $0x1f8] sm:$0xff] %v588
  // Predicated region
  $region14: #{vae_forward.9} parent=0 // pred_check
    _
  $region15: #{vae_forward.9} parent=0 // pred_check_branch
    %654 = sbr.rel (0) target = $region17
  $region16: #{vae_forward.9} parent=0 // pred_region
    _
  $region17: #{vae_forward.9} parent=0 // pred_fallthru
    _
  // Predicated region
  $region18: #{vae_forward.9} parent=0 // pred_check
    _
  $region19: #{vae_forward.9} parent=0 // pred_check_branch
    %656 = sbr.rel (0) target = $region21
  $region20: #{vae_forward.9} parent=0 // pred_region
    _
  $region21: #{vae_forward.9} parent=0 // pred_fallthru
    _

// kernel: vae_forward.10
$region0: #{vae_forward.10}
  #allocation0 [shape = 'u32[]', space=smem, size = 0x4, offset = 0x4, fixed_abs, tag = 'smem constant byte address 0x4 - core index']
  #allocation1 [shape = 'u32[72,128]{1,0:T(1,128)}', space=vmem, size = 0x9000, scoped, tag = 'internal scratch']
  %s0 = inlined_call_operand.vmem [shape: bf16[128,288], index: 0, kind: input, shape index: {}]
  %s1 = inlined_call_operand.vmem [shape: bf16[288,128], index: 1, kind: input, shape index: {}]
  %s2 = inlined_call_operand.vmem [shape: f32[1,128], index: 2, kind: input, shape index: {}]
  %s3 = inlined_call_operand.vmem [shape: f32[128,128], index: 3, kind: output, shape index: {}]
  %s4 = sld [smem:[#allocation0]]
  $region22: #{vae_forward.10} parent=0
    _
  %s6 = ssub.s32 1, %s4
  %s7 = scalar_select 0, %s6, %s4
  // Predicated region
  $region2: #{vae_forward.10} parent=0 // pred_check
    _
  $region3: #{vae_forward.10} parent=0 // pred_check_branch
    %9 = sbr.rel (0) target = $region5
  $region4: #{vae_forward.10} parent=0 // pred_region
    _
  $region5: #{vae_forward.10} parent=0 // pred_fallthru
    _
  // Predicated region
  $region6: #{vae_forward.10} parent=0 // pred_check
    _
  $region7: #{vae_forward.10} parent=0 // pred_check_branch
    %11 = sbr.rel (0) target = $region9
  $region8: #{vae_forward.10} parent=0 // pred_region
    _
  $region9: #{vae_forward.10} parent=0 // pred_fallthru
    _
  // Predicated region
  $region10: #{vae_forward.10} parent=0 // pred_check
    _
  $region11: #{vae_forward.10} parent=0 // pred_check_branch
    %13 = sbr.rel (0) target = $region13
  $region12: #{vae_forward.10} parent=0 // pred_region
    _
  $region13: #{vae_forward.10} parent=0 // pred_fallthru
    _
  %v15 = vld [vmem:[%s0] sm:$0xff]
  %v16 = vld [vmem:[%s0 + $0x8] sm:$0xf]
  %v17 = vld [vmem:[%s0 + $0xc] sm:$0xff]
  %v18 = vld [vmem:[%s0 + $0x14] sm:$0xf]
  %v19 = vld [vmem:[%s0 + $0x18] sm:$0xff]
  %v20 = vld [vmem:[%s0 + $0x20] sm:$0xf]
  %v21 = vld [vmem:[%s0 + $0x24] sm:$0xff]
  %v22 = vld [vmem:[%s0 + $0x2c] sm:$0xf]
  %v23 = vld [vmem:[%s0 + $0x30] sm:$0xff]
  %v24 = vld [vmem:[%s0 + $0x38] sm:$0xf]
  %v25 = vld [vmem:[%s0 + $0x3c] sm:$0xff]
  %v26 = vld [vmem:[%s0 + $0x44] sm:$0xf]
  %v27 = vld [vmem:[%s0 + $0x48] sm:$0xff]
  %v28 = vld [vmem:[%s0 + $0x50] sm:$0xf]
  %v29 = vld [vmem:[%s0 + $0x54] sm:$0xff]
  %v30 = vld [vmem:[%s0 + $0x5c] sm:$0xf]
  %v31 = vld [vmem:[%s0 + $0x60] sm:$0xff]
  %v32 = vld [vmem:[%s0 + $0x68] sm:$0xf]
  %v33 = vld [vmem:[%s0 + $0x6c] sm:$0xff]
  %v34 = vld [vmem:[%s0 + $0x74] sm:$0xf]
  %v35 = vld [vmem:[%s0 + $0x78] sm:$0xff]
  %v36 = vld [vmem:[%s0 + $0x80] sm:$0xf]
  %v37 = vld [vmem:[%s0 + $0x84] sm:$0xff]
  %v38 = vld [vmem:[%s0 + $0x8c] sm:$0xf]
  %v39 = vld [vmem:[%s0 + $0x90] sm:$0xff]
  %v40 = vld [vmem:[%s0 + $0x98] sm:$0xf]
  %v41 = vld [vmem:[%s0 + $0x9c] sm:$0xff]
  %v42 = vld [vmem:[%s0 + $0xa4] sm:$0xf]
  %v43 = vld [vmem:[%s0 + $0xa8] sm:$0xff]
  %v44 = vld [vmem:[%s0 + $0xb0] sm:$0xf]
  %v45 = vld [vmem:[%s0 + $0xb4] sm:$0xff]
  %v46 = vld [vmem:[%s0 + $0xbc] sm:$0xf]
  %v47 = vld [vmem:[%s1] sm:$0xf]
  %v48 = vld [vmem:[%s1 + $0x4] sm:$0xf]
  %v49 = vld [vmem:[%s1 + $0x8] sm:$0xf]
  %v50 = vld [vmem:[%s1 + $0xc] sm:$0xf]
  %v51 = vld [vmem:[%s1 + $0x10] sm:$0xf]
  %v52 = vld [vmem:[%s1 + $0x14] sm:$0xf]
  %v53 = vld [vmem:[%s1 + $0x18] sm:$0xf]
  %v54 = vld [vmem:[%s1 + $0x1c] sm:$0xf]
  %v55 = vld [vmem:[%s1 + $0x20] sm:$0xf]
  %v56 = vld [vmem:[%s1 + $0x24] sm:$0xf]
  %v57 = vld [vmem:[%s1 + $0x28] sm:$0xf]
  %v58 = vld [vmem:[%s1 + $0x2c] sm:$0xf]
  %v59 = vld [vmem:[%s1 + $0x30] sm:$0xf]
  %v60 = vld [vmem:[%s1 + $0x34] sm:$0xf]
  %v61 = vld [vmem:[%s1 + $0x38] sm:$0xf]
  %v62 = vld [vmem:[%s1 + $0x3c] sm:$0xf]
  %v63 = vld [vmem:[%s1 + $0x40] sm:$0xf]
  %v64 = vld [vmem:[%s1 + $0x44] sm:$0xf]
  %v65 = vld [vmem:[%s1 + $0x48] sm:$0xf]
  %v66 = vld [vmem:[%s1 + $0x4c] sm:$0xf]
  %v67 = vld [vmem:[%s1 + $0x50] sm:$0xf]
  %v68 = vld [vmem:[%s1 + $0x54] sm:$0xf]
  %v69 = vld [vmem:[%s1 + $0x58] sm:$0xf]
  %v70 = vld [vmem:[%s1 + $0x5c] sm:$0xf]
  %v71 = vld [vmem:[%s1 + $0x60] sm:$0xf]
  %v72 = vld [vmem:[%s1 + $0x64] sm:$0xf]
  %v73 = vld [vmem:[%s1 + $0x68] sm:$0xf]
  %v74 = vld [vmem:[%s1 + $0x6c] sm:$0xf]
  %v75 = vld [vmem:[%s1 + $0x70] sm:$0xf]
  %v76 = vld [vmem:[%s1 + $0x74] sm:$0xf]
  %v77 = vld [vmem:[%s1 + $0x78] sm:$0xf]
  %v78 = vld [vmem:[%s1 + $0x7c] sm:$0xf]
  %v79 = vld [vmem:[%s1 + $0x80] sm:$0xf]
  %v80 = vld [vmem:[%s1 + $0x84] sm:$0xf]
  %v81 = vld [vmem:[%s1 + $0x88] sm:$0xf]
  %v82 = vld [vmem:[%s1 + $0x8c] sm:$0xf]
  %v83 = vld [vmem:[%s2] sm:$0x1]
  %v85 = vperm.slane %v83, 0
  %v119 = vunpack.c.l.b16 %v15
  %v120 = vunpack.c.h.b16 %v15
  %v121 = vunpack.c.l.b16 %v16
  %v122 = vunpack.c.l.b16 %v17
  %v123 = vunpack.c.h.b16 %v17
  %v124 = vunpack.c.l.b16 %v18
  %v125 = vunpack.c.l.b16 %v19
  %v126 = vunpack.c.h.b16 %v19
  %v127 = vunpack.c.l.b16 %v20
  %v128 = vunpack.c.l.b16 %v21
  %v129 = vunpack.c.h.b16 %v21
  %v130 = vunpack.c.l.b16 %v22
  %v131 = vunpack.c.l.b16 %v23
  %v132 = vunpack.c.h.b16 %v23
  %v133 = vunpack.c.l.b16 %v24
  %v134 = vunpack.c.l.b16 %v25
  %v135 = vunpack.c.h.b16 %v25
  %v136 = vunpack.c.l.b16 %v26
  %v137 = vunpack.c.l.b16 %v27
  %v138 = vunpack.c.h.b16 %v27
  %v139 = vunpack.c.l.b16 %v28
  %v140 = vunpack.c.l.b16 %v29
  %v141 = vunpack.c.h.b16 %v29
  %v142 = vunpack.c.l.b16 %v30
  %v143 = vunpack.c.l.b16 %v31
  %v144 = vunpack.c.h.b16 %v31
  %v145 = vunpack.c.l.b16 %v32
  %v146 = vunpack.c.l.b16 %v33
  %v147 = vunpack.c.h.b16 %v33
  %v148 = vunpack.c.l.b16 %v34
  %v149 = vunpack.c.l.b16 %v35
  %v150 = vunpack.c.h.b16 %v35
  %v151 = vunpack.c.l.b16 %v36
  %v152 = vunpack.c.l.b16 %v37
  %v153 = vunpack.c.h.b16 %v37
  %v154 = vunpack.c.l.b16 %v38
  %v155 = vunpack.c.l.b16 %v39
  %v156 = vunpack.c.h.b16 %v39
  %v157 = vunpack.c.l.b16 %v40
  %v158 = vunpack.c.l.b16 %v41
  %v159 = vunpack.c.h.b16 %v41
  %v160 = vunpack.c.l.b16 %v42
  %v161 = vunpack.c.l.b16 %v43
  %v162 = vunpack.c.h.b16 %v43
  %v163 = vunpack.c.l.b16 %v44
  %v164 = vunpack.c.l.b16 %v45
  %v165 = vunpack.c.h.b16 %v45
  %v166 = vunpack.c.l.b16 %v46
  %v167 = vpack.c.b16 %v122, %v119
  %v168 = vpack.c.b16 %v123, %v120
  %v169 = vpack.c.b16 %v124, %v121
  %v170 = vpack.c.b16 %v128, %v125
  %v171 = vpack.c.b16 %v129, %v126
  %v172 = vpack.c.b16 %v130, %v127
  %v173 = vpack.c.b16 %v134, %v131
  %v174 = vpack.c.b16 %v135, %v132
  %v175 = vpack.c.b16 %v136, %v133
  %v176 = vpack.c.b16 %v140, %v137
  %v177 = vpack.c.b16 %v141, %v138
  %v178 = vpack.c.b16 %v142, %v139
  %v179 = vpack.c.b16 %v146, %v143
  %v180 = vpack.c.b16 %v147, %v144
  %v181 = vpack.c.b16 %v148, %v145
  %v182 = vpack.c.b16 %v152, %v149
  %v183 = vpack.c.b16 %v153, %v150
  %v184 = vpack.c.b16 %v154, %v151
  %v185 = vpack.c.b16 %v158, %v155
  %v186 = vpack.c.b16 %v159, %v156
  %v187 = vpack.c.b16 %v160, %v157
  %v188 = vpack.c.b16 %v164, %v161
  %v189 = vpack.c.b16 %v165, %v162
  %v190 = vpack.c.b16 %v166, %v163
  %v243 = vunpack.c.l.b16 %v47
  %v244 = vunpack.c.l.b16 %v48
  %v245 = vunpack.c.l.b16 %v49
  %v246 = vunpack.c.l.b16 %v50
  %v247 = vunpack.c.l.b16 %v51
  %v248 = vunpack.c.l.b16 %v52
  %v249 = vunpack.c.l.b16 %v53
  %v250 = vunpack.c.l.b16 %v54
  %v251 = vunpack.c.l.b16 %v55
  %v252 = vunpack.c.l.b16 %v56
  %v253 = vunpack.c.l.b16 %v57
  %v254 = vunpack.c.l.b16 %v58
  %v255 = vunpack.c.l.b16 %v59
  %v256 = vunpack.c.l.b16 %v60
  %v257 = vunpack.c.l.b16 %v61
  %v258 = vunpack.c.l.b16 %v62
  %v259 = vunpack.c.l.b16 %v63
  %v260 = vunpack.c.l.b16 %v64
  %v261 = vunpack.c.l.b16 %v65
  %v262 = vunpack.c.l.b16 %v66
  %v263 = vunpack.c.l.b16 %v67
  %v264 = vunpack.c.l.b16 %v68
  %v265 = vunpack.c.l.b16 %v69
  %v266 = vunpack.c.l.b16 %v70
  %v267 = vunpack.c.l.b16 %v71
  %v268 = vunpack.c.l.b16 %v72
  %v269 = vunpack.c.l.b16 %v73
  %v270 = vunpack.c.l.b16 %v74
  %v271 = vunpack.c.l.b16 %v75
  %v272 = vunpack.c.l.b16 %v76
  %v273 = vunpack.c.l.b16 %v77
  %v274 = vunpack.c.l.b16 %v78
  %v275 = vunpack.c.l.b16 %v79
  %v276 = vunpack.c.l.b16 %v80
  %v277 = vunpack.c.l.b16 %v81
  %v278 = vunpack.c.l.b16 %v82
  %v279 = vpack.c.b16 %v244, %v243
  %v280 = vpack.c.b16 %v246, %v245
  %v281 = vpack.c.b16 %v248, %v247
  %v282 = vpack.c.b16 %v250, %v249
  %v283 = vpack.c.b16 %v252, %v251
  %v284 = vpack.c.b16 %v254, %v253
  %v285 = vpack.c.b16 %v256, %v255
  %v286 = vpack.c.b16 %v258, %v257
  %v287 = vpack.c.b16 %v260, %v259
  %v288 = vpack.c.b16 %v262, %v261
  %v289 = vpack.c.b16 %v264, %v263
  %v290 = vpack.c.b16 %v266, %v265
  %v291 = vpack.c.b16 %v268, %v267
  %v292 = vpack.c.b16 %v270, %v269
  %v293 = vpack.c.b16 %v272, %v271
  %v294 = vpack.c.b16 %v274, %v273
  %v295 = vpack.c.b16 %v276, %v275
  %v296 = vpack.c.b16 %v278, %v277
  %vm315 = vcmask 261120
  %v317 = vsel %vm315, %v169, 0
  %v320 = vsel %vm315, %v172, 0
  %v323 = vsel %vm315, %v175, 0
  %v326 = vsel %vm315, %v178, 0
  %v329 = vsel %vm315, %v181, 0
  %v332 = vsel %vm315, %v184, 0
  %v335 = vsel %vm315, %v187, 0
  %v338 = vsel %vm315, %v190, 0
  %340 = vmatpush.bf16.msra.mxu0 %v286
  %341 = vmatpush.bf16.msra.mxu0 %v285
  %342 = vmatpush.bf16.msra.mxu0 %v284
  %343 = vmatpush.bf16.msra.mxu0 %v283
  %344 = vmatpush.bf16.msra.mxu0 %v282
  %345 = vmatpush.bf16.msra.mxu0 %v281
  %346 = vmatpush.bf16.msra.mxu0 %v280
  %347 = vmatpush.bf16.msra.mxu0 %v279
  %348 = vmatmul.bf16.gmra.mxu0 %v167
  %v349 = vpop.f32.mrf.mxu0
  %v350 = vadd.f32 %v85, %v349
  %v351 = vpop.f32.mrf.mxu0
  %v352 = vadd.f32 %v85, %v351
  %353 = vmatmul.bf16.gmra.mxu0 %v170
  %v354 = vpop.f32.mrf.mxu0
  %v355 = vadd.f32 %v85, %v354
  %v356 = vpop.f32.mrf.mxu0
  %v357 = vadd.f32 %v85, %v356
  %358 = vmatmul.bf16.gmra.mxu0 %v173
  %v359 = vpop.f32.mrf.mxu0
  %v360 = vadd.f32 %v85, %v359
  %v361 = vpop.f32.mrf.mxu0
  %v362 = vadd.f32 %v85, %v361
  %363 = vmatmul.bf16.gmra.mxu0 %v176
  %v364 = vpop.f32.mrf.mxu0
  %v365 = vadd.f32 %v85, %v364
  %v366 = vpop.f32.mrf.mxu0
  %v367 = vadd.f32 %v85, %v366
  %368 = vmatmul.bf16.gmra.mxu0 %v179
  %v369 = vpop.f32.mrf.mxu0
  %v370 = vadd.f32 %v85, %v369
  %v371 = vpop.f32.mrf.mxu0
  %v372 = vadd.f32 %v85, %v371
  %373 = vmatmul.bf16.gmra.mxu0 %v182
  %v374 = vpop.f32.mrf.mxu0
  %v375 = vadd.f32 %v85, %v374
  %v376 = vpop.f32.mrf.mxu0
  %v377 = vadd.f32 %v85, %v376
  %378 = vmatmul.bf16.gmra.mxu0 %v185
  %v379 = vpop.f32.mrf.mxu0
  %v380 = vadd.f32 %v85, %v379
  %v381 = vpop.f32.mrf.mxu0
  %v382 = vadd.f32 %v85, %v381
  %383 = vmatmul.bf16.gmra.mxu0 %v188
  %v384 = vpop.f32.mrf.mxu0
  %v385 = vadd.f32 %v85, %v384
  %v386 = vpop.f32.mrf.mxu0
  %v387 = vadd.f32 %v85, %v386
  %388 = vdwg.mxu0
  %389 = vmatpush.bf16.msra.mxu0 %v294
  %390 = vmatpush.bf16.msra.mxu0 %v293
  %391 = vmatpush.bf16.msra.mxu0 %v292
  %392 = vmatpush.bf16.msra.mxu0 %v291
  %393 = vmatpush.bf16.msra.mxu0 %v290
  %394 = vmatpush.bf16.msra.mxu0 %v289
  %395 = vmatpush.bf16.msra.mxu0 %v288
  %396 = vmatpush.bf16.msra.mxu0 %v287
  %397 = vmatmul.bf16.gmra.mxu0 %v168
  %v398 = vpop.f32.mrf.mxu0
  %v399 = vadd.f32 %v350, %v398
  %v400 = vpop.f32.mrf.mxu0
  %v401 = vadd.f32 %v352, %v400
  %402 = vmatmul.bf16.gmra.mxu0 %v171
  %v403 = vpop.f32.mrf.mxu0
  %v404 = vadd.f32 %v355, %v403
  %v405 = vpop.f32.mrf.mxu0
  %v406 = vadd.f32 %v357, %v405
  %407 = vmatmul.bf16.gmra.mxu0 %v174
  %v408 = vpop.f32.mrf.mxu0
  %v409 = vadd.f32 %v360, %v408
  %v410 = vpop.f32.mrf.mxu0
  %v411 = vadd.f32 %v362, %v410
  %412 = vmatmul.bf16.gmra.mxu0 %v177
  %v413 = vpop.f32.mrf.mxu0
  %v414 = vadd.f32 %v365, %v413
  %v415 = vpop.f32.mrf.mxu0
  %v416 = vadd.f32 %v367, %v415
  %417 = vmatmul.bf16.gmra.mxu0 %v180
  %v418 = vpop.f32.mrf.mxu0
  %v419 = vadd.f32 %v370, %v418
  %v420 = vpop.f32.mrf.mxu0
  %v421 = vadd.f32 %v372, %v420
  %422 = vmatmul.bf16.gmra.mxu0 %v183
  %v423 = vpop.f32.mrf.mxu0
  %v424 = vadd.f32 %v375, %v423
  %v425 = vpop.f32.mrf.mxu0
  %v426 = vadd.f32 %v377, %v425
  %427 = vmatmul.bf16.gmra.mxu0 %v186
  %v428 = vpop.f32.mrf.mxu0
  %v429 = vadd.f32 %v380, %v428
  %v430 = vpop.f32.mrf.mxu0
  %v431 = vadd.f32 %v382, %v430
  %432 = vmatmul.bf16.gmra.mxu0 %v189
  %v433 = vpop.f32.mrf.mxu0
  %v434 = vadd.f32 %v385, %v433
  %v435 = vpop.f32.mrf.mxu0
  %v436 = vadd.f32 %v387, %v435
  %437 = vdwg.mxu0
  %438 = vmatpush.bf16.msra.mxu0 0
  %439 = vmatpush.bf16.msra.mxu0 0
  %440 = vmatpush.bf16.msra.mxu0 0
  %441 = vmatpush.bf16.msra.mxu0 0
  %442 = vmatpush.bf16.msra.mxu0 0
  %443 = vmatpush.bf16.msra.mxu0 0
  %444 = vmatpush.bf16.msra.mxu0 %v296
  %445 = vmatpush.bf16.msra.mxu0 %v295
  %446 = vmatmul.bf16.gmra.mxu0 %v317
  %v447 = vpop.f32.mrf.mxu0
  %v448 = vadd.f32 %v399, %v447
  %v449 = vpop.f32.mrf.mxu0
  %v450 = vadd.f32 %v401, %v449
  %451 = vmatmul.bf16.gmra.mxu0 %v320
  %v452 = vpop.f32.mrf.mxu0
  %v453 = vadd.f32 %v404, %v452
  %v454 = vpop.f32.mrf.mxu0
  %v455 = vadd.f32 %v406, %v454
  %456 = vmatmul.bf16.gmra.mxu0 %v323
  %v457 = vpop.f32.mrf.mxu0
  %v458 = vadd.f32 %v409, %v457
  %v459 = vpop.f32.mrf.mxu0
  %v460 = vadd.f32 %v411, %v459
  %461 = vmatmul.bf16.gmra.mxu0 %v326
  %v462 = vpop.f32.mrf.mxu0
  %v463 = vadd.f32 %v414, %v462
  %v464 = vpop.f32.mrf.mxu0
  %v465 = vadd.f32 %v416, %v464
  %466 = vmatmul.bf16.gmra.mxu0 %v329
  %v467 = vpop.f32.mrf.mxu0
  %v468 = vadd.f32 %v419, %v467
  %v469 = vpop.f32.mrf.mxu0
  %v470 = vadd.f32 %v421, %v469
  %471 = vmatmul.bf16.gmra.mxu0 %v332
  %v472 = vpop.f32.mrf.mxu0
  %v473 = vadd.f32 %v424, %v472
  %v474 = vpop.f32.mrf.mxu0
  %v475 = vadd.f32 %v426, %v474
  %476 = vmatmul.bf16.gmra.mxu0 %v335
  %v477 = vpop.f32.mrf.mxu0
  %v478 = vadd.f32 %v429, %v477
  %v479 = vpop.f32.mrf.mxu0
  %v480 = vadd.f32 %v431, %v479
  %481 = vmatmul.bf16.gmra.mxu0 %v338
  %v482 = vpop.f32.mrf.mxu0
  %v483 = vadd.f32 %v434, %v482
  %v484 = vpop.f32.mrf.mxu0
  %v485 = vadd.f32 %v436, %v484
  %486 = vdwg.mxu0
  %v487 = vmax.f32 %v448, 0.0
  %v488 = vmax.f32 %v450, 0.0
  %v489 = vmax.f32 %v453, 0.0
  %v490 = vmax.f32 %v455, 0.0
  %v491 = vmax.f32 %v458, 0.0
  %v492 = vmax.f32 %v460, 0.0
  %v493 = vmax.f32 %v463, 0.0
  %v494 = vmax.f32 %v465, 0.0
  %v495 = vmax.f32 %v468, 0.0
  %v496 = vmax.f32 %v470, 0.0
  %v497 = vmax.f32 %v473, 0.0
  %v498 = vmax.f32 %v475, 0.0
  %v499 = vmax.f32 %v478, 0.0
  %v500 = vmax.f32 %v480, 0.0
  %v501 = vmax.f32 %v483, 0.0
  %v502 = vmax.f32 %v485, 0.0
  %503 = vst [vmem:[%s3] sm:$0xff] %v487
  %504 = vst [vmem:[%s3 + $0x8] sm:$0xff] %v488
  %505 = vst [vmem:[%s3 + $0x10] sm:$0xff] %v489
  %506 = vst [vmem:[%s3 + $0x18] sm:$0xff] %v490
  %507 = vst [vmem:[%s3 + $0x20] sm:$0xff] %v491
  %508 = vst [vmem:[%s3 + $0x28] sm:$0xff] %v492
  %509 = vst [vmem:[%s3 + $0x30] sm:$0xff] %v493
  %510 = vst [vmem:[%s3 + $0x38] sm:$0xff] %v494
  %511 = vst [vmem:[%s3 + $0x40] sm:$0xff] %v495
  %512 = vst [vmem:[%s3 + $0x48] sm:$0xff] %v496
  %513 = vst [vmem:[%s3 + $0x50] sm:$0xff] %v497
  %514 = vst [vmem:[%s3 + $0x58] sm:$0xff] %v498
  %515 = vst [vmem:[%s3 + $0x60] sm:$0xff] %v499
  %516 = vst [vmem:[%s3 + $0x68] sm:$0xff] %v500
  %517 = vst [vmem:[%s3 + $0x70] sm:$0xff] %v501
  %518 = vst [vmem:[%s3 + $0x78] sm:$0xff] %v502
  // Predicated region
  $region14: #{vae_forward.10} parent=0 // pred_check
    _
  $region15: #{vae_forward.10} parent=0 // pred_check_branch
    %520 = sbr.rel (0) target = $region17
  $region16: #{vae_forward.10} parent=0 // pred_region
    _
  $region17: #{vae_forward.10} parent=0 // pred_fallthru
    _
  // Predicated region
  $region18: #{vae_forward.10} parent=0 // pred_check
    _
  $region19: #{vae_forward.10} parent=0 // pred_check_branch
    %522 = sbr.rel (0) target = $region21
  $region20: #{vae_forward.10} parent=0 // pred_region
    _
  $region21: #{vae_forward.10} parent=0 // pred_fallthru
    _

// kernel: vae_forward.11
$region0: #{vae_forward.11}
  #allocation0 [shape = 'u32[]', space=smem, size = 0x4, offset = 0x4, fixed_abs, tag = 'smem constant byte address 0x4 - core index']
  #allocation1 [shape = 'u32[72,128]{1,0:T(1,128)}', space=vmem, size = 0x9000, scoped, tag = 'internal scratch']
  %s0 = inlined_call_operand.vmem [shape: bf16[32,576], index: 0, kind: input, shape index: {}]
  %s1 = inlined_call_operand.vmem [shape: bf16[576,128], index: 1, kind: input, shape index: {}]
  %s2 = inlined_call_operand.vmem [shape: f32[1,128], index: 2, kind: input, shape index: {}]
  %s3 = inlined_call_operand.vmem [shape: f32[32,128], index: 3, kind: output, shape index: {}]
  %s4 = sld [smem:[#allocation0]]
  $region22: #{vae_forward.11} parent=0
    _
  %s6 = ssub.s32 1, %s4
  %s7 = scalar_select 0, %s6, %s4
  // Predicated region
  $region2: #{vae_forward.11} parent=0 // pred_check
    _
  $region3: #{vae_forward.11} parent=0 // pred_check_branch
    %9 = sbr.rel (0) target = $region5
  $region4: #{vae_forward.11} parent=0 // pred_region
    _
  $region5: #{vae_forward.11} parent=0 // pred_fallthru
    _
  // Predicated region
  $region6: #{vae_forward.11} parent=0 // pred_check
    _
  $region7: #{vae_forward.11} parent=0 // pred_check_branch
    %11 = sbr.rel (0) target = $region9
  $region8: #{vae_forward.11} parent=0 // pred_region
    _
  $region9: #{vae_forward.11} parent=0 // pred_fallthru
    _
  // Predicated region
  $region10: #{vae_forward.11} parent=0 // pred_check
    _
  $region11: #{vae_forward.11} parent=0 // pred_check_branch
    %13 = sbr.rel (0) target = $region13
  $region12: #{vae_forward.11} parent=0 // pred_region
    _
  $region13: #{vae_forward.11} parent=0 // pred_fallthru
    _
  %v15 = vld [vmem:[%s0] sm:$0xff]
  %v16 = vld [vmem:[%s0 + $0x8] sm:$0xff]
  %v17 = vld [vmem:[%s0 + $0x10] sm:$0xf]
  %v18 = vld [vmem:[%s0 + $0x14] sm:$0xff]
  %v19 = vld [vmem:[%s0 + $0x1c] sm:$0xff]
  %v20 = vld [vmem:[%s0 + $0x24] sm:$0xf]
  %v21 = vld [vmem:[%s0 + $0x28] sm:$0xff]
  %v22 = vld [vmem:[%s0 + $0x30] sm:$0xff]
  %v23 = vld [vmem:[%s0 + $0x38] sm:$0xf]
  %v24 = vld [vmem:[%s0 + $0x3c] sm:$0xff]
  %v25 = vld [vmem:[%s0 + $0x44] sm:$0xff]
  %v26 = vld [vmem:[%s0 + $0x4c] sm:$0xf]
  %v27 = vld [vmem:[%s1] sm:$0xf]
  %v28 = vld [vmem:[%s1 + $0x4] sm:$0xf]
  %v29 = vld [vmem:[%s1 + $0x8] sm:$0xf]
  %v30 = vld [vmem:[%s1 + $0xc] sm:$0xf]
  %v31 = vld [vmem:[%s1 + $0x10] sm:$0xf]
  %v32 = vld [vmem:[%s1 + $0x14] sm:$0xf]
  %v33 = vld [vmem:[%s1 + $0x18] sm:$0xf]
  %v34 = vld [vmem:[%s1 + $0x1c] sm:$0xf]
  %v35 = vld [vmem:[%s1 + $0x20] sm:$0xf]
  %v36 = vld [vmem:[%s1 + $0x24] sm:$0xf]
  %v37 = vld [vmem:[%s1 + $0x28] sm:$0xf]
  %v38 = vld [vmem:[%s1 + $0x2c] sm:$0xf]
  %v39 = vld [vmem:[%s1 + $0x30] sm:$0xf]
  %v40 = vld [vmem:[%s1 + $0x34] sm:$0xf]
  %v41 = vld [vmem:[%s1 + $0x38] sm:$0xf]
  %v42 = vld [vmem:[%s1 + $0x3c] sm:$0xf]
  %v43 = vld [vmem:[%s1 + $0x40] sm:$0xf]
  %v44 = vld [vmem:[%s1 + $0x44] sm:$0xf]
  %v45 = vld [vmem:[%s1 + $0x48] sm:$0xf]
  %v46 = vld [vmem:[%s1 + $0x4c] sm:$0xf]
  %v47 = vld [vmem:[%s1 + $0x50] sm:$0xf]
  %v48 = vld [vmem:[%s1 + $0x54] sm:$0xf]
  %v49 = vld [vmem:[%s1 + $0x58] sm:$0xf]
  %v50 = vld [vmem:[%s1 + $0x5c] sm:$0xf]
  %v51 = vld [vmem:[%s1 + $0x60] sm:$0xf]
  %v52 = vld [vmem:[%s1 + $0x64] sm:$0xf]
  %v53 = vld [vmem:[%s1 + $0x68] sm:$0xf]
  %v54 = vld [vmem:[%s1 + $0x6c] sm:$0xf]
  %v55 = vld [vmem:[%s1 + $0x70] sm:$0xf]
  %v56 = vld [vmem:[%s1 + $0x74] sm:$0xf]
  %v57 = vld [vmem:[%s1 + $0x78] sm:$0xf]
  %v58 = vld [vmem:[%s1 + $0x7c] sm:$0xf]
  %v59 = vld [vmem:[%s1 + $0x80] sm:$0xf]
  %v60 = vld [vmem:[%s1 + $0x84] sm:$0xf]
  %v61 = vld [vmem:[%s1 + $0x88] sm:$0xf]
  %v62 = vld [vmem:[%s1 + $0x8c] sm:$0xf]
  %v63 = vld [vmem:[%s1 + $0x90] sm:$0xf]
  %v64 = vld [vmem:[%s1 + $0x94] sm:$0xf]
  %v65 = vld [vmem:[%s1 + $0x98] sm:$0xf]
  %v66 = vld [vmem:[%s1 + $0x9c] sm:$0xf]
  %v67 = vld [vmem:[%s1 + $0xa0] sm:$0xf]
  %v68 = vld [vmem:[%s1 + $0xa4] sm:$0xf]
  %v69 = vld [vmem:[%s1 + $0xa8] sm:$0xf]
  %v70 = vld [vmem:[%s1 + $0xac] sm:$0xf]
  %v71 = vld [vmem:[%s1 + $0xb0] sm:$0xf]
  %v72 = vld [vmem:[%s1 + $0xb4] sm:$0xf]
  %v73 = vld [vmem:[%s1 + $0xb8] sm:$0xf]
  %v74 = vld [vmem:[%s1 + $0xbc] sm:$0xf]
  %v75 = vld [vmem:[%s1 + $0xc0] sm:$0xf]
  %v76 = vld [vmem:[%s1 + $0xc4] sm:$0xf]
  %v77 = vld [vmem:[%s1 + $0xc8] sm:$0xf]
  %v78 = vld [vmem:[%s1 + $0xcc] sm:$0xf]
  %v79 = vld [vmem:[%s1 + $0xd0] sm:$0xf]
  %v80 = vld [vmem:[%s1 + $0xd4] sm:$0xf]
  %v81 = vld [vmem:[%s1 + $0xd8] sm:$0xf]
  %v82 = vld [vmem:[%s1 + $0xdc] sm:$0xf]
  %v83 = vld [vmem:[%s1 + $0xe0] sm:$0xf]
  %v84 = vld [vmem:[%s1 + $0xe4] sm:$0xf]
  %v85 = vld [vmem:[%s1 + $0xe8] sm:$0xf]
  %v86 = vld [vmem:[%s1 + $0xec] sm:$0xf]
  %v87 = vld [vmem:[%s1 + $0xf0] sm:$0xf]
  %v88 = vld [vmem:[%s1 + $0xf4] sm:$0xf]
  %v89 = vld [vmem:[%s1 + $0xf8] sm:$0xf]
  %v90 = vld [vmem:[%s1 + $0xfc] sm:$0xf]
  %v91 = vld [vmem:[%s1 + $0x100] sm:$0xf]
  %v92 = vld [vmem:[%s1 + $0x104] sm:$0xf]
  %v93 = vld [vmem:[%s1 + $0x108] sm:$0xf]
  %v94 = vld [vmem:[%s1 + $0x10c] sm:$0xf]
  %v95 = vld [vmem:[%s1 + $0x110] sm:$0xf]
  %v96 = vld [vmem:[%s1 + $0x114] sm:$0xf]
  %v97 = vld [vmem:[%s1 + $0x118] sm:$0xf]
  %v98 = vld [vmem:[%s1 + $0x11c] sm:$0xf]
  %v99 = vld [vmem:[%s2] sm:$0x1]
  %v101 = vperm.slane %v99, 0
  %v115 = vunpack.c.l.b16 %v15
  %v116 = vunpack.c.h.b16 %v15
  %v117 = vunpack.c.l.b16 %v16
  %v118 = vunpack.c.h.b16 %v16
  %v119 = vunpack.c.l.b16 %v17
  %v120 = vunpack.c.l.b16 %v18
  %v121 = vunpack.c.h.b16 %v18
  %v122 = vunpack.c.l.b16 %v19
  %v123 = vunpack.c.h.b16 %v19
  %v124 = vunpack.c.l.b16 %v20
  %v125 = vunpack.c.l.b16 %v21
  %v126 = vunpack.c.h.b16 %v21
  %v127 = vunpack.c.l.b16 %v22
  %v128 = vunpack.c.h.b16 %v22
  %v129 = vunpack.c.l.b16 %v23
  %v130 = vunpack.c.l.b16 %v24
  %v131 = vunpack.c.h.b16 %v24
  %v132 = vunpack.c.l.b16 %v25
  %v133 = vunpack.c.h.b16 %v25
  %v134 = vunpack.c.l.b16 %v26
  %v135 = vpack.c.b16 %v120, %v115
  %v136 = vpack.c.b16 %v121, %v116
  %v137 = vpack.c.b16 %v122, %v117
  %v138 = vpack.c.b16 %v123, %v118
  %v139 = vpack.c.b16 %v124, %v119
  %v140 = vpack.c.b16 %v130, %v125
  %v141 = vpack.c.b16 %v131, %v126
  %v142 = vpack.c.b16 %v132, %v127
  %v143 = vpack.c.b16 %v133, %v128
  %v144 = vpack.c.b16 %v134, %v129
  %v225 = vunpack.c.l.b16 %v27
  %v226 = vunpack.c.l.b16 %v28
  %v227 = vunpack.c.l.b16 %v29
  %v228 = vunpack.c.l.b16 %v30
  %v229 = vunpack.c.l.b16 %v31
  %v230 = vunpack.c.l.b16 %v32
  %v231 = vunpack.c.l.b16 %v33
  %v232 = vunpack.c.l.b16 %v34
  %v233 = vunpack.c.l.b16 %v35
  %v234 = vunpack.c.l.b16 %v36
  %v235 = vunpack.c.l.b16 %v37
  %v236 = vunpack.c.l.b16 %v38
  %v237 = vunpack.c.l.b16 %v39
  %v238 = vunpack.c.l.b16 %v40
  %v239 = vunpack.c.l.b16 %v41
  %v240 = vunpack.c.l.b16 %v42
  %v241 = vunpack.c.l.b16 %v43
  %v242 = vunpack.c.l.b16 %v44
  %v243 = vunpack.c.l.b16 %v45
  %v244 = vunpack.c.l.b16 %v46
  %v245 = vunpack.c.l.b16 %v47
  %v246 = vunpack.c.l.b16 %v48
  %v247 = vunpack.c.l.b16 %v49
  %v248 = vunpack.c.l.b16 %v50
  %v249 = vunpack.c.l.b16 %v51
  %v250 = vunpack.c.l.b16 %v52
  %v251 = vunpack.c.l.b16 %v53
  %v252 = vunpack.c.l.b16 %v54
  %v253 = vunpack.c.l.b16 %v55
  %v254 = vunpack.c.l.b16 %v56
  %v255 = vunpack.c.l.b16 %v57
  %v256 = vunpack.c.l.b16 %v58
  %v257 = vunpack.c.l.b16 %v59
  %v258 = vunpack.c.l.b16 %v60
  %v259 = vunpack.c.l.b16 %v61
  %v260 = vunpack.c.l.b16 %v62
  %v261 = vunpack.c.l.b16 %v63
  %v262 = vunpack.c.l.b16 %v64
  %v263 = vunpack.c.l.b16 %v65
  %v264 = vunpack.c.l.b16 %v66
  %v265 = vunpack.c.l.b16 %v67
  %v266 = vunpack.c.l.b16 %v68
  %v267 = vunpack.c.l.b16 %v69
  %v268 = vunpack.c.l.b16 %v70
  %v269 = vunpack.c.l.b16 %v71
  %v270 = vunpack.c.l.b16 %v72
  %v271 = vunpack.c.l.b16 %v73
  %v272 = vunpack.c.l.b16 %v74
  %v273 = vunpack.c.l.b16 %v75
  %v274 = vunpack.c.l.b16 %v76
  %v275 = vunpack.c.l.b16 %v77
  %v276 = vunpack.c.l.b16 %v78
  %v277 = vunpack.c.l.b16 %v79
  %v278 = vunpack.c.l.b16 %v80
  %v279 = vunpack.c.l.b16 %v81
  %v280 = vunpack.c.l.b16 %v82
  %v281 = vunpack.c.l.b16 %v83
  %v282 = vunpack.c.l.b16 %v84
  %v283 = vunpack.c.l.b16 %v85
  %v284 = vunpack.c.l.b16 %v86
  %v285 = vunpack.c.l.b16 %v87
  %v286 = vunpack.c.l.b16 %v88
  %v287 = vunpack.c.l.b16 %v89
  %v288 = vunpack.c.l.b16 %v90
  %v289 = vunpack.c.l.b16 %v91
  %v290 = vunpack.c.l.b16 %v92
  %v291 = vunpack.c.l.b16 %v93
  %v292 = vunpack.c.l.b16 %v94
  %v293 = vunpack.c.l.b16 %v95
  %v294 = vunpack.c.l.b16 %v96
  %v295 = vunpack.c.l.b16 %v97
  %v296 = vunpack.c.l.b16 %v98
  %v297 = vpack.c.b16 %v226, %v225
  %v298 = vpack.c.b16 %v228, %v227
  %v299 = vpack.c.b16 %v230, %v229
  %v300 = vpack.c.b16 %v232, %v231
  %v301 = vpack.c.b16 %v234, %v233
  %v302 = vpack.c.b16 %v236, %v235
  %v303 = vpack.c.b16 %v238, %v237
  %v304 = vpack.c.b16 %v240, %v239
  %v305 = vpack.c.b16 %v242, %v241
  %v306 = vpack.c.b16 %v244, %v243
  %v307 = vpack.c.b16 %v246, %v245
  %v308 = vpack.c.b16 %v248, %v247
  %v309 = vpack.c.b16 %v250, %v249
  %v310 = vpack.c.b16 %v252, %v251
  %v311 = vpack.c.b16 %v254, %v253
  %v312 = vpack.c.b16 %v256, %v255
  %v313 = vpack.c.b16 %v258, %v257
  %v314 = vpack.c.b16 %v260, %v259
  %v315 = vpack.c.b16 %v262, %v261
  %v316 = vpack.c.b16 %v264, %v263
  %v317 = vpack.c.b16 %v266, %v265
  %v318 = vpack.c.b16 %v268, %v267
  %v319 = vpack.c.b16 %v270, %v269
  %v320 = vpack.c.b16 %v272, %v271
  %v321 = vpack.c.b16 %v274, %v273
  %v322 = vpack.c.b16 %v276, %v275
  %v323 = vpack.c.b16 %v278, %v277
  %v324 = vpack.c.b16 %v280, %v279
  %v325 = vpack.c.b16 %v282, %v281
  %v326 = vpack.c.b16 %v284, %v283
  %v327 = vpack.c.b16 %v286, %v285
  %v328 = vpack.c.b16 %v288, %v287
  %v329 = vpack.c.b16 %v290, %v289
  %v330 = vpack.c.b16 %v292, %v291
  %v331 = vpack.c.b16 %v294, %v293
  %v332 = vpack.c.b16 %v296, %v295
  %vm369 = vcmask 523264
  %v371 = vsel %vm369, %v139, 0
  %v374 = vsel %vm369, %v144, 0
  %376 = vmatpush.bf16.msra.mxu0 %v304
  %377 = vmatpush.bf16.msra.mxu0 %v303
  %378 = vmatpush.bf16.msra.mxu0 %v302
  %379 = vmatpush.bf16.msra.mxu0 %v301
  %380 = vmatpush.bf16.msra.mxu0 %v300
  %381 = vmatpush.bf16.msra.mxu0 %v299
  %382 = vmatpush.bf16.msra.mxu0 %v298
  %383 = vmatpush.bf16.msra.mxu0 %v297
  %384 = vmatmul.bf16.gmra.mxu0 %v135
  %v385 = vpop.f32.mrf.mxu0
  %v386 = vadd.f32 %v101, %v385
  %v387 = vpop.f32.mrf.mxu0
  %v388 = vadd.f32 %v101, %v387
  %389 = vmatmul.bf16.gmra.mxu0 %v140
  %v390 = vpop.f32.mrf.mxu0
  %v391 = vadd.f32 %v101, %v390
  %v392 = vpop.f32.mrf.mxu0
  %v393 = vadd.f32 %v101, %v392
  %394 = vdwg.mxu0
  %395 = vmatpush.bf16.msra.mxu0 %v312
  %396 = vmatpush.bf16.msra.mxu0 %v311
  %397 = vmatpush.bf16.msra.mxu0 %v310
  %398 = vmatpush.bf16.msra.mxu0 %v309
  %399 = vmatpush.bf16.msra.mxu0 %v308
  %400 = vmatpush.bf16.msra.mxu0 %v307
  %401 = vmatpush.bf16.msra.mxu0 %v306
  %402 = vmatpush.bf16.msra.mxu0 %v305
  %403 = vmatmul.bf16.gmra.mxu0 %v136
  %v404 = vpop.f32.mrf.mxu0
  %v405 = vadd.f32 %v386, %v404
  %v406 = vpop.f32.mrf.mxu0
  %v407 = vadd.f32 %v388, %v406
  %408 = vmatmul.bf16.gmra.mxu0 %v141
  %v409 = vpop.f32.mrf.mxu0
  %v410 = vadd.f32 %v391, %v409
  %v411 = vpop.f32.mrf.mxu0
  %v412 = vadd.f32 %v393, %v411
  %413 = vdwg.mxu0
  %414 = vmatpush.bf16.msra.mxu0 %v320
  %415 = vmatpush.bf16.msra.mxu0 %v319
  %416 = vmatpush.bf16.msra.mxu0 %v318
  %417 = vmatpush.bf16.msra.mxu0 %v317
  %418 = vmatpush.bf16.msra.mxu0 %v316
  %419 = vmatpush.bf16.msra.mxu0 %v315
  %420 = vmatpush.bf16.msra.mxu0 %v314
  %421 = vmatpush.bf16.msra.mxu0 %v313
  %422 = vmatmul.bf16.gmra.mxu0 %v137
  %v423 = vpop.f32.mrf.mxu0
  %v424 = vadd.f32 %v405, %v423
  %v425 = vpop.f32.mrf.mxu0
  %v426 = vadd.f32 %v407, %v425
  %427 = vmatmul.bf16.gmra.mxu0 %v142
  %v428 = vpop.f32.mrf.mxu0
  %v429 = vadd.f32 %v410, %v428
  %v430 = vpop.f32.mrf.mxu0
  %v431 = vadd.f32 %v412, %v430
  %432 = vdwg.mxu0
  %433 = vmatpush.bf16.msra.mxu0 %v328
  %434 = vmatpush.bf16.msra.mxu0 %v327
  %435 = vmatpush.bf16.msra.mxu0 %v326
  %436 = vmatpush.bf16.msra.mxu0 %v325
  %437 = vmatpush.bf16.msra.mxu0 %v324
  %438 = vmatpush.bf16.msra.mxu0 %v323
  %439 = vmatpush.bf16.msra.mxu0 %v322
  %440 = vmatpush.bf16.msra.mxu0 %v321
  %441 = vmatmul.bf16.gmra.mxu0 %v138
  %v442 = vpop.f32.mrf.mxu0
  %v443 = vadd.f32 %v424, %v442
  %v444 = vpop.f32.mrf.mxu0
  %v445 = vadd.f32 %v426, %v444
  %446 = vmatmul.bf16.gmra.mxu0 %v143
  %v447 = vpop.f32.mrf.mxu0
  %v448 = vadd.f32 %v429, %v447
  %v449 = vpop.f32.mrf.mxu0
  %v450 = vadd.f32 %v431, %v449
  %451 = vdwg.mxu0
  %452 = vmatpush.bf16.msra.mxu0 0
  %453 = vmatpush.bf16.msra.mxu0 0
  %454 = vmatpush.bf16.msra.mxu0 0
  %455 = vmatpush.bf16.msra.mxu0 0
  %456 = vmatpush.bf16.msra.mxu0 %v332
  %457 = vmatpush.bf16.msra.mxu0 %v331
  %458 = vmatpush.bf16.msra.mxu0 %v330
  %459 = vmatpush.bf16.msra.mxu0 %v329
  %460 = vmatmul.bf16.gmra.mxu0 %v371
  %v461 = vpop.f32.mrf.mxu0
  %v462 = vadd.f32 %v443, %v461
  %v463 = vpop.f32.mrf.mxu0
  %v464 = vadd.f32 %v445, %v463
  %465 = vmatmul.bf16.gmra.mxu0 %v374
  %v466 = vpop.f32.mrf.mxu0
  %v467 = vadd.f32 %v448, %v466
  %v468 = vpop.f32.mrf.mxu0
  %v469 = vadd.f32 %v450, %v468
  %470 = vdwg.mxu0
  %v471 = vmax.f32 %v462, 0.0
  %v472 = vmax.f32 %v464, 0.0
  %v473 = vmax.f32 %v467, 0.0
  %v474 = vmax.f32 %v469, 0.0
  %475 = vst [vmem:[%s3] sm:$0xff] %v471
  %476 = vst [vmem:[%s3 + $0x8] sm:$0xff] %v472
  %477 = vst [vmem:[%s3 + $0x10] sm:$0xff] %v473
  %478 = vst [vmem:[%s3 + $0x18] sm:$0xff] %v474
  // Predicated region
  $region14: #{vae_forward.11} parent=0 // pred_check
    _
  $region15: #{vae_forward.11} parent=0 // pred_check_branch
    %480 = sbr.rel (0) target = $region17
  $region16: #{vae_forward.11} parent=0 // pred_region
    _
  $region17: #{vae_forward.11} parent=0 // pred_fallthru
    _
  // Predicated region
  $region18: #{vae_forward.11} parent=0 // pred_check
    _
  $region19: #{vae_forward.11} parent=0 // pred_check_branch
    %482 = sbr.rel (0) target = $region21
  $region20: #{vae_forward.11} parent=0 // pred_region
    _
  $region21: #{vae_forward.11} parent=0 // pred_fallthru
    _

// kernel: vae_forward.13
$region0: #{vae_forward.13}
  #allocation0 [shape = 'u32[]', space=smem, size = 0x4, offset = 0x4, fixed_abs, tag = 'smem constant byte address 0x4 - core index']
  #allocation1 [shape = 'u32[72,128]{1,0:T(1,128)}', space=vmem, size = 0x9000, scoped, tag = 'internal scratch']
  %s0 = inlined_call_operand.vmem [shape: bf16[16,32], index: 0, kind: input, shape index: {}]
  %s1 = inlined_call_operand.vmem [shape: bf16[32,2048], index: 1, kind: input, shape index: {}]
  %s2 = inlined_call_operand.vmem [shape: f32[1,2048], index: 2, kind: input, shape index: {}]
  %s3 = inlined_call_operand.vmem [shape: f32[16,2048], index: 3, kind: output, shape index: {}]
  %s4 = sld [smem:[#allocation0]]
  $region22: #{vae_forward.13} parent=0
    _
  %s6 = ssub.s32 1, %s4
  %s7 = scalar_select 0, %s6, %s4
  // Predicated region
  $region2: #{vae_forward.13} parent=0 // pred_check
    _
  $region3: #{vae_forward.13} parent=0 // pred_check_branch
    %9 = sbr.rel (0) target = $region5
  $region4: #{vae_forward.13} parent=0 // pred_region
    _
  $region5: #{vae_forward.13} parent=0 // pred_fallthru
    _
  // Predicated region
  $region6: #{vae_forward.13} parent=0 // pred_check
    _
  $region7: #{vae_forward.13} parent=0 // pred_check_branch
    %11 = sbr.rel (0) target = $region9
  $region8: #{vae_forward.13} parent=0 // pred_region
    _
  $region9: #{vae_forward.13} parent=0 // pred_fallthru
    _
  // Predicated region
  $region10: #{vae_forward.13} parent=0 // pred_check
    _
  $region11: #{vae_forward.13} parent=0 // pred_check_branch
    %13 = sbr.rel (0) target = $region13
  $region12: #{vae_forward.13} parent=0 // pred_region
    _
  $region13: #{vae_forward.13} parent=0 // pred_fallthru
    _
  %v15 = vld [vmem:[%s0] sm:$0xf]
  %v16 = vld [vmem:[%s0 + $0x4] sm:$0xf]
  %v17 = vld [vmem:[%s1] sm:$0xff]
  %v18 = vld [vmem:[%s1 + $0x8] sm:$0xff]
  %v19 = vld [vmem:[%s1 + $0x10] sm:$0xff]
  %v20 = vld [vmem:[%s1 + $0x18] sm:$0xff]
  %v21 = vld [vmem:[%s1 + $0x20] sm:$0xff]
  %v22 = vld [vmem:[%s1 + $0x28] sm:$0xff]
  %v23 = vld [vmem:[%s1 + $0x30] sm:$0xff]
  %v24 = vld [vmem:[%s1 + $0x38] sm:$0xff]
  %v25 = vld [vmem:[%s1 + $0x40] sm:$0xff]
  %v26 = vld [vmem:[%s1 + $0x48] sm:$0xff]
  %v27 = vld [vmem:[%s1 + $0x50] sm:$0xff]
  %v28 = vld [vmem:[%s1 + $0x58] sm:$0xff]
  %v29 = vld [vmem:[%s1 + $0x60] sm:$0xff]
  %v30 = vld [vmem:[%s1 + $0x68] sm:$0xff]
  %v31 = vld [vmem:[%s1 + $0x70] sm:$0xff]
  %v32 = vld [vmem:[%s1 + $0x78] sm:$0xff]
  %v33 = vld [vmem:[%s1 + $0x80] sm:$0xff]
  %v34 = vld [vmem:[%s1 + $0x88] sm:$0xff]
  %v35 = vld [vmem:[%s1 + $0x90] sm:$0xff]
  %v36 = vld [vmem:[%s1 + $0x98] sm:$0xff]
  %v37 = vld [vmem:[%s1 + $0xa0] sm:$0xff]
  %v38 = vld [vmem:[%s1 + $0xa8] sm:$0xff]
  %v39 = vld [vmem:[%s1 + $0xb0] sm:$0xff]
  %v40 = vld [vmem:[%s1 + $0xb8] sm:$0xff]
  %v41 = vld [vmem:[%s1 + $0xc0] sm:$0xff]
  %v42 = vld [vmem:[%s1 + $0xc8] sm:$0xff]
  %v43 = vld [vmem:[%s1 + $0xd0] sm:$0xff]
  %v44 = vld [vmem:[%s1 + $0xd8] sm:$0xff]
  %v45 = vld [vmem:[%s1 + $0xe0] sm:$0xff]
  %v46 = vld [vmem:[%s1 + $0xe8] sm:$0xff]
  %v47 = vld [vmem:[%s1 + $0xf0] sm:$0xff]
  %v48 = vld [vmem:[%s1 + $0xf8] sm:$0xff]
  %v49 = vld [vmem:[%s2] sm:$0xff]
  %v50 = vld [vmem:[%s2 + $0x8] sm:$0xff]
  %v53 = vperm.slane %v49, 0
  %v54 = vperm.slane %v49, 1
  %v55 = vperm.slane %v49, 2
  %v56 = vperm.slane %v49, 3
  %v57 = vperm.slane %v49, 4
  %v58 = vperm.slane %v49, 5
  %v59 = vperm.slane %v49, 6
  %v60 = vperm.slane %v49, 7
  %v61 = vperm.slane %v50, 0
  %v62 = vperm.slane %v50, 1
  %v63 = vperm.slane %v50, 2
  %v64 = vperm.slane %v50, 3
  %v65 = vperm.slane %v50, 4
  %v66 = vperm.slane %v50, 5
  %v67 = vperm.slane %v50, 6
  %v68 = vperm.slane %v50, 7
  %v87 = vunpack.c.l.b16 %v15
  %v88 = vunpack.c.l.b16 %v16
  %v89 = vpack.c.b16 %v88, %v87
  %v122 = vunpack.c.l.b16 %v17
  %v123 = vunpack.c.h.b16 %v17
  %v124 = vunpack.c.l.b16 %v18
  %v125 = vunpack.c.h.b16 %v18
  %v126 = vunpack.c.l.b16 %v19
  %v127 = vunpack.c.h.b16 %v19
  %v128 = vunpack.c.l.b16 %v20
  %v129 = vunpack.c.h.b16 %v20
  %v130 = vunpack.c.l.b16 %v21
  %v131 = vunpack.c.h.b16 %v21
  %v132 = vunpack.c.l.b16 %v22
  %v133 = vunpack.c.h.b16 %v22
  %v134 = vunpack.c.l.b16 %v23
  %v135 = vunpack.c.h.b16 %v23
  %v136 = vunpack.c.l.b16 %v24
  %v137 = vunpack.c.h.b16 %v24
  %v138 = vunpack.c.l.b16 %v25
  %v139 = vunpack.c.h.b16 %v25
  %v140 = vunpack.c.l.b16 %v26
  %v141 = vunpack.c.h.b16 %v26
  %v142 = vunpack.c.l.b16 %v27
  %v143 = vunpack.c.h.b16 %v27
  %v144 = vunpack.c.l.b16 %v28
  %v145 = vunpack.c.h.b16 %v28
  %v146 = vunpack.c.l.b16 %v29
  %v147 = vunpack.c.h.b16 %v29
  %v148 = vunpack.c.l.b16 %v30
  %v149 = vunpack.c.h.b16 %v30
  %v150 = vunpack.c.l.b16 %v31
  %v151 = vunpack.c.h.b16 %v31
  %v152 = vunpack.c.l.b16 %v32
  %v153 = vunpack.c.h.b16 %v32
  %v154 = vunpack.c.l.b16 %v33
  %v155 = vunpack.c.h.b16 %v33
  %v156 = vunpack.c.l.b16 %v34
  %v157 = vunpack.c.h.b16 %v34
  %v158 = vunpack.c.l.b16 %v35
  %v159 = vunpack.c.h.b16 %v35
  %v160 = vunpack.c.l.b16 %v36
  %v161 = vunpack.c.h.b16 %v36
  %v162 = vunpack.c.l.b16 %v37
  %v163 = vunpack.c.h.b16 %v37
  %v164 = vunpack.c.l.b16 %v38
  %v165 = vunpack.c.h.b16 %v38
  %v166 = vunpack.c.l.b16 %v39
  %v167 = vunpack.c.h.b16 %v39
  %v168 = vunpack.c.l.b16 %v40
  %v169 = vunpack.c.h.b16 %v40
  %v170 = vunpack.c.l.b16 %v41
  %v171 = vunpack.c.h.b16 %v41
  %v172 = vunpack.c.l.b16 %v42
  %v173 = vunpack.c.h.b16 %v42
  %v174 = vunpack.c.l.b16 %v43
  %v175 = vunpack.c.h.b16 %v43
  %v176 = vunpack.c.l.b16 %v44
  %v177 = vunpack.c.h.b16 %v44
  %v178 = vunpack.c.l.b16 %v45
  %v179 = vunpack.c.h.b16 %v45
  %v180 = vunpack.c.l.b16 %v46
  %v181 = vunpack.c.h.b16 %v46
  %v182 = vunpack.c.l.b16 %v47
  %v183 = vunpack.c.h.b16 %v47
  %v184 = vunpack.c.l.b16 %v48
  %v185 = vunpack.c.h.b16 %v48
  %v186 = vpack.c.b16 %v138, %v122
  %v187 = vpack.c.b16 %v139, %v123
  %v188 = vpack.c.b16 %v140, %v124
  %v189 = vpack.c.b16 %v141, %v125
  %v190 = vpack.c.b16 %v142, %v126
  %v191 = vpack.c.b16 %v143, %v127
  %v192 = vpack.c.b16 %v144, %v128
  %v193 = vpack.c.b16 %v145, %v129
  %v194 = vpack.c.b16 %v146, %v130
  %v195 = vpack.c.b16 %v147, %v131
  %v196 = vpack.c.b16 %v148, %v132
  %v197 = vpack.c.b16 %v149, %v133
  %v198 = vpack.c.b16 %v150, %v134
  %v199 = vpack.c.b16 %v151, %v135
  %v200 = vpack.c.b16 %v152, %v136
  %v201 = vpack.c.b16 %v153, %v137
  %v202 = vpack.c.b16 %v170, %v154
  %v203 = vpack.c.b16 %v171, %v155
  %v204 = vpack.c.b16 %v172, %v156
  %v205 = vpack.c.b16 %v173, %v157
  %v206 = vpack.c.b16 %v174, %v158
  %v207 = vpack.c.b16 %v175, %v159
  %v208 = vpack.c.b16 %v176, %v160
  %v209 = vpack.c.b16 %v177, %v161
  %v210 = vpack.c.b16 %v178, %v162
  %v211 = vpack.c.b16 %v179, %v163
  %v212 = vpack.c.b16 %v180, %v164
  %v213 = vpack.c.b16 %v181, %v165
  %v214 = vpack.c.b16 %v182, %v166
  %v215 = vpack.c.b16 %v183, %v167
  %v216 = vpack.c.b16 %v184, %v168
  %v217 = vpack.c.b16 %v185, %v169
  %vm250 = vcmask 261120
  %v252 = vsel %vm250, %v89, 0
  %254 = vmatpush.bf16.msra.mxu0 0
  %255 = vmatpush.bf16.msra.mxu0 0
  %256 = vmatpush.bf16.msra.mxu0 0
  %257 = vmatpush.bf16.msra.mxu0 0
  %258 = vmatpush.bf16.msra.mxu0 0
  %259 = vmatpush.bf16.msra.mxu0 0
  %260 = vmatpush.bf16.msra.mxu0 %v202
  %261 = vmatpush.bf16.msra.mxu0 %v186
  %262 = vmatmul.bf16.gmra.mxu0 %v252
  %v263 = vpop.f32.mrf.mxu0
  %v264 = vadd.f32 %v53, %v263
  %v265 = vpop.f32.mrf.mxu0
  %v266 = vadd.f32 %v53, %v265
  %267 = vdwg.mxu0
  %268 = vmatpush.bf16.msra.mxu0 0
  %269 = vmatpush.bf16.msra.mxu0 0
  %270 = vmatpush.bf16.msra.mxu0 0
  %271 = vmatpush.bf16.msra.mxu0 0
  %272 = vmatpush.bf16.msra.mxu0 0
  %273 = vmatpush.bf16.msra.mxu0 0
  %274 = vmatpush.bf16.msra.mxu0 %v203
  %275 = vmatpush.bf16.msra.mxu0 %v187
  %276 = vmatmul.bf16.gmra.mxu0 %v252
  %v277 = vpop.f32.mrf.mxu0
  %v278 = vadd.f32 %v54, %v277
  %v279 = vpop.f32.mrf.mxu0
  %v280 = vadd.f32 %v54, %v279
  %281 = vdwg.mxu0
  %282 = vmatpush.bf16.msra.mxu0 0
  %283 = vmatpush.bf16.msra.mxu0 0
  %284 = vmatpush.bf16.msra.mxu0 0
  %285 = vmatpush.bf16.msra.mxu0 0
  %286 = vmatpush.bf16.msra.mxu0 0
  %287 = vmatpush.bf16.msra.mxu0 0
  %288 = vmatpush.bf16.msra.mxu0 %v204
  %289 = vmatpush.bf16.msra.mxu0 %v188
  %290 = vmatmul.bf16.gmra.mxu0 %v252
  %v291 = vpop.f32.mrf.mxu0
  %v292 = vadd.f32 %v55, %v291
  %v293 = vpop.f32.mrf.mxu0
  %v294 = vadd.f32 %v55, %v293
  %295 = vdwg.mxu0
  %296 = vmatpush.bf16.msra.mxu0 0
  %297 = vmatpush.bf16.msra.mxu0 0
  %298 = vmatpush.bf16.msra.mxu0 0
  %299 = vmatpush.bf16.msra.mxu0 0
  %300 = vmatpush.bf16.msra.mxu0 0
  %301 = vmatpush.bf16.msra.mxu0 0
  %302 = vmatpush.bf16.msra.mxu0 %v205
  %303 = vmatpush.bf16.msra.mxu0 %v189
  %304 = vmatmul.bf16.gmra.mxu0 %v252
  %v305 = vpop.f32.mrf.mxu0
  %v306 = vadd.f32 %v56, %v305
  %v307 = vpop.f32.mrf.mxu0
  %v308 = vadd.f32 %v56, %v307
  %309 = vdwg.mxu0
  %310 = vmatpush.bf16.msra.mxu0 0
  %311 = vmatpush.bf16.msra.mxu0 0
  %312 = vmatpush.bf16.msra.mxu0 0
  %313 = vmatpush.bf16.msra.mxu0 0
  %314 = vmatpush.bf16.msra.mxu0 0
  %315 = vmatpush.bf16.msra.mxu0 0
  %316 = vmatpush.bf16.msra.mxu0 %v206
  %317 = vmatpush.bf16.msra.mxu0 %v190
  %318 = vmatmul.bf16.gmra.mxu0 %v252
  %v319 = vpop.f32.mrf.mxu0
  %v320 = vadd.f32 %v57, %v319
  %v321 = vpop.f32.mrf.mxu0
  %v322 = vadd.f32 %v57, %v321
  %323 = vdwg.mxu0
  %324 = vmatpush.bf16.msra.mxu0 0
  %325 = vmatpush.bf16.msra.mxu0 0
  %326 = vmatpush.bf16.msra.mxu0 0
  %327 = vmatpush.bf16.msra.mxu0 0
  %328 = vmatpush.bf16.msra.mxu0 0
  %329 = vmatpush.bf16.msra.mxu0 0
  %330 = vmatpush.bf16.msra.mxu0 %v207
  %331 = vmatpush.bf16.msra.mxu0 %v191
  %332 = vmatmul.bf16.gmra.mxu0 %v252
  %v333 = vpop.f32.mrf.mxu0
  %v334 = vadd.f32 %v58, %v333
  %v335 = vpop.f32.mrf.mxu0
  %v336 = vadd.f32 %v58, %v335
  %337 = vdwg.mxu0
  %338 = vmatpush.bf16.msra.mxu0 0
  %339 = vmatpush.bf16.msra.mxu0 0
  %340 = vmatpush.bf16.msra.mxu0 0
  %341 = vmatpush.bf16.msra.mxu0 0
  %342 = vmatpush.bf16.msra.mxu0 0
  %343 = vmatpush.bf16.msra.mxu0 0
  %344 = vmatpush.bf16.msra.mxu0 %v208
  %345 = vmatpush.bf16.msra.mxu0 %v192
  %346 = vmatmul.bf16.gmra.mxu0 %v252
  %v347 = vpop.f32.mrf.mxu0
  %v348 = vadd.f32 %v59, %v347
  %v349 = vpop.f32.mrf.mxu0
  %v350 = vadd.f32 %v59, %v349
  %351 = vdwg.mxu0
  %352 = vmatpush.bf16.msra.mxu0 0
  %353 = vmatpush.bf16.msra.mxu0 0
  %354 = vmatpush.bf16.msra.mxu0 0
  %355 = vmatpush.bf16.msra.mxu0 0
  %356 = vmatpush.bf16.msra.mxu0 0
  %357 = vmatpush.bf16.msra.mxu0 0
  %358 = vmatpush.bf16.msra.mxu0 %v209
  %359 = vmatpush.bf16.msra.mxu0 %v193
  %360 = vmatmul.bf16.gmra.mxu0 %v252
  %v361 = vpop.f32.mrf.mxu0
  %v362 = vadd.f32 %v60, %v361
  %v363 = vpop.f32.mrf.mxu0
  %v364 = vadd.f32 %v60, %v363
  %365 = vdwg.mxu0
  %366 = vmatpush.bf16.msra.mxu0 0
  %367 = vmatpush.bf16.msra.mxu0 0
  %368 = vmatpush.bf16.msra.mxu0 0
  %369 = vmatpush.bf16.msra.mxu0 0
  %370 = vmatpush.bf16.msra.mxu0 0
  %371 = vmatpush.bf16.msra.mxu0 0
  %372 = vmatpush.bf16.msra.mxu0 %v210
  %373 = vmatpush.bf16.msra.mxu0 %v194
  %374 = vmatmul.bf16.gmra.mxu0 %v252
  %v375 = vpop.f32.mrf.mxu0
  %v376 = vadd.f32 %v61, %v375
  %v377 = vpop.f32.mrf.mxu0
  %v378 = vadd.f32 %v61, %v377
  %379 = vdwg.mxu0
  %380 = vmatpush.bf16.msra.mxu0 0
  %381 = vmatpush.bf16.msra.mxu0 0
  %382 = vmatpush.bf16.msra.mxu0 0
  %383 = vmatpush.bf16.msra.mxu0 0
  %384 = vmatpush.bf16.msra.mxu0 0
  %385 = vmatpush.bf16.msra.mxu0 0
  %386 = vmatpush.bf16.msra.mxu0 %v211
  %387 = vmatpush.bf16.msra.mxu0 %v195
  %388 = vmatmul.bf16.gmra.mxu0 %v252
  %v389 = vpop.f32.mrf.mxu0
  %v390 = vadd.f32 %v62, %v389
  %v391 = vpop.f32.mrf.mxu0
  %v392 = vadd.f32 %v62, %v391
  %393 = vdwg.mxu0
  %394 = vmatpush.bf16.msra.mxu0 0
  %395 = vmatpush.bf16.msra.mxu0 0
  %396 = vmatpush.bf16.msra.mxu0 0
  %397 = vmatpush.bf16.msra.mxu0 0
  %398 = vmatpush.bf16.msra.mxu0 0
  %399 = vmatpush.bf16.msra.mxu0 0
  %400 = vmatpush.bf16.msra.mxu0 %v212
  %401 = vmatpush.bf16.msra.mxu0 %v196
  %402 = vmatmul.bf16.gmra.mxu0 %v252
  %v403 = vpop.f32.mrf.mxu0
  %v404 = vadd.f32 %v63, %v403
  %v405 = vpop.f32.mrf.mxu0
  %v406 = vadd.f32 %v63, %v405
  %407 = vdwg.mxu0
  %408 = vmatpush.bf16.msra.mxu0 0
  %409 = vmatpush.bf16.msra.mxu0 0
  %410 = vmatpush.bf16.msra.mxu0 0
  %411 = vmatpush.bf16.msra.mxu0 0
  %412 = vmatpush.bf16.msra.mxu0 0
  %413 = vmatpush.bf16.msra.mxu0 0
  %414 = vmatpush.bf16.msra.mxu0 %v213
  %415 = vmatpush.bf16.msra.mxu0 %v197
  %416 = vmatmul.bf16.gmra.mxu0 %v252
  %v417 = vpop.f32.mrf.mxu0
  %v418 = vadd.f32 %v64, %v417
  %v419 = vpop.f32.mrf.mxu0
  %v420 = vadd.f32 %v64, %v419
  %421 = vdwg.mxu0
  %422 = vmatpush.bf16.msra.mxu0 0
  %423 = vmatpush.bf16.msra.mxu0 0
  %424 = vmatpush.bf16.msra.mxu0 0
  %425 = vmatpush.bf16.msra.mxu0 0
  %426 = vmatpush.bf16.msra.mxu0 0
  %427 = vmatpush.bf16.msra.mxu0 0
  %428 = vmatpush.bf16.msra.mxu0 %v214
  %429 = vmatpush.bf16.msra.mxu0 %v198
  %430 = vmatmul.bf16.gmra.mxu0 %v252
  %v431 = vpop.f32.mrf.mxu0
  %v432 = vadd.f32 %v65, %v431
  %v433 = vpop.f32.mrf.mxu0
  %v434 = vadd.f32 %v65, %v433
  %435 = vdwg.mxu0
  %436 = vmatpush.bf16.msra.mxu0 0
  %437 = vmatpush.bf16.msra.mxu0 0
  %438 = vmatpush.bf16.msra.mxu0 0
  %439 = vmatpush.bf16.msra.mxu0 0
  %440 = vmatpush.bf16.msra.mxu0 0
  %441 = vmatpush.bf16.msra.mxu0 0
  %442 = vmatpush.bf16.msra.mxu0 %v215
  %443 = vmatpush.bf16.msra.mxu0 %v199
  %444 = vmatmul.bf16.gmra.mxu0 %v252
  %v445 = vpop.f32.mrf.mxu0
  %v446 = vadd.f32 %v66, %v445
  %v447 = vpop.f32.mrf.mxu0
  %v448 = vadd.f32 %v66, %v447
  %449 = vdwg.mxu0
  %450 = vmatpush.bf16.msra.mxu0 0
  %451 = vmatpush.bf16.msra.mxu0 0
  %452 = vmatpush.bf16.msra.mxu0 0
  %453 = vmatpush.bf16.msra.mxu0 0
  %454 = vmatpush.bf16.msra.mxu0 0
  %455 = vmatpush.bf16.msra.mxu0 0
  %456 = vmatpush.bf16.msra.mxu0 %v216
  %457 = vmatpush.bf16.msra.mxu0 %v200
  %458 = vmatmul.bf16.gmra.mxu0 %v252
  %v459 = vpop.f32.mrf.mxu0
  %v460 = vadd.f32 %v67, %v459
  %v461 = vpop.f32.mrf.mxu0
  %v462 = vadd.f32 %v67, %v461
  %463 = vdwg.mxu0
  %464 = vmatpush.bf16.msra.mxu0 0
  %465 = vmatpush.bf16.msra.mxu0 0
  %466 = vmatpush.bf16.msra.mxu0 0
  %467 = vmatpush.bf16.msra.mxu0 0
  %468 = vmatpush.bf16.msra.mxu0 0
  %469 = vmatpush.bf16.msra.mxu0 0
  %470 = vmatpush.bf16.msra.mxu0 %v217
  %471 = vmatpush.bf16.msra.mxu0 %v201
  %472 = vmatmul.bf16.gmra.mxu0 %v252
  %v473 = vpop.f32.mrf.mxu0
  %v474 = vadd.f32 %v68, %v473
  %v475 = vpop.f32.mrf.mxu0
  %v476 = vadd.f32 %v68, %v475
  %477 = vdwg.mxu0
  %478 = vst [vmem:[%s3] sm:$0xff] %v264
  %479 = vst [vmem:[%s3 + $0x8] sm:$0xff] %v278
  %480 = vst [vmem:[%s3 + $0x10] sm:$0xff] %v292
  %481 = vst [vmem:[%s3 + $0x18] sm:$0xff] %v306
  %482 = vst [vmem:[%s3 + $0x20] sm:$0xff] %v320
  %483 = vst [vmem:[%s3 + $0x28] sm:$0xff] %v334
  %484 = vst [vmem:[%s3 + $0x30] sm:$0xff] %v348
  %485 = vst [vmem:[%s3 + $0x38] sm:$0xff] %v362
  %486 = vst [vmem:[%s3 + $0x40] sm:$0xff] %v376
  %487 = vst [vmem:[%s3 + $0x48] sm:$0xff] %v390
  %488 = vst [vmem:[%s3 + $0x50] sm:$0xff] %v404
  %489 = vst [vmem:[%s3 + $0x58] sm:$0xff] %v418
  %490 = vst [vmem:[%s3 + $0x60] sm:$0xff] %v432
  %491 = vst [vmem:[%s3 + $0x68] sm:$0xff] %v446
  %492 = vst [vmem:[%s3 + $0x70] sm:$0xff] %v460
  %493 = vst [vmem:[%s3 + $0x78] sm:$0xff] %v474
  %494 = vst [vmem:[%s3 + $0x80] sm:$0xff] %v266
  %495 = vst [vmem:[%s3 + $0x88] sm:$0xff] %v280
  %496 = vst [vmem:[%s3 + $0x90] sm:$0xff] %v294
  %497 = vst [vmem:[%s3 + $0x98] sm:$0xff] %v308
  %498 = vst [vmem:[%s3 + $0xa0] sm:$0xff] %v322
  %499 = vst [vmem:[%s3 + $0xa8] sm:$0xff] %v336
  %500 = vst [vmem:[%s3 + $0xb0] sm:$0xff] %v350
  %501 = vst [vmem:[%s3 + $0xb8] sm:$0xff] %v364
  %502 = vst [vmem:[%s3 + $0xc0] sm:$0xff] %v378
  %503 = vst [vmem:[%s3 + $0xc8] sm:$0xff] %v392
  %504 = vst [vmem:[%s3 + $0xd0] sm:$0xff] %v406
  %505 = vst [vmem:[%s3 + $0xd8] sm:$0xff] %v420
  %506 = vst [vmem:[%s3 + $0xe0] sm:$0xff] %v434
  %507 = vst [vmem:[%s3 + $0xe8] sm:$0xff] %v448
  %508 = vst [vmem:[%s3 + $0xf0] sm:$0xff] %v462
  %509 = vst [vmem:[%s3 + $0xf8] sm:$0xff] %v476
  // Predicated region
  $region14: #{vae_forward.13} parent=0 // pred_check
    _
  $region15: #{vae_forward.13} parent=0 // pred_check_branch
    %511 = sbr.rel (0) target = $region17
  $region16: #{vae_forward.13} parent=0 // pred_region
    _
  $region17: #{vae_forward.13} parent=0 // pred_fallthru
    _
  // Predicated region
  $region18: #{vae_forward.13} parent=0 // pred_check
    _
  $region19: #{vae_forward.13} parent=0 // pred_check_branch
    %513 = sbr.rel (0) target = $region21
  $region20: #{vae_forward.13} parent=0 // pred_region
    _
  $region21: #{vae_forward.13} parent=0 // pred_fallthru
    _

// kernel: vae_forward.12
$region0: #{vae_forward.12}
  #allocation0 [shape = 'u32[]', space=smem, size = 0x4, offset = 0x4, fixed_abs, tag = 'smem constant byte address 0x4 - core index']
  #allocation1 [shape = 'u32[72,128]{1,0:T(1,128)}', space=vmem, size = 0x9000, scoped, tag = 'internal scratch']
  %s0 = inlined_call_operand.vmem [shape: bf16[16,2048], index: 0, kind: input, shape index: {}]
  %s1 = inlined_call_operand.vmem [shape: bf16[2048,256], index: 1, kind: input, shape index: {}]
  %s2 = inlined_call_operand.vmem [shape: f32[1,256], index: 2, kind: input, shape index: {}]
  %s3 = inlined_call_operand.vmem [shape: f32[16,128], index: 3, kind: input, shape index: {}]
  %s4 = inlined_call_operand.vmem [shape: f32[16,256], index: 4, kind: output, shape index: {0}]
  %s5 = inlined_call_operand.vmem [shape: f32[16,128], index: 5, kind: output, shape index: {1}]
  %6 = xla_tuple %s4, %s5
  %s7 = sld [smem:[#allocation0]]
  $region34: #{vae_forward.12} parent=0
    _
  %s9 = ssub.s32 1, %s7
  %s10 = scalar_select 0, %s9, %s7
  // Predicated region
  $region2: #{vae_forward.12} parent=0 // pred_check
    _
  $region3: #{vae_forward.12} parent=0 // pred_check_branch
    %12 = sbr.rel (0) target = $region5
  $region4: #{vae_forward.12} parent=0 // pred_region
    _
  $region5: #{vae_forward.12} parent=0 // pred_fallthru
    _
  // Predicated region
  $region6: #{vae_forward.12} parent=0 // pred_check
    _
  $region7: #{vae_forward.12} parent=0 // pred_check_branch
    %14 = sbr.rel (0) target = $region9
  $region8: #{vae_forward.12} parent=0 // pred_region
    _
  $region9: #{vae_forward.12} parent=0 // pred_fallthru
    _
  // Predicated region
  $region10: #{vae_forward.12} parent=0 // pred_check
    _
  $region11: #{vae_forward.12} parent=0 // pred_check_branch
    %16 = sbr.rel (0) target = $region13
  $region12: #{vae_forward.12} parent=0 // pred_region
    _
  $region13: #{vae_forward.12} parent=0 // pred_fallthru
    _
  // Predicated region
  $region14: #{vae_forward.12} parent=0 // pred_check
    _
  $region15: #{vae_forward.12} parent=0 // pred_check_branch
    %18 = sbr.rel (0) target = $region17
  $region16: #{vae_forward.12} parent=0 // pred_region
    _
  $region17: #{vae_forward.12} parent=0 // pred_fallthru
    _
  %v19 = vld [vmem:[%s0] sm:$0xff]
  %v20 = vld [vmem:[%s0 + $0x8] sm:$0xff]
  %v21 = vld [vmem:[%s0 + $0x10] sm:$0xff]
  %v22 = vld [vmem:[%s0 + $0x18] sm:$0xff]
  %v23 = vld [vmem:[%s0 + $0x20] sm:$0xff]
  %v24 = vld [vmem:[%s0 + $0x28] sm:$0xff]
  %v25 = vld [vmem:[%s0 + $0x30] sm:$0xff]
  %v26 = vld [vmem:[%s0 + $0x38] sm:$0xff]
  %v27 = vld [vmem:[%s0 + $0x40] sm:$0xff]
  %v28 = vld [vmem:[%s0 + $0x48] sm:$0xff]
  %v29 = vld [vmem:[%s0 + $0x50] sm:$0xff]
  %v30 = vld [vmem:[%s0 + $0x58] sm:$0xff]
  %v31 = vld [vmem:[%s0 + $0x60] sm:$0xff]
  %v32 = vld [vmem:[%s0 + $0x68] sm:$0xff]
  %v33 = vld [vmem:[%s0 + $0x70] sm:$0xff]
  %v34 = vld [vmem:[%s0 + $0x78] sm:$0xff]
  %v35 = vld [vmem:[%s1] sm:$0xff]
  %v36 = vld [vmem:[%s1 + $0x8] sm:$0xff]
  %v37 = vld [vmem:[%s1 + $0x10] sm:$0xff]
  %v38 = vld [vmem:[%s1 + $0x18] sm:$0xff]
  %v39 = vld [vmem:[%s1 + $0x20] sm:$0xff]
  %v40 = vld [vmem:[%s1 + $0x28] sm:$0xff]
  %v41 = vld [vmem:[%s1 + $0x30] sm:$0xff]
  %v42 = vld [vmem:[%s1 + $0x38] sm:$0xff]
  %v43 = vld [vmem:[%s1 + $0x40] sm:$0xff]
  %v44 = vld [vmem:[%s1 + $0x48] sm:$0xff]
  %v45 = vld [vmem:[%s1 + $0x50] sm:$0xff]
  %v46 = vld [vmem:[%s1 + $0x58] sm:$0xff]
  %v47 = vld [vmem:[%s1 + $0x60] sm:$0xff]
  %v48 = vld [vmem:[%s1 + $0x68] sm:$0xff]
  %v49 = vld [vmem:[%s1 + $0x70] sm:$0xff]
  %v50 = vld [vmem:[%s1 + $0x78] sm:$0xff]
  %v51 = vld [vmem:[%s1 + $0x80] sm:$0xff]
  %v52 = vld [vmem:[%s1 + $0x88] sm:$0xff]
  %v53 = vld [vmem:[%s1 + $0x90] sm:$0xff]
  %v54 = vld [vmem:[%s1 + $0x98] sm:$0xff]
  %v55 = vld [vmem:[%s1 + $0xa0] sm:$0xff]
  %v56 = vld [vmem:[%s1 + $0xa8] sm:$0xff]
  %v57 = vld [vmem:[%s1 + $0xb0] sm:$0xff]
  %v58 = vld [vmem:[%s1 + $0xb8] sm:$0xff]
  %v59 = vld [vmem:[%s1 + $0xc0] sm:$0xff]
  %v60 = vld [vmem:[%s1 + $0xc8] sm:$0xff]
  %v61 = vld [vmem:[%s1 + $0xd0] sm:$0xff]
  %v62 = vld [vmem:[%s1 + $0xd8] sm:$0xff]
  %v63 = vld [vmem:[%s1 + $0xe0] sm:$0xff]
  %v64 = vld [vmem:[%s1 + $0xe8] sm:$0xff]
  %v65 = vld [vmem:[%s1 + $0xf0] sm:$0xff]
  %v66 = vld [vmem:[%s1 + $0xf8] sm:$0xff]
  %v67 = vld [vmem:[%s1 + $0x100] sm:$0xff]
  %v68 = vld [vmem:[%s1 + $0x108] sm:$0xff]
  %v69 = vld [vmem:[%s1 + $0x110] sm:$0xff]
  %v70 = vld [vmem:[%s1 + $0x118] sm:$0xff]
  %v71 = vld [vmem:[%s1 + $0x120] sm:$0xff]
  %v72 = vld [vmem:[%s1 + $0x128] sm:$0xff]
  %v73 = vld [vmem:[%s1 + $0x130] sm:$0xff]
  %v74 = vld [vmem:[%s1 + $0x138] sm:$0xff]
  %v75 = vld [vmem:[%s1 + $0x140] sm:$0xff]
  %v76 = vld [vmem:[%s1 + $0x148] sm:$0xff]
  %v77 = vld [vmem:[%s1 + $0x150] sm:$0xff]
  %v78 = vld [vmem:[%s1 + $0x158] sm:$0xff]
  %v79 = vld [vmem:[%s1 + $0x160] sm:$0xff]
  %v80 = vld [vmem:[%s1 + $0x168] sm:$0xff]
  %v81 = vld [vmem:[%s1 + $0x170] sm:$0xff]
  %v82 = vld [vmem:[%s1 + $0x178] sm:$0xff]
  %v83 = vld [vmem:[%s1 + $0x180] sm:$0xff]
  %v84 = vld [vmem:[%s1 + $0x188] sm:$0xff]
  %v85 = vld [vmem:[%s1 + $0x190] sm:$0xff]
  %v86 = vld [vmem:[%s1 + $0x198] sm:$0xff]
  %v87 = vld [vmem:[%s1 + $0x1a0] sm:$0xff]
  %v88 = vld [vmem:[%s1 + $0x1a8] sm:$0xff]
  %v89 = vld [vmem:[%s1 + $0x1b0] sm:$0xff]
  %v90 = vld [vmem:[%s1 + $0x1b8] sm:$0xff]
  %v91 = vld [vmem:[%s1 + $0x1c0] sm:$0xff]
  %v92 = vld [vmem:[%s1 + $0x1c8] sm:$0xff]
  %v93 = vld [vmem:[%s1 + $0x1d0] sm:$0xff]
  %v94 = vld [vmem:[%s1 + $0x1d8] sm:$0xff]
  %v95 = vld [vmem:[%s1 + $0x1e0] sm:$0xff]
  %v96 = vld [vmem:[%s1 + $0x1e8] sm:$0xff]
  %v97 = vld [vmem:[%s1 + $0x1f0] sm:$0xff]
  %v98 = vld [vmem:[%s1 + $0x1f8] sm:$0xff]
  %v99 = vld [vmem:[%s1 + $0x200] sm:$0xff]
  %v100 = vld [vmem:[%s1 + $0x208] sm:$0xff]
  %v101 = vld [vmem:[%s1 + $0x210] sm:$0xff]
  %v102 = vld [vmem:[%s1 + $0x218] sm:$0xff]
  %v103 = vld [vmem:[%s1 + $0x220] sm:$0xff]
  %v104 = vld [vmem:[%s1 + $0x228] sm:$0xff]
  %v105 = vld [vmem:[%s1 + $0x230] sm:$0xff]
  %v106 = vld [vmem:[%s1 + $0x238] sm:$0xff]
  %v107 = vld [vmem:[%s1 + $0x240] sm:$0xff]
  %v108 = vld [vmem:[%s1 + $0x248] sm:$0xff]
  %v109 = vld [vmem:[%s1 + $0x250] sm:$0xff]
  %v110 = vld [vmem:[%s1 + $0x258] sm:$0xff]
  %v111 = vld [vmem:[%s1 + $0x260] sm:$0xff]
  %v112 = vld [vmem:[%s1 + $0x268] sm:$0xff]
  %v113 = vld [vmem:[%s1 + $0x270] sm:$0xff]
  %v114 = vld [vmem:[%s1 + $0x278] sm:$0xff]
  %v115 = vld [vmem:[%s1 + $0x280] sm:$0xff]
  %v116 = vld [vmem:[%s1 + $0x288] sm:$0xff]
  %v117 = vld [vmem:[%s1 + $0x290] sm:$0xff]
  %v118 = vld [vmem:[%s1 + $0x298] sm:$0xff]
  %v119 = vld [vmem:[%s1 + $0x2a0] sm:$0xff]
  %v120 = vld [vmem:[%s1 + $0x2a8] sm:$0xff]
  %v121 = vld [vmem:[%s1 + $0x2b0] sm:$0xff]
  %v122 = vld [vmem:[%s1 + $0x2b8] sm:$0xff]
  %v123 = vld [vmem:[%s1 + $0x2c0] sm:$0xff]
  %v124 = vld [vmem:[%s1 + $0x2c8] sm:$0xff]
  %v125 = vld [vmem:[%s1 + $0x2d0] sm:$0xff]
  %v126 = vld [vmem:[%s1 + $0x2d8] sm:$0xff]
  %v127 = vld [vmem:[%s1 + $0x2e0] sm:$0xff]
  %v128 = vld [vmem:[%s1 + $0x2e8] sm:$0xff]
  %v129 = vld [vmem:[%s1 + $0x2f0] sm:$0xff]
  %v130 = vld [vmem:[%s1 + $0x2f8] sm:$0xff]
  %v131 = vld [vmem:[%s1 + $0x300] sm:$0xff]
  %v132 = vld [vmem:[%s1 + $0x308] sm:$0xff]
  %v133 = vld [vmem:[%s1 + $0x310] sm:$0xff]
  %v134 = vld [vmem:[%s1 + $0x318] sm:$0xff]
  %v135 = vld [vmem:[%s1 + $0x320] sm:$0xff]
  %v136 = vld [vmem:[%s1 + $0x328] sm:$0xff]
  %v137 = vld [vmem:[%s1 + $0x330] sm:$0xff]
  %v138 = vld [vmem:[%s1 + $0x338] sm:$0xff]
  %v139 = vld [vmem:[%s1 + $0x340] sm:$0xff]
  %v140 = vld [vmem:[%s1 + $0x348] sm:$0xff]
  %v141 = vld [vmem:[%s1 + $0x350] sm:$0xff]
  %v142 = vld [vmem:[%s1 + $0x358] sm:$0xff]
  %v143 = vld [vmem:[%s1 + $0x360] sm:$0xff]
  %v144 = vld [vmem:[%s1 + $0x368] sm:$0xff]
  %v145 = vld [vmem:[%s1 + $0x370] sm:$0xff]
  %v146 = vld [vmem:[%s1 + $0x378] sm:$0xff]
  %v147 = vld [vmem:[%s1 + $0x380] sm:$0xff]
  %v148 = vld [vmem:[%s1 + $0x388] sm:$0xff]
  %v149 = vld [vmem:[%s1 + $0x390] sm:$0xff]
  %v150 = vld [vmem:[%s1 + $0x398] sm:$0xff]
  %v151 = vld [vmem:[%s1 + $0x3a0] sm:$0xff]
  %v152 = vld [vmem:[%s1 + $0x3a8] sm:$0xff]
  %v153 = vld [vmem:[%s1 + $0x3b0] sm:$0xff]
  %v154 = vld [vmem:[%s1 + $0x3b8] sm:$0xff]
  %v155 = vld [vmem:[%s1 + $0x3c0] sm:$0xff]
  %v156 = vld [vmem:[%s1 + $0x3c8] sm:$0xff]
  %v157 = vld [vmem:[%s1 + $0x3d0] sm:$0xff]
  %v158 = vld [vmem:[%s1 + $0x3d8] sm:$0xff]
  %v159 = vld [vmem:[%s1 + $0x3e0] sm:$0xff]
  %v160 = vld [vmem:[%s1 + $0x3e8] sm:$0xff]
  %v161 = vld [vmem:[%s1 + $0x3f0] sm:$0xff]
  %v162 = vld [vmem:[%s1 + $0x3f8] sm:$0xff]
  %v163 = vld [vmem:[%s1 + $0x400] sm:$0xff]
  %v164 = vld [vmem:[%s1 + $0x408] sm:$0xff]
  %v165 = vld [vmem:[%s1 + $0x410] sm:$0xff]
  %v166 = vld [vmem:[%s1 + $0x418] sm:$0xff]
  %v167 = vld [vmem:[%s1 + $0x420] sm:$0xff]
  %v168 = vld [vmem:[%s1 + $0x428] sm:$0xff]
  %v169 = vld [vmem:[%s1 + $0x430] sm:$0xff]
  %v170 = vld [vmem:[%s1 + $0x438] sm:$0xff]
  %v171 = vld [vmem:[%s1 + $0x440] sm:$0xff]
  %v172 = vld [vmem:[%s1 + $0x448] sm:$0xff]
  %v173 = vld [vmem:[%s1 + $0x450] sm:$0xff]
  %v174 = vld [vmem:[%s1 + $0x458] sm:$0xff]
  %v175 = vld [vmem:[%s1 + $0x460] sm:$0xff]
  %v176 = vld [vmem:[%s1 + $0x468] sm:$0xff]
  %v177 = vld [vmem:[%s1 + $0x470] sm:$0xff]
  %v178 = vld [vmem:[%s1 + $0x478] sm:$0xff]
  %v179 = vld [vmem:[%s1 + $0x480] sm:$0xff]
  %v180 = vld [vmem:[%s1 + $0x488] sm:$0xff]
  %v181 = vld [vmem:[%s1 + $0x490] sm:$0xff]
  %v182 = vld [vmem:[%s1 + $0x498] sm:$0xff]
  %v183 = vld [vmem:[%s1 + $0x4a0] sm:$0xff]
  %v184 = vld [vmem:[%s1 + $0x4a8] sm:$0xff]
  %v185 = vld [vmem:[%s1 + $0x4b0] sm:$0xff]
  %v186 = vld [vmem:[%s1 + $0x4b8] sm:$0xff]
  %v187 = vld [vmem:[%s1 + $0x4c0] sm:$0xff]
  %v188 = vld [vmem:[%s1 + $0x4c8] sm:$0xff]
  %v189 = vld [vmem:[%s1 + $0x4d0] sm:$0xff]
  %v190 = vld [vmem:[%s1 + $0x4d8] sm:$0xff]
  %v191 = vld [vmem:[%s1 + $0x4e0] sm:$0xff]
  %v192 = vld [vmem:[%s1 + $0x4e8] sm:$0xff]
  %v193 = vld [vmem:[%s1 + $0x4f0] sm:$0xff]
  %v194 = vld [vmem:[%s1 + $0x4f8] sm:$0xff]
  %v195 = vld [vmem:[%s1 + $0x500] sm:$0xff]
  %v196 = vld [vmem:[%s1 + $0x508] sm:$0xff]
  %v197 = vld [vmem:[%s1 + $0x510] sm:$0xff]
  %v198 = vld [vmem:[%s1 + $0x518] sm:$0xff]
  %v199 = vld [vmem:[%s1 + $0x520] sm:$0xff]
  %v200 = vld [vmem:[%s1 + $0x528] sm:$0xff]
  %v201 = vld [vmem:[%s1 + $0x530] sm:$0xff]
  %v202 = vld [vmem:[%s1 + $0x538] sm:$0xff]
  %v203 = vld [vmem:[%s1 + $0x540] sm:$0xff]
  %v204 = vld [vmem:[%s1 + $0x548] sm:$0xff]
  %v205 = vld [vmem:[%s1 + $0x550] sm:$0xff]
  %v206 = vld [vmem:[%s1 + $0x558] sm:$0xff]
  %v207 = vld [vmem:[%s1 + $0x560] sm:$0xff]
  %v208 = vld [vmem:[%s1 + $0x568] sm:$0xff]
  %v209 = vld [vmem:[%s1 + $0x570] sm:$0xff]
  %v210 = vld [vmem:[%s1 + $0x578] sm:$0xff]
  %v211 = vld [vmem:[%s1 + $0x580] sm:$0xff]
  %v212 = vld [vmem:[%s1 + $0x588] sm:$0xff]
  %v213 = vld [vmem:[%s1 + $0x590] sm:$0xff]
  %v214 = vld [vmem:[%s1 + $0x598] sm:$0xff]
  %v215 = vld [vmem:[%s1 + $0x5a0] sm:$0xff]
  %v216 = vld [vmem:[%s1 + $0x5a8] sm:$0xff]
  %v217 = vld [vmem:[%s1 + $0x5b0] sm:$0xff]
  %v218 = vld [vmem:[%s1 + $0x5b8] sm:$0xff]
  %v219 = vld [vmem:[%s1 + $0x5c0] sm:$0xff]
  %v220 = vld [vmem:[%s1 + $0x5c8] sm:$0xff]
  %v221 = vld [vmem:[%s1 + $0x5d0] sm:$0xff]
  %v222 = vld [vmem:[%s1 + $0x5d8] sm:$0xff]
  %v223 = vld [vmem:[%s1 + $0x5e0] sm:$0xff]
  %v224 = vld [vmem:[%s1 + $0x5e8] sm:$0xff]
  %v225 = vld [vmem:[%s1 + $0x5f0] sm:$0xff]
  %v226 = vld [vmem:[%s1 + $0x5f8] sm:$0xff]
  %v227 = vld [vmem:[%s1 + $0x600] sm:$0xff]
  %v228 = vld [vmem:[%s1 + $0x608] sm:$0xff]
  %v229 = vld [vmem:[%s1 + $0x610] sm:$0xff]
  %v230 = vld [vmem:[%s1 + $0x618] sm:$0xff]
  %v231 = vld [vmem:[%s1 + $0x620] sm:$0xff]
  %v232 = vld [vmem:[%s1 + $0x628] sm:$0xff]
  %v233 = vld [vmem:[%s1 + $0x630] sm:$0xff]
  %v234 = vld [vmem:[%s1 + $0x638] sm:$0xff]
  %v235 = vld [vmem:[%s1 + $0x640] sm:$0xff]
  %v236 = vld [vmem:[%s1 + $0x648] sm:$0xff]
  %v237 = vld [vmem:[%s1 + $0x650] sm:$0xff]
  %v238 = vld [vmem:[%s1 + $0x658] sm:$0xff]
  %v239 = vld [vmem:[%s1 + $0x660] sm:$0xff]
  %v240 = vld [vmem:[%s1 + $0x668] sm:$0xff]
  %v241 = vld [vmem:[%s1 + $0x670] sm:$0xff]
  %v242 = vld [vmem:[%s1 + $0x678] sm:$0xff]
  %v243 = vld [vmem:[%s1 + $0x680] sm:$0xff]
  %v244 = vld [vmem:[%s1 + $0x688] sm:$0xff]
  %v245 = vld [vmem:[%s1 + $0x690] sm:$0xff]
  %v246 = vld [vmem:[%s1 + $0x698] sm:$0xff]
  %v247 = vld [vmem:[%s1 + $0x6a0] sm:$0xff]
  %v248 = vld [vmem:[%s1 + $0x6a8] sm:$0xff]
  %v249 = vld [vmem:[%s1 + $0x6b0] sm:$0xff]
  %v250 = vld [vmem:[%s1 + $0x6b8] sm:$0xff]
  %v251 = vld [vmem:[%s1 + $0x6c0] sm:$0xff]
  %v252 = vld [vmem:[%s1 + $0x6c8] sm:$0xff]
  %v253 = vld [vmem:[%s1 + $0x6d0] sm:$0xff]
  %v254 = vld [vmem:[%s1 + $0x6d8] sm:$0xff]
  %v255 = vld [vmem:[%s1 + $0x6e0] sm:$0xff]
  %v256 = vld [vmem:[%s1 + $0x6e8] sm:$0xff]
  %v257 = vld [vmem:[%s1 + $0x6f0] sm:$0xff]
  %v258 = vld [vmem:[%s1 + $0x6f8] sm:$0xff]
  %v259 = vld [vmem:[%s1 + $0x700] sm:$0xff]
  %v260 = vld [vmem:[%s1 + $0x708] sm:$0xff]
  %v261 = vld [vmem:[%s1 + $0x710] sm:$0xff]
  %v262 = vld [vmem:[%s1 + $0x718] sm:$0xff]
  %v263 = vld [vmem:[%s1 + $0x720] sm:$0xff]
  %v264 = vld [vmem:[%s1 + $0x728] sm:$0xff]
  %v265 = vld [vmem:[%s1 + $0x730] sm:$0xff]
  %v266 = vld [vmem:[%s1 + $0x738] sm:$0xff]
  %v267 = vld [vmem:[%s1 + $0x740] sm:$0xff]
  %v268 = vld [vmem:[%s1 + $0x748] sm:$0xff]
  %v269 = vld [vmem:[%s1 + $0x750] sm:$0xff]
  %v270 = vld [vmem:[%s1 + $0x758] sm:$0xff]
  %v271 = vld [vmem:[%s1 + $0x760] sm:$0xff]
  %v272 = vld [vmem:[%s1 + $0x768] sm:$0xff]
  %v273 = vld [vmem:[%s1 + $0x770] sm:$0xff]
  %v274 = vld [vmem:[%s1 + $0x778] sm:$0xff]
  %v275 = vld [vmem:[%s1 + $0x780] sm:$0xff]
  %v276 = vld [vmem:[%s1 + $0x788] sm:$0xff]
  %v277 = vld [vmem:[%s1 + $0x790] sm:$0xff]
  %v278 = vld [vmem:[%s1 + $0x798] sm:$0xff]
  %v279 = vld [vmem:[%s1 + $0x7a0] sm:$0xff]
  %v280 = vld [vmem:[%s1 + $0x7a8] sm:$0xff]
  %v281 = vld [vmem:[%s1 + $0x7b0] sm:$0xff]
  %v282 = vld [vmem:[%s1 + $0x7b8] sm:$0xff]
  %v283 = vld [vmem:[%s1 + $0x7c0] sm:$0xff]
  %v284 = vld [vmem:[%s1 + $0x7c8] sm:$0xff]
  %v285 = vld [vmem:[%s1 + $0x7d0] sm:$0xff]
  %v286 = vld [vmem:[%s1 + $0x7d8] sm:$0xff]
  %v287 = vld [vmem:[%s1 + $0x7e0] sm:$0xff]
  %v288 = vld [vmem:[%s1 + $0x7e8] sm:$0xff]
  %v289 = vld [vmem:[%s1 + $0x7f0] sm:$0xff]
  %v290 = vld [vmem:[%s1 + $0x7f8] sm:$0xff]
  %v291 = vld [vmem:[%s2] sm:$0x3]
  %v293 = vperm.slane %v291, 0
  %v294 = vperm.slane %v291, 1
  %v313 = vunpack.c.l.b16 %v19
  %v314 = vunpack.c.h.b16 %v19
  %v315 = vunpack.c.l.b16 %v20
  %v316 = vunpack.c.h.b16 %v20
  %v317 = vunpack.c.l.b16 %v21
  %v318 = vunpack.c.h.b16 %v21
  %v319 = vunpack.c.l.b16 %v22
  %v320 = vunpack.c.h.b16 %v22
  %v321 = vunpack.c.l.b16 %v23
  %v322 = vunpack.c.h.b16 %v23
  %v323 = vunpack.c.l.b16 %v24
  %v324 = vunpack.c.h.b16 %v24
  %v325 = vunpack.c.l.b16 %v25
  %v326 = vunpack.c.h.b16 %v25
  %v327 = vunpack.c.l.b16 %v26
  %v328 = vunpack.c.h.b16 %v26
  %v329 = vunpack.c.l.b16 %v27
  %v330 = vunpack.c.h.b16 %v27
  %v331 = vunpack.c.l.b16 %v28
  %v332 = vunpack.c.h.b16 %v28
  %v333 = vunpack.c.l.b16 %v29
  %v334 = vunpack.c.h.b16 %v29
  %v335 = vunpack.c.l.b16 %v30
  %v336 = vunpack.c.h.b16 %v30
  %v337 = vunpack.c.l.b16 %v31
  %v338 = vunpack.c.h.b16 %v31
  %v339 = vunpack.c.l.b16 %v32
  %v340 = vunpack.c.h.b16 %v32
  %v341 = vunpack.c.l.b16 %v33
  %v342 = vunpack.c.h.b16 %v33
  %v343 = vunpack.c.l.b16 %v34
  %v344 = vunpack.c.h.b16 %v34
  %v345 = vpack.c.b16 %v329, %v313
  %v346 = vpack.c.b16 %v330, %v314
  %v347 = vpack.c.b16 %v331, %v315
  %v348 = vpack.c.b16 %v332, %v316
  %v349 = vpack.c.b16 %v333, %v317
  %v350 = vpack.c.b16 %v334, %v318
  %v351 = vpack.c.b16 %v335, %v319
  %v352 = vpack.c.b16 %v336, %v320
  %v353 = vpack.c.b16 %v337, %v321
  %v354 = vpack.c.b16 %v338, %v322
  %v355 = vpack.c.b16 %v339, %v323
  %v356 = vpack.c.b16 %v340, %v324
  %v357 = vpack.c.b16 %v341, %v325
  %v358 = vpack.c.b16 %v342, %v326
  %v359 = vpack.c.b16 %v343, %v327
  %v360 = vpack.c.b16 %v344, %v328
  %v633 = vunpack.c.l.b16 %v35
  %v634 = vunpack.c.h.b16 %v35
  %v635 = vunpack.c.l.b16 %v36
  %v636 = vunpack.c.h.b16 %v36
  %v637 = vunpack.c.l.b16 %v37
  %v638 = vunpack.c.h.b16 %v37
  %v639 = vunpack.c.l.b16 %v38
  %v640 = vunpack.c.h.b16 %v38
  %v641 = vunpack.c.l.b16 %v39
  %v642 = vunpack.c.h.b16 %v39
  %v643 = vunpack.c.l.b16 %v40
  %v644 = vunpack.c.h.b16 %v40
  %v645 = vunpack.c.l.b16 %v41
  %v646 = vunpack.c.h.b16 %v41
  %v647 = vunpack.c.l.b16 %v42
  %v648 = vunpack.c.h.b16 %v42
  %v649 = vunpack.c.l.b16 %v43
  %v650 = vunpack.c.h.b16 %v43
  %v651 = vunpack.c.l.b16 %v44
  %v652 = vunpack.c.h.b16 %v44
  %v653 = vunpack.c.l.b16 %v45
  %v654 = vunpack.c.h.b16 %v45
  %v655 = vunpack.c.l.b16 %v46
  %v656 = vunpack.c.h.b16 %v46
  %v657 = vunpack.c.l.b16 %v47
  %v658 = vunpack.c.h.b16 %v47
  %v659 = vunpack.c.l.b16 %v48
  %v660 = vunpack.c.h.b16 %v48
  %v661 = vunpack.c.l.b16 %v49
  %v662 = vunpack.c.h.b16 %v49
  %v663 = vunpack.c.l.b16 %v50
  %v664 = vunpack.c.h.b16 %v50
  %v665 = vunpack.c.l.b16 %v51
  %v666 = vunpack.c.h.b16 %v51
  %v667 = vunpack.c.l.b16 %v52
  %v668 = vunpack.c.h.b16 %v52
  %v669 = vunpack.c.l.b16 %v53
  %v670 = vunpack.c.h.b16 %v53
  %v671 = vunpack.c.l.b16 %v54
  %v672 = vunpack.c.h.b16 %v54
  %v673 = vunpack.c.l.b16 %v55
  %v674 = vunpack.c.h.b16 %v55
  %v675 = vunpack.c.l.b16 %v56
  %v676 = vunpack.c.h.b16 %v56
  %v677 = vunpack.c.l.b16 %v57
  %v678 = vunpack.c.h.b16 %v57
  %v679 = vunpack.c.l.b16 %v58
  %v680 = vunpack.c.h.b16 %v58
  %v681 = vunpack.c.l.b16 %v59
  %v682 = vunpack.c.h.b16 %v59
  %v683 = vunpack.c.l.b16 %v60
  %v684 = vunpack.c.h.b16 %v60
  %v685 = vunpack.c.l.b16 %v61
  %v686 = vunpack.c.h.b16 %v61
  %v687 = vunpack.c.l.b16 %v62
  %v688 = vunpack.c.h.b16 %v62
  %v689 = vunpack.c.l.b16 %v63
  %v690 = vunpack.c.h.b16 %v63
  %v691 = vunpack.c.l.b16 %v64
  %v692 = vunpack.c.h.b16 %v64
  %v693 = vunpack.c.l.b16 %v65
  %v694 = vunpack.c.h.b16 %v65
  %v695 = vunpack.c.l.b16 %v66
  %v696 = vunpack.c.h.b16 %v66
  %v697 = vunpack.c.l.b16 %v67
  %v698 = vunpack.c.h.b16 %v67
  %v699 = vunpack.c.l.b16 %v68
  %v700 = vunpack.c.h.b16 %v68
  %v701 = vunpack.c.l.b16 %v69
  %v702 = vunpack.c.h.b16 %v69
  %v703 = vunpack.c.l.b16 %v70
  %v704 = vunpack.c.h.b16 %v70
  %v705 = vunpack.c.l.b16 %v71
  %v706 = vunpack.c.h.b16 %v71
  %v707 = vunpack.c.l.b16 %v72
  %v708 = vunpack.c.h.b16 %v72
  %v709 = vunpack.c.l.b16 %v73
  %v710 = vunpack.c.h.b16 %v73
  %v711 = vunpack.c.l.b16 %v74
  %v712 = vunpack.c.h.b16 %v74
  %v713 = vunpack.c.l.b16 %v75
  %v714 = vunpack.c.h.b16 %v75
  %v715 = vunpack.c.l.b16 %v76
  %v716 = vunpack.c.h.b16 %v76
  %v717 = vunpack.c.l.b16 %v77
  %v718 = vunpack.c.h.b16 %v77
  %v719 = vunpack.c.l.b16 %v78
  %v720 = vunpack.c.h.b16 %v78
  %v721 = vunpack.c.l.b16 %v79
  %v722 = vunpack.c.h.b16 %v79
  %v723 = vunpack.c.l.b16 %v80
  %v724 = vunpack.c.h.b16 %v80
  %v725 = vunpack.c.l.b16 %v81
  %v726 = vunpack.c.h.b16 %v81
  %v727 = vunpack.c.l.b16 %v82
  %v728 = vunpack.c.h.b16 %v82
  %v729 = vunpack.c.l.b16 %v83
  %v730 = vunpack.c.h.b16 %v83
  %v731 = vunpack.c.l.b16 %v84
  %v732 = vunpack.c.h.b16 %v84
  %v733 = vunpack.c.l.b16 %v85
  %v734 = vunpack.c.h.b16 %v85
  %v735 = vunpack.c.l.b16 %v86
  %v736 = vunpack.c.h.b16 %v86
  %v737 = vunpack.c.l.b16 %v87
  %v738 = vunpack.c.h.b16 %v87
  %v739 = vunpack.c.l.b16 %v88
  %v740 = vunpack.c.h.b16 %v88
  %v741 = vunpack.c.l.b16 %v89
  %v742 = vunpack.c.h.b16 %v89
  %v743 = vunpack.c.l.b16 %v90
  %v744 = vunpack.c.h.b16 %v90
  %v745 = vunpack.c.l.b16 %v91
  %v746 = vunpack.c.h.b16 %v91
  %v747 = vunpack.c.l.b16 %v92
  %v748 = vunpack.c.h.b16 %v92
  %v749 = vunpack.c.l.b16 %v93
  %v750 = vunpack.c.h.b16 %v93
  %v751 = vunpack.c.l.b16 %v94
  %v752 = vunpack.c.h.b16 %v94
  %v753 = vunpack.c.l.b16 %v95
  %v754 = vunpack.c.h.b16 %v95
  %v755 = vunpack.c.l.b16 %v96
  %v756 = vunpack.c.h.b16 %v96
  %v757 = vunpack.c.l.b16 %v97
  %v758 = vunpack.c.h.b16 %v97
  %v759 = vunpack.c.l.b16 %v98
  %v760 = vunpack.c.h.b16 %v98
  %v761 = vunpack.c.l.b16 %v99
  %v762 = vunpack.c.h.b16 %v99
  %v763 = vunpack.c.l.b16 %v100
  %v764 = vunpack.c.h.b16 %v100
  %v765 = vunpack.c.l.b16 %v101
  %v766 = vunpack.c.h.b16 %v101
  %v767 = vunpack.c.l.b16 %v102
  %v768 = vunpack.c.h.b16 %v102
  %v769 = vunpack.c.l.b16 %v103
  %v770 = vunpack.c.h.b16 %v103
  %v771 = vunpack.c.l.b16 %v104
  %v772 = vunpack.c.h.b16 %v104
  %v773 = vunpack.c.l.b16 %v105
  %v774 = vunpack.c.h.b16 %v105
  %v775 = vunpack.c.l.b16 %v106
  %v776 = vunpack.c.h.b16 %v106
  %v777 = vunpack.c.l.b16 %v107
  %v778 = vunpack.c.h.b16 %v107
  %v779 = vunpack.c.l.b16 %v108
  %v780 = vunpack.c.h.b16 %v108
  %v781 = vunpack.c.l.b16 %v109
  %v782 = vunpack.c.h.b16 %v109
  %v783 = vunpack.c.l.b16 %v110
  %v784 = vunpack.c.h.b16 %v110
  %v785 = vunpack.c.l.b16 %v111
  %v786 = vunpack.c.h.b16 %v111
  %v787 = vunpack.c.l.b16 %v112
  %v788 = vunpack.c.h.b16 %v112
  %v789 = vunpack.c.l.b16 %v113
  %v790 = vunpack.c.h.b16 %v113
  %v791 = vunpack.c.l.b16 %v114
  %v792 = vunpack.c.h.b16 %v114
  %v793 = vunpack.c.l.b16 %v115
  %v794 = vunpack.c.h.b16 %v115
  %v795 = vunpack.c.l.b16 %v116
  %v796 = vunpack.c.h.b16 %v116
  %v797 = vunpack.c.l.b16 %v117
  %v798 = vunpack.c.h.b16 %v117
  %v799 = vunpack.c.l.b16 %v118
  %v800 = vunpack.c.h.b16 %v118
  %v801 = vunpack.c.l.b16 %v119
  %v802 = vunpack.c.h.b16 %v119
  %v803 = vunpack.c.l.b16 %v120
  %v804 = vunpack.c.h.b16 %v120
  %v805 = vunpack.c.l.b16 %v121
  %v806 = vunpack.c.h.b16 %v121
  %v807 = vunpack.c.l.b16 %v122
  %v808 = vunpack.c.h.b16 %v122
  %v809 = vunpack.c.l.b16 %v123
  %v810 = vunpack.c.h.b16 %v123
  %v811 = vunpack.c.l.b16 %v124
  %v812 = vunpack.c.h.b16 %v124
  %v813 = vunpack.c.l.b16 %v125
  %v814 = vunpack.c.h.b16 %v125
  %v815 = vunpack.c.l.b16 %v126
  %v816 = vunpack.c.h.b16 %v126
  %v817 = vunpack.c.l.b16 %v127
  %v818 = vunpack.c.h.b16 %v127
  %v819 = vunpack.c.l.b16 %v128
  %v820 = vunpack.c.h.b16 %v128
  %v821 = vunpack.c.l.b16 %v129
  %v822 = vunpack.c.h.b16 %v129
  %v823 = vunpack.c.l.b16 %v130
  %v824 = vunpack.c.h.b16 %v130
  %v825 = vunpack.c.l.b16 %v131
  %v826 = vunpack.c.h.b16 %v131
  %v827 = vunpack.c.l.b16 %v132
  %v828 = vunpack.c.h.b16 %v132
  %v829 = vunpack.c.l.b16 %v133
  %v830 = vunpack.c.h.b16 %v133
  %v831 = vunpack.c.l.b16 %v134
  %v832 = vunpack.c.h.b16 %v134
  %v833 = vunpack.c.l.b16 %v135
  %v834 = vunpack.c.h.b16 %v135
  %v835 = vunpack.c.l.b16 %v136
  %v836 = vunpack.c.h.b16 %v136
  %v837 = vunpack.c.l.b16 %v137
  %v838 = vunpack.c.h.b16 %v137
  %v839 = vunpack.c.l.b16 %v138
  %v840 = vunpack.c.h.b16 %v138
  %v841 = vunpack.c.l.b16 %v139
  %v842 = vunpack.c.h.b16 %v139
  %v843 = vunpack.c.l.b16 %v140
  %v844 = vunpack.c.h.b16 %v140
  %v845 = vunpack.c.l.b16 %v141
  %v846 = vunpack.c.h.b16 %v141
  %v847 = vunpack.c.l.b16 %v142
  %v848 = vunpack.c.h.b16 %v142
  %v849 = vunpack.c.l.b16 %v143
  %v850 = vunpack.c.h.b16 %v143
  %v851 = vunpack.c.l.b16 %v144
  %v852 = vunpack.c.h.b16 %v144
  %v853 = vunpack.c.l.b16 %v145
  %v854 = vunpack.c.h.b16 %v145
  %v855 = vunpack.c.l.b16 %v146
  %v856 = vunpack.c.h.b16 %v146
  %v857 = vunpack.c.l.b16 %v147
  %v858 = vunpack.c.h.b16 %v147
  %v859 = vunpack.c.l.b16 %v148
  %v860 = vunpack.c.h.b16 %v148
  %v861 = vunpack.c.l.b16 %v149
  %v862 = vunpack.c.h.b16 %v149
  %v863 = vunpack.c.l.b16 %v150
  %v864 = vunpack.c.h.b16 %v150
  %v865 = vunpack.c.l.b16 %v151
  %v866 = vunpack.c.h.b16 %v151
  %v867 = vunpack.c.l.b16 %v152
  %v868 = vunpack.c.h.b16 %v152
  %v869 = vunpack.c.l.b16 %v153
  %v870 = vunpack.c.h.b16 %v153
  %v871 = vunpack.c.l.b16 %v154
  %v872 = vunpack.c.h.b16 %v154
  %v873 = vunpack.c.l.b16 %v155
  %v874 = vunpack.c.h.b16 %v155
  %v875 = vunpack.c.l.b16 %v156
  %v876 = vunpack.c.h.b16 %v156
  %v877 = vunpack.c.l.b16 %v157
  %v878 = vunpack.c.h.b16 %v157
  %v879 = vunpack.c.l.b16 %v158
  %v880 = vunpack.c.h.b16 %v158
  %v881 = vunpack.c.l.b16 %v159
  %v882 = vunpack.c.h.b16 %v159
  %v883 = vunpack.c.l.b16 %v160
  %v884 = vunpack.c.h.b16 %v160
  %v885 = vunpack.c.l.b16 %v161
  %v886 = vunpack.c.h.b16 %v161
  %v887 = vunpack.c.l.b16 %v162
  %v888 = vunpack.c.h.b16 %v162
  %v889 = vunpack.c.l.b16 %v163
  %v890 = vunpack.c.h.b16 %v163
  %v891 = vunpack.c.l.b16 %v164
  %v892 = vunpack.c.h.b16 %v164
  %v893 = vunpack.c.l.b16 %v165
  %v894 = vunpack.c.h.b16 %v165
  %v895 = vunpack.c.l.b16 %v166
  %v896 = vunpack.c.h.b16 %v166
  %v897 = vunpack.c.l.b16 %v167
  %v898 = vunpack.c.h.b16 %v167
  %v899 = vunpack.c.l.b16 %v168
  %v900 = vunpack.c.h.b16 %v168
  %v901 = vunpack.c.l.b16 %v169
  %v902 = vunpack.c.h.b16 %v169
  %v903 = vunpack.c.l.b16 %v170
  %v904 = vunpack.c.h.b16 %v170
  %v905 = vunpack.c.l.b16 %v171
  %v906 = vunpack.c.h.b16 %v171
  %v907 = vunpack.c.l.b16 %v172
  %v908 = vunpack.c.h.b16 %v172
  %v909 = vunpack.c.l.b16 %v173
  %v910 = vunpack.c.h.b16 %v173
  %v911 = vunpack.c.l.b16 %v174
  %v912 = vunpack.c.h.b16 %v174
  %v913 = vunpack.c.l.b16 %v175
  %v914 = vunpack.c.h.b16 %v175
  %v915 = vunpack.c.l.b16 %v176
  %v916 = vunpack.c.h.b16 %v176
  %v917 = vunpack.c.l.b16 %v177
  %v918 = vunpack.c.h.b16 %v177
  %v919 = vunpack.c.l.b16 %v178
  %v920 = vunpack.c.h.b16 %v178
  %v921 = vunpack.c.l.b16 %v179
  %v922 = vunpack.c.h.b16 %v179
  %v923 = vunpack.c.l.b16 %v180
  %v924 = vunpack.c.h.b16 %v180
  %v925 = vunpack.c.l.b16 %v181
  %v926 = vunpack.c.h.b16 %v181
  %v927 = vunpack.c.l.b16 %v182
  %v928 = vunpack.c.h.b16 %v182
  %v929 = vunpack.c.l.b16 %v183
  %v930 = vunpack.c.h.b16 %v183
  %v931 = vunpack.c.l.b16 %v184
  %v932 = vunpack.c.h.b16 %v184
  %v933 = vunpack.c.l.b16 %v185
  %v934 = vunpack.c.h.b16 %v185
  %v935 = vunpack.c.l.b16 %v186
  %v936 = vunpack.c.h.b16 %v186
  %v937 = vunpack.c.l.b16 %v187
  %v938 = vunpack.c.h.b16 %v187
  %v939 = vunpack.c.l.b16 %v188
  %v940 = vunpack.c.h.b16 %v188
  %v941 = vunpack.c.l.b16 %v189
  %v942 = vunpack.c.h.b16 %v189
  %v943 = vunpack.c.l.b16 %v190
  %v944 = vunpack.c.h.b16 %v190
  %v945 = vunpack.c.l.b16 %v191
  %v946 = vunpack.c.h.b16 %v191
  %v947 = vunpack.c.l.b16 %v192
  %v948 = vunpack.c.h.b16 %v192
  %v949 = vunpack.c.l.b16 %v193
  %v950 = vunpack.c.h.b16 %v193
  %v951 = vunpack.c.l.b16 %v194
  %v952 = vunpack.c.h.b16 %v194
  %v953 = vunpack.c.l.b16 %v195
  %v954 = vunpack.c.h.b16 %v195
  %v955 = vunpack.c.l.b16 %v196
  %v956 = vunpack.c.h.b16 %v196
  %v957 = vunpack.c.l.b16 %v197
  %v958 = vunpack.c.h.b16 %v197
  %v959 = vunpack.c.l.b16 %v198
  %v960 = vunpack.c.h.b16 %v198
  %v961 = vunpack.c.l.b16 %v199
  %v962 = vunpack.c.h.b16 %v199
  %v963 = vunpack.c.l.b16 %v200
  %v964 = vunpack.c.h.b16 %v200
  %v965 = vunpack.c.l.b16 %v201
  %v966 = vunpack.c.h.b16 %v201
  %v967 = vunpack.c.l.b16 %v202
  %v968 = vunpack.c.h.b16 %v202
  %v969 = vunpack.c.l.b16 %v203
  %v970 = vunpack.c.h.b16 %v203
  %v971 = vunpack.c.l.b16 %v204
  %v972 = vunpack.c.h.b16 %v204
  %v973 = vunpack.c.l.b16 %v205
  %v974 = vunpack.c.h.b16 %v205
  %v975 = vunpack.c.l.b16 %v206
  %v976 = vunpack.c.h.b16 %v206
  %v977 = vunpack.c.l.b16 %v207
  %v978 = vunpack.c.h.b16 %v207
  %v979 = vunpack.c.l.b16 %v208
  %v980 = vunpack.c.h.b16 %v208
  %v981 = vunpack.c.l.b16 %v209
  %v982 = vunpack.c.h.b16 %v209
  %v983 = vunpack.c.l.b16 %v210
  %v984 = vunpack.c.h.b16 %v210
  %v985 = vunpack.c.l.b16 %v211
  %v986 = vunpack.c.h.b16 %v211
  %v987 = vunpack.c.l.b16 %v212
  %v988 = vunpack.c.h.b16 %v212
  %v989 = vunpack.c.l.b16 %v213
  %v990 = vunpack.c.h.b16 %v213
  %v991 = vunpack.c.l.b16 %v214
  %v992 = vunpack.c.h.b16 %v214
  %v993 = vunpack.c.l.b16 %v215
  %v994 = vunpack.c.h.b16 %v215
  %v995 = vunpack.c.l.b16 %v216
  %v996 = vunpack.c.h.b16 %v216
  %v997 = vunpack.c.l.b16 %v217
  %v998 = vunpack.c.h.b16 %v217
  %v999 = vunpack.c.l.b16 %v218
  %v1000 = vunpack.c.h.b16 %v218
  %v1001 = vunpack.c.l.b16 %v219
  %v1002 = vunpack.c.h.b16 %v219
  %v1003 = vunpack.c.l.b16 %v220
  %v1004 = vunpack.c.h.b16 %v220
  %v1005 = vunpack.c.l.b16 %v221
  %v1006 = vunpack.c.h.b16 %v221
  %v1007 = vunpack.c.l.b16 %v222
  %v1008 = vunpack.c.h.b16 %v222
  %v1009 = vunpack.c.l.b16 %v223
  %v1010 = vunpack.c.h.b16 %v223
  %v1011 = vunpack.c.l.b16 %v224
  %v1012 = vunpack.c.h.b16 %v224
  %v1013 = vunpack.c.l.b16 %v225
  %v1014 = vunpack.c.h.b16 %v225
  %v1015 = vunpack.c.l.b16 %v226
  %v1016 = vunpack.c.h.b16 %v226
  %v1017 = vunpack.c.l.b16 %v227
  %v1018 = vunpack.c.h.b16 %v227
  %v1019 = vunpack.c.l.b16 %v228
  %v1020 = vunpack.c.h.b16 %v228
  %v1021 = vunpack.c.l.b16 %v229
  %v1022 = vunpack.c.h.b16 %v229
  %v1023 = vunpack.c.l.b16 %v230
  %v1024 = vunpack.c.h.b16 %v230
  %v1025 = vunpack.c.l.b16 %v231
  %v1026 = vunpack.c.h.b16 %v231
  %v1027 = vunpack.c.l.b16 %v232
  %v1028 = vunpack.c.h.b16 %v232
  %v1029 = vunpack.c.l.b16 %v233
  %v1030 = vunpack.c.h.b16 %v233
  %v1031 = vunpack.c.l.b16 %v234
  %v1032 = vunpack.c.h.b16 %v234
  %v1033 = vunpack.c.l.b16 %v235
  %v1034 = vunpack.c.h.b16 %v235
  %v1035 = vunpack.c.l.b16 %v236
  %v1036 = vunpack.c.h.b16 %v236
  %v1037 = vunpack.c.l.b16 %v237
  %v1038 = vunpack.c.h.b16 %v237
  %v1039 = vunpack.c.l.b16 %v238
  %v1040 = vunpack.c.h.b16 %v238
  %v1041 = vunpack.c.l.b16 %v239
  %v1042 = vunpack.c.h.b16 %v239
  %v1043 = vunpack.c.l.b16 %v240
  %v1044 = vunpack.c.h.b16 %v240
  %v1045 = vunpack.c.l.b16 %v241
  %v1046 = vunpack.c.h.b16 %v241
  %v1047 = vunpack.c.l.b16 %v242
  %v1048 = vunpack.c.h.b16 %v242
  %v1049 = vunpack.c.l.b16 %v243
  %v1050 = vunpack.c.h.b16 %v243
  %v1051 = vunpack.c.l.b16 %v244
  %v1052 = vunpack.c.h.b16 %v244
  %v1053 = vunpack.c.l.b16 %v245
  %v1054 = vunpack.c.h.b16 %v245
  %v1055 = vunpack.c.l.b16 %v246
  %v1056 = vunpack.c.h.b16 %v246
  %v1057 = vunpack.c.l.b16 %v247
  %v1058 = vunpack.c.h.b16 %v247
  %v1059 = vunpack.c.l.b16 %v248
  %v1060 = vunpack.c.h.b16 %v248
  %v1061 = vunpack.c.l.b16 %v249
  %v1062 = vunpack.c.h.b16 %v249
  %v1063 = vunpack.c.l.b16 %v250
  %v1064 = vunpack.c.h.b16 %v250
  %v1065 = vunpack.c.l.b16 %v251
  %v1066 = vunpack.c.h.b16 %v251
  %v1067 = vunpack.c.l.b16 %v252
  %v1068 = vunpack.c.h.b16 %v252
  %v1069 = vunpack.c.l.b16 %v253
  %v1070 = vunpack.c.h.b16 %v253
  %v1071 = vunpack.c.l.b16 %v254
  %v1072 = vunpack.c.h.b16 %v254
  %v1073 = vunpack.c.l.b16 %v255
  %v1074 = vunpack.c.h.b16 %v255
  %v1075 = vunpack.c.l.b16 %v256
  %v1076 = vunpack.c.h.b16 %v256
  %v1077 = vunpack.c.l.b16 %v257
  %v1078 = vunpack.c.h.b16 %v257
  %v1079 = vunpack.c.l.b16 %v258
  %v1080 = vunpack.c.h.b16 %v258
  %v1081 = vunpack.c.l.b16 %v259
  %v1082 = vunpack.c.h.b16 %v259
  %v1083 = vunpack.c.l.b16 %v260
  %v1084 = vunpack.c.h.b16 %v260
  %v1085 = vunpack.c.l.b16 %v261
  %v1086 = vunpack.c.h.b16 %v261
  %v1087 = vunpack.c.l.b16 %v262
  %v1088 = vunpack.c.h.b16 %v262
  %v1089 = vunpack.c.l.b16 %v263
  %v1090 = vunpack.c.h.b16 %v263
  %v1091 = vunpack.c.l.b16 %v264
  %v1092 = vunpack.c.h.b16 %v264
  %v1093 = vunpack.c.l.b16 %v265
  %v1094 = vunpack.c.h.b16 %v265
  %v1095 = vunpack.c.l.b16 %v266
  %v1096 = vunpack.c.h.b16 %v266
  %v1097 = vunpack.c.l.b16 %v267
  %v1098 = vunpack.c.h.b16 %v267
  %v1099 = vunpack.c.l.b16 %v268
  %v1100 = vunpack.c.h.b16 %v268
  %v1101 = vunpack.c.l.b16 %v269
  %v1102 = vunpack.c.h.b16 %v269
  %v1103 = vunpack.c.l.b16 %v270
  %v1104 = vunpack.c.h.b16 %v270
  %v1105 = vunpack.c.l.b16 %v271
  %v1106 = vunpack.c.h.b16 %v271
  %v1107 = vunpack.c.l.b16 %v272
  %v1108 = vunpack.c.h.b16 %v272
  %v1109 = vunpack.c.l.b16 %v273
  %v1110 = vunpack.c.h.b16 %v273
  %v1111 = vunpack.c.l.b16 %v274
  %v1112 = vunpack.c.h.b16 %v274
  %v1113 = vunpack.c.l.b16 %v275
  %v1114 = vunpack.c.h.b16 %v275
  %v1115 = vunpack.c.l.b16 %v276
  %v1116 = vunpack.c.h.b16 %v276
  %v1117 = vunpack.c.l.b16 %v277
  %v1118 = vunpack.c.h.b16 %v277
  %v1119 = vunpack.c.l.b16 %v278
  %v1120 = vunpack.c.h.b16 %v278
  %v1121 = vunpack.c.l.b16 %v279
  %v1122 = vunpack.c.h.b16 %v279
  %v1123 = vunpack.c.l.b16 %v280
  %v1124 = vunpack.c.h.b16 %v280
  %v1125 = vunpack.c.l.b16 %v281
  %v1126 = vunpack.c.h.b16 %v281
  %v1127 = vunpack.c.l.b16 %v282
  %v1128 = vunpack.c.h.b16 %v282
  %v1129 = vunpack.c.l.b16 %v283
  %v1130 = vunpack.c.h.b16 %v283
  %v1131 = vunpack.c.l.b16 %v284
  %v1132 = vunpack.c.h.b16 %v284
  %v1133 = vunpack.c.l.b16 %v285
  %v1134 = vunpack.c.h.b16 %v285
  %v1135 = vunpack.c.l.b16 %v286
  %v1136 = vunpack.c.h.b16 %v286
  %v1137 = vunpack.c.l.b16 %v287
  %v1138 = vunpack.c.h.b16 %v287
  %v1139 = vunpack.c.l.b16 %v288
  %v1140 = vunpack.c.h.b16 %v288
  %v1141 = vunpack.c.l.b16 %v289
  %v1142 = vunpack.c.h.b16 %v289
  %v1143 = vunpack.c.l.b16 %v290
  %v1144 = vunpack.c.h.b16 %v290
  %v1145 = vpack.c.b16 %v635, %v633
  %v1146 = vpack.c.b16 %v636, %v634
  %v1147 = vpack.c.b16 %v639, %v637
  %v1148 = vpack.c.b16 %v640, %v638
  %v1149 = vpack.c.b16 %v643, %v641
  %v1150 = vpack.c.b16 %v644, %v642
  %v1151 = vpack.c.b16 %v647, %v645
  %v1152 = vpack.c.b16 %v648, %v646
  %v1153 = vpack.c.b16 %v651, %v649
  %v1154 = vpack.c.b16 %v652, %v650
  %v1155 = vpack.c.b16 %v655, %v653
  %v1156 = vpack.c.b16 %v656, %v654
  %v1157 = vpack.c.b16 %v659, %v657
  %v1158 = vpack.c.b16 %v660, %v658
  %v1159 = vpack.c.b16 %v663, %v661
  %v1160 = vpack.c.b16 %v664, %v662
  %v1161 = vpack.c.b16 %v667, %v665
  %v1162 = vpack.c.b16 %v668, %v666
  %v1163 = vpack.c.b16 %v671, %v669
  %v1164 = vpack.c.b16 %v672, %v670
  %v1165 = vpack.c.b16 %v675, %v673
  %v1166 = vpack.c.b16 %v676, %v674
  %v1167 = vpack.c.b16 %v679, %v677
  %v1168 = vpack.c.b16 %v680, %v678
  %v1169 = vpack.c.b16 %v683, %v681
  %v1170 = vpack.c.b16 %v684, %v682
  %v1171 = vpack.c.b16 %v687, %v685
  %v1172 = vpack.c.b16 %v688, %v686
  %v1173 = vpack.c.b16 %v691, %v689
  %v1174 = vpack.c.b16 %v692, %v690
  %v1175 = vpack.c.b16 %v695, %v693
  %v1176 = vpack.c.b16 %v696, %v694
  %v1177 = vpack.c.b16 %v699, %v697
  %v1178 = vpack.c.b16 %v700, %v698
  %v1179 = vpack.c.b16 %v703, %v701
  %v1180 = vpack.c.b16 %v704, %v702
  %v1181 = vpack.c.b16 %v707, %v705
  %v1182 = vpack.c.b16 %v708, %v706
  %v1183 = vpack.c.b16 %v711, %v709
  %v1184 = vpack.c.b16 %v712, %v710
  %v1185 = vpack.c.b16 %v715, %v713
  %v1186 = vpack.c.b16 %v716, %v714
  %v1187 = vpack.c.b16 %v719, %v717
  %v1188 = vpack.c.b16 %v720, %v718
  %v1189 = vpack.c.b16 %v723, %v721
  %v1190 = vpack.c.b16 %v724, %v722
  %v1191 = vpack.c.b16 %v727, %v725
  %v1192 = vpack.c.b16 %v728, %v726
  %v1193 = vpack.c.b16 %v731, %v729
  %v1194 = vpack.c.b16 %v732, %v730
  %v1195 = vpack.c.b16 %v735, %v733
  %v1196 = vpack.c.b16 %v736, %v734
  %v1197 = vpack.c.b16 %v739, %v737
  %v1198 = vpack.c.b16 %v740, %v738
  %v1199 = vpack.c.b16 %v743, %v741
  %v1200 = vpack.c.b16 %v744, %v742
  %v1201 = vpack.c.b16 %v747, %v745
  %v1202 = vpack.c.b16 %v748, %v746
  %v1203 = vpack.c.b16 %v751, %v749
  %v1204 = vpack.c.b16 %v752, %v750
  %v1205 = vpack.c.b16 %v755, %v753
  %v1206 = vpack.c.b16 %v756, %v754
  %v1207 = vpack.c.b16 %v759, %v757
  %v1208 = vpack.c.b16 %v760, %v758
  %v1209 = vpack.c.b16 %v763, %v761
  %v1210 = vpack.c.b16 %v764, %v762
  %v1211 = vpack.c.b16 %v767, %v765
  %v1212 = vpack.c.b16 %v768, %v766
  %v1213 = vpack.c.b16 %v771, %v769
  %v1214 = vpack.c.b16 %v772, %v770
  %v1215 = vpack.c.b16 %v775, %v773
  %v1216 = vpack.c.b16 %v776, %v774
  %v1217 = vpack.c.b16 %v779, %v777
  %v1218 = vpack.c.b16 %v780, %v778
  %v1219 = vpack.c.b16 %v783, %v781
  %v1220 = vpack.c.b16 %v784, %v782
  %v1221 = vpack.c.b16 %v787, %v785
  %v1222 = vpack.c.b16 %v788, %v786
  %v1223 = vpack.c.b16 %v791, %v789
  %v1224 = vpack.c.b16 %v792, %v790
  %v1225 = vpack.c.b16 %v795, %v793
  %v1226 = vpack.c.b16 %v796, %v794
  %v1227 = vpack.c.b16 %v799, %v797
  %v1228 = vpack.c.b16 %v800, %v798
  %v1229 = vpack.c.b16 %v803, %v801
  %v1230 = vpack.c.b16 %v804, %v802
  %v1231 = vpack.c.b16 %v807, %v805
  %v1232 = vpack.c.b16 %v808, %v806
  %v1233 = vpack.c.b16 %v811, %v809
  %v1234 = vpack.c.b16 %v812, %v810
  %v1235 = vpack.c.b16 %v815, %v813
  %v1236 = vpack.c.b16 %v816, %v814
  %v1237 = vpack.c.b16 %v819, %v817
  %v1238 = vpack.c.b16 %v820, %v818
  %v1239 = vpack.c.b16 %v823, %v821
  %v1240 = vpack.c.b16 %v824, %v822
  %v1241 = vpack.c.b16 %v827, %v825
  %v1242 = vpack.c.b16 %v828, %v826
  %v1243 = vpack.c.b16 %v831, %v829
  %v1244 = vpack.c.b16 %v832, %v830
  %v1245 = vpack.c.b16 %v835, %v833
  %v1246 = vpack.c.b16 %v836, %v834
  %v1247 = vpack.c.b16 %v839, %v837
  %v1248 = vpack.c.b16 %v840, %v838
  %v1249 = vpack.c.b16 %v843, %v841
  %v1250 = vpack.c.b16 %v844, %v842
  %v1251 = vpack.c.b16 %v847, %v845
  %v1252 = vpack.c.b16 %v848, %v846
  %v1253 = vpack.c.b16 %v851, %v849
  %v1254 = vpack.c.b16 %v852, %v850
  %v1255 = vpack.c.b16 %v855, %v853
  %v1256 = vpack.c.b16 %v856, %v854
  %v1257 = vpack.c.b16 %v859, %v857
  %v1258 = vpack.c.b16 %v860, %v858
  %v1259 = vpack.c.b16 %v863, %v861
  %v1260 = vpack.c.b16 %v864, %v862
  %v1261 = vpack.c.b16 %v867, %v865
  %v1262 = vpack.c.b16 %v868, %v866
  %v1263 = vpack.c.b16 %v871, %v869
  %v1264 = vpack.c.b16 %v872, %v870
  %v1265 = vpack.c.b16 %v875, %v873
  %v1266 = vpack.c.b16 %v876, %v874
  %v1267 = vpack.c.b16 %v879, %v877
  %v1268 = vpack.c.b16 %v880, %v878
  %v1269 = vpack.c.b16 %v883, %v881
  %v1270 = vpack.c.b16 %v884, %v882
  %v1271 = vpack.c.b16 %v887, %v885
  %v1272 = vpack.c.b16 %v888, %v886
  %v1273 = vpack.c.b16 %v891, %v889
  %v1274 = vpack.c.b16 %v892, %v890
  %v1275 = vpack.c.b16 %v895, %v893
  %v1276 = vpack.c.b16 %v896, %v894
  %v1277 = vpack.c.b16 %v899, %v897
  %v1278 = vpack.c.b16 %v900, %v898
  %v1279 = vpack.c.b16 %v903, %v901
  %v1280 = vpack.c.b16 %v904, %v902
  %v1281 = vpack.c.b16 %v907, %v905
  %v1282 = vpack.c.b16 %v908, %v906
  %v1283 = vpack.c.b16 %v911, %v909
  %v1284 = vpack.c.b16 %v912, %v910
  %v1285 = vpack.c.b16 %v915, %v913
  %v1286 = vpack.c.b16 %v916, %v914
  %v1287 = vpack.c.b16 %v919, %v917
  %v1288 = vpack.c.b16 %v920, %v918
  %v1289 = vpack.c.b16 %v923, %v921
  %v1290 = vpack.c.b16 %v924, %v922
  %v1291 = vpack.c.b16 %v927, %v925
  %v1292 = vpack.c.b16 %v928, %v926
  %v1293 = vpack.c.b16 %v931, %v929
  %v1294 = vpack.c.b16 %v932, %v930
  %v1295 = vpack.c.b16 %v935, %v933
  %v1296 = vpack.c.b16 %v936, %v934
  %v1297 = vpack.c.b16 %v939, %v937
  %v1298 = vpack.c.b16 %v940, %v938
  %v1299 = vpack.c.b16 %v943, %v941
  %v1300 = vpack.c.b16 %v944, %v942
  %v1301 = vpack.c.b16 %v947, %v945
  %v1302 = vpack.c.b16 %v948, %v946
  %v1303 = vpack.c.b16 %v951, %v949
  %v1304 = vpack.c.b16 %v952, %v950
  %v1305 = vpack.c.b16 %v955, %v953
  %v1306 = vpack.c.b16 %v956, %v954
  %v1307 = vpack.c.b16 %v959, %v957
  %v1308 = vpack.c.b16 %v960, %v958
  %v1309 = vpack.c.b16 %v963, %v961
  %v1310 = vpack.c.b16 %v964, %v962
  %v1311 = vpack.c.b16 %v967, %v965
  %v1312 = vpack.c.b16 %v968, %v966
  %v1313 = vpack.c.b16 %v971, %v969
  %v1314 = vpack.c.b16 %v972, %v970
  %v1315 = vpack.c.b16 %v975, %v973
  %v1316 = vpack.c.b16 %v976, %v974
  %v1317 = vpack.c.b16 %v979, %v977
  %v1318 = vpack.c.b16 %v980, %v978
  %v1319 = vpack.c.b16 %v983, %v981
  %v1320 = vpack.c.b16 %v984, %v982
  %v1321 = vpack.c.b16 %v987, %v985
  %v1322 = vpack.c.b16 %v988, %v986
  %v1323 = vpack.c.b16 %v991, %v989
  %v1324 = vpack.c.b16 %v992, %v990
  %v1325 = vpack.c.b16 %v995, %v993
  %v1326 = vpack.c.b16 %v996, %v994
  %v1327 = vpack.c.b16 %v999, %v997
  %v1328 = vpack.c.b16 %v1000, %v998
  %v1329 = vpack.c.b16 %v1003, %v1001
  %v1330 = vpack.c.b16 %v1004, %v1002
  %v1331 = vpack.c.b16 %v1007, %v1005
  %v1332 = vpack.c.b16 %v1008, %v1006
  %v1333 = vpack.c.b16 %v1011, %v1009
  %v1334 = vpack.c.b16 %v1012, %v1010
  %v1335 = vpack.c.b16 %v1015, %v1013
  %v1336 = vpack.c.b16 %v1016, %v1014
  %v1337 = vpack.c.b16 %v1019, %v1017
  %v1338 = vpack.c.b16 %v1020, %v1018
  %v1339 = vpack.c.b16 %v1023, %v1021
  %v1340 = vpack.c.b16 %v1024, %v1022
  %v1341 = vpack.c.b16 %v1027, %v1025
  %v1342 = vpack.c.b16 %v1028, %v1026
  %v1343 = vpack.c.b16 %v1031, %v1029
  %v1344 = vpack.c.b16 %v1032, %v1030
  %v1345 = vpack.c.b16 %v1035, %v1033
  %v1346 = vpack.c.b16 %v1036, %v1034
  %v1347 = vpack.c.b16 %v1039, %v1037
  %v1348 = vpack.c.b16 %v1040, %v1038
  %v1349 = vpack.c.b16 %v1043, %v1041
  %v1350 = vpack.c.b16 %v1044, %v1042
  %v1351 = vpack.c.b16 %v1047, %v1045
  %v1352 = vpack.c.b16 %v1048, %v1046
  %v1353 = vpack.c.b16 %v1051, %v1049
  %v1354 = vpack.c.b16 %v1052, %v1050
  %v1355 = vpack.c.b16 %v1055, %v1053
  %v1356 = vpack.c.b16 %v1056, %v1054
  %v1357 = vpack.c.b16 %v1059, %v1057
  %v1358 = vpack.c.b16 %v1060, %v1058
  %v1359 = vpack.c.b16 %v1063, %v1061
  %v1360 = vpack.c.b16 %v1064, %v1062
  %v1361 = vpack.c.b16 %v1067, %v1065
  %v1362 = vpack.c.b16 %v1068, %v1066
  %v1363 = vpack.c.b16 %v1071, %v1069
  %v1364 = vpack.c.b16 %v1072, %v1070
  %v1365 = vpack.c.b16 %v1075, %v1073
  %v1366 = vpack.c.b16 %v1076, %v1074
  %v1367 = vpack.c.b16 %v1079, %v1077
  %v1368 = vpack.c.b16 %v1080, %v1078
  %v1369 = vpack.c.b16 %v1083, %v1081
  %v1370 = vpack.c.b16 %v1084, %v1082
  %v1371 = vpack.c.b16 %v1087, %v1085
  %v1372 = vpack.c.b16 %v1088, %v1086
  %v1373 = vpack.c.b16 %v1091, %v1089
  %v1374 = vpack.c.b16 %v1092, %v1090
  %v1375 = vpack.c.b16 %v1095, %v1093
  %v1376 = vpack.c.b16 %v1096, %v1094
  %v1377 = vpack.c.b16 %v1099, %v1097
  %v1378 = vpack.c.b16 %v1100, %v1098
  %v1379 = vpack.c.b16 %v1103, %v1101
  %v1380 = vpack.c.b16 %v1104, %v1102
  %v1381 = vpack.c.b16 %v1107, %v1105
  %v1382 = vpack.c.b16 %v1108, %v1106
  %v1383 = vpack.c.b16 %v1111, %v1109
  %v1384 = vpack.c.b16 %v1112, %v1110
  %v1385 = vpack.c.b16 %v1115, %v1113
  %v1386 = vpack.c.b16 %v1116, %v1114
  %v1387 = vpack.c.b16 %v1119, %v1117
  %v1388 = vpack.c.b16 %v1120, %v1118
  %v1389 = vpack.c.b16 %v1123, %v1121
  %v1390 = vpack.c.b16 %v1124, %v1122
  %v1391 = vpack.c.b16 %v1127, %v1125
  %v1392 = vpack.c.b16 %v1128, %v1126
  %v1393 = vpack.c.b16 %v1131, %v1129
  %v1394 = vpack.c.b16 %v1132, %v1130
  %v1395 = vpack.c.b16 %v1135, %v1133
  %v1396 = vpack.c.b16 %v1136, %v1134
  %v1397 = vpack.c.b16 %v1139, %v1137
  %v1398 = vpack.c.b16 %v1140, %v1138
  %v1399 = vpack.c.b16 %v1143, %v1141
  %v1400 = vpack.c.b16 %v1144, %v1142
  %1657 = vmatpush.bf16.msra.mxu0 %v1159
  %1658 = vmatpush.bf16.msra.mxu0 %v1157
  %1659 = vmatpush.bf16.msra.mxu0 %v1155
  %1660 = vmatpush.bf16.msra.mxu0 %v1153
  %1661 = vmatpush.bf16.msra.mxu0 %v1151
  %1662 = vmatpush.bf16.msra.mxu0 %v1149
  %1663 = vmatpush.bf16.msra.mxu0 %v1147
  %1664 = vmatpush.bf16.msra.mxu0 %v1145
  %1665 = vmatmul.bf16.gmra.mxu0 %v345
  %v1666 = vpop.f32.mrf.mxu0
  %v1667 = vadd.f32 %v293, %v1666
  %v1668 = vpop.f32.mrf.mxu0
  %v1669 = vadd.f32 %v293, %v1668
  %1670 = vdwg.mxu0
  %1671 = vmatpush.bf16.msra.mxu0 %v1175
  %1672 = vmatpush.bf16.msra.mxu0 %v1173
  %1673 = vmatpush.bf16.msra.mxu0 %v1171
  %1674 = vmatpush.bf16.msra.mxu0 %v1169
  %1675 = vmatpush.bf16.msra.mxu0 %v1167
  %1676 = vmatpush.bf16.msra.mxu0 %v1165
  %1677 = vmatpush.bf16.msra.mxu0 %v1163
  %1678 = vmatpush.bf16.msra.mxu0 %v1161
  %1679 = vmatmul.bf16.gmra.mxu0 %v346
  %v1680 = vpop.f32.mrf.mxu0
  %v1681 = vadd.f32 %v1667, %v1680
  %v1682 = vpop.f32.mrf.mxu0
  %v1683 = vadd.f32 %v1669, %v1682
  %1684 = vdwg.mxu0
  %1685 = vmatpush.bf16.msra.mxu0 %v1191
  %1686 = vmatpush.bf16.msra.mxu0 %v1189
  %1687 = vmatpush.bf16.msra.mxu0 %v1187
  %1688 = vmatpush.bf16.msra.mxu0 %v1185
  %1689 = vmatpush.bf16.msra.mxu0 %v1183
  %1690 = vmatpush.bf16.msra.mxu0 %v1181
  %1691 = vmatpush.bf16.msra.mxu0 %v1179
  %1692 = vmatpush.bf16.msra.mxu0 %v1177
  %1693 = vmatmul.bf16.gmra.mxu0 %v347
  %v1694 = vpop.f32.mrf.mxu0
  %v1695 = vadd.f32 %v1681, %v1694
  %v1696 = vpop.f32.mrf.mxu0
  %v1697 = vadd.f32 %v1683, %v1696
  %1698 = vdwg.mxu0
  %1699 = vmatpush.bf16.msra.mxu0 %v1207
  %1700 = vmatpush.bf16.msra.mxu0 %v1205
  %1701 = vmatpush.bf16.msra.mxu0 %v1203
  %1702 = vmatpush.bf16.msra.mxu0 %v1201
  %1703 = vmatpush.bf16.msra.mxu0 %v1199
  %1704 = vmatpush.bf16.msra.mxu0 %v1197
  %1705 = vmatpush.bf16.msra.mxu0 %v1195
  %1706 = vmatpush.bf16.msra.mxu0 %v1193
  %1707 = vmatmul.bf16.gmra.mxu0 %v348
  %v1708 = vpop.f32.mrf.mxu0
  %v1709 = vadd.f32 %v1695, %v1708
  %v1710 = vpop.f32.mrf.mxu0
  %v1711 = vadd.f32 %v1697, %v1710
  %1712 = vdwg.mxu0
  %1713 = vmatpush.bf16.msra.mxu0 %v1223
  %1714 = vmatpush.bf16.msra.mxu0 %v1221
  %1715 = vmatpush.bf16.msra.mxu0 %v1219
  %1716 = vmatpush.bf16.msra.mxu0 %v1217
  %1717 = vmatpush.bf16.msra.mxu0 %v1215
  %1718 = vmatpush.bf16.msra.mxu0 %v1213
  %1719 = vmatpush.bf16.msra.mxu0 %v1211
  %1720 = vmatpush.bf16.msra.mxu0 %v1209
  %1721 = vmatmul.bf16.gmra.mxu0 %v349
  %v1722 = vpop.f32.mrf.mxu0
  %v1723 = vadd.f32 %v1709, %v1722
  %v1724 = vpop.f32.mrf.mxu0
  %v1725 = vadd.f32 %v1711, %v1724
  %1726 = vdwg.mxu0
  %1727 = vmatpush.bf16.msra.mxu0 %v1239
  %1728 = vmatpush.bf16.msra.mxu0 %v1237
  %1729 = vmatpush.bf16.msra.mxu0 %v1235
  %1730 = vmatpush.bf16.msra.mxu0 %v1233
  %1731 = vmatpush.bf16.msra.mxu0 %v1231
  %1732 = vmatpush.bf16.msra.mxu0 %v1229
  %1733 = vmatpush.bf16.msra.mxu0 %v1227
  %1734 = vmatpush.bf16.msra.mxu0 %v1225
  %1735 = vmatmul.bf16.gmra.mxu0 %v350
  %v1736 = vpop.f32.mrf.mxu0
  %v1737 = vadd.f32 %v1723, %v1736
  %v1738 = vpop.f32.mrf.mxu0
  %v1739 = vadd.f32 %v1725, %v1738
  %1740 = vdwg.mxu0
  %1741 = vmatpush.bf16.msra.mxu0 %v1255
  %1742 = vmatpush.bf16.msra.mxu0 %v1253
  %1743 = vmatpush.bf16.msra.mxu0 %v1251
  %1744 = vmatpush.bf16.msra.mxu0 %v1249
  %1745 = vmatpush.bf16.msra.mxu0 %v1247
  %1746 = vmatpush.bf16.msra.mxu0 %v1245
  %1747 = vmatpush.bf16.msra.mxu0 %v1243
  %1748 = vmatpush.bf16.msra.mxu0 %v1241
  %1749 = vmatmul.bf16.gmra.mxu0 %v351
  %v1750 = vpop.f32.mrf.mxu0
  %v1751 = vadd.f32 %v1737, %v1750
  %v1752 = vpop.f32.mrf.mxu0
  %v1753 = vadd.f32 %v1739, %v1752
  %1754 = vdwg.mxu0
  %1755 = vmatpush.bf16.msra.mxu0 %v1271
  %1756 = vmatpush.bf16.msra.mxu0 %v1269
  %1757 = vmatpush.bf16.msra.mxu0 %v1267
  %1758 = vmatpush.bf16.msra.mxu0 %v1265
  %1759 = vmatpush.bf16.msra.mxu0 %v1263
  %1760 = vmatpush.bf16.msra.mxu0 %v1261
  %1761 = vmatpush.bf16.msra.mxu0 %v1259
  %1762 = vmatpush.bf16.msra.mxu0 %v1257
  %1763 = vmatmul.bf16.gmra.mxu0 %v352
  %v1764 = vpop.f32.mrf.mxu0
  %v1765 = vadd.f32 %v1751, %v1764
  %v1766 = vpop.f32.mrf.mxu0
  %v1767 = vadd.f32 %v1753, %v1766
  %1768 = vdwg.mxu0
  %1769 = vmatpush.bf16.msra.mxu0 %v1287
  %1770 = vmatpush.bf16.msra.mxu0 %v1285
  %1771 = vmatpush.bf16.msra.mxu0 %v1283
  %1772 = vmatpush.bf16.msra.mxu0 %v1281
  %1773 = vmatpush.bf16.msra.mxu0 %v1279
  %1774 = vmatpush.bf16.msra.mxu0 %v1277
  %1775 = vmatpush.bf16.msra.mxu0 %v1275
  %1776 = vmatpush.bf16.msra.mxu0 %v1273
  %1777 = vmatmul.bf16.gmra.mxu0 %v353
  %v1778 = vpop.f32.mrf.mxu0
  %v1779 = vadd.f32 %v1765, %v1778
  %v1780 = vpop.f32.mrf.mxu0
  %v1781 = vadd.f32 %v1767, %v1780
  %1782 = vdwg.mxu0
  %1783 = vmatpush.bf16.msra.mxu0 %v1303
  %1784 = vmatpush.bf16.msra.mxu0 %v1301
  %1785 = vmatpush.bf16.msra.mxu0 %v1299
  %1786 = vmatpush.bf16.msra.mxu0 %v1297
  %1787 = vmatpush.bf16.msra.mxu0 %v1295
  %1788 = vmatpush.bf16.msra.mxu0 %v1293
  %1789 = vmatpush.bf16.msra.mxu0 %v1291
  %1790 = vmatpush.bf16.msra.mxu0 %v1289
  %1791 = vmatmul.bf16.gmra.mxu0 %v354
  %v1792 = vpop.f32.mrf.mxu0
  %v1793 = vadd.f32 %v1779, %v1792
  %v1794 = vpop.f32.mrf.mxu0
  %v1795 = vadd.f32 %v1781, %v1794
  %1796 = vdwg.mxu0
  %1797 = vmatpush.bf16.msra.mxu0 %v1319
  %1798 = vmatpush.bf16.msra.mxu0 %v1317
  %1799 = vmatpush.bf16.msra.mxu0 %v1315
  %1800 = vmatpush.bf16.msra.mxu0 %v1313
  %1801 = vmatpush.bf16.msra.mxu0 %v1311
  %1802 = vmatpush.bf16.msra.mxu0 %v1309
  %1803 = vmatpush.bf16.msra.mxu0 %v1307
  %1804 = vmatpush.bf16.msra.mxu0 %v1305
  %1805 = vmatmul.bf16.gmra.mxu0 %v355
  %v1806 = vpop.f32.mrf.mxu0
  %v1807 = vadd.f32 %v1793, %v1806
  %v1808 = vpop.f32.mrf.mxu0
  %v1809 = vadd.f32 %v1795, %v1808
  %1810 = vdwg.mxu0
  %1811 = vmatpush.bf16.msra.mxu0 %v1335
  %1812 = vmatpush.bf16.msra.mxu0 %v1333
  %1813 = vmatpush.bf16.msra.mxu0 %v1331
  %1814 = vmatpush.bf16.msra.mxu0 %v1329
  %1815 = vmatpush.bf16.msra.mxu0 %v1327
  %1816 = vmatpush.bf16.msra.mxu0 %v1325
  %1817 = vmatpush.bf16.msra.mxu0 %v1323
  %1818 = vmatpush.bf16.msra.mxu0 %v1321
  %1819 = vmatmul.bf16.gmra.mxu0 %v356
  %v1820 = vpop.f32.mrf.mxu0
  %v1821 = vadd.f32 %v1807, %v1820
  %v1822 = vpop.f32.mrf.mxu0
  %v1823 = vadd.f32 %v1809, %v1822
  %1824 = vdwg.mxu0
  %1825 = vmatpush.bf16.msra.mxu0 %v1351
  %1826 = vmatpush.bf16.msra.mxu0 %v1349
  %1827 = vmatpush.bf16.msra.mxu0 %v1347
  %1828 = vmatpush.bf16.msra.mxu0 %v1345
  %1829 = vmatpush.bf16.msra.mxu0 %v1343
  %1830 = vmatpush.bf16.msra.mxu0 %v1341
  %1831 = vmatpush.bf16.msra.mxu0 %v1339
  %1832 = vmatpush.bf16.msra.mxu0 %v1337
  %1833 = vmatmul.bf16.gmra.mxu0 %v357
  %v1834 = vpop.f32.mrf.mxu0
  %v1835 = vadd.f32 %v1821, %v1834
  %v1836 = vpop.f32.mrf.mxu0
  %v1837 = vadd.f32 %v1823, %v1836
  %1838 = vdwg.mxu0
  %1839 = vmatpush.bf16.msra.mxu0 %v1367
  %1840 = vmatpush.bf16.msra.mxu0 %v1365
  %1841 = vmatpush.bf16.msra.mxu0 %v1363
  %1842 = vmatpush.bf16.msra.mxu0 %v1361
  %1843 = vmatpush.bf16.msra.mxu0 %v1359
  %1844 = vmatpush.bf16.msra.mxu0 %v1357
  %1845 = vmatpush.bf16.msra.mxu0 %v1355
  %1846 = vmatpush.bf16.msra.mxu0 %v1353
  %1847 = vmatmul.bf16.gmra.mxu0 %v358
  %v1848 = vpop.f32.mrf.mxu0
  %v1849 = vadd.f32 %v1835, %v1848
  %v1850 = vpop.f32.mrf.mxu0
  %v1851 = vadd.f32 %v1837, %v1850
  %1852 = vdwg.mxu0
  %1853 = vmatpush.bf16.msra.mxu0 %v1383
  %1854 = vmatpush.bf16.msra.mxu0 %v1381
  %1855 = vmatpush.bf16.msra.mxu0 %v1379
  %1856 = vmatpush.bf16.msra.mxu0 %v1377
  %1857 = vmatpush.bf16.msra.mxu0 %v1375
  %1858 = vmatpush.bf16.msra.mxu0 %v1373
  %1859 = vmatpush.bf16.msra.mxu0 %v1371
  %1860 = vmatpush.bf16.msra.mxu0 %v1369
  %1861 = vmatmul.bf16.gmra.mxu0 %v359
  %v1862 = vpop.f32.mrf.mxu0
  %v1863 = vadd.f32 %v1849, %v1862
  %v1864 = vpop.f32.mrf.mxu0
  %v1865 = vadd.f32 %v1851, %v1864
  %1866 = vdwg.mxu0
  %1867 = vmatpush.bf16.msra.mxu0 %v1399
  %1868 = vmatpush.bf16.msra.mxu0 %v1397
  %1869 = vmatpush.bf16.msra.mxu0 %v1395
  %1870 = vmatpush.bf16.msra.mxu0 %v1393
  %1871 = vmatpush.bf16.msra.mxu0 %v1391
  %1872 = vmatpush.bf16.msra.mxu0 %v1389
  %1873 = vmatpush.bf16.msra.mxu0 %v1387
  %1874 = vmatpush.bf16.msra.mxu0 %v1385
  %1875 = vmatmul.bf16.gmra.mxu0 %v360
  %v1876 = vpop.f32.mrf.mxu0
  %v1877 = vadd.f32 %v1863, %v1876
  %v1878 = vpop.f32.mrf.mxu0
  %v1879 = vadd.f32 %v1865, %v1878
  %1880 = vdwg.mxu0
  %1881 = vmatpush.bf16.msra.mxu0 %v1160
  %1882 = vmatpush.bf16.msra.mxu0 %v1158
  %1883 = vmatpush.bf16.msra.mxu0 %v1156
  %1884 = vmatpush.bf16.msra.mxu0 %v1154
  %1885 = vmatpush.bf16.msra.mxu0 %v1152
  %1886 = vmatpush.bf16.msra.mxu0 %v1150
  %1887 = vmatpush.bf16.msra.mxu0 %v1148
  %1888 = vmatpush.bf16.msra.mxu0 %v1146
  %1889 = vmatmul.bf16.gmra.mxu0 %v345
  %v1890 = vpop.f32.mrf.mxu0
  %v1891 = vadd.f32 %v294, %v1890
  %v1892 = vpop.f32.mrf.mxu0
  %v1893 = vadd.f32 %v294, %v1892
  %1894 = vdwg.mxu0
  %1895 = vmatpush.bf16.msra.mxu0 %v1176
  %1896 = vmatpush.bf16.msra.mxu0 %v1174
  %1897 = vmatpush.bf16.msra.mxu0 %v1172
  %1898 = vmatpush.bf16.msra.mxu0 %v1170
  %1899 = vmatpush.bf16.msra.mxu0 %v1168
  %1900 = vmatpush.bf16.msra.mxu0 %v1166
  %1901 = vmatpush.bf16.msra.mxu0 %v1164
  %1902 = vmatpush.bf16.msra.mxu0 %v1162
  %1903 = vmatmul.bf16.gmra.mxu0 %v346
  %v1904 = vpop.f32.mrf.mxu0
  %v1905 = vadd.f32 %v1891, %v1904
  %v1906 = vpop.f32.mrf.mxu0
  %v1907 = vadd.f32 %v1893, %v1906
  %1908 = vdwg.mxu0
  %1909 = vmatpush.bf16.msra.mxu0 %v1192
  %1910 = vmatpush.bf16.msra.mxu0 %v1190
  %1911 = vmatpush.bf16.msra.mxu0 %v1188
  %1912 = vmatpush.bf16.msra.mxu0 %v1186
  %1913 = vmatpush.bf16.msra.mxu0 %v1184
  %1914 = vmatpush.bf16.msra.mxu0 %v1182
  %1915 = vmatpush.bf16.msra.mxu0 %v1180
  %1916 = vmatpush.bf16.msra.mxu0 %v1178
  %1917 = vmatmul.bf16.gmra.mxu0 %v347
  %v1918 = vpop.f32.mrf.mxu0
  %v1919 = vadd.f32 %v1905, %v1918
  %v1920 = vpop.f32.mrf.mxu0
  %v1921 = vadd.f32 %v1907, %v1920
  %1922 = vdwg.mxu0
  %1923 = vmatpush.bf16.msra.mxu0 %v1208
  %1924 = vmatpush.bf16.msra.mxu0 %v1206
  %1925 = vmatpush.bf16.msra.mxu0 %v1204
  %1926 = vmatpush.bf16.msra.mxu0 %v1202
  %1927 = vmatpush.bf16.msra.mxu0 %v1200
  %1928 = vmatpush.bf16.msra.mxu0 %v1198
  %1929 = vmatpush.bf16.msra.mxu0 %v1196
  %1930 = vmatpush.bf16.msra.mxu0 %v1194
  %1931 = vmatmul.bf16.gmra.mxu0 %v348
  %v1932 = vpop.f32.mrf.mxu0
  %v1933 = vadd.f32 %v1919, %v1932
  %v1934 = vpop.f32.mrf.mxu0
  %v1935 = vadd.f32 %v1921, %v1934
  %1936 = vdwg.mxu0
  %1937 = vmatpush.bf16.msra.mxu0 %v1224
  %1938 = vmatpush.bf16.msra.mxu0 %v1222
  %1939 = vmatpush.bf16.msra.mxu0 %v1220
  %1940 = vmatpush.bf16.msra.mxu0 %v1218
  %1941 = vmatpush.bf16.msra.mxu0 %v1216
  %1942 = vmatpush.bf16.msra.mxu0 %v1214
  %1943 = vmatpush.bf16.msra.mxu0 %v1212
  %1944 = vmatpush.bf16.msra.mxu0 %v1210
  %1945 = vmatmul.bf16.gmra.mxu0 %v349
  %v1946 = vpop.f32.mrf.mxu0
  %v1947 = vadd.f32 %v1933, %v1946
  %v1948 = vpop.f32.mrf.mxu0
  %v1949 = vadd.f32 %v1935, %v1948
  %1950 = vdwg.mxu0
  %1951 = vmatpush.bf16.msra.mxu0 %v1240
  %1952 = vmatpush.bf16.msra.mxu0 %v1238
  %1953 = vmatpush.bf16.msra.mxu0 %v1236
  %1954 = vmatpush.bf16.msra.mxu0 %v1234
  %1955 = vmatpush.bf16.msra.mxu0 %v1232
  %1956 = vmatpush.bf16.msra.mxu0 %v1230
  %1957 = vmatpush.bf16.msra.mxu0 %v1228
  %1958 = vmatpush.bf16.msra.mxu0 %v1226
  %1959 = vmatmul.bf16.gmra.mxu0 %v350
  %v1960 = vpop.f32.mrf.mxu0
  %v1961 = vadd.f32 %v1947, %v1960
  %v1962 = vpop.f32.mrf.mxu0
  %v1963 = vadd.f32 %v1949, %v1962
  %1964 = vdwg.mxu0
  %1965 = vmatpush.bf16.msra.mxu0 %v1256
  %1966 = vmatpush.bf16.msra.mxu0 %v1254
  %1967 = vmatpush.bf16.msra.mxu0 %v1252
  %1968 = vmatpush.bf16.msra.mxu0 %v1250
  %1969 = vmatpush.bf16.msra.mxu0 %v1248
  %1970 = vmatpush.bf16.msra.mxu0 %v1246
  %1971 = vmatpush.bf16.msra.mxu0 %v1244
  %1972 = vmatpush.bf16.msra.mxu0 %v1242
  %1973 = vmatmul.bf16.gmra.mxu0 %v351
  %v1974 = vpop.f32.mrf.mxu0
  %v1975 = vadd.f32 %v1961, %v1974
  %v1976 = vpop.f32.mrf.mxu0
  %v1977 = vadd.f32 %v1963, %v1976
  %1978 = vdwg.mxu0
  %1979 = vmatpush.bf16.msra.mxu0 %v1272
  %1980 = vmatpush.bf16.msra.mxu0 %v1270
  %1981 = vmatpush.bf16.msra.mxu0 %v1268
  %1982 = vmatpush.bf16.msra.mxu0 %v1266
  %1983 = vmatpush.bf16.msra.mxu0 %v1264
  %1984 = vmatpush.bf16.msra.mxu0 %v1262
  %1985 = vmatpush.bf16.msra.mxu0 %v1260
  %1986 = vmatpush.bf16.msra.mxu0 %v1258
  %1987 = vmatmul.bf16.gmra.mxu0 %v352
  %v1988 = vpop.f32.mrf.mxu0
  %v1989 = vadd.f32 %v1975, %v1988
  %v1990 = vpop.f32.mrf.mxu0
  %v1991 = vadd.f32 %v1977, %v1990
  %1992 = vdwg.mxu0
  %1993 = vmatpush.bf16.msra.mxu0 %v1288
  %1994 = vmatpush.bf16.msra.mxu0 %v1286
  %1995 = vmatpush.bf16.msra.mxu0 %v1284
  %1996 = vmatpush.bf16.msra.mxu0 %v1282
  %1997 = vmatpush.bf16.msra.mxu0 %v1280
  %1998 = vmatpush.bf16.msra.mxu0 %v1278
  %1999 = vmatpush.bf16.msra.mxu0 %v1276
  %2000 = vmatpush.bf16.msra.mxu0 %v1274
  %2001 = vmatmul.bf16.gmra.mxu0 %v353
  %v2002 = vpop.f32.mrf.mxu0
  %v2003 = vadd.f32 %v1989, %v2002
  %v2004 = vpop.f32.mrf.mxu0
  %v2005 = vadd.f32 %v1991, %v2004
  %2006 = vdwg.mxu0
  %2007 = vmatpush.bf16.msra.mxu0 %v1304
  %2008 = vmatpush.bf16.msra.mxu0 %v1302
  %2009 = vmatpush.bf16.msra.mxu0 %v1300
  %2010 = vmatpush.bf16.msra.mxu0 %v1298
  %2011 = vmatpush.bf16.msra.mxu0 %v1296
  %2012 = vmatpush.bf16.msra.mxu0 %v1294
  %2013 = vmatpush.bf16.msra.mxu0 %v1292
  %2014 = vmatpush.bf16.msra.mxu0 %v1290
  %2015 = vmatmul.bf16.gmra.mxu0 %v354
  %v2016 = vpop.f32.mrf.mxu0
  %v2017 = vadd.f32 %v2003, %v2016
  %v2018 = vpop.f32.mrf.mxu0
  %v2019 = vadd.f32 %v2005, %v2018
  %2020 = vdwg.mxu0
  %2021 = vmatpush.bf16.msra.mxu0 %v1320
  %2022 = vmatpush.bf16.msra.mxu0 %v1318
  %2023 = vmatpush.bf16.msra.mxu0 %v1316
  %2024 = vmatpush.bf16.msra.mxu0 %v1314
  %2025 = vmatpush.bf16.msra.mxu0 %v1312
  %2026 = vmatpush.bf16.msra.mxu0 %v1310
  %2027 = vmatpush.bf16.msra.mxu0 %v1308
  %2028 = vmatpush.bf16.msra.mxu0 %v1306
  %2029 = vmatmul.bf16.gmra.mxu0 %v355
  %v2030 = vpop.f32.mrf.mxu0
  %v2031 = vadd.f32 %v2017, %v2030
  %v2032 = vpop.f32.mrf.mxu0
  %v2033 = vadd.f32 %v2019, %v2032
  %2034 = vdwg.mxu0
  %2035 = vmatpush.bf16.msra.mxu0 %v1336
  %2036 = vmatpush.bf16.msra.mxu0 %v1334
  %2037 = vmatpush.bf16.msra.mxu0 %v1332
  %2038 = vmatpush.bf16.msra.mxu0 %v1330
  %2039 = vmatpush.bf16.msra.mxu0 %v1328
  %2040 = vmatpush.bf16.msra.mxu0 %v1326
  %2041 = vmatpush.bf16.msra.mxu0 %v1324
  %2042 = vmatpush.bf16.msra.mxu0 %v1322
  %2043 = vmatmul.bf16.gmra.mxu0 %v356
  %v2044 = vpop.f32.mrf.mxu0
  %v2045 = vadd.f32 %v2031, %v2044
  %v2046 = vpop.f32.mrf.mxu0
  %v2047 = vadd.f32 %v2033, %v2046
  %2048 = vdwg.mxu0
  %2049 = vmatpush.bf16.msra.mxu0 %v1352
  %2050 = vmatpush.bf16.msra.mxu0 %v1350
  %2051 = vmatpush.bf16.msra.mxu0 %v1348
  %2052 = vmatpush.bf16.msra.mxu0 %v1346
  %2053 = vmatpush.bf16.msra.mxu0 %v1344
  %2054 = vmatpush.bf16.msra.mxu0 %v1342
  %2055 = vmatpush.bf16.msra.mxu0 %v1340
  %2056 = vmatpush.bf16.msra.mxu0 %v1338
  %2057 = vmatmul.bf16.gmra.mxu0 %v357
  %v2058 = vpop.f32.mrf.mxu0
  %v2059 = vadd.f32 %v2045, %v2058
  %v2060 = vpop.f32.mrf.mxu0
  %v2061 = vadd.f32 %v2047, %v2060
  %2062 = vdwg.mxu0
  %2063 = vmatpush.bf16.msra.mxu0 %v1368
  %2064 = vmatpush.bf16.msra.mxu0 %v1366
  %2065 = vmatpush.bf16.msra.mxu0 %v1364
  %2066 = vmatpush.bf16.msra.mxu0 %v1362
  %2067 = vmatpush.bf16.msra.mxu0 %v1360
  %2068 = vmatpush.bf16.msra.mxu0 %v1358
  %2069 = vmatpush.bf16.msra.mxu0 %v1356
  %2070 = vmatpush.bf16.msra.mxu0 %v1354
  %2071 = vmatmul.bf16.gmra.mxu0 %v358
  %v2072 = vpop.f32.mrf.mxu0
  %v2073 = vadd.f32 %v2059, %v2072
  %v2074 = vpop.f32.mrf.mxu0
  %v2075 = vadd.f32 %v2061, %v2074
  %2076 = vdwg.mxu0
  %2077 = vmatpush.bf16.msra.mxu0 %v1384
  %2078 = vmatpush.bf16.msra.mxu0 %v1382
  %2079 = vmatpush.bf16.msra.mxu0 %v1380
  %2080 = vmatpush.bf16.msra.mxu0 %v1378
  %2081 = vmatpush.bf16.msra.mxu0 %v1376
  %2082 = vmatpush.bf16.msra.mxu0 %v1374
  %2083 = vmatpush.bf16.msra.mxu0 %v1372
  %2084 = vmatpush.bf16.msra.mxu0 %v1370
  %2085 = vmatmul.bf16.gmra.mxu0 %v359
  %v2086 = vpop.f32.mrf.mxu0
  %v2087 = vadd.f32 %v2073, %v2086
  %v2088 = vpop.f32.mrf.mxu0
  %v2089 = vadd.f32 %v2075, %v2088
  %2090 = vdwg.mxu0
  %2091 = vmatpush.bf16.msra.mxu0 %v1400
  %2092 = vmatpush.bf16.msra.mxu0 %v1398
  %2093 = vmatpush.bf16.msra.mxu0 %v1396
  %2094 = vmatpush.bf16.msra.mxu0 %v1394
  %2095 = vmatpush.bf16.msra.mxu0 %v1392
  %2096 = vmatpush.bf16.msra.mxu0 %v1390
  %2097 = vmatpush.bf16.msra.mxu0 %v1388
  %2098 = vmatpush.bf16.msra.mxu0 %v1386
  %2099 = vmatmul.bf16.gmra.mxu0 %v360
  %v2100 = vpop.f32.mrf.mxu0
  %v2101 = vadd.f32 %v2087, %v2100
  %v2102 = vpop.f32.mrf.mxu0
  %v2103 = vadd.f32 %v2089, %v2102
  %2104 = vdwg.mxu0
  %2105 = vst [vmem:[%s4] sm:$0xff] %v1877
  %2106 = vst [vmem:[%s4 + $0x8] sm:$0xff] %v2101
  %2107 = vst [vmem:[%s4 + $0x10] sm:$0xff] %v1879
  %2108 = vst [vmem:[%s4 + $0x18] sm:$0xff] %v2103
  %v2109 = vmul.f32 %v2101, 0.5
  %v2110 = vmul.f32 %v2103, 0.5
  %v2111 = vmul.f32 %v2109, 1.442695
  %v2112 = vpow.pop %v2111
  %v2113 = vmul.f32 %v2110, 1.442695
  %v2114 = vpow.pop %v2113
  %v2115 = vld [vmem:[%s3] sm:$0xff]
  %v2116 = vld [vmem:[%s3 + $0x8] sm:$0xff]
  %v2117 = vmul.f32 %v2112, %v2115
  %v2118 = vmul.f32 %v2114, %v2116
  %v2119 = vadd.f32 %v1877, %v2117
  %v2120 = vadd.f32 %v1879, %v2118
  %2121 = vst [vmem:[%s5] sm:$0xff] %v2119
  %2122 = vst [vmem:[%s5 + $0x8] sm:$0xff] %v2120
  // Predicated region
  $region18: #{vae_forward.12} parent=0 // pred_check
    _
  $region19: #{vae_forward.12} parent=0 // pred_check_branch
    %2124 = sbr.rel (0) target = $region21
  $region20: #{vae_forward.12} parent=0 // pred_region
    _
  $region21: #{vae_forward.12} parent=0 // pred_fallthru
    _
  // Predicated region
  $region22: #{vae_forward.12} parent=0 // pred_check
    _
  $region23: #{vae_forward.12} parent=0 // pred_check_branch
    %2126 = sbr.rel (0) target = $region25
  $region24: #{vae_forward.12} parent=0 // pred_region
    _
  $region25: #{vae_forward.12} parent=0 // pred_fallthru
    _
  // Predicated region
  $region26: #{vae_forward.12} parent=0 // pred_check
    _
  $region27: #{vae_forward.12} parent=0 // pred_check_branch
    %2128 = sbr.rel (0) target = $region29
  $region28: #{vae_forward.12} parent=0 // pred_region
    _
  $region29: #{vae_forward.12} parent=0 // pred_fallthru
    _
  // Predicated region
  $region30: #{vae_forward.12} parent=0 // pred_check
    _
  $region31: #{vae_forward.12} parent=0 // pred_check_branch
    %2130 = sbr.rel (0) target = $region33
  $region32: #{vae_forward.12} parent=0 // pred_region
    _
  $region33: #{vae_forward.12} parent=0 // pred_fallthru
    _

// kernel: tile.18
$region0: #{tile.18}
  #allocation0 [shape = 's32[1]{0}', space=sflag, size = 0x4, scoped, tag = 'scoped memory for tile.18']
  %s0 = inlined_call_operand.vmem [shape: f32[128], index: 0, kind: input, shape index: {}]
  %s1 = inlined_call_operand.vmem [shape: f32[4,128], index: 1, kind: output, shape index: {}]
  // Predicated region
  $region2: #{tile.18} parent=0 // pred_check
    _
  $region3: #{tile.18} parent=0 // pred_check_branch
    %3 = sbr.rel (0) target = $region5
  $region4: #{tile.18} parent=0 // pred_region
    _
  $region5: #{tile.18} parent=0 // pred_fallthru
    _
  %v4 = vld [vmem:[%s0] ss:$0 sm:$0xff]
  %5 = vst [vmem:[%s1] sm:$0xf] %v4

// kernel: vae_forward.14
$region0: #{vae_forward.14}
  #allocation0 [shape = 'u32[]', space=smem, size = 0x4, offset = 0x4, fixed_abs, tag = 'smem constant byte address 0x4 - core index']
  #allocation1 [shape = 'u32[72,128]{1,0:T(1,128)}', space=vmem, size = 0x9000, scoped, tag = 'internal scratch']
  %s0 = inlined_call_operand.vmem [shape: bf16[32,512], index: 0, kind: input, shape index: {}]
  %s1 = inlined_call_operand.vmem [shape: bf16[512,512], index: 1, kind: input, shape index: {}]
  %s2 = inlined_call_operand.vmem [shape: f32[1,512], index: 2, kind: input, shape index: {}]
  %s3 = inlined_call_operand.vmem [shape: f32[32,512], index: 3, kind: output, shape index: {}]
  %s4 = sld [smem:[#allocation0]]
  $region22: #{vae_forward.14} parent=0
    _
  %s6 = ssub.s32 1, %s4
  %s7 = scalar_select 0, %s6, %s4
  // Predicated region
  $region2: #{vae_forward.14} parent=0 // pred_check
    _
  $region3: #{vae_forward.14} parent=0 // pred_check_branch
    %9 = sbr.rel (0) target = $region5
  $region4: #{vae_forward.14} parent=0 // pred_region
    _
  $region5: #{vae_forward.14} parent=0 // pred_fallthru
    _
  // Predicated region
  $region6: #{vae_forward.14} parent=0 // pred_check
    _
  $region7: #{vae_forward.14} parent=0 // pred_check_branch
    %11 = sbr.rel (0) target = $region9
  $region8: #{vae_forward.14} parent=0 // pred_region
    _
  $region9: #{vae_forward.14} parent=0 // pred_fallthru
    _
  // Predicated region
  $region10: #{vae_forward.14} parent=0 // pred_check
    _
  $region11: #{vae_forward.14} parent=0 // pred_check_branch
    %13 = sbr.rel (0) target = $region13
  $region12: #{vae_forward.14} parent=0 // pred_region
    _
  $region13: #{vae_forward.14} parent=0 // pred_fallthru
    _
  %v14 = vld [vmem:[%s0] sm:$0xff]
  %v15 = vld [vmem:[%s0 + $0x8] sm:$0xff]
  %v16 = vld [vmem:[%s0 + $0x10] sm:$0xff]
  %v17 = vld [vmem:[%s0 + $0x18] sm:$0xff]
  %v18 = vld [vmem:[%s0 + $0x20] sm:$0xff]
  %v19 = vld [vmem:[%s0 + $0x28] sm:$0xff]
  %v20 = vld [vmem:[%s0 + $0x30] sm:$0xff]
  %v21 = vld [vmem:[%s0 + $0x38] sm:$0xff]
  %v22 = vld [vmem:[%s1] sm:$0xff]
  %v23 = vld [vmem:[%s1 + $0x8] sm:$0xff]
  %v24 = vld [vmem:[%s1 + $0x10] sm:$0xff]
  %v25 = vld [vmem:[%s1 + $0x18] sm:$0xff]
  %v26 = vld [vmem:[%s1 + $0x20] sm:$0xff]
  %v27 = vld [vmem:[%s1 + $0x28] sm:$0xff]
  %v28 = vld [vmem:[%s1 + $0x30] sm:$0xff]
  %v29 = vld [vmem:[%s1 + $0x38] sm:$0xff]
  %v30 = vld [vmem:[%s1 + $0x40] sm:$0xff]
  %v31 = vld [vmem:[%s1 + $0x48] sm:$0xff]
  %v32 = vld [vmem:[%s1 + $0x50] sm:$0xff]
  %v33 = vld [vmem:[%s1 + $0x58] sm:$0xff]
  %v34 = vld [vmem:[%s1 + $0x60] sm:$0xff]
  %v35 = vld [vmem:[%s1 + $0x68] sm:$0xff]
  %v36 = vld [vmem:[%s1 + $0x70] sm:$0xff]
  %v37 = vld [vmem:[%s1 + $0x78] sm:$0xff]
  %v38 = vld [vmem:[%s1 + $0x80] sm:$0xff]
  %v39 = vld [vmem:[%s1 + $0x88] sm:$0xff]
  %v40 = vld [vmem:[%s1 + $0x90] sm:$0xff]
  %v41 = vld [vmem:[%s1 + $0x98] sm:$0xff]
  %v42 = vld [vmem:[%s1 + $0xa0] sm:$0xff]
  %v43 = vld [vmem:[%s1 + $0xa8] sm:$0xff]
  %v44 = vld [vmem:[%s1 + $0xb0] sm:$0xff]
  %v45 = vld [vmem:[%s1 + $0xb8] sm:$0xff]
  %v46 = vld [vmem:[%s1 + $0xc0] sm:$0xff]
  %v47 = vld [vmem:[%s1 + $0xc8] sm:$0xff]
  %v48 = vld [vmem:[%s1 + $0xd0] sm:$0xff]
  %v49 = vld [vmem:[%s1 + $0xd8] sm:$0xff]
  %v50 = vld [vmem:[%s1 + $0xe0] sm:$0xff]
  %v51 = vld [vmem:[%s1 + $0xe8] sm:$0xff]
  %v52 = vld [vmem:[%s1 + $0xf0] sm:$0xff]
  %v53 = vld [vmem:[%s1 + $0xf8] sm:$0xff]
  %v54 = vld [vmem:[%s1 + $0x100] sm:$0xff]
  %v55 = vld [vmem:[%s1 + $0x108] sm:$0xff]
  %v56 = vld [vmem:[%s1 + $0x110] sm:$0xff]
  %v57 = vld [vmem:[%s1 + $0x118] sm:$0xff]
  %v58 = vld [vmem:[%s1 + $0x120] sm:$0xff]
  %v59 = vld [vmem:[%s1 + $0x128] sm:$0xff]
  %v60 = vld [vmem:[%s1 + $0x130] sm:$0xff]
  %v61 = vld [vmem:[%s1 + $0x138] sm:$0xff]
  %v62 = vld [vmem:[%s1 + $0x140] sm:$0xff]
  %v63 = vld [vmem:[%s1 + $0x148] sm:$0xff]
  %v64 = vld [vmem:[%s1 + $0x150] sm:$0xff]
  %v65 = vld [vmem:[%s1 + $0x158] sm:$0xff]
  %v66 = vld [vmem:[%s1 + $0x160] sm:$0xff]
  %v67 = vld [vmem:[%s1 + $0x168] sm:$0xff]
  %v68 = vld [vmem:[%s1 + $0x170] sm:$0xff]
  %v69 = vld [vmem:[%s1 + $0x178] sm:$0xff]
  %v70 = vld [vmem:[%s1 + $0x180] sm:$0xff]
  %v71 = vld [vmem:[%s1 + $0x188] sm:$0xff]
  %v72 = vld [vmem:[%s1 + $0x190] sm:$0xff]
  %v73 = vld [vmem:[%s1 + $0x198] sm:$0xff]
  %v74 = vld [vmem:[%s1 + $0x1a0] sm:$0xff]
  %v75 = vld [vmem:[%s1 + $0x1a8] sm:$0xff]
  %v76 = vld [vmem:[%s1 + $0x1b0] sm:$0xff]
  %v77 = vld [vmem:[%s1 + $0x1b8] sm:$0xff]
  %v78 = vld [vmem:[%s1 + $0x1c0] sm:$0xff]
  %v79 = vld [vmem:[%s1 + $0x1c8] sm:$0xff]
  %v80 = vld [vmem:[%s1 + $0x1d0] sm:$0xff]
  %v81 = vld [vmem:[%s1 + $0x1d8] sm:$0xff]
  %v82 = vld [vmem:[%s1 + $0x1e0] sm:$0xff]
  %v83 = vld [vmem:[%s1 + $0x1e8] sm:$0xff]
  %v84 = vld [vmem:[%s1 + $0x1f0] sm:$0xff]
  %v85 = vld [vmem:[%s1 + $0x1f8] sm:$0xff]
  %v86 = vld [vmem:[%s1 + $0x200] sm:$0xff]
  %v87 = vld [vmem:[%s1 + $0x208] sm:$0xff]
  %v88 = vld [vmem:[%s1 + $0x210] sm:$0xff]
  %v89 = vld [vmem:[%s1 + $0x218] sm:$0xff]
  %v90 = vld [vmem:[%s1 + $0x220] sm:$0xff]
  %v91 = vld [vmem:[%s1 + $0x228] sm:$0xff]
  %v92 = vld [vmem:[%s1 + $0x230] sm:$0xff]
  %v93 = vld [vmem:[%s1 + $0x238] sm:$0xff]
  %v94 = vld [vmem:[%s1 + $0x240] sm:$0xff]
  %v95 = vld [vmem:[%s1 + $0x248] sm:$0xff]
  %v96 = vld [vmem:[%s1 + $0x250] sm:$0xff]
  %v97 = vld [vmem:[%s1 + $0x258] sm:$0xff]
  %v98 = vld [vmem:[%s1 + $0x260] sm:$0xff]
  %v99 = vld [vmem:[%s1 + $0x268] sm:$0xff]
  %v100 = vld [vmem:[%s1 + $0x270] sm:$0xff]
  %v101 = vld [vmem:[%s1 + $0x278] sm:$0xff]
  %v102 = vld [vmem:[%s1 + $0x280] sm:$0xff]
  %v103 = vld [vmem:[%s1 + $0x288] sm:$0xff]
  %v104 = vld [vmem:[%s1 + $0x290] sm:$0xff]
  %v105 = vld [vmem:[%s1 + $0x298] sm:$0xff]
  %v106 = vld [vmem:[%s1 + $0x2a0] sm:$0xff]
  %v107 = vld [vmem:[%s1 + $0x2a8] sm:$0xff]
  %v108 = vld [vmem:[%s1 + $0x2b0] sm:$0xff]
  %v109 = vld [vmem:[%s1 + $0x2b8] sm:$0xff]
  %v110 = vld [vmem:[%s1 + $0x2c0] sm:$0xff]
  %v111 = vld [vmem:[%s1 + $0x2c8] sm:$0xff]
  %v112 = vld [vmem:[%s1 + $0x2d0] sm:$0xff]
  %v113 = vld [vmem:[%s1 + $0x2d8] sm:$0xff]
  %v114 = vld [vmem:[%s1 + $0x2e0] sm:$0xff]
  %v115 = vld [vmem:[%s1 + $0x2e8] sm:$0xff]
  %v116 = vld [vmem:[%s1 + $0x2f0] sm:$0xff]
  %v117 = vld [vmem:[%s1 + $0x2f8] sm:$0xff]
  %v118 = vld [vmem:[%s1 + $0x300] sm:$0xff]
  %v119 = vld [vmem:[%s1 + $0x308] sm:$0xff]
  %v120 = vld [vmem:[%s1 + $0x310] sm:$0xff]
  %v121 = vld [vmem:[%s1 + $0x318] sm:$0xff]
  %v122 = vld [vmem:[%s1 + $0x320] sm:$0xff]
  %v123 = vld [vmem:[%s1 + $0x328] sm:$0xff]
  %v124 = vld [vmem:[%s1 + $0x330] sm:$0xff]
  %v125 = vld [vmem:[%s1 + $0x338] sm:$0xff]
  %v126 = vld [vmem:[%s1 + $0x340] sm:$0xff]
  %v127 = vld [vmem:[%s1 + $0x348] sm:$0xff]
  %v128 = vld [vmem:[%s1 + $0x350] sm:$0xff]
  %v129 = vld [vmem:[%s1 + $0x358] sm:$0xff]
  %v130 = vld [vmem:[%s1 + $0x360] sm:$0xff]
  %v131 = vld [vmem:[%s1 + $0x368] sm:$0xff]
  %v132 = vld [vmem:[%s1 + $0x370] sm:$0xff]
  %v133 = vld [vmem:[%s1 + $0x378] sm:$0xff]
  %v134 = vld [vmem:[%s1 + $0x380] sm:$0xff]
  %v135 = vld [vmem:[%s1 + $0x388] sm:$0xff]
  %v136 = vld [vmem:[%s1 + $0x390] sm:$0xff]
  %v137 = vld [vmem:[%s1 + $0x398] sm:$0xff]
  %v138 = vld [vmem:[%s1 + $0x3a0] sm:$0xff]
  %v139 = vld [vmem:[%s1 + $0x3a8] sm:$0xff]
  %v140 = vld [vmem:[%s1 + $0x3b0] sm:$0xff]
  %v141 = vld [vmem:[%s1 + $0x3b8] sm:$0xff]
  %v142 = vld [vmem:[%s1 + $0x3c0] sm:$0xff]
  %v143 = vld [vmem:[%s1 + $0x3c8] sm:$0xff]
  %v144 = vld [vmem:[%s1 + $0x3d0] sm:$0xff]
  %v145 = vld [vmem:[%s1 + $0x3d8] sm:$0xff]
  %v146 = vld [vmem:[%s1 + $0x3e0] sm:$0xff]
  %v147 = vld [vmem:[%s1 + $0x3e8] sm:$0xff]
  %v148 = vld [vmem:[%s1 + $0x3f0] sm:$0xff]
  %v149 = vld [vmem:[%s1 + $0x3f8] sm:$0xff]
  %v150 = vld [vmem:[%s2] sm:$0xf]
  %v152 = vperm.slane %v150, 0
  %v153 = vperm.slane %v150, 1
  %v154 = vperm.slane %v150, 2
  %v155 = vperm.slane %v150, 3
  %v168 = vunpack.c.l.b16 %v14
  %v169 = vunpack.c.h.b16 %v14
  %v170 = vunpack.c.l.b16 %v15
  %v171 = vunpack.c.h.b16 %v15
  %v172 = vunpack.c.l.b16 %v16
  %v173 = vunpack.c.h.b16 %v16
  %v174 = vunpack.c.l.b16 %v17
  %v175 = vunpack.c.h.b16 %v17
  %v176 = vunpack.c.l.b16 %v18
  %v177 = vunpack.c.h.b16 %v18
  %v178 = vunpack.c.l.b16 %v19
  %v179 = vunpack.c.h.b16 %v19
  %v180 = vunpack.c.l.b16 %v20
  %v181 = vunpack.c.h.b16 %v20
  %v182 = vunpack.c.l.b16 %v21
  %v183 = vunpack.c.h.b16 %v21
  %v184 = vpack.c.b16 %v172, %v168
  %v185 = vpack.c.b16 %v173, %v169
  %v186 = vpack.c.b16 %v174, %v170
  %v187 = vpack.c.b16 %v175, %v171
  %v188 = vpack.c.b16 %v180, %v176
  %v189 = vpack.c.b16 %v181, %v177
  %v190 = vpack.c.b16 %v182, %v178
  %v191 = vpack.c.b16 %v183, %v179
  %v328 = vunpack.c.l.b16 %v22
  %v329 = vunpack.c.h.b16 %v22
  %v330 = vunpack.c.l.b16 %v23
  %v331 = vunpack.c.h.b16 %v23
  %v332 = vunpack.c.l.b16 %v24
  %v333 = vunpack.c.h.b16 %v24
  %v334 = vunpack.c.l.b16 %v25
  %v335 = vunpack.c.h.b16 %v25
  %v336 = vunpack.c.l.b16 %v26
  %v337 = vunpack.c.h.b16 %v26
  %v338 = vunpack.c.l.b16 %v27
  %v339 = vunpack.c.h.b16 %v27
  %v340 = vunpack.c.l.b16 %v28
  %v341 = vunpack.c.h.b16 %v28
  %v342 = vunpack.c.l.b16 %v29
  %v343 = vunpack.c.h.b16 %v29
  %v344 = vunpack.c.l.b16 %v30
  %v345 = vunpack.c.h.b16 %v30
  %v346 = vunpack.c.l.b16 %v31
  %v347 = vunpack.c.h.b16 %v31
  %v348 = vunpack.c.l.b16 %v32
  %v349 = vunpack.c.h.b16 %v32
  %v350 = vunpack.c.l.b16 %v33
  %v351 = vunpack.c.h.b16 %v33
  %v352 = vunpack.c.l.b16 %v34
  %v353 = vunpack.c.h.b16 %v34
  %v354 = vunpack.c.l.b16 %v35
  %v355 = vunpack.c.h.b16 %v35
  %v356 = vunpack.c.l.b16 %v36
  %v357 = vunpack.c.h.b16 %v36
  %v358 = vunpack.c.l.b16 %v37
  %v359 = vunpack.c.h.b16 %v37
  %v360 = vunpack.c.l.b16 %v38
  %v361 = vunpack.c.h.b16 %v38
  %v362 = vunpack.c.l.b16 %v39
  %v363 = vunpack.c.h.b16 %v39
  %v364 = vunpack.c.l.b16 %v40
  %v365 = vunpack.c.h.b16 %v40
  %v366 = vunpack.c.l.b16 %v41
  %v367 = vunpack.c.h.b16 %v41
  %v368 = vunpack.c.l.b16 %v42
  %v369 = vunpack.c.h.b16 %v42
  %v370 = vunpack.c.l.b16 %v43
  %v371 = vunpack.c.h.b16 %v43
  %v372 = vunpack.c.l.b16 %v44
  %v373 = vunpack.c.h.b16 %v44
  %v374 = vunpack.c.l.b16 %v45
  %v375 = vunpack.c.h.b16 %v45
  %v376 = vunpack.c.l.b16 %v46
  %v377 = vunpack.c.h.b16 %v46
  %v378 = vunpack.c.l.b16 %v47
  %v379 = vunpack.c.h.b16 %v47
  %v380 = vunpack.c.l.b16 %v48
  %v381 = vunpack.c.h.b16 %v48
  %v382 = vunpack.c.l.b16 %v49
  %v383 = vunpack.c.h.b16 %v49
  %v384 = vunpack.c.l.b16 %v50
  %v385 = vunpack.c.h.b16 %v50
  %v386 = vunpack.c.l.b16 %v51
  %v387 = vunpack.c.h.b16 %v51
  %v388 = vunpack.c.l.b16 %v52
  %v389 = vunpack.c.h.b16 %v52
  %v390 = vunpack.c.l.b16 %v53
  %v391 = vunpack.c.h.b16 %v53
  %v392 = vunpack.c.l.b16 %v54
  %v393 = vunpack.c.h.b16 %v54
  %v394 = vunpack.c.l.b16 %v55
  %v395 = vunpack.c.h.b16 %v55
  %v396 = vunpack.c.l.b16 %v56
  %v397 = vunpack.c.h.b16 %v56
  %v398 = vunpack.c.l.b16 %v57
  %v399 = vunpack.c.h.b16 %v57
  %v400 = vunpack.c.l.b16 %v58
  %v401 = vunpack.c.h.b16 %v58
  %v402 = vunpack.c.l.b16 %v59
  %v403 = vunpack.c.h.b16 %v59
  %v404 = vunpack.c.l.b16 %v60
  %v405 = vunpack.c.h.b16 %v60
  %v406 = vunpack.c.l.b16 %v61
  %v407 = vunpack.c.h.b16 %v61
  %v408 = vunpack.c.l.b16 %v62
  %v409 = vunpack.c.h.b16 %v62
  %v410 = vunpack.c.l.b16 %v63
  %v411 = vunpack.c.h.b16 %v63
  %v412 = vunpack.c.l.b16 %v64
  %v413 = vunpack.c.h.b16 %v64
  %v414 = vunpack.c.l.b16 %v65
  %v415 = vunpack.c.h.b16 %v65
  %v416 = vunpack.c.l.b16 %v66
  %v417 = vunpack.c.h.b16 %v66
  %v418 = vunpack.c.l.b16 %v67
  %v419 = vunpack.c.h.b16 %v67
  %v420 = vunpack.c.l.b16 %v68
  %v421 = vunpack.c.h.b16 %v68
  %v422 = vunpack.c.l.b16 %v69
  %v423 = vunpack.c.h.b16 %v69
  %v424 = vunpack.c.l.b16 %v70
  %v425 = vunpack.c.h.b16 %v70
  %v426 = vunpack.c.l.b16 %v71
  %v427 = vunpack.c.h.b16 %v71
  %v428 = vunpack.c.l.b16 %v72
  %v429 = vunpack.c.h.b16 %v72
  %v430 = vunpack.c.l.b16 %v73
  %v431 = vunpack.c.h.b16 %v73
  %v432 = vunpack.c.l.b16 %v74
  %v433 = vunpack.c.h.b16 %v74
  %v434 = vunpack.c.l.b16 %v75
  %v435 = vunpack.c.h.b16 %v75
  %v436 = vunpack.c.l.b16 %v76
  %v437 = vunpack.c.h.b16 %v76
  %v438 = vunpack.c.l.b16 %v77
  %v439 = vunpack.c.h.b16 %v77
  %v440 = vunpack.c.l.b16 %v78
  %v441 = vunpack.c.h.b16 %v78
  %v442 = vunpack.c.l.b16 %v79
  %v443 = vunpack.c.h.b16 %v79
  %v444 = vunpack.c.l.b16 %v80
  %v445 = vunpack.c.h.b16 %v80
  %v446 = vunpack.c.l.b16 %v81
  %v447 = vunpack.c.h.b16 %v81
  %v448 = vunpack.c.l.b16 %v82
  %v449 = vunpack.c.h.b16 %v82
  %v450 = vunpack.c.l.b16 %v83
  %v451 = vunpack.c.h.b16 %v83
  %v452 = vunpack.c.l.b16 %v84
  %v453 = vunpack.c.h.b16 %v84
  %v454 = vunpack.c.l.b16 %v85
  %v455 = vunpack.c.h.b16 %v85
  %v456 = vunpack.c.l.b16 %v86
  %v457 = vunpack.c.h.b16 %v86
  %v458 = vunpack.c.l.b16 %v87
  %v459 = vunpack.c.h.b16 %v87
  %v460 = vunpack.c.l.b16 %v88
  %v461 = vunpack.c.h.b16 %v88
  %v462 = vunpack.c.l.b16 %v89
  %v463 = vunpack.c.h.b16 %v89
  %v464 = vunpack.c.l.b16 %v90
  %v465 = vunpack.c.h.b16 %v90
  %v466 = vunpack.c.l.b16 %v91
  %v467 = vunpack.c.h.b16 %v91
  %v468 = vunpack.c.l.b16 %v92
  %v469 = vunpack.c.h.b16 %v92
  %v470 = vunpack.c.l.b16 %v93
  %v471 = vunpack.c.h.b16 %v93
  %v472 = vunpack.c.l.b16 %v94
  %v473 = vunpack.c.h.b16 %v94
  %v474 = vunpack.c.l.b16 %v95
  %v475 = vunpack.c.h.b16 %v95
  %v476 = vunpack.c.l.b16 %v96
  %v477 = vunpack.c.h.b16 %v96
  %v478 = vunpack.c.l.b16 %v97
  %v479 = vunpack.c.h.b16 %v97
  %v480 = vunpack.c.l.b16 %v98
  %v481 = vunpack.c.h.b16 %v98
  %v482 = vunpack.c.l.b16 %v99
  %v483 = vunpack.c.h.b16 %v99
  %v484 = vunpack.c.l.b16 %v100
  %v485 = vunpack.c.h.b16 %v100
  %v486 = vunpack.c.l.b16 %v101
  %v487 = vunpack.c.h.b16 %v101
  %v488 = vunpack.c.l.b16 %v102
  %v489 = vunpack.c.h.b16 %v102
  %v490 = vunpack.c.l.b16 %v103
  %v491 = vunpack.c.h.b16 %v103
  %v492 = vunpack.c.l.b16 %v104
  %v493 = vunpack.c.h.b16 %v104
  %v494 = vunpack.c.l.b16 %v105
  %v495 = vunpack.c.h.b16 %v105
  %v496 = vunpack.c.l.b16 %v106
  %v497 = vunpack.c.h.b16 %v106
  %v498 = vunpack.c.l.b16 %v107
  %v499 = vunpack.c.h.b16 %v107
  %v500 = vunpack.c.l.b16 %v108
  %v501 = vunpack.c.h.b16 %v108
  %v502 = vunpack.c.l.b16 %v109
  %v503 = vunpack.c.h.b16 %v109
  %v504 = vunpack.c.l.b16 %v110
  %v505 = vunpack.c.h.b16 %v110
  %v506 = vunpack.c.l.b16 %v111
  %v507 = vunpack.c.h.b16 %v111
  %v508 = vunpack.c.l.b16 %v112
  %v509 = vunpack.c.h.b16 %v112
  %v510 = vunpack.c.l.b16 %v113
  %v511 = vunpack.c.h.b16 %v113
  %v512 = vunpack.c.l.b16 %v114
  %v513 = vunpack.c.h.b16 %v114
  %v514 = vunpack.c.l.b16 %v115
  %v515 = vunpack.c.h.b16 %v115
  %v516 = vunpack.c.l.b16 %v116
  %v517 = vunpack.c.h.b16 %v116
  %v518 = vunpack.c.l.b16 %v117
  %v519 = vunpack.c.h.b16 %v117
  %v520 = vunpack.c.l.b16 %v118
  %v521 = vunpack.c.h.b16 %v118
  %v522 = vunpack.c.l.b16 %v119
  %v523 = vunpack.c.h.b16 %v119
  %v524 = vunpack.c.l.b16 %v120
  %v525 = vunpack.c.h.b16 %v120
  %v526 = vunpack.c.l.b16 %v121
  %v527 = vunpack.c.h.b16 %v121
  %v528 = vunpack.c.l.b16 %v122
  %v529 = vunpack.c.h.b16 %v122
  %v530 = vunpack.c.l.b16 %v123
  %v531 = vunpack.c.h.b16 %v123
  %v532 = vunpack.c.l.b16 %v124
  %v533 = vunpack.c.h.b16 %v124
  %v534 = vunpack.c.l.b16 %v125
  %v535 = vunpack.c.h.b16 %v125
  %v536 = vunpack.c.l.b16 %v126
  %v537 = vunpack.c.h.b16 %v126
  %v538 = vunpack.c.l.b16 %v127
  %v539 = vunpack.c.h.b16 %v127
  %v540 = vunpack.c.l.b16 %v128
  %v541 = vunpack.c.h.b16 %v128
  %v542 = vunpack.c.l.b16 %v129
  %v543 = vunpack.c.h.b16 %v129
  %v544 = vunpack.c.l.b16 %v130
  %v545 = vunpack.c.h.b16 %v130
  %v546 = vunpack.c.l.b16 %v131
  %v547 = vunpack.c.h.b16 %v131
  %v548 = vunpack.c.l.b16 %v132
  %v549 = vunpack.c.h.b16 %v132
  %v550 = vunpack.c.l.b16 %v133
  %v551 = vunpack.c.h.b16 %v133
  %v552 = vunpack.c.l.b16 %v134
  %v553 = vunpack.c.h.b16 %v134
  %v554 = vunpack.c.l.b16 %v135
  %v555 = vunpack.c.h.b16 %v135
  %v556 = vunpack.c.l.b16 %v136
  %v557 = vunpack.c.h.b16 %v136
  %v558 = vunpack.c.l.b16 %v137
  %v559 = vunpack.c.h.b16 %v137
  %v560 = vunpack.c.l.b16 %v138
  %v561 = vunpack.c.h.b16 %v138
  %v562 = vunpack.c.l.b16 %v139
  %v563 = vunpack.c.h.b16 %v139
  %v564 = vunpack.c.l.b16 %v140
  %v565 = vunpack.c.h.b16 %v140
  %v566 = vunpack.c.l.b16 %v141
  %v567 = vunpack.c.h.b16 %v141
  %v568 = vunpack.c.l.b16 %v142
  %v569 = vunpack.c.h.b16 %v142
  %v570 = vunpack.c.l.b16 %v143
  %v571 = vunpack.c.h.b16 %v143
  %v572 = vunpack.c.l.b16 %v144
  %v573 = vunpack.c.h.b16 %v144
  %v574 = vunpack.c.l.b16 %v145
  %v575 = vunpack.c.h.b16 %v145
  %v576 = vunpack.c.l.b16 %v146
  %v577 = vunpack.c.h.b16 %v146
  %v578 = vunpack.c.l.b16 %v147
  %v579 = vunpack.c.h.b16 %v147
  %v580 = vunpack.c.l.b16 %v148
  %v581 = vunpack.c.h.b16 %v148
  %v582 = vunpack.c.l.b16 %v149
  %v583 = vunpack.c.h.b16 %v149
  %v584 = vpack.c.b16 %v332, %v328
  %v585 = vpack.c.b16 %v333, %v329
  %v586 = vpack.c.b16 %v334, %v330
  %v587 = vpack.c.b16 %v335, %v331
  %v588 = vpack.c.b16 %v340, %v336
  %v589 = vpack.c.b16 %v341, %v337
  %v590 = vpack.c.b16 %v342, %v338
  %v591 = vpack.c.b16 %v343, %v339
  %v592 = vpack.c.b16 %v348, %v344
  %v593 = vpack.c.b16 %v349, %v345
  %v594 = vpack.c.b16 %v350, %v346
  %v595 = vpack.c.b16 %v351, %v347
  %v596 = vpack.c.b16 %v356, %v352
  %v597 = vpack.c.b16 %v357, %v353
  %v598 = vpack.c.b16 %v358, %v354
  %v599 = vpack.c.b16 %v359, %v355
  %v600 = vpack.c.b16 %v364, %v360
  %v601 = vpack.c.b16 %v365, %v361
  %v602 = vpack.c.b16 %v366, %v362
  %v603 = vpack.c.b16 %v367, %v363
  %v604 = vpack.c.b16 %v372, %v368
  %v605 = vpack.c.b16 %v373, %v369
  %v606 = vpack.c.b16 %v374, %v370
  %v607 = vpack.c.b16 %v375, %v371
  %v608 = vpack.c.b16 %v380, %v376
  %v609 = vpack.c.b16 %v381, %v377
  %v610 = vpack.c.b16 %v382, %v378
  %v611 = vpack.c.b16 %v383, %v379
  %v612 = vpack.c.b16 %v388, %v384
  %v613 = vpack.c.b16 %v389, %v385
  %v614 = vpack.c.b16 %v390, %v386
  %v615 = vpack.c.b16 %v391, %v387
  %v616 = vpack.c.b16 %v396, %v392
  %v617 = vpack.c.b16 %v397, %v393
  %v618 = vpack.c.b16 %v398, %v394
  %v619 = vpack.c.b16 %v399, %v395
  %v620 = vpack.c.b16 %v404, %v400
  %v621 = vpack.c.b16 %v405, %v401
  %v622 = vpack.c.b16 %v406, %v402
  %v623 = vpack.c.b16 %v407, %v403
  %v624 = vpack.c.b16 %v412, %v408
  %v625 = vpack.c.b16 %v413, %v409
  %v626 = vpack.c.b16 %v414, %v410
  %v627 = vpack.c.b16 %v415, %v411
  %v628 = vpack.c.b16 %v420, %v416
  %v629 = vpack.c.b16 %v421, %v417
  %v630 = vpack.c.b16 %v422, %v418
  %v631 = vpack.c.b16 %v423, %v419
  %v632 = vpack.c.b16 %v428, %v424
  %v633 = vpack.c.b16 %v429, %v425
  %v634 = vpack.c.b16 %v430, %v426
  %v635 = vpack.c.b16 %v431, %v427
  %v636 = vpack.c.b16 %v436, %v432
  %v637 = vpack.c.b16 %v437, %v433
  %v638 = vpack.c.b16 %v438, %v434
  %v639 = vpack.c.b16 %v439, %v435
  %v640 = vpack.c.b16 %v444, %v440
  %v641 = vpack.c.b16 %v445, %v441
  %v642 = vpack.c.b16 %v446, %v442
  %v643 = vpack.c.b16 %v447, %v443
  %v644 = vpack.c.b16 %v452, %v448
  %v645 = vpack.c.b16 %v453, %v449
  %v646 = vpack.c.b16 %v454, %v450
  %v647 = vpack.c.b16 %v455, %v451
  %v648 = vpack.c.b16 %v460, %v456
  %v649 = vpack.c.b16 %v461, %v457
  %v650 = vpack.c.b16 %v462, %v458
  %v651 = vpack.c.b16 %v463, %v459
  %v652 = vpack.c.b16 %v468, %v464
  %v653 = vpack.c.b16 %v469, %v465
  %v654 = vpack.c.b16 %v470, %v466
  %v655 = vpack.c.b16 %v471, %v467
  %v656 = vpack.c.b16 %v476, %v472
  %v657 = vpack.c.b16 %v477, %v473
  %v658 = vpack.c.b16 %v478, %v474
  %v659 = vpack.c.b16 %v479, %v475
  %v660 = vpack.c.b16 %v484, %v480
  %v661 = vpack.c.b16 %v485, %v481
  %v662 = vpack.c.b16 %v486, %v482
  %v663 = vpack.c.b16 %v487, %v483
  %v664 = vpack.c.b16 %v492, %v488
  %v665 = vpack.c.b16 %v493, %v489
  %v666 = vpack.c.b16 %v494, %v490
  %v667 = vpack.c.b16 %v495, %v491
  %v668 = vpack.c.b16 %v500, %v496
  %v669 = vpack.c.b16 %v501, %v497
  %v670 = vpack.c.b16 %v502, %v498
  %v671 = vpack.c.b16 %v503, %v499
  %v672 = vpack.c.b16 %v508, %v504
  %v673 = vpack.c.b16 %v509, %v505
  %v674 = vpack.c.b16 %v510, %v506
  %v675 = vpack.c.b16 %v511, %v507
  %v676 = vpack.c.b16 %v516, %v512
  %v677 = vpack.c.b16 %v517, %v513
  %v678 = vpack.c.b16 %v518, %v514
  %v679 = vpack.c.b16 %v519, %v515
  %v680 = vpack.c.b16 %v524, %v520
  %v681 = vpack.c.b16 %v525, %v521
  %v682 = vpack.c.b16 %v526, %v522
  %v683 = vpack.c.b16 %v527, %v523
  %v684 = vpack.c.b16 %v532, %v528
  %v685 = vpack.c.b16 %v533, %v529
  %v686 = vpack.c.b16 %v534, %v530
  %v687 = vpack.c.b16 %v535, %v531
  %v688 = vpack.c.b16 %v540, %v536
  %v689 = vpack.c.b16 %v541, %v537
  %v690 = vpack.c.b16 %v542, %v538
  %v691 = vpack.c.b16 %v543, %v539
  %v692 = vpack.c.b16 %v548, %v544
  %v693 = vpack.c.b16 %v549, %v545
  %v694 = vpack.c.b16 %v550, %v546
  %v695 = vpack.c.b16 %v551, %v547
  %v696 = vpack.c.b16 %v556, %v552
  %v697 = vpack.c.b16 %v557, %v553
  %v698 = vpack.c.b16 %v558, %v554
  %v699 = vpack.c.b16 %v559, %v555
  %v700 = vpack.c.b16 %v564, %v560
  %v701 = vpack.c.b16 %v565, %v561
  %v702 = vpack.c.b16 %v566, %v562
  %v703 = vpack.c.b16 %v567, %v563
  %v704 = vpack.c.b16 %v572, %v568
  %v705 = vpack.c.b16 %v573, %v569
  %v706 = vpack.c.b16 %v574, %v570
  %v707 = vpack.c.b16 %v575, %v571
  %v708 = vpack.c.b16 %v580, %v576
  %v709 = vpack.c.b16 %v581, %v577
  %v710 = vpack.c.b16 %v582, %v578
  %v711 = vpack.c.b16 %v583, %v579
  %840 = vmatpush.bf16.msra.mxu0 %v612
  %841 = vmatpush.bf16.msra.mxu0 %v608
  %842 = vmatpush.bf16.msra.mxu0 %v604
  %843 = vmatpush.bf16.msra.mxu0 %v600
  %844 = vmatpush.bf16.msra.mxu0 %v596
  %845 = vmatpush.bf16.msra.mxu0 %v592
  %846 = vmatpush.bf16.msra.mxu0 %v588
  %847 = vmatpush.bf16.msra.mxu0 %v584
  %848 = vmatmul.bf16.gmra.mxu0 %v184
  %v849 = vpop.f32.mrf.mxu0
  %v850 = vadd.f32 %v152, %v849
  %v851 = vpop.f32.mrf.mxu0
  %v852 = vadd.f32 %v152, %v851
  %853 = vmatmul.bf16.gmra.mxu0 %v188
  %v854 = vpop.f32.mrf.mxu0
  %v855 = vadd.f32 %v152, %v854
  %v856 = vpop.f32.mrf.mxu0
  %v857 = vadd.f32 %v152, %v856
  %858 = vdwg.mxu0
  %859 = vmatpush.bf16.msra.mxu0 %v644
  %860 = vmatpush.bf16.msra.mxu0 %v640
  %861 = vmatpush.bf16.msra.mxu0 %v636
  %862 = vmatpush.bf16.msra.mxu0 %v632
  %863 = vmatpush.bf16.msra.mxu0 %v628
  %864 = vmatpush.bf16.msra.mxu0 %v624
  %865 = vmatpush.bf16.msra.mxu0 %v620
  %866 = vmatpush.bf16.msra.mxu0 %v616
  %867 = vmatmul.bf16.gmra.mxu0 %v185
  %v868 = vpop.f32.mrf.mxu0
  %v869 = vadd.f32 %v850, %v868
  %v870 = vpop.f32.mrf.mxu0
  %v871 = vadd.f32 %v852, %v870
  %872 = vmatmul.bf16.gmra.mxu0 %v189
  %v873 = vpop.f32.mrf.mxu0
  %v874 = vadd.f32 %v855, %v873
  %v875 = vpop.f32.mrf.mxu0
  %v876 = vadd.f32 %v857, %v875
  %877 = vdwg.mxu0
  %878 = vmatpush.bf16.msra.mxu0 %v676
  %879 = vmatpush.bf16.msra.mxu0 %v672
  %880 = vmatpush.bf16.msra.mxu0 %v668
  %881 = vmatpush.bf16.msra.mxu0 %v664
  %882 = vmatpush.bf16.msra.mxu0 %v660
  %883 = vmatpush.bf16.msra.mxu0 %v656
  %884 = vmatpush.bf16.msra.mxu0 %v652
  %885 = vmatpush.bf16.msra.mxu0 %v648
  %886 = vmatmul.bf16.gmra.mxu0 %v186
  %v887 = vpop.f32.mrf.mxu0
  %v888 = vadd.f32 %v869, %v887
  %v889 = vpop.f32.mrf.mxu0
  %v890 = vadd.f32 %v871, %v889
  %891 = vmatmul.bf16.gmra.mxu0 %v190
  %v892 = vpop.f32.mrf.mxu0
  %v893 = vadd.f32 %v874, %v892
  %v894 = vpop.f32.mrf.mxu0
  %v895 = vadd.f32 %v876, %v894
  %896 = vdwg.mxu0
  %897 = vmatpush.bf16.msra.mxu0 %v708
  %898 = vmatpush.bf16.msra.mxu0 %v704
  %899 = vmatpush.bf16.msra.mxu0 %v700
  %900 = vmatpush.bf16.msra.mxu0 %v696
  %901 = vmatpush.bf16.msra.mxu0 %v692
  %902 = vmatpush.bf16.msra.mxu0 %v688
  %903 = vmatpush.bf16.msra.mxu0 %v684
  %904 = vmatpush.bf16.msra.mxu0 %v680
  %905 = vmatmul.bf16.gmra.mxu0 %v187
  %v906 = vpop.f32.mrf.mxu0
  %v907 = vadd.f32 %v888, %v906
  %v908 = vpop.f32.mrf.mxu0
  %v909 = vadd.f32 %v890, %v908
  %910 = vmatmul.bf16.gmra.mxu0 %v191
  %v911 = vpop.f32.mrf.mxu0
  %v912 = vadd.f32 %v893, %v911
  %v913 = vpop.f32.mrf.mxu0
  %v914 = vadd.f32 %v895, %v913
  %915 = vdwg.mxu0
  %916 = vmatpush.bf16.msra.mxu0 %v613
  %917 = vmatpush.bf16.msra.mxu0 %v609
  %918 = vmatpush.bf16.msra.mxu0 %v605
  %919 = vmatpush.bf16.msra.mxu0 %v601
  %920 = vmatpush.bf16.msra.mxu0 %v597
  %921 = vmatpush.bf16.msra.mxu0 %v593
  %922 = vmatpush.bf16.msra.mxu0 %v589
  %923 = vmatpush.bf16.msra.mxu0 %v585
  %924 = vmatmul.bf16.gmra.mxu0 %v184
  %v925 = vpop.f32.mrf.mxu0
  %v926 = vadd.f32 %v153, %v925
  %v927 = vpop.f32.mrf.mxu0
  %v928 = vadd.f32 %v153, %v927
  %929 = vmatmul.bf16.gmra.mxu0 %v188
  %v930 = vpop.f32.mrf.mxu0
  %v931 = vadd.f32 %v153, %v930
  %v932 = vpop.f32.mrf.mxu0
  %v933 = vadd.f32 %v153, %v932
  %934 = vdwg.mxu0
  %935 = vmatpush.bf16.msra.mxu0 %v645
  %936 = vmatpush.bf16.msra.mxu0 %v641
  %937 = vmatpush.bf16.msra.mxu0 %v637
  %938 = vmatpush.bf16.msra.mxu0 %v633
  %939 = vmatpush.bf16.msra.mxu0 %v629
  %940 = vmatpush.bf16.msra.mxu0 %v625
  %941 = vmatpush.bf16.msra.mxu0 %v621
  %942 = vmatpush.bf16.msra.mxu0 %v617
  %943 = vmatmul.bf16.gmra.mxu0 %v185
  %v944 = vpop.f32.mrf.mxu0
  %v945 = vadd.f32 %v926, %v944
  %v946 = vpop.f32.mrf.mxu0
  %v947 = vadd.f32 %v928, %v946
  %948 = vmatmul.bf16.gmra.mxu0 %v189
  %v949 = vpop.f32.mrf.mxu0
  %v950 = vadd.f32 %v931, %v949
  %v951 = vpop.f32.mrf.mxu0
  %v952 = vadd.f32 %v933, %v951
  %953 = vdwg.mxu0
  %954 = vmatpush.bf16.msra.mxu0 %v677
  %955 = vmatpush.bf16.msra.mxu0 %v673
  %956 = vmatpush.bf16.msra.mxu0 %v669
  %957 = vmatpush.bf16.msra.mxu0 %v665
  %958 = vmatpush.bf16.msra.mxu0 %v661
  %959 = vmatpush.bf16.msra.mxu0 %v657
  %960 = vmatpush.bf16.msra.mxu0 %v653
  %961 = vmatpush.bf16.msra.mxu0 %v649
  %962 = vmatmul.bf16.gmra.mxu0 %v186
  %v963 = vpop.f32.mrf.mxu0
  %v964 = vadd.f32 %v945, %v963
  %v965 = vpop.f32.mrf.mxu0
  %v966 = vadd.f32 %v947, %v965
  %967 = vmatmul.bf16.gmra.mxu0 %v190
  %v968 = vpop.f32.mrf.mxu0
  %v969 = vadd.f32 %v950, %v968
  %v970 = vpop.f32.mrf.mxu0
  %v971 = vadd.f32 %v952, %v970
  %972 = vdwg.mxu0
  %973 = vmatpush.bf16.msra.mxu0 %v709
  %974 = vmatpush.bf16.msra.mxu0 %v705
  %975 = vmatpush.bf16.msra.mxu0 %v701
  %976 = vmatpush.bf16.msra.mxu0 %v697
  %977 = vmatpush.bf16.msra.mxu0 %v693
  %978 = vmatpush.bf16.msra.mxu0 %v689
  %979 = vmatpush.bf16.msra.mxu0 %v685
  %980 = vmatpush.bf16.msra.mxu0 %v681
  %981 = vmatmul.bf16.gmra.mxu0 %v187
  %v982 = vpop.f32.mrf.mxu0
  %v983 = vadd.f32 %v964, %v982
  %v984 = vpop.f32.mrf.mxu0
  %v985 = vadd.f32 %v966, %v984
  %986 = vmatmul.bf16.gmra.mxu0 %v191
  %v987 = vpop.f32.mrf.mxu0
  %v988 = vadd.f32 %v969, %v987
  %v989 = vpop.f32.mrf.mxu0
  %v990 = vadd.f32 %v971, %v989
  %991 = vdwg.mxu0
  %992 = vmatpush.bf16.msra.mxu0 %v614
  %993 = vmatpush.bf16.msra.mxu0 %v610
  %994 = vmatpush.bf16.msra.mxu0 %v606
  %995 = vmatpush.bf16.msra.mxu0 %v602
  %996 = vmatpush.bf16.msra.mxu0 %v598
  %997 = vmatpush.bf16.msra.mxu0 %v594
  %998 = vmatpush.bf16.msra.mxu0 %v590
  %999 = vmatpush.bf16.msra.mxu0 %v586
  %1000 = vmatmul.bf16.gmra.mxu0 %v184
  %v1001 = vpop.f32.mrf.mxu0
  %v1002 = vadd.f32 %v154, %v1001
  %v1003 = vpop.f32.mrf.mxu0
  %v1004 = vadd.f32 %v154, %v1003
  %1005 = vmatmul.bf16.gmra.mxu0 %v188
  %v1006 = vpop.f32.mrf.mxu0
  %v1007 = vadd.f32 %v154, %v1006
  %v1008 = vpop.f32.mrf.mxu0
  %v1009 = vadd.f32 %v154, %v1008
  %1010 = vdwg.mxu0
  %1011 = vmatpush.bf16.msra.mxu0 %v646
  %1012 = vmatpush.bf16.msra.mxu0 %v642
  %1013 = vmatpush.bf16.msra.mxu0 %v638
  %1014 = vmatpush.bf16.msra.mxu0 %v634
  %1015 = vmatpush.bf16.msra.mxu0 %v630
  %1016 = vmatpush.bf16.msra.mxu0 %v626
  %1017 = vmatpush.bf16.msra.mxu0 %v622
  %1018 = vmatpush.bf16.msra.mxu0 %v618
  %1019 = vmatmul.bf16.gmra.mxu0 %v185
  %v1020 = vpop.f32.mrf.mxu0
  %v1021 = vadd.f32 %v1002, %v1020
  %v1022 = vpop.f32.mrf.mxu0
  %v1023 = vadd.f32 %v1004, %v1022
  %1024 = vmatmul.bf16.gmra.mxu0 %v189
  %v1025 = vpop.f32.mrf.mxu0
  %v1026 = vadd.f32 %v1007, %v1025
  %v1027 = vpop.f32.mrf.mxu0
  %v1028 = vadd.f32 %v1009, %v1027
  %1029 = vdwg.mxu0
  %1030 = vmatpush.bf16.msra.mxu0 %v678
  %1031 = vmatpush.bf16.msra.mxu0 %v674
  %1032 = vmatpush.bf16.msra.mxu0 %v670
  %1033 = vmatpush.bf16.msra.mxu0 %v666
  %1034 = vmatpush.bf16.msra.mxu0 %v662
  %1035 = vmatpush.bf16.msra.mxu0 %v658
  %1036 = vmatpush.bf16.msra.mxu0 %v654
  %1037 = vmatpush.bf16.msra.mxu0 %v650
  %1038 = vmatmul.bf16.gmra.mxu0 %v186
  %v1039 = vpop.f32.mrf.mxu0
  %v1040 = vadd.f32 %v1021, %v1039
  %v1041 = vpop.f32.mrf.mxu0
  %v1042 = vadd.f32 %v1023, %v1041
  %1043 = vmatmul.bf16.gmra.mxu0 %v190
  %v1044 = vpop.f32.mrf.mxu0
  %v1045 = vadd.f32 %v1026, %v1044
  %v1046 = vpop.f32.mrf.mxu0
  %v1047 = vadd.f32 %v1028, %v1046
  %1048 = vdwg.mxu0
  %1049 = vmatpush.bf16.msra.mxu0 %v710
  %1050 = vmatpush.bf16.msra.mxu0 %v706
  %1051 = vmatpush.bf16.msra.mxu0 %v702
  %1052 = vmatpush.bf16.msra.mxu0 %v698
  %1053 = vmatpush.bf16.msra.mxu0 %v694
  %1054 = vmatpush.bf16.msra.mxu0 %v690
  %1055 = vmatpush.bf16.msra.mxu0 %v686
  %1056 = vmatpush.bf16.msra.mxu0 %v682
  %1057 = vmatmul.bf16.gmra.mxu0 %v187
  %v1058 = vpop.f32.mrf.mxu0
  %v1059 = vadd.f32 %v1040, %v1058
  %v1060 = vpop.f32.mrf.mxu0
  %v1061 = vadd.f32 %v1042, %v1060
  %1062 = vmatmul.bf16.gmra.mxu0 %v191
  %v1063 = vpop.f32.mrf.mxu0
  %v1064 = vadd.f32 %v1045, %v1063
  %v1065 = vpop.f32.mrf.mxu0
  %v1066 = vadd.f32 %v1047, %v1065
  %1067 = vdwg.mxu0
  %1068 = vmatpush.bf16.msra.mxu0 %v615
  %1069 = vmatpush.bf16.msra.mxu0 %v611
  %1070 = vmatpush.bf16.msra.mxu0 %v607
  %1071 = vmatpush.bf16.msra.mxu0 %v603
  %1072 = vmatpush.bf16.msra.mxu0 %v599
  %1073 = vmatpush.bf16.msra.mxu0 %v595
  %1074 = vmatpush.bf16.msra.mxu0 %v591
  %1075 = vmatpush.bf16.msra.mxu0 %v587
  %1076 = vmatmul.bf16.gmra.mxu0 %v184
  %v1077 = vpop.f32.mrf.mxu0
  %v1078 = vadd.f32 %v155, %v1077
  %v1079 = vpop.f32.mrf.mxu0
  %v1080 = vadd.f32 %v155, %v1079
  %1081 = vmatmul.bf16.gmra.mxu0 %v188
  %v1082 = vpop.f32.mrf.mxu0
  %v1083 = vadd.f32 %v155, %v1082
  %v1084 = vpop.f32.mrf.mxu0
  %v1085 = vadd.f32 %v155, %v1084
  %1086 = vdwg.mxu0
  %1087 = vmatpush.bf16.msra.mxu0 %v647
  %1088 = vmatpush.bf16.msra.mxu0 %v643
  %1089 = vmatpush.bf16.msra.mxu0 %v639
  %1090 = vmatpush.bf16.msra.mxu0 %v635
  %1091 = vmatpush.bf16.msra.mxu0 %v631
  %1092 = vmatpush.bf16.msra.mxu0 %v627
  %1093 = vmatpush.bf16.msra.mxu0 %v623
  %1094 = vmatpush.bf16.msra.mxu0 %v619
  %1095 = vmatmul.bf16.gmra.mxu0 %v185
  %v1096 = vpop.f32.mrf.mxu0
  %v1097 = vadd.f32 %v1078, %v1096
  %v1098 = vpop.f32.mrf.mxu0
  %v1099 = vadd.f32 %v1080, %v1098
  %1100 = vmatmul.bf16.gmra.mxu0 %v189
  %v1101 = vpop.f32.mrf.mxu0
  %v1102 = vadd.f32 %v1083, %v1101
  %v1103 = vpop.f32.mrf.mxu0
  %v1104 = vadd.f32 %v1085, %v1103
  %1105 = vdwg.mxu0
  %1106 = vmatpush.bf16.msra.mxu0 %v679
  %1107 = vmatpush.bf16.msra.mxu0 %v675
  %1108 = vmatpush.bf16.msra.mxu0 %v671
  %1109 = vmatpush.bf16.msra.mxu0 %v667
  %1110 = vmatpush.bf16.msra.mxu0 %v663
  %1111 = vmatpush.bf16.msra.mxu0 %v659
  %1112 = vmatpush.bf16.msra.mxu0 %v655
  %1113 = vmatpush.bf16.msra.mxu0 %v651
  %1114 = vmatmul.bf16.gmra.mxu0 %v186
  %v1115 = vpop.f32.mrf.mxu0
  %v1116 = vadd.f32 %v1097, %v1115
  %v1117 = vpop.f32.mrf.mxu0
  %v1118 = vadd.f32 %v1099, %v1117
  %1119 = vmatmul.bf16.gmra.mxu0 %v190
  %v1120 = vpop.f32.mrf.mxu0
  %v1121 = vadd.f32 %v1102, %v1120
  %v1122 = vpop.f32.mrf.mxu0
  %v1123 = vadd.f32 %v1104, %v1122
  %1124 = vdwg.mxu0
  %1125 = vmatpush.bf16.msra.mxu0 %v711
  %1126 = vmatpush.bf16.msra.mxu0 %v707
  %1127 = vmatpush.bf16.msra.mxu0 %v703
  %1128 = vmatpush.bf16.msra.mxu0 %v699
  %1129 = vmatpush.bf16.msra.mxu0 %v695
  %1130 = vmatpush.bf16.msra.mxu0 %v691
  %1131 = vmatpush.bf16.msra.mxu0 %v687
  %1132 = vmatpush.bf16.msra.mxu0 %v683
  %1133 = vmatmul.bf16.gmra.mxu0 %v187
  %v1134 = vpop.f32.mrf.mxu0
  %v1135 = vadd.f32 %v1116, %v1134
  %v1136 = vpop.f32.mrf.mxu0
  %v1137 = vadd.f32 %v1118, %v1136
  %1138 = vmatmul.bf16.gmra.mxu0 %v191
  %v1139 = vpop.f32.mrf.mxu0
  %v1140 = vadd.f32 %v1121, %v1139
  %v1141 = vpop.f32.mrf.mxu0
  %v1142 = vadd.f32 %v1123, %v1141
  %1143 = vdwg.mxu0
  %v1144 = vmax.f32 %v907, 0.0
  %v1145 = vmax.f32 %v983, 0.0
  %v1146 = vmax.f32 %v1059, 0.0
  %v1147 = vmax.f32 %v1135, 0.0
  %v1148 = vmax.f32 %v909, 0.0
  %v1149 = vmax.f32 %v985, 0.0
  %v1150 = vmax.f32 %v1061, 0.0
  %v1151 = vmax.f32 %v1137, 0.0
  %v1152 = vmax.f32 %v912, 0.0
  %v1153 = vmax.f32 %v988, 0.0
  %v1154 = vmax.f32 %v1064, 0.0
  %v1155 = vmax.f32 %v1140, 0.0
  %v1156 = vmax.f32 %v914, 0.0
  %v1157 = vmax.f32 %v990, 0.0
  %v1158 = vmax.f32 %v1066, 0.0
  %v1159 = vmax.f32 %v1142, 0.0
  %1160 = vst [vmem:[%s3] sm:$0xff] %v1144
  %1161 = vst [vmem:[%s3 + $0x8] sm:$0xff] %v1145
  %1162 = vst [vmem:[%s3 + $0x10] sm:$0xff] %v1146
  %1163 = vst [vmem:[%s3 + $0x18] sm:$0xff] %v1147
  %1164 = vst [vmem:[%s3 + $0x20] sm:$0xff] %v1148
  %1165 = vst [vmem:[%s3 + $0x28] sm:$0xff] %v1149
  %1166 = vst [vmem:[%s3 + $0x30] sm:$0xff] %v1150
  %1167 = vst [vmem:[%s3 + $0x38] sm:$0xff] %v1151
  %1168 = vst [vmem:[%s3 + $0x40] sm:$0xff] %v1152
  %1169 = vst [vmem:[%s3 + $0x48] sm:$0xff] %v1153
  %1170 = vst [vmem:[%s3 + $0x50] sm:$0xff] %v1154
  %1171 = vst [vmem:[%s3 + $0x58] sm:$0xff] %v1155
  %1172 = vst [vmem:[%s3 + $0x60] sm:$0xff] %v1156
  %1173 = vst [vmem:[%s3 + $0x68] sm:$0xff] %v1157
  %1174 = vst [vmem:[%s3 + $0x70] sm:$0xff] %v1158
  %1175 = vst [vmem:[%s3 + $0x78] sm:$0xff] %v1159
  // Predicated region
  $region14: #{vae_forward.14} parent=0 // pred_check
    _
  $region15: #{vae_forward.14} parent=0 // pred_check_branch
    %1177 = sbr.rel (0) target = $region17
  $region16: #{vae_forward.14} parent=0 // pred_region
    _
  $region17: #{vae_forward.14} parent=0 // pred_fallthru
    _
  // Predicated region
  $region18: #{vae_forward.14} parent=0 // pred_check
    _
  $region19: #{vae_forward.14} parent=0 // pred_check_branch
    %1179 = sbr.rel (0) target = $region21
  $region20: #{vae_forward.14} parent=0 // pred_region
    _
  $region21: #{vae_forward.14} parent=0 // pred_fallthru
    _

// kernel: tile.23
$region0: #{tile.23}
  #allocation0 [shape = 's32[1]{0}', space=sflag, size = 0x4, scoped, tag = 'scoped memory for tile.23']
  %s0 = inlined_call_operand.vmem [shape: f32[64], index: 0, kind: input, shape index: {}]
  %s1 = inlined_call_operand.vmem [shape: f32[4,64], index: 1, kind: output, shape index: {}]
  // Predicated region
  $region2: #{tile.23} parent=0 // pred_check
    _
  $region3: #{tile.23} parent=0 // pred_check_branch
    %3 = sbr.rel (0) target = $region5
  $region4: #{tile.23} parent=0 // pred_region
    _
  $region5: #{tile.23} parent=0 // pred_fallthru
    _
  %v4 = vld [vmem:[%s0] ss:$0 sm:$0xff]
  %5 = vst [vmem:[%s1] sm:$0xf] %v4

// kernel: tile.24
$region0: #{tile.24}
  %s0 = inlined_call_operand.vmem [shape: f32[4,64], index: 0, kind: input, shape index: {}]
  %s1 = inlined_call_operand.vmem [shape: f32[1,256], index: 1, kind: output, shape index: {}]
  $region1: #{tile.24} parent=0
    #allocation0 [shape = 'u8[8192]{0}', space=vmem, size = 0x2000, scoped, tag = 'scoped mem for output reshape']
    #allocation1 [shape = 'u8[4096]{0}', space=vmem, size = 0x1000, scoped, tag = 'scoped mem for input reshape']
    %s3 = ssub.s32 16, 1
    %v4 = vld [vmem:[%s0] sm:%s3]
    %5 = vst [vmem:[#allocation1] sm:%s3] %v4
    %s6 = smov 3
    %v7 = vld [vmem:[#allocation1] ss:$2 sm:%s6]
    %vm8 = vcmask 523264
    %9 = vst.msk [vmem:[#allocation0] ss:$8 sm:$0x3] %vm8, %v7
    %s10 = scalar_lea.vmem [#allocation1], 1
    %s11 = smov 3
    %v12 = vld [vmem:[%s10] ss:$2 sm:%s11]
    %13 = vrot.lane.b32.xlu0 %v12, 64
    %v14 = vpop.permute.xlu0 %13
    %vm15 = vcmask 1048064
    %16 = vst.msk [vmem:[#allocation0] ss:$8 sm:$0x3] %vm15, %v14
    %s18 = ssub.s32 2, 1
    %v19 = vld [vmem:[#allocation0] sm:%s18]
    %s21 = ssub.s32 2, 1
    %22 = vst [vmem:[%s1] sm:%s21] %v19
    %s23 = scalar_lea.vmem [#allocation0], 8
    %v24 = vld [vmem:[%s23] sm:%s18]
    %s26 = ssub.s32 2, 1
    %s27 = scalar_lea.vmem %s1, 1
    %28 = vst [vmem:[%s27] sm:%s26] %v24

// kernel: vae_forward.15
$region0: #{vae_forward.15}
  #allocation0 [shape = 'u32[]', space=smem, size = 0x4, offset = 0x4, fixed_abs, tag = 'smem constant byte address 0x4 - core index']
  #allocation1 [shape = 'u32[72,128]{1,0:T(1,128)}', space=vmem, size = 0x9000, scoped, tag = 'internal scratch']
  %s0 = inlined_call_operand.vmem [shape: bf16[128,512], index: 0, kind: input, shape index: {}]
  %s1 = inlined_call_operand.vmem [shape: bf16[512,256], index: 1, kind: input, shape index: {}]
  %s2 = inlined_call_operand.vmem [shape: f32[1,256], index: 2, kind: input, shape index: {}]
  %s3 = inlined_call_operand.vmem [shape: f32[128,256], index: 3, kind: output, shape index: {}]
  %s4 = sld [smem:[#allocation0]]
  $region22: #{vae_forward.15} parent=0
    _
  %s6 = ssub.s32 1, %s4
  %s7 = scalar_select 0, %s6, %s4
  // Predicated region
  $region2: #{vae_forward.15} parent=0 // pred_check
    _
  $region3: #{vae_forward.15} parent=0 // pred_check_branch
    %9 = sbr.rel (0) target = $region5
  $region4: #{vae_forward.15} parent=0 // pred_region
    _
  $region5: #{vae_forward.15} parent=0 // pred_fallthru
    _
  // Predicated region
  $region6: #{vae_forward.15} parent=0 // pred_check
    _
  $region7: #{vae_forward.15} parent=0 // pred_check_branch
    %11 = sbr.rel (0) target = $region9
  $region8: #{vae_forward.15} parent=0 // pred_region
    _
  $region9: #{vae_forward.15} parent=0 // pred_fallthru
    _
  // Predicated region
  $region10: #{vae_forward.15} parent=0 // pred_check
    _
  $region11: #{vae_forward.15} parent=0 // pred_check_branch
    %13 = sbr.rel (0) target = $region13
  $region12: #{vae_forward.15} parent=0 // pred_region
    _
  $region13: #{vae_forward.15} parent=0 // pred_fallthru
    _
  %v14 = vld [vmem:[%s0] sm:$0xff]
  %v15 = vld [vmem:[%s0 + $0x8] sm:$0xff]
  %v16 = vld [vmem:[%s0 + $0x10] sm:$0xff]
  %v17 = vld [vmem:[%s0 + $0x18] sm:$0xff]
  %v18 = vld [vmem:[%s0 + $0x20] sm:$0xff]
  %v19 = vld [vmem:[%s0 + $0x28] sm:$0xff]
  %v20 = vld [vmem:[%s0 + $0x30] sm:$0xff]
  %v21 = vld [vmem:[%s0 + $0x38] sm:$0xff]
  %v22 = vld [vmem:[%s0 + $0x40] sm:$0xff]
  %v23 = vld [vmem:[%s0 + $0x48] sm:$0xff]
  %v24 = vld [vmem:[%s0 + $0x50] sm:$0xff]
  %v25 = vld [vmem:[%s0 + $0x58] sm:$0xff]
  %v26 = vld [vmem:[%s0 + $0x60] sm:$0xff]
  %v27 = vld [vmem:[%s0 + $0x68] sm:$0xff]
  %v28 = vld [vmem:[%s0 + $0x70] sm:$0xff]
  %v29 = vld [vmem:[%s0 + $0x78] sm:$0xff]
  %v30 = vld [vmem:[%s0 + $0x80] sm:$0xff]
  %v31 = vld [vmem:[%s0 + $0x88] sm:$0xff]
  %v32 = vld [vmem:[%s0 + $0x90] sm:$0xff]
  %v33 = vld [vmem:[%s0 + $0x98] sm:$0xff]
  %v34 = vld [vmem:[%s0 + $0xa0] sm:$0xff]
  %v35 = vld [vmem:[%s0 + $0xa8] sm:$0xff]
  %v36 = vld [vmem:[%s0 + $0xb0] sm:$0xff]
  %v37 = vld [vmem:[%s0 + $0xb8] sm:$0xff]
  %v38 = vld [vmem:[%s0 + $0xc0] sm:$0xff]
  %v39 = vld [vmem:[%s0 + $0xc8] sm:$0xff]
  %v40 = vld [vmem:[%s0 + $0xd0] sm:$0xff]
  %v41 = vld [vmem:[%s0 + $0xd8] sm:$0xff]
  %v42 = vld [vmem:[%s0 + $0xe0] sm:$0xff]
  %v43 = vld [vmem:[%s0 + $0xe8] sm:$0xff]
  %v44 = vld [vmem:[%s0 + $0xf0] sm:$0xff]
  %v45 = vld [vmem:[%s0 + $0xf8] sm:$0xff]
  %v46 = vld [vmem:[%s1] sm:$0xff]
  %v47 = vld [vmem:[%s1 + $0x8] sm:$0xff]
  %v48 = vld [vmem:[%s1 + $0x10] sm:$0xff]
  %v49 = vld [vmem:[%s1 + $0x18] sm:$0xff]
  %v50 = vld [vmem:[%s1 + $0x20] sm:$0xff]
  %v51 = vld [vmem:[%s1 + $0x28] sm:$0xff]
  %v52 = vld [vmem:[%s1 + $0x30] sm:$0xff]
  %v53 = vld [vmem:[%s1 + $0x38] sm:$0xff]
  %v54 = vld [vmem:[%s1 + $0x40] sm:$0xff]
  %v55 = vld [vmem:[%s1 + $0x48] sm:$0xff]
  %v56 = vld [vmem:[%s1 + $0x50] sm:$0xff]
  %v57 = vld [vmem:[%s1 + $0x58] sm:$0xff]
  %v58 = vld [vmem:[%s1 + $0x60] sm:$0xff]
  %v59 = vld [vmem:[%s1 + $0x68] sm:$0xff]
  %v60 = vld [vmem:[%s1 + $0x70] sm:$0xff]
  %v61 = vld [vmem:[%s1 + $0x78] sm:$0xff]
  %v62 = vld [vmem:[%s1 + $0x80] sm:$0xff]
  %v63 = vld [vmem:[%s1 + $0x88] sm:$0xff]
  %v64 = vld [vmem:[%s1 + $0x90] sm:$0xff]
  %v65 = vld [vmem:[%s1 + $0x98] sm:$0xff]
  %v66 = vld [vmem:[%s1 + $0xa0] sm:$0xff]
  %v67 = vld [vmem:[%s1 + $0xa8] sm:$0xff]
  %v68 = vld [vmem:[%s1 + $0xb0] sm:$0xff]
  %v69 = vld [vmem:[%s1 + $0xb8] sm:$0xff]
  %v70 = vld [vmem:[%s1 + $0xc0] sm:$0xff]
  %v71 = vld [vmem:[%s1 + $0xc8] sm:$0xff]
  %v72 = vld [vmem:[%s1 + $0xd0] sm:$0xff]
  %v73 = vld [vmem:[%s1 + $0xd8] sm:$0xff]
  %v74 = vld [vmem:[%s1 + $0xe0] sm:$0xff]
  %v75 = vld [vmem:[%s1 + $0xe8] sm:$0xff]
  %v76 = vld [vmem:[%s1 + $0xf0] sm:$0xff]
  %v77 = vld [vmem:[%s1 + $0xf8] sm:$0xff]
  %v78 = vld [vmem:[%s1 + $0x100] sm:$0xff]
  %v79 = vld [vmem:[%s1 + $0x108] sm:$0xff]
  %v80 = vld [vmem:[%s1 + $0x110] sm:$0xff]
  %v81 = vld [vmem:[%s1 + $0x118] sm:$0xff]
  %v82 = vld [vmem:[%s1 + $0x120] sm:$0xff]
  %v83 = vld [vmem:[%s1 + $0x128] sm:$0xff]
  %v84 = vld [vmem:[%s1 + $0x130] sm:$0xff]
  %v85 = vld [vmem:[%s1 + $0x138] sm:$0xff]
  %v86 = vld [vmem:[%s1 + $0x140] sm:$0xff]
  %v87 = vld [vmem:[%s1 + $0x148] sm:$0xff]
  %v88 = vld [vmem:[%s1 + $0x150] sm:$0xff]
  %v89 = vld [vmem:[%s1 + $0x158] sm:$0xff]
  %v90 = vld [vmem:[%s1 + $0x160] sm:$0xff]
  %v91 = vld [vmem:[%s1 + $0x168] sm:$0xff]
  %v92 = vld [vmem:[%s1 + $0x170] sm:$0xff]
  %v93 = vld [vmem:[%s1 + $0x178] sm:$0xff]
  %v94 = vld [vmem:[%s1 + $0x180] sm:$0xff]
  %v95 = vld [vmem:[%s1 + $0x188] sm:$0xff]
  %v96 = vld [vmem:[%s1 + $0x190] sm:$0xff]
  %v97 = vld [vmem:[%s1 + $0x198] sm:$0xff]
  %v98 = vld [vmem:[%s1 + $0x1a0] sm:$0xff]
  %v99 = vld [vmem:[%s1 + $0x1a8] sm:$0xff]
  %v100 = vld [vmem:[%s1 + $0x1b0] sm:$0xff]
  %v101 = vld [vmem:[%s1 + $0x1b8] sm:$0xff]
  %v102 = vld [vmem:[%s1 + $0x1c0] sm:$0xff]
  %v103 = vld [vmem:[%s1 + $0x1c8] sm:$0xff]
  %v104 = vld [vmem:[%s1 + $0x1d0] sm:$0xff]
  %v105 = vld [vmem:[%s1 + $0x1d8] sm:$0xff]
  %v106 = vld [vmem:[%s1 + $0x1e0] sm:$0xff]
  %v107 = vld [vmem:[%s1 + $0x1e8] sm:$0xff]
  %v108 = vld [vmem:[%s1 + $0x1f0] sm:$0xff]
  %v109 = vld [vmem:[%s1 + $0x1f8] sm:$0xff]
  %v110 = vld [vmem:[%s2] sm:$0x3]
  %v112 = vperm.slane %v110, 0
  %v113 = vperm.slane %v110, 1
  %v148 = vunpack.c.l.b16 %v14
  %v149 = vunpack.c.h.b16 %v14
  %v150 = vunpack.c.l.b16 %v15
  %v151 = vunpack.c.h.b16 %v15
  %v152 = vunpack.c.l.b16 %v16
  %v153 = vunpack.c.h.b16 %v16
  %v154 = vunpack.c.l.b16 %v17
  %v155 = vunpack.c.h.b16 %v17
  %v156 = vunpack.c.l.b16 %v18
  %v157 = vunpack.c.h.b16 %v18
  %v158 = vunpack.c.l.b16 %v19
  %v159 = vunpack.c.h.b16 %v19
  %v160 = vunpack.c.l.b16 %v20
  %v161 = vunpack.c.h.b16 %v20
  %v162 = vunpack.c.l.b16 %v21
  %v163 = vunpack.c.h.b16 %v21
  %v164 = vunpack.c.l.b16 %v22
  %v165 = vunpack.c.h.b16 %v22
  %v166 = vunpack.c.l.b16 %v23
  %v167 = vunpack.c.h.b16 %v23
  %v168 = vunpack.c.l.b16 %v24
  %v169 = vunpack.c.h.b16 %v24
  %v170 = vunpack.c.l.b16 %v25
  %v171 = vunpack.c.h.b16 %v25
  %v172 = vunpack.c.l.b16 %v26
  %v173 = vunpack.c.h.b16 %v26
  %v174 = vunpack.c.l.b16 %v27
  %v175 = vunpack.c.h.b16 %v27
  %v176 = vunpack.c.l.b16 %v28
  %v177 = vunpack.c.h.b16 %v28
  %v178 = vunpack.c.l.b16 %v29
  %v179 = vunpack.c.h.b16 %v29
  %v180 = vunpack.c.l.b16 %v30
  %v181 = vunpack.c.h.b16 %v30
  %v182 = vunpack.c.l.b16 %v31
  %v183 = vunpack.c.h.b16 %v31
  %v184 = vunpack.c.l.b16 %v32
  %v185 = vunpack.c.h.b16 %v32
  %v186 = vunpack.c.l.b16 %v33
  %v187 = vunpack.c.h.b16 %v33
  %v188 = vunpack.c.l.b16 %v34
  %v189 = vunpack.c.h.b16 %v34
  %v190 = vunpack.c.l.b16 %v35
  %v191 = vunpack.c.h.b16 %v35
  %v192 = vunpack.c.l.b16 %v36
  %v193 = vunpack.c.h.b16 %v36
  %v194 = vunpack.c.l.b16 %v37
  %v195 = vunpack.c.h.b16 %v37
  %v196 = vunpack.c.l.b16 %v38
  %v197 = vunpack.c.h.b16 %v38
  %v198 = vunpack.c.l.b16 %v39
  %v199 = vunpack.c.h.b16 %v39
  %v200 = vunpack.c.l.b16 %v40
  %v201 = vunpack.c.h.b16 %v40
  %v202 = vunpack.c.l.b16 %v41
  %v203 = vunpack.c.h.b16 %v41
  %v204 = vunpack.c.l.b16 %v42
  %v205 = vunpack.c.h.b16 %v42
  %v206 = vunpack.c.l.b16 %v43
  %v207 = vunpack.c.h.b16 %v43
  %v208 = vunpack.c.l.b16 %v44
  %v209 = vunpack.c.h.b16 %v44
  %v210 = vunpack.c.l.b16 %v45
  %v211 = vunpack.c.h.b16 %v45
  %v212 = vpack.c.b16 %v152, %v148
  %v213 = vpack.c.b16 %v153, %v149
  %v214 = vpack.c.b16 %v154, %v150
  %v215 = vpack.c.b16 %v155, %v151
  %v216 = vpack.c.b16 %v160, %v156
  %v217 = vpack.c.b16 %v161, %v157
  %v218 = vpack.c.b16 %v162, %v158
  %v219 = vpack.c.b16 %v163, %v159
  %v220 = vpack.c.b16 %v168, %v164
  %v221 = vpack.c.b16 %v169, %v165
  %v222 = vpack.c.b16 %v170, %v166
  %v223 = vpack.c.b16 %v171, %v167
  %v224 = vpack.c.b16 %v176, %v172
  %v225 = vpack.c.b16 %v177, %v173
  %v226 = vpack.c.b16 %v178, %v174
  %v227 = vpack.c.b16 %v179, %v175
  %v228 = vpack.c.b16 %v184, %v180
  %v229 = vpack.c.b16 %v185, %v181
  %v230 = vpack.c.b16 %v186, %v182
  %v231 = vpack.c.b16 %v187, %v183
  %v232 = vpack.c.b16 %v192, %v188
  %v233 = vpack.c.b16 %v193, %v189
  %v234 = vpack.c.b16 %v194, %v190
  %v235 = vpack.c.b16 %v195, %v191
  %v236 = vpack.c.b16 %v200, %v196
  %v237 = vpack.c.b16 %v201, %v197
  %v238 = vpack.c.b16 %v202, %v198
  %v239 = vpack.c.b16 %v203, %v199
  %v240 = vpack.c.b16 %v208, %v204
  %v241 = vpack.c.b16 %v209, %v205
  %v242 = vpack.c.b16 %v210, %v206
  %v243 = vpack.c.b16 %v211, %v207
  %v340 = vunpack.c.l.b16 %v46
  %v341 = vunpack.c.h.b16 %v46
  %v342 = vunpack.c.l.b16 %v47
  %v343 = vunpack.c.h.b16 %v47
  %v344 = vunpack.c.l.b16 %v48
  %v345 = vunpack.c.h.b16 %v48
  %v346 = vunpack.c.l.b16 %v49
  %v347 = vunpack.c.h.b16 %v49
  %v348 = vunpack.c.l.b16 %v50
  %v349 = vunpack.c.h.b16 %v50
  %v350 = vunpack.c.l.b16 %v51
  %v351 = vunpack.c.h.b16 %v51
  %v352 = vunpack.c.l.b16 %v52
  %v353 = vunpack.c.h.b16 %v52
  %v354 = vunpack.c.l.b16 %v53
  %v355 = vunpack.c.h.b16 %v53
  %v356 = vunpack.c.l.b16 %v54
  %v357 = vunpack.c.h.b16 %v54
  %v358 = vunpack.c.l.b16 %v55
  %v359 = vunpack.c.h.b16 %v55
  %v360 = vunpack.c.l.b16 %v56
  %v361 = vunpack.c.h.b16 %v56
  %v362 = vunpack.c.l.b16 %v57
  %v363 = vunpack.c.h.b16 %v57
  %v364 = vunpack.c.l.b16 %v58
  %v365 = vunpack.c.h.b16 %v58
  %v366 = vunpack.c.l.b16 %v59
  %v367 = vunpack.c.h.b16 %v59
  %v368 = vunpack.c.l.b16 %v60
  %v369 = vunpack.c.h.b16 %v60
  %v370 = vunpack.c.l.b16 %v61
  %v371 = vunpack.c.h.b16 %v61
  %v372 = vunpack.c.l.b16 %v62
  %v373 = vunpack.c.h.b16 %v62
  %v374 = vunpack.c.l.b16 %v63
  %v375 = vunpack.c.h.b16 %v63
  %v376 = vunpack.c.l.b16 %v64
  %v377 = vunpack.c.h.b16 %v64
  %v378 = vunpack.c.l.b16 %v65
  %v379 = vunpack.c.h.b16 %v65
  %v380 = vunpack.c.l.b16 %v66
  %v381 = vunpack.c.h.b16 %v66
  %v382 = vunpack.c.l.b16 %v67
  %v383 = vunpack.c.h.b16 %v67
  %v384 = vunpack.c.l.b16 %v68
  %v385 = vunpack.c.h.b16 %v68
  %v386 = vunpack.c.l.b16 %v69
  %v387 = vunpack.c.h.b16 %v69
  %v388 = vunpack.c.l.b16 %v70
  %v389 = vunpack.c.h.b16 %v70
  %v390 = vunpack.c.l.b16 %v71
  %v391 = vunpack.c.h.b16 %v71
  %v392 = vunpack.c.l.b16 %v72
  %v393 = vunpack.c.h.b16 %v72
  %v394 = vunpack.c.l.b16 %v73
  %v395 = vunpack.c.h.b16 %v73
  %v396 = vunpack.c.l.b16 %v74
  %v397 = vunpack.c.h.b16 %v74
  %v398 = vunpack.c.l.b16 %v75
  %v399 = vunpack.c.h.b16 %v75
  %v400 = vunpack.c.l.b16 %v76
  %v401 = vunpack.c.h.b16 %v76
  %v402 = vunpack.c.l.b16 %v77
  %v403 = vunpack.c.h.b16 %v77
  %v404 = vunpack.c.l.b16 %v78
  %v405 = vunpack.c.h.b16 %v78
  %v406 = vunpack.c.l.b16 %v79
  %v407 = vunpack.c.h.b16 %v79
  %v408 = vunpack.c.l.b16 %v80
  %v409 = vunpack.c.h.b16 %v80
  %v410 = vunpack.c.l.b16 %v81
  %v411 = vunpack.c.h.b16 %v81
  %v412 = vunpack.c.l.b16 %v82
  %v413 = vunpack.c.h.b16 %v82
  %v414 = vunpack.c.l.b16 %v83
  %v415 = vunpack.c.h.b16 %v83
  %v416 = vunpack.c.l.b16 %v84
  %v417 = vunpack.c.h.b16 %v84
  %v418 = vunpack.c.l.b16 %v85
  %v419 = vunpack.c.h.b16 %v85
  %v420 = vunpack.c.l.b16 %v86
  %v421 = vunpack.c.h.b16 %v86
  %v422 = vunpack.c.l.b16 %v87
  %v423 = vunpack.c.h.b16 %v87
  %v424 = vunpack.c.l.b16 %v88
  %v425 = vunpack.c.h.b16 %v88
  %v426 = vunpack.c.l.b16 %v89
  %v427 = vunpack.c.h.b16 %v89
  %v428 = vunpack.c.l.b16 %v90
  %v429 = vunpack.c.h.b16 %v90
  %v430 = vunpack.c.l.b16 %v91
  %v431 = vunpack.c.h.b16 %v91
  %v432 = vunpack.c.l.b16 %v92
  %v433 = vunpack.c.h.b16 %v92
  %v434 = vunpack.c.l.b16 %v93
  %v435 = vunpack.c.h.b16 %v93
  %v436 = vunpack.c.l.b16 %v94
  %v437 = vunpack.c.h.b16 %v94
  %v438 = vunpack.c.l.b16 %v95
  %v439 = vunpack.c.h.b16 %v95
  %v440 = vunpack.c.l.b16 %v96
  %v441 = vunpack.c.h.b16 %v96
  %v442 = vunpack.c.l.b16 %v97
  %v443 = vunpack.c.h.b16 %v97
  %v444 = vunpack.c.l.b16 %v98
  %v445 = vunpack.c.h.b16 %v98
  %v446 = vunpack.c.l.b16 %v99
  %v447 = vunpack.c.h.b16 %v99
  %v448 = vunpack.c.l.b16 %v100
  %v449 = vunpack.c.h.b16 %v100
  %v450 = vunpack.c.l.b16 %v101
  %v451 = vunpack.c.h.b16 %v101
  %v452 = vunpack.c.l.b16 %v102
  %v453 = vunpack.c.h.b16 %v102
  %v454 = vunpack.c.l.b16 %v103
  %v455 = vunpack.c.h.b16 %v103
  %v456 = vunpack.c.l.b16 %v104
  %v457 = vunpack.c.h.b16 %v104
  %v458 = vunpack.c.l.b16 %v105
  %v459 = vunpack.c.h.b16 %v105
  %v460 = vunpack.c.l.b16 %v106
  %v461 = vunpack.c.h.b16 %v106
  %v462 = vunpack.c.l.b16 %v107
  %v463 = vunpack.c.h.b16 %v107
  %v464 = vunpack.c.l.b16 %v108
  %v465 = vunpack.c.h.b16 %v108
  %v466 = vunpack.c.l.b16 %v109
  %v467 = vunpack.c.h.b16 %v109
  %v468 = vpack.c.b16 %v342, %v340
  %v469 = vpack.c.b16 %v343, %v341
  %v470 = vpack.c.b16 %v346, %v344
  %v471 = vpack.c.b16 %v347, %v345
  %v472 = vpack.c.b16 %v350, %v348
  %v473 = vpack.c.b16 %v351, %v349
  %v474 = vpack.c.b16 %v354, %v352
  %v475 = vpack.c.b16 %v355, %v353
  %v476 = vpack.c.b16 %v358, %v356
  %v477 = vpack.c.b16 %v359, %v357
  %v478 = vpack.c.b16 %v362, %v360
  %v479 = vpack.c.b16 %v363, %v361
  %v480 = vpack.c.b16 %v366, %v364
  %v481 = vpack.c.b16 %v367, %v365
  %v482 = vpack.c.b16 %v370, %v368
  %v483 = vpack.c.b16 %v371, %v369
  %v484 = vpack.c.b16 %v374, %v372
  %v485 = vpack.c.b16 %v375, %v373
  %v486 = vpack.c.b16 %v378, %v376
  %v487 = vpack.c.b16 %v379, %v377
  %v488 = vpack.c.b16 %v382, %v380
  %v489 = vpack.c.b16 %v383, %v381
  %v490 = vpack.c.b16 %v386, %v384
  %v491 = vpack.c.b16 %v387, %v385
  %v492 = vpack.c.b16 %v390, %v388
  %v493 = vpack.c.b16 %v391, %v389
  %v494 = vpack.c.b16 %v394, %v392
  %v495 = vpack.c.b16 %v395, %v393
  %v496 = vpack.c.b16 %v398, %v396
  %v497 = vpack.c.b16 %v399, %v397
  %v498 = vpack.c.b16 %v402, %v400
  %v499 = vpack.c.b16 %v403, %v401
  %v500 = vpack.c.b16 %v406, %v404
  %v501 = vpack.c.b16 %v407, %v405
  %v502 = vpack.c.b16 %v410, %v408
  %v503 = vpack.c.b16 %v411, %v409
  %v504 = vpack.c.b16 %v414, %v412
  %v505 = vpack.c.b16 %v415, %v413
  %v506 = vpack.c.b16 %v418, %v416
  %v507 = vpack.c.b16 %v419, %v417
  %v508 = vpack.c.b16 %v422, %v420
  %v509 = vpack.c.b16 %v423, %v421
  %v510 = vpack.c.b16 %v426, %v424
  %v511 = vpack.c.b16 %v427, %v425
  %v512 = vpack.c.b16 %v430, %v428
  %v513 = vpack.c.b16 %v431, %v429
  %v514 = vpack.c.b16 %v434, %v432
  %v515 = vpack.c.b16 %v435, %v433
  %v516 = vpack.c.b16 %v438, %v436
  %v517 = vpack.c.b16 %v439, %v437
  %v518 = vpack.c.b16 %v442, %v440
  %v519 = vpack.c.b16 %v443, %v441
  %v520 = vpack.c.b16 %v446, %v444
  %v521 = vpack.c.b16 %v447, %v445
  %v522 = vpack.c.b16 %v450, %v448
  %v523 = vpack.c.b16 %v451, %v449
  %v524 = vpack.c.b16 %v454, %v452
  %v525 = vpack.c.b16 %v455, %v453
  %v526 = vpack.c.b16 %v458, %v456
  %v527 = vpack.c.b16 %v459, %v457
  %v528 = vpack.c.b16 %v462, %v460
  %v529 = vpack.c.b16 %v463, %v461
  %v530 = vpack.c.b16 %v466, %v464
  %v531 = vpack.c.b16 %v467, %v465
  %596 = vmatpush.bf16.msra.mxu0 %v482
  %597 = vmatpush.bf16.msra.mxu0 %v480
  %598 = vmatpush.bf16.msra.mxu0 %v478
  %599 = vmatpush.bf16.msra.mxu0 %v476
  %600 = vmatpush.bf16.msra.mxu0 %v474
  %601 = vmatpush.bf16.msra.mxu0 %v472
  %602 = vmatpush.bf16.msra.mxu0 %v470
  %603 = vmatpush.bf16.msra.mxu0 %v468
  %604 = vmatmul.bf16.gmra.mxu0 %v212
  %v605 = vpop.f32.mrf.mxu0
  %v606 = vadd.f32 %v112, %v605
  %v607 = vpop.f32.mrf.mxu0
  %v608 = vadd.f32 %v112, %v607
  %609 = vmatmul.bf16.gmra.mxu0 %v216
  %v610 = vpop.f32.mrf.mxu0
  %v611 = vadd.f32 %v112, %v610
  %v612 = vpop.f32.mrf.mxu0
  %v613 = vadd.f32 %v112, %v612
  %614 = vmatmul.bf16.gmra.mxu0 %v220
  %v615 = vpop.f32.mrf.mxu0
  %v616 = vadd.f32 %v112, %v615
  %v617 = vpop.f32.mrf.mxu0
  %v618 = vadd.f32 %v112, %v617
  %619 = vmatmul.bf16.gmra.mxu0 %v224
  %v620 = vpop.f32.mrf.mxu0
  %v621 = vadd.f32 %v112, %v620
  %v622 = vpop.f32.mrf.mxu0
  %v623 = vadd.f32 %v112, %v622
  %624 = vmatmul.bf16.gmra.mxu0 %v228
  %v625 = vpop.f32.mrf.mxu0
  %v626 = vadd.f32 %v112, %v625
  %v627 = vpop.f32.mrf.mxu0
  %v628 = vadd.f32 %v112, %v627
  %629 = vmatmul.bf16.gmra.mxu0 %v232
  %v630 = vpop.f32.mrf.mxu0
  %v631 = vadd.f32 %v112, %v630
  %v632 = vpop.f32.mrf.mxu0
  %v633 = vadd.f32 %v112, %v632
  %634 = vmatmul.bf16.gmra.mxu0 %v236
  %v635 = vpop.f32.mrf.mxu0
  %v636 = vadd.f32 %v112, %v635
  %v637 = vpop.f32.mrf.mxu0
  %v638 = vadd.f32 %v112, %v637
  %639 = vmatmul.bf16.gmra.mxu0 %v240
  %v640 = vpop.f32.mrf.mxu0
  %v641 = vadd.f32 %v112, %v640
  %v642 = vpop.f32.mrf.mxu0
  %v643 = vadd.f32 %v112, %v642
  %644 = vdwg.mxu0
  %645 = vmatpush.bf16.msra.mxu0 %v498
  %646 = vmatpush.bf16.msra.mxu0 %v496
  %647 = vmatpush.bf16.msra.mxu0 %v494
  %648 = vmatpush.bf16.msra.mxu0 %v492
  %649 = vmatpush.bf16.msra.mxu0 %v490
  %650 = vmatpush.bf16.msra.mxu0 %v488
  %651 = vmatpush.bf16.msra.mxu0 %v486
  %652 = vmatpush.bf16.msra.mxu0 %v484
  %653 = vmatmul.bf16.gmra.mxu0 %v213
  %v654 = vpop.f32.mrf.mxu0
  %v655 = vadd.f32 %v606, %v654
  %v656 = vpop.f32.mrf.mxu0
  %v657 = vadd.f32 %v608, %v656
  %658 = vmatmul.bf16.gmra.mxu0 %v217
  %v659 = vpop.f32.mrf.mxu0
  %v660 = vadd.f32 %v611, %v659
  %v661 = vpop.f32.mrf.mxu0
  %v662 = vadd.f32 %v613, %v661
  %663 = vmatmul.bf16.gmra.mxu0 %v221
  %v664 = vpop.f32.mrf.mxu0
  %v665 = vadd.f32 %v616, %v664
  %v666 = vpop.f32.mrf.mxu0
  %v667 = vadd.f32 %v618, %v666
  %668 = vmatmul.bf16.gmra.mxu0 %v225
  %v669 = vpop.f32.mrf.mxu0
  %v670 = vadd.f32 %v621, %v669
  %v671 = vpop.f32.mrf.mxu0
  %v672 = vadd.f32 %v623, %v671
  %673 = vmatmul.bf16.gmra.mxu0 %v229
  %v674 = vpop.f32.mrf.mxu0
  %v675 = vadd.f32 %v626, %v674
  %v676 = vpop.f32.mrf.mxu0
  %v677 = vadd.f32 %v628, %v676
  %678 = vmatmul.bf16.gmra.mxu0 %v233
  %v679 = vpop.f32.mrf.mxu0
  %v680 = vadd.f32 %v631, %v679
  %v681 = vpop.f32.mrf.mxu0
  %v682 = vadd.f32 %v633, %v681
  %683 = vmatmul.bf16.gmra.mxu0 %v237
  %v684 = vpop.f32.mrf.mxu0
  %v685 = vadd.f32 %v636, %v684
  %v686 = vpop.f32.mrf.mxu0
  %v687 = vadd.f32 %v638, %v686
  %688 = vmatmul.bf16.gmra.mxu0 %v241
  %v689 = vpop.f32.mrf.mxu0
  %v690 = vadd.f32 %v641, %v689
  %v691 = vpop.f32.mrf.mxu0
  %v692 = vadd.f32 %v643, %v691
  %693 = vdwg.mxu0
  %694 = vmatpush.bf16.msra.mxu0 %v514
  %695 = vmatpush.bf16.msra.mxu0 %v512
  %696 = vmatpush.bf16.msra.mxu0 %v510
  %697 = vmatpush.bf16.msra.mxu0 %v508
  %698 = vmatpush.bf16.msra.mxu0 %v506
  %699 = vmatpush.bf16.msra.mxu0 %v504
  %700 = vmatpush.bf16.msra.mxu0 %v502
  %701 = vmatpush.bf16.msra.mxu0 %v500
  %702 = vmatmul.bf16.gmra.mxu0 %v214
  %v703 = vpop.f32.mrf.mxu0
  %v704 = vadd.f32 %v655, %v703
  %v705 = vpop.f32.mrf.mxu0
  %v706 = vadd.f32 %v657, %v705
  %707 = vmatmul.bf16.gmra.mxu0 %v218
  %v708 = vpop.f32.mrf.mxu0
  %v709 = vadd.f32 %v660, %v708
  %v710 = vpop.f32.mrf.mxu0
  %v711 = vadd.f32 %v662, %v710
  %712 = vmatmul.bf16.gmra.mxu0 %v222
  %v713 = vpop.f32.mrf.mxu0
  %v714 = vadd.f32 %v665, %v713
  %v715 = vpop.f32.mrf.mxu0
  %v716 = vadd.f32 %v667, %v715
  %717 = vmatmul.bf16.gmra.mxu0 %v226
  %v718 = vpop.f32.mrf.mxu0
  %v719 = vadd.f32 %v670, %v718
  %v720 = vpop.f32.mrf.mxu0
  %v721 = vadd.f32 %v672, %v720
  %722 = vmatmul.bf16.gmra.mxu0 %v230
  %v723 = vpop.f32.mrf.mxu0
  %v724 = vadd.f32 %v675, %v723
  %v725 = vpop.f32.mrf.mxu0
  %v726 = vadd.f32 %v677, %v725
  %727 = vmatmul.bf16.gmra.mxu0 %v234
  %v728 = vpop.f32.mrf.mxu0
  %v729 = vadd.f32 %v680, %v728
  %v730 = vpop.f32.mrf.mxu0
  %v731 = vadd.f32 %v682, %v730
  %732 = vmatmul.bf16.gmra.mxu0 %v238
  %v733 = vpop.f32.mrf.mxu0
  %v734 = vadd.f32 %v685, %v733
  %v735 = vpop.f32.mrf.mxu0
  %v736 = vadd.f32 %v687, %v735
  %737 = vmatmul.bf16.gmra.mxu0 %v242
  %v738 = vpop.f32.mrf.mxu0
  %v739 = vadd.f32 %v690, %v738
  %v740 = vpop.f32.mrf.mxu0
  %v741 = vadd.f32 %v692, %v740
  %742 = vdwg.mxu0
  %743 = vmatpush.bf16.msra.mxu0 %v530
  %744 = vmatpush.bf16.msra.mxu0 %v528
  %745 = vmatpush.bf16.msra.mxu0 %v526
  %746 = vmatpush.bf16.msra.mxu0 %v524
  %747 = vmatpush.bf16.msra.mxu0 %v522
  %748 = vmatpush.bf16.msra.mxu0 %v520
  %749 = vmatpush.bf16.msra.mxu0 %v518
  %750 = vmatpush.bf16.msra.mxu0 %v516
  %751 = vmatmul.bf16.gmra.mxu0 %v215
  %v752 = vpop.f32.mrf.mxu0
  %v753 = vadd.f32 %v704, %v752
  %v754 = vpop.f32.mrf.mxu0
  %v755 = vadd.f32 %v706, %v754
  %756 = vmatmul.bf16.gmra.mxu0 %v219
  %v757 = vpop.f32.mrf.mxu0
  %v758 = vadd.f32 %v709, %v757
  %v759 = vpop.f32.mrf.mxu0
  %v760 = vadd.f32 %v711, %v759
  %761 = vmatmul.bf16.gmra.mxu0 %v223
  %v762 = vpop.f32.mrf.mxu0
  %v763 = vadd.f32 %v714, %v762
  %v764 = vpop.f32.mrf.mxu0
  %v765 = vadd.f32 %v716, %v764
  %766 = vmatmul.bf16.gmra.mxu0 %v227
  %v767 = vpop.f32.mrf.mxu0
  %v768 = vadd.f32 %v719, %v767
  %v769 = vpop.f32.mrf.mxu0
  %v770 = vadd.f32 %v721, %v769
  %771 = vmatmul.bf16.gmra.mxu0 %v231
  %v772 = vpop.f32.mrf.mxu0
  %v773 = vadd.f32 %v724, %v772
  %v774 = vpop.f32.mrf.mxu0
  %v775 = vadd.f32 %v726, %v774
  %776 = vmatmul.bf16.gmra.mxu0 %v235
  %v777 = vpop.f32.mrf.mxu0
  %v778 = vadd.f32 %v729, %v777
  %v779 = vpop.f32.mrf.mxu0
  %v780 = vadd.f32 %v731, %v779
  %781 = vmatmul.bf16.gmra.mxu0 %v239
  %v782 = vpop.f32.mrf.mxu0
  %v783 = vadd.f32 %v734, %v782
  %v784 = vpop.f32.mrf.mxu0
  %v785 = vadd.f32 %v736, %v784
  %786 = vmatmul.bf16.gmra.mxu0 %v243
  %v787 = vpop.f32.mrf.mxu0
  %v788 = vadd.f32 %v739, %v787
  %v789 = vpop.f32.mrf.mxu0
  %v790 = vadd.f32 %v741, %v789
  %791 = vdwg.mxu0
  %792 = vmatpush.bf16.msra.mxu0 %v483
  %793 = vmatpush.bf16.msra.mxu0 %v481
  %794 = vmatpush.bf16.msra.mxu0 %v479
  %795 = vmatpush.bf16.msra.mxu0 %v477
  %796 = vmatpush.bf16.msra.mxu0 %v475
  %797 = vmatpush.bf16.msra.mxu0 %v473
  %798 = vmatpush.bf16.msra.mxu0 %v471
  %799 = vmatpush.bf16.msra.mxu0 %v469
  %800 = vmatmul.bf16.gmra.mxu0 %v212
  %v801 = vpop.f32.mrf.mxu0
  %v802 = vadd.f32 %v113, %v801
  %v803 = vpop.f32.mrf.mxu0
  %v804 = vadd.f32 %v113, %v803
  %805 = vmatmul.bf16.gmra.mxu0 %v216
  %v806 = vpop.f32.mrf.mxu0
  %v807 = vadd.f32 %v113, %v806
  %v808 = vpop.f32.mrf.mxu0
  %v809 = vadd.f32 %v113, %v808
  %810 = vmatmul.bf16.gmra.mxu0 %v220
  %v811 = vpop.f32.mrf.mxu0
  %v812 = vadd.f32 %v113, %v811
  %v813 = vpop.f32.mrf.mxu0
  %v814 = vadd.f32 %v113, %v813
  %815 = vmatmul.bf16.gmra.mxu0 %v224
  %v816 = vpop.f32.mrf.mxu0
  %v817 = vadd.f32 %v113, %v816
  %v818 = vpop.f32.mrf.mxu0
  %v819 = vadd.f32 %v113, %v818
  %820 = vmatmul.bf16.gmra.mxu0 %v228
  %v821 = vpop.f32.mrf.mxu0
  %v822 = vadd.f32 %v113, %v821
  %v823 = vpop.f32.mrf.mxu0
  %v824 = vadd.f32 %v113, %v823
  %825 = vmatmul.bf16.gmra.mxu0 %v232
  %v826 = vpop.f32.mrf.mxu0
  %v827 = vadd.f32 %v113, %v826
  %v828 = vpop.f32.mrf.mxu0
  %v829 = vadd.f32 %v113, %v828
  %830 = vmatmul.bf16.gmra.mxu0 %v236
  %v831 = vpop.f32.mrf.mxu0
  %v832 = vadd.f32 %v113, %v831
  %v833 = vpop.f32.mrf.mxu0
  %v834 = vadd.f32 %v113, %v833
  %835 = vmatmul.bf16.gmra.mxu0 %v240
  %v836 = vpop.f32.mrf.mxu0
  %v837 = vadd.f32 %v113, %v836
  %v838 = vpop.f32.mrf.mxu0
  %v839 = vadd.f32 %v113, %v838
  %840 = vdwg.mxu0
  %841 = vmatpush.bf16.msra.mxu0 %v499
  %842 = vmatpush.bf16.msra.mxu0 %v497
  %843 = vmatpush.bf16.msra.mxu0 %v495
  %844 = vmatpush.bf16.msra.mxu0 %v493
  %845 = vmatpush.bf16.msra.mxu0 %v491
  %846 = vmatpush.bf16.msra.mxu0 %v489
  %847 = vmatpush.bf16.msra.mxu0 %v487
  %848 = vmatpush.bf16.msra.mxu0 %v485
  %849 = vmatmul.bf16.gmra.mxu0 %v213
  %v850 = vpop.f32.mrf.mxu0
  %v851 = vadd.f32 %v802, %v850
  %v852 = vpop.f32.mrf.mxu0
  %v853 = vadd.f32 %v804, %v852
  %854 = vmatmul.bf16.gmra.mxu0 %v217
  %v855 = vpop.f32.mrf.mxu0
  %v856 = vadd.f32 %v807, %v855
  %v857 = vpop.f32.mrf.mxu0
  %v858 = vadd.f32 %v809, %v857
  %859 = vmatmul.bf16.gmra.mxu0 %v221
  %v860 = vpop.f32.mrf.mxu0
  %v861 = vadd.f32 %v812, %v860
  %v862 = vpop.f32.mrf.mxu0
  %v863 = vadd.f32 %v814, %v862
  %864 = vmatmul.bf16.gmra.mxu0 %v225
  %v865 = vpop.f32.mrf.mxu0
  %v866 = vadd.f32 %v817, %v865
  %v867 = vpop.f32.mrf.mxu0
  %v868 = vadd.f32 %v819, %v867
  %869 = vmatmul.bf16.gmra.mxu0 %v229
  %v870 = vpop.f32.mrf.mxu0
  %v871 = vadd.f32 %v822, %v870
  %v872 = vpop.f32.mrf.mxu0
  %v873 = vadd.f32 %v824, %v872
  %874 = vmatmul.bf16.gmra.mxu0 %v233
  %v875 = vpop.f32.mrf.mxu0
  %v876 = vadd.f32 %v827, %v875
  %v877 = vpop.f32.mrf.mxu0
  %v878 = vadd.f32 %v829, %v877
  %879 = vmatmul.bf16.gmra.mxu0 %v237
  %v880 = vpop.f32.mrf.mxu0
  %v881 = vadd.f32 %v832, %v880
  %v882 = vpop.f32.mrf.mxu0
  %v883 = vadd.f32 %v834, %v882
  %884 = vmatmul.bf16.gmra.mxu0 %v241
  %v885 = vpop.f32.mrf.mxu0
  %v886 = vadd.f32 %v837, %v885
  %v887 = vpop.f32.mrf.mxu0
  %v888 = vadd.f32 %v839, %v887
  %889 = vdwg.mxu0
  %890 = vmatpush.bf16.msra.mxu0 %v515
  %891 = vmatpush.bf16.msra.mxu0 %v513
  %892 = vmatpush.bf16.msra.mxu0 %v511
  %893 = vmatpush.bf16.msra.mxu0 %v509
  %894 = vmatpush.bf16.msra.mxu0 %v507
  %895 = vmatpush.bf16.msra.mxu0 %v505
  %896 = vmatpush.bf16.msra.mxu0 %v503
  %897 = vmatpush.bf16.msra.mxu0 %v501
  %898 = vmatmul.bf16.gmra.mxu0 %v214
  %v899 = vpop.f32.mrf.mxu0
  %v900 = vadd.f32 %v851, %v899
  %v901 = vpop.f32.mrf.mxu0
  %v902 = vadd.f32 %v853, %v901
  %903 = vmatmul.bf16.gmra.mxu0 %v218
  %v904 = vpop.f32.mrf.mxu0
  %v905 = vadd.f32 %v856, %v904
  %v906 = vpop.f32.mrf.mxu0
  %v907 = vadd.f32 %v858, %v906
  %908 = vmatmul.bf16.gmra.mxu0 %v222
  %v909 = vpop.f32.mrf.mxu0
  %v910 = vadd.f32 %v861, %v909
  %v911 = vpop.f32.mrf.mxu0
  %v912 = vadd.f32 %v863, %v911
  %913 = vmatmul.bf16.gmra.mxu0 %v226
  %v914 = vpop.f32.mrf.mxu0
  %v915 = vadd.f32 %v866, %v914
  %v916 = vpop.f32.mrf.mxu0
  %v917 = vadd.f32 %v868, %v916
  %918 = vmatmul.bf16.gmra.mxu0 %v230
  %v919 = vpop.f32.mrf.mxu0
  %v920 = vadd.f32 %v871, %v919
  %v921 = vpop.f32.mrf.mxu0
  %v922 = vadd.f32 %v873, %v921
  %923 = vmatmul.bf16.gmra.mxu0 %v234
  %v924 = vpop.f32.mrf.mxu0
  %v925 = vadd.f32 %v876, %v924
  %v926 = vpop.f32.mrf.mxu0
  %v927 = vadd.f32 %v878, %v926
  %928 = vmatmul.bf16.gmra.mxu0 %v238
  %v929 = vpop.f32.mrf.mxu0
  %v930 = vadd.f32 %v881, %v929
  %v931 = vpop.f32.mrf.mxu0
  %v932 = vadd.f32 %v883, %v931
  %933 = vmatmul.bf16.gmra.mxu0 %v242
  %v934 = vpop.f32.mrf.mxu0
  %v935 = vadd.f32 %v886, %v934
  %v936 = vpop.f32.mrf.mxu0
  %v937 = vadd.f32 %v888, %v936
  %938 = vdwg.mxu0
  %939 = vmatpush.bf16.msra.mxu0 %v531
  %940 = vmatpush.bf16.msra.mxu0 %v529
  %941 = vmatpush.bf16.msra.mxu0 %v527
  %942 = vmatpush.bf16.msra.mxu0 %v525
  %943 = vmatpush.bf16.msra.mxu0 %v523
  %944 = vmatpush.bf16.msra.mxu0 %v521
  %945 = vmatpush.bf16.msra.mxu0 %v519
  %946 = vmatpush.bf16.msra.mxu0 %v517
  %947 = vmatmul.bf16.gmra.mxu0 %v215
  %v948 = vpop.f32.mrf.mxu0
  %v949 = vadd.f32 %v900, %v948
  %v950 = vpop.f32.mrf.mxu0
  %v951 = vadd.f32 %v902, %v950
  %952 = vmatmul.bf16.gmra.mxu0 %v219
  %v953 = vpop.f32.mrf.mxu0
  %v954 = vadd.f32 %v905, %v953
  %v955 = vpop.f32.mrf.mxu0
  %v956 = vadd.f32 %v907, %v955
  %957 = vmatmul.bf16.gmra.mxu0 %v223
  %v958 = vpop.f32.mrf.mxu0
  %v959 = vadd.f32 %v910, %v958
  %v960 = vpop.f32.mrf.mxu0
  %v961 = vadd.f32 %v912, %v960
  %962 = vmatmul.bf16.gmra.mxu0 %v227
  %v963 = vpop.f32.mrf.mxu0
  %v964 = vadd.f32 %v915, %v963
  %v965 = vpop.f32.mrf.mxu0
  %v966 = vadd.f32 %v917, %v965
  %967 = vmatmul.bf16.gmra.mxu0 %v231
  %v968 = vpop.f32.mrf.mxu0
  %v969 = vadd.f32 %v920, %v968
  %v970 = vpop.f32.mrf.mxu0
  %v971 = vadd.f32 %v922, %v970
  %972 = vmatmul.bf16.gmra.mxu0 %v235
  %v973 = vpop.f32.mrf.mxu0
  %v974 = vadd.f32 %v925, %v973
  %v975 = vpop.f32.mrf.mxu0
  %v976 = vadd.f32 %v927, %v975
  %977 = vmatmul.bf16.gmra.mxu0 %v239
  %v978 = vpop.f32.mrf.mxu0
  %v979 = vadd.f32 %v930, %v978
  %v980 = vpop.f32.mrf.mxu0
  %v981 = vadd.f32 %v932, %v980
  %982 = vmatmul.bf16.gmra.mxu0 %v243
  %v983 = vpop.f32.mrf.mxu0
  %v984 = vadd.f32 %v935, %v983
  %v985 = vpop.f32.mrf.mxu0
  %v986 = vadd.f32 %v937, %v985
  %987 = vdwg.mxu0
  %v988 = vmax.f32 %v753, 0.0
  %v989 = vmax.f32 %v949, 0.0
  %v990 = vmax.f32 %v755, 0.0
  %v991 = vmax.f32 %v951, 0.0
  %v992 = vmax.f32 %v758, 0.0
  %v993 = vmax.f32 %v954, 0.0
  %v994 = vmax.f32 %v760, 0.0
  %v995 = vmax.f32 %v956, 0.0
  %v996 = vmax.f32 %v763, 0.0
  %v997 = vmax.f32 %v959, 0.0
  %v998 = vmax.f32 %v765, 0.0
  %v999 = vmax.f32 %v961, 0.0
  %v1000 = vmax.f32 %v768, 0.0
  %v1001 = vmax.f32 %v964, 0.0
  %v1002 = vmax.f32 %v770, 0.0
  %v1003 = vmax.f32 %v966, 0.0
  %v1004 = vmax.f32 %v773, 0.0
  %v1005 = vmax.f32 %v969, 0.0
  %v1006 = vmax.f32 %v775, 0.0
  %v1007 = vmax.f32 %v971, 0.0
  %v1008 = vmax.f32 %v778, 0.0
  %v1009 = vmax.f32 %v974, 0.0
  %v1010 = vmax.f32 %v780, 0.0
  %v1011 = vmax.f32 %v976, 0.0
  %v1012 = vmax.f32 %v783, 0.0
  %v1013 = vmax.f32 %v979, 0.0
  %v1014 = vmax.f32 %v785, 0.0
  %v1015 = vmax.f32 %v981, 0.0
  %v1016 = vmax.f32 %v788, 0.0
  %v1017 = vmax.f32 %v984, 0.0
  %v1018 = vmax.f32 %v790, 0.0
  %v1019 = vmax.f32 %v986, 0.0
  %1020 = vst [vmem:[%s3] sm:$0xff] %v988
  %1021 = vst [vmem:[%s3 + $0x8] sm:$0xff] %v989
  %1022 = vst [vmem:[%s3 + $0x10] sm:$0xff] %v990
  %1023 = vst [vmem:[%s3 + $0x18] sm:$0xff] %v991
  %1024 = vst [vmem:[%s3 + $0x20] sm:$0xff] %v992
  %1025 = vst [vmem:[%s3 + $0x28] sm:$0xff] %v993
  %1026 = vst [vmem:[%s3 + $0x30] sm:$0xff] %v994
  %1027 = vst [vmem:[%s3 + $0x38] sm:$0xff] %v995
  %1028 = vst [vmem:[%s3 + $0x40] sm:$0xff] %v996
  %1029 = vst [vmem:[%s3 + $0x48] sm:$0xff] %v997
  %1030 = vst [vmem:[%s3 + $0x50] sm:$0xff] %v998
  %1031 = vst [vmem:[%s3 + $0x58] sm:$0xff] %v999
  %1032 = vst [vmem:[%s3 + $0x60] sm:$0xff] %v1000
  %1033 = vst [vmem:[%s3 + $0x68] sm:$0xff] %v1001
  %1034 = vst [vmem:[%s3 + $0x70] sm:$0xff] %v1002
  %1035 = vst [vmem:[%s3 + $0x78] sm:$0xff] %v1003
  %1036 = vst [vmem:[%s3 + $0x80] sm:$0xff] %v1004
  %1037 = vst [vmem:[%s3 + $0x88] sm:$0xff] %v1005
  %1038 = vst [vmem:[%s3 + $0x90] sm:$0xff] %v1006
  %1039 = vst [vmem:[%s3 + $0x98] sm:$0xff] %v1007
  %1040 = vst [vmem:[%s3 + $0xa0] sm:$0xff] %v1008
  %1041 = vst [vmem:[%s3 + $0xa8] sm:$0xff] %v1009
  %1042 = vst [vmem:[%s3 + $0xb0] sm:$0xff] %v1010
  %1043 = vst [vmem:[%s3 + $0xb8] sm:$0xff] %v1011
  %1044 = vst [vmem:[%s3 + $0xc0] sm:$0xff] %v1012
  %1045 = vst [vmem:[%s3 + $0xc8] sm:$0xff] %v1013
  %1046 = vst [vmem:[%s3 + $0xd0] sm:$0xff] %v1014
  %1047 = vst [vmem:[%s3 + $0xd8] sm:$0xff] %v1015
  %1048 = vst [vmem:[%s3 + $0xe0] sm:$0xff] %v1016
  %1049 = vst [vmem:[%s3 + $0xe8] sm:$0xff] %v1017
  %1050 = vst [vmem:[%s3 + $0xf0] sm:$0xff] %v1018
  %1051 = vst [vmem:[%s3 + $0xf8] sm:$0xff] %v1019
  // Predicated region
  $region14: #{vae_forward.15} parent=0 // pred_check
    _
  $region15: #{vae_forward.15} parent=0 // pred_check_branch
    %1053 = sbr.rel (0) target = $region17
  $region16: #{vae_forward.15} parent=0 // pred_region
    _
  $region17: #{vae_forward.15} parent=0 // pred_fallthru
    _
  // Predicated region
  $region18: #{vae_forward.15} parent=0 // pred_check
    _
  $region19: #{vae_forward.15} parent=0 // pred_check_branch
    %1055 = sbr.rel (0) target = $region21
  $region20: #{vae_forward.15} parent=0 // pred_region
    _
  $region21: #{vae_forward.15} parent=0 // pred_fallthru
    _

// kernel: tile.28
$region0: #{tile.28}
  #allocation0 [shape = 's32[1]{0}', space=sflag, size = 0x4, scoped, tag = 'scoped memory for tile.28']
  %s0 = inlined_call_operand.vmem [shape: f32[32], index: 0, kind: input, shape index: {}]
  %s1 = inlined_call_operand.vmem [shape: f32[4,32], index: 1, kind: output, shape index: {}]
  // Predicated region
  $region2: #{tile.28} parent=0 // pred_check
    _
  $region3: #{tile.28} parent=0 // pred_check_branch
    %3 = sbr.rel (0) target = $region5
  $region4: #{tile.28} parent=0 // pred_region
    _
  $region5: #{tile.28} parent=0 // pred_fallthru
    _
  %v4 = vld [vmem:[%s0] ss:$0 sm:$0xff]
  %5 = vst [vmem:[%s1] sm:$0xf] %v4

// kernel: tile.29
$region0: #{tile.29}
  %s0 = inlined_call_operand.vmem [shape: f32[4,32], index: 0, kind: input, shape index: {}]
  %s1 = inlined_call_operand.vmem [shape: f32[1,128], index: 1, kind: output, shape index: {}]
  $region1: #{tile.29} parent=0
    #allocation0 [shape = 'u8[4096]{0}', space=vmem, size = 0x1000, scoped, tag = 'scoped mem for output reshape']
    #allocation1 [shape = 'u8[4096]{0}', space=vmem, size = 0x1000, scoped, tag = 'scoped mem for input reshape']
    %s3 = ssub.s32 16, 1
    %v4 = vld [vmem:[%s0] sm:%s3]
    %5 = vst [vmem:[#allocation1] sm:%s3] %v4
    %v6 = vld [vmem:[#allocation1] sm:$0x1]
    %vm7 = vcmask 261120
    %8 = vst.msk [vmem:[#allocation0] sm:$0x1] %vm7, %v6
    %s9 = scalar_lea.vmem [#allocation1], 3
    %v10 = vld [vmem:[%s9] sm:$0x1]
    %11 = vrot.lane.b32.xlu0 %v10, 96
    %v12 = vpop.permute.xlu0 %11
    %vm13 = vcmask 1048320
    %14 = vst.msk [vmem:[#allocation0] sm:$0x1] %vm13, %v12
    %s15 = scalar_lea.vmem [#allocation1], 2
    %v16 = vld [vmem:[%s15] sm:$0x1]
    %17 = vrot.lane.b32.xlu0 %v16, 64
    %v18 = vpop.permute.xlu0 %17
    %vm19 = vcmask 785920
    %20 = vst.msk [vmem:[#allocation0] sm:$0x1] %vm19, %v18
    %s21 = scalar_lea.vmem [#allocation1], 1
    %v22 = vld [vmem:[%s21] sm:$0x1]
    %23 = vrot.lane.b32.xlu0 %v22, 32
    %v24 = vpop.permute.xlu0 %23
    %vm25 = vcmask 523520
    %26 = vst.msk [vmem:[#allocation0] sm:$0x1] %vm25, %v24
    %s28 = ssub.s32 2, 1
    %v29 = vld [vmem:[#allocation0] sm:%s28]
    %s31 = ssub.s32 2, 1
    %32 = vst [vmem:[%s1] sm:%s31] %v29

// kernel: vae_forward.16
$region0: #{vae_forward.16}
  #allocation0 [shape = 'u32[]', space=smem, size = 0x4, offset = 0x4, fixed_abs, tag = 'smem constant byte address 0x4 - core index']
  #allocation1 [shape = 'u32[72,128]{1,0:T(1,128)}', space=vmem, size = 0x9000, scoped, tag = 'internal scratch']
  %s0 = inlined_call_operand.vmem [shape: bf16[512,256], index: 0, kind: input, shape index: {}]
  %s1 = inlined_call_operand.vmem [shape: bf16[256,128], index: 1, kind: input, shape index: {}]
  %s2 = inlined_call_operand.vmem [shape: f32[1,128], index: 2, kind: input, shape index: {}]
  %s3 = inlined_call_operand.vmem [shape: f32[512,128], index: 3, kind: output, shape index: {}]
  %s4 = sld [smem:[#allocation0]]
  $region22: #{vae_forward.16} parent=0
    _
  %s6 = ssub.s32 1, %s4
  %s7 = scalar_select 0, %s6, %s4
  // Predicated region
  $region2: #{vae_forward.16} parent=0 // pred_check
    _
  $region3: #{vae_forward.16} parent=0 // pred_check_branch
    %9 = sbr.rel (0) target = $region5
  $region4: #{vae_forward.16} parent=0 // pred_region
    _
  $region5: #{vae_forward.16} parent=0 // pred_fallthru
    _
  // Predicated region
  $region6: #{vae_forward.16} parent=0 // pred_check
    _
  $region7: #{vae_forward.16} parent=0 // pred_check_branch
    %11 = sbr.rel (0) target = $region9
  $region8: #{vae_forward.16} parent=0 // pred_region
    _
  $region9: #{vae_forward.16} parent=0 // pred_fallthru
    _
  // Predicated region
  $region10: #{vae_forward.16} parent=0 // pred_check
    _
  $region11: #{vae_forward.16} parent=0 // pred_check_branch
    %13 = sbr.rel (0) target = $region13
  $region12: #{vae_forward.16} parent=0 // pred_region
    _
  $region13: #{vae_forward.16} parent=0 // pred_fallthru
    _
  %v14 = vld [vmem:[%s0] sm:$0xff]
  %v15 = vld [vmem:[%s0 + $0x8] sm:$0xff]
  %v16 = vld [vmem:[%s0 + $0x10] sm:$0xff]
  %v17 = vld [vmem:[%s0 + $0x18] sm:$0xff]
  %v18 = vld [vmem:[%s0 + $0x20] sm:$0xff]
  %v19 = vld [vmem:[%s0 + $0x28] sm:$0xff]
  %v20 = vld [vmem:[%s0 + $0x30] sm:$0xff]
  %v21 = vld [vmem:[%s0 + $0x38] sm:$0xff]
  %v22 = vld [vmem:[%s0 + $0x40] sm:$0xff]
  %v23 = vld [vmem:[%s0 + $0x48] sm:$0xff]
  %v24 = vld [vmem:[%s0 + $0x50] sm:$0xff]
  %v25 = vld [vmem:[%s0 + $0x58] sm:$0xff]
  %v26 = vld [vmem:[%s0 + $0x60] sm:$0xff]
  %v27 = vld [vmem:[%s0 + $0x68] sm:$0xff]
  %v28 = vld [vmem:[%s0 + $0x70] sm:$0xff]
  %v29 = vld [vmem:[%s0 + $0x78] sm:$0xff]
  %v30 = vld [vmem:[%s0 + $0x80] sm:$0xff]
  %v31 = vld [vmem:[%s0 + $0x88] sm:$0xff]
  %v32 = vld [vmem:[%s0 + $0x90] sm:$0xff]
  %v33 = vld [vmem:[%s0 + $0x98] sm:$0xff]
  %v34 = vld [vmem:[%s0 + $0xa0] sm:$0xff]
  %v35 = vld [vmem:[%s0 + $0xa8] sm:$0xff]
  %v36 = vld [vmem:[%s0 + $0xb0] sm:$0xff]
  %v37 = vld [vmem:[%s0 + $0xb8] sm:$0xff]
  %v38 = vld [vmem:[%s0 + $0xc0] sm:$0xff]
  %v39 = vld [vmem:[%s0 + $0xc8] sm:$0xff]
  %v40 = vld [vmem:[%s0 + $0xd0] sm:$0xff]
  %v41 = vld [vmem:[%s0 + $0xd8] sm:$0xff]
  %v42 = vld [vmem:[%s0 + $0xe0] sm:$0xff]
  %v43 = vld [vmem:[%s0 + $0xe8] sm:$0xff]
  %v44 = vld [vmem:[%s0 + $0xf0] sm:$0xff]
  %v45 = vld [vmem:[%s0 + $0xf8] sm:$0xff]
  %v46 = vld [vmem:[%s0 + $0x100] sm:$0xff]
  %v47 = vld [vmem:[%s0 + $0x108] sm:$0xff]
  %v48 = vld [vmem:[%s0 + $0x110] sm:$0xff]
  %v49 = vld [vmem:[%s0 + $0x118] sm:$0xff]
  %v50 = vld [vmem:[%s0 + $0x120] sm:$0xff]
  %v51 = vld [vmem:[%s0 + $0x128] sm:$0xff]
  %v52 = vld [vmem:[%s0 + $0x130] sm:$0xff]
  %v53 = vld [vmem:[%s0 + $0x138] sm:$0xff]
  %v54 = vld [vmem:[%s0 + $0x140] sm:$0xff]
  %v55 = vld [vmem:[%s0 + $0x148] sm:$0xff]
  %v56 = vld [vmem:[%s0 + $0x150] sm:$0xff]
  %v57 = vld [vmem:[%s0 + $0x158] sm:$0xff]
  %v58 = vld [vmem:[%s0 + $0x160] sm:$0xff]
  %v59 = vld [vmem:[%s0 + $0x168] sm:$0xff]
  %v60 = vld [vmem:[%s0 + $0x170] sm:$0xff]
  %v61 = vld [vmem:[%s0 + $0x178] sm:$0xff]
  %v62 = vld [vmem:[%s0 + $0x180] sm:$0xff]
  %v63 = vld [vmem:[%s0 + $0x188] sm:$0xff]
  %v64 = vld [vmem:[%s0 + $0x190] sm:$0xff]
  %v65 = vld [vmem:[%s0 + $0x198] sm:$0xff]
  %v66 = vld [vmem:[%s0 + $0x1a0] sm:$0xff]
  %v67 = vld [vmem:[%s0 + $0x1a8] sm:$0xff]
  %v68 = vld [vmem:[%s0 + $0x1b0] sm:$0xff]
  %v69 = vld [vmem:[%s0 + $0x1b8] sm:$0xff]
  %v70 = vld [vmem:[%s0 + $0x1c0] sm:$0xff]
  %v71 = vld [vmem:[%s0 + $0x1c8] sm:$0xff]
  %v72 = vld [vmem:[%s0 + $0x1d0] sm:$0xff]
  %v73 = vld [vmem:[%s0 + $0x1d8] sm:$0xff]
  %v74 = vld [vmem:[%s0 + $0x1e0] sm:$0xff]
  %v75 = vld [vmem:[%s0 + $0x1e8] sm:$0xff]
  %v76 = vld [vmem:[%s0 + $0x1f0] sm:$0xff]
  %v77 = vld [vmem:[%s0 + $0x1f8] sm:$0xff]
  %v78 = vld [vmem:[%s1] sm:$0xf]
  %v79 = vld [vmem:[%s1 + $0x4] sm:$0xf]
  %v80 = vld [vmem:[%s1 + $0x8] sm:$0xf]
  %v81 = vld [vmem:[%s1 + $0xc] sm:$0xf]
  %v82 = vld [vmem:[%s1 + $0x10] sm:$0xf]
  %v83 = vld [vmem:[%s1 + $0x14] sm:$0xf]
  %v84 = vld [vmem:[%s1 + $0x18] sm:$0xf]
  %v85 = vld [vmem:[%s1 + $0x1c] sm:$0xf]
  %v86 = vld [vmem:[%s1 + $0x20] sm:$0xf]
  %v87 = vld [vmem:[%s1 + $0x24] sm:$0xf]
  %v88 = vld [vmem:[%s1 + $0x28] sm:$0xf]
  %v89 = vld [vmem:[%s1 + $0x2c] sm:$0xf]
  %v90 = vld [vmem:[%s1 + $0x30] sm:$0xf]
  %v91 = vld [vmem:[%s1 + $0x34] sm:$0xf]
  %v92 = vld [vmem:[%s1 + $0x38] sm:$0xf]
  %v93 = vld [vmem:[%s1 + $0x3c] sm:$0xf]
  %v94 = vld [vmem:[%s1 + $0x40] sm:$0xf]
  %v95 = vld [vmem:[%s1 + $0x44] sm:$0xf]
  %v96 = vld [vmem:[%s1 + $0x48] sm:$0xf]
  %v97 = vld [vmem:[%s1 + $0x4c] sm:$0xf]
  %v98 = vld [vmem:[%s1 + $0x50] sm:$0xf]
  %v99 = vld [vmem:[%s1 + $0x54] sm:$0xf]
  %v100 = vld [vmem:[%s1 + $0x58] sm:$0xf]
  %v101 = vld [vmem:[%s1 + $0x5c] sm:$0xf]
  %v102 = vld [vmem:[%s1 + $0x60] sm:$0xf]
  %v103 = vld [vmem:[%s1 + $0x64] sm:$0xf]
  %v104 = vld [vmem:[%s1 + $0x68] sm:$0xf]
  %v105 = vld [vmem:[%s1 + $0x6c] sm:$0xf]
  %v106 = vld [vmem:[%s1 + $0x70] sm:$0xf]
  %v107 = vld [vmem:[%s1 + $0x74] sm:$0xf]
  %v108 = vld [vmem:[%s1 + $0x78] sm:$0xf]
  %v109 = vld [vmem:[%s1 + $0x7c] sm:$0xf]
  %v110 = vld [vmem:[%s2] sm:$0x1]
  %v112 = vperm.slane %v110, 0
  %v178 = vunpack.c.l.b16 %v14
  %v179 = vunpack.c.h.b16 %v14
  %v180 = vunpack.c.l.b16 %v15
  %v181 = vunpack.c.h.b16 %v15
  %v182 = vunpack.c.l.b16 %v16
  %v183 = vunpack.c.h.b16 %v16
  %v184 = vunpack.c.l.b16 %v17
  %v185 = vunpack.c.h.b16 %v17
  %v186 = vunpack.c.l.b16 %v18
  %v187 = vunpack.c.h.b16 %v18
  %v188 = vunpack.c.l.b16 %v19
  %v189 = vunpack.c.h.b16 %v19
  %v190 = vunpack.c.l.b16 %v20
  %v191 = vunpack.c.h.b16 %v20
  %v192 = vunpack.c.l.b16 %v21
  %v193 = vunpack.c.h.b16 %v21
  %v194 = vunpack.c.l.b16 %v22
  %v195 = vunpack.c.h.b16 %v22
  %v196 = vunpack.c.l.b16 %v23
  %v197 = vunpack.c.h.b16 %v23
  %v198 = vunpack.c.l.b16 %v24
  %v199 = vunpack.c.h.b16 %v24
  %v200 = vunpack.c.l.b16 %v25
  %v201 = vunpack.c.h.b16 %v25
  %v202 = vunpack.c.l.b16 %v26
  %v203 = vunpack.c.h.b16 %v26
  %v204 = vunpack.c.l.b16 %v27
  %v205 = vunpack.c.h.b16 %v27
  %v206 = vunpack.c.l.b16 %v28
  %v207 = vunpack.c.h.b16 %v28
  %v208 = vunpack.c.l.b16 %v29
  %v209 = vunpack.c.h.b16 %v29
  %v210 = vunpack.c.l.b16 %v30
  %v211 = vunpack.c.h.b16 %v30
  %v212 = vunpack.c.l.b16 %v31
  %v213 = vunpack.c.h.b16 %v31
  %v214 = vunpack.c.l.b16 %v32
  %v215 = vunpack.c.h.b16 %v32
  %v216 = vunpack.c.l.b16 %v33
  %v217 = vunpack.c.h.b16 %v33
  %v218 = vunpack.c.l.b16 %v34
  %v219 = vunpack.c.h.b16 %v34
  %v220 = vunpack.c.l.b16 %v35
  %v221 = vunpack.c.h.b16 %v35
  %v222 = vunpack.c.l.b16 %v36
  %v223 = vunpack.c.h.b16 %v36
  %v224 = vunpack.c.l.b16 %v37
  %v225 = vunpack.c.h.b16 %v37
  %v226 = vunpack.c.l.b16 %v38
  %v227 = vunpack.c.h.b16 %v38
  %v228 = vunpack.c.l.b16 %v39
  %v229 = vunpack.c.h.b16 %v39
  %v230 = vunpack.c.l.b16 %v40
  %v231 = vunpack.c.h.b16 %v40
  %v232 = vunpack.c.l.b16 %v41
  %v233 = vunpack.c.h.b16 %v41
  %v234 = vunpack.c.l.b16 %v42
  %v235 = vunpack.c.h.b16 %v42
  %v236 = vunpack.c.l.b16 %v43
  %v237 = vunpack.c.h.b16 %v43
  %v238 = vunpack.c.l.b16 %v44
  %v239 = vunpack.c.h.b16 %v44
  %v240 = vunpack.c.l.b16 %v45
  %v241 = vunpack.c.h.b16 %v45
  %v242 = vunpack.c.l.b16 %v46
  %v243 = vunpack.c.h.b16 %v46
  %v244 = vunpack.c.l.b16 %v47
  %v245 = vunpack.c.h.b16 %v47
  %v246 = vunpack.c.l.b16 %v48
  %v247 = vunpack.c.h.b16 %v48
  %v248 = vunpack.c.l.b16 %v49
  %v249 = vunpack.c.h.b16 %v49
  %v250 = vunpack.c.l.b16 %v50
  %v251 = vunpack.c.h.b16 %v50
  %v252 = vunpack.c.l.b16 %v51
  %v253 = vunpack.c.h.b16 %v51
  %v254 = vunpack.c.l.b16 %v52
  %v255 = vunpack.c.h.b16 %v52
  %v256 = vunpack.c.l.b16 %v53
  %v257 = vunpack.c.h.b16 %v53
  %v258 = vunpack.c.l.b16 %v54
  %v259 = vunpack.c.h.b16 %v54
  %v260 = vunpack.c.l.b16 %v55
  %v261 = vunpack.c.h.b16 %v55
  %v262 = vunpack.c.l.b16 %v56
  %v263 = vunpack.c.h.b16 %v56
  %v264 = vunpack.c.l.b16 %v57
  %v265 = vunpack.c.h.b16 %v57
  %v266 = vunpack.c.l.b16 %v58
  %v267 = vunpack.c.h.b16 %v58
  %v268 = vunpack.c.l.b16 %v59
  %v269 = vunpack.c.h.b16 %v59
  %v270 = vunpack.c.l.b16 %v60
  %v271 = vunpack.c.h.b16 %v60
  %v272 = vunpack.c.l.b16 %v61
  %v273 = vunpack.c.h.b16 %v61
  %v274 = vunpack.c.l.b16 %v62
  %v275 = vunpack.c.h.b16 %v62
  %v276 = vunpack.c.l.b16 %v63
  %v277 = vunpack.c.h.b16 %v63
  %v278 = vunpack.c.l.b16 %v64
  %v279 = vunpack.c.h.b16 %v64
  %v280 = vunpack.c.l.b16 %v65
  %v281 = vunpack.c.h.b16 %v65
  %v282 = vunpack.c.l.b16 %v66
  %v283 = vunpack.c.h.b16 %v66
  %v284 = vunpack.c.l.b16 %v67
  %v285 = vunpack.c.h.b16 %v67
  %v286 = vunpack.c.l.b16 %v68
  %v287 = vunpack.c.h.b16 %v68
  %v288 = vunpack.c.l.b16 %v69
  %v289 = vunpack.c.h.b16 %v69
  %v290 = vunpack.c.l.b16 %v70
  %v291 = vunpack.c.h.b16 %v70
  %v292 = vunpack.c.l.b16 %v71
  %v293 = vunpack.c.h.b16 %v71
  %v294 = vunpack.c.l.b16 %v72
  %v295 = vunpack.c.h.b16 %v72
  %v296 = vunpack.c.l.b16 %v73
  %v297 = vunpack.c.h.b16 %v73
  %v298 = vunpack.c.l.b16 %v74
  %v299 = vunpack.c.h.b16 %v74
  %v300 = vunpack.c.l.b16 %v75
  %v301 = vunpack.c.h.b16 %v75
  %v302 = vunpack.c.l.b16 %v76
  %v303 = vunpack.c.h.b16 %v76
  %v304 = vunpack.c.l.b16 %v77
  %v305 = vunpack.c.h.b16 %v77
  %v306 = vpack.c.b16 %v180, %v178
  %v307 = vpack.c.b16 %v181, %v179
  %v308 = vpack.c.b16 %v184, %v182
  %v309 = vpack.c.b16 %v185, %v183
  %v310 = vpack.c.b16 %v188, %v186
  %v311 = vpack.c.b16 %v189, %v187
  %v312 = vpack.c.b16 %v192, %v190
  %v313 = vpack.c.b16 %v193, %v191
  %v314 = vpack.c.b16 %v196, %v194
  %v315 = vpack.c.b16 %v197, %v195
  %v316 = vpack.c.b16 %v200, %v198
  %v317 = vpack.c.b16 %v201, %v199
  %v318 = vpack.c.b16 %v204, %v202
  %v319 = vpack.c.b16 %v205, %v203
  %v320 = vpack.c.b16 %v208, %v206
  %v321 = vpack.c.b16 %v209, %v207
  %v322 = vpack.c.b16 %v212, %v210
  %v323 = vpack.c.b16 %v213, %v211
  %v324 = vpack.c.b16 %v216, %v214
  %v325 = vpack.c.b16 %v217, %v215
  %v326 = vpack.c.b16 %v220, %v218
  %v327 = vpack.c.b16 %v221, %v219
  %v328 = vpack.c.b16 %v224, %v222
  %v329 = vpack.c.b16 %v225, %v223
  %v330 = vpack.c.b16 %v228, %v226
  %v331 = vpack.c.b16 %v229, %v227
  %v332 = vpack.c.b16 %v232, %v230
  %v333 = vpack.c.b16 %v233, %v231
  %v334 = vpack.c.b16 %v236, %v234
  %v335 = vpack.c.b16 %v237, %v235
  %v336 = vpack.c.b16 %v240, %v238
  %v337 = vpack.c.b16 %v241, %v239
  %v338 = vpack.c.b16 %v244, %v242
  %v339 = vpack.c.b16 %v245, %v243
  %v340 = vpack.c.b16 %v248, %v246
  %v341 = vpack.c.b16 %v249, %v247
  %v342 = vpack.c.b16 %v252, %v250
  %v343 = vpack.c.b16 %v253, %v251
  %v344 = vpack.c.b16 %v256, %v254
  %v345 = vpack.c.b16 %v257, %v255
  %v346 = vpack.c.b16 %v260, %v258
  %v347 = vpack.c.b16 %v261, %v259
  %v348 = vpack.c.b16 %v264, %v262
  %v349 = vpack.c.b16 %v265, %v263
  %v350 = vpack.c.b16 %v268, %v266
  %v351 = vpack.c.b16 %v269, %v267
  %v352 = vpack.c.b16 %v272, %v270
  %v353 = vpack.c.b16 %v273, %v271
  %v354 = vpack.c.b16 %v276, %v274
  %v355 = vpack.c.b16 %v277, %v275
  %v356 = vpack.c.b16 %v280, %v278
  %v357 = vpack.c.b16 %v281, %v279
  %v358 = vpack.c.b16 %v284, %v282
  %v359 = vpack.c.b16 %v285, %v283
  %v360 = vpack.c.b16 %v288, %v286
  %v361 = vpack.c.b16 %v289, %v287
  %v362 = vpack.c.b16 %v292, %v290
  %v363 = vpack.c.b16 %v293, %v291
  %v364 = vpack.c.b16 %v296, %v294
  %v365 = vpack.c.b16 %v297, %v295
  %v366 = vpack.c.b16 %v300, %v298
  %v367 = vpack.c.b16 %v301, %v299
  %v368 = vpack.c.b16 %v304, %v302
  %v369 = vpack.c.b16 %v305, %v303
  %v466 = vunpack.c.l.b16 %v78
  %v467 = vunpack.c.l.b16 %v79
  %v468 = vunpack.c.l.b16 %v80
  %v469 = vunpack.c.l.b16 %v81
  %v470 = vunpack.c.l.b16 %v82
  %v471 = vunpack.c.l.b16 %v83
  %v472 = vunpack.c.l.b16 %v84
  %v473 = vunpack.c.l.b16 %v85
  %v474 = vunpack.c.l.b16 %v86
  %v475 = vunpack.c.l.b16 %v87
  %v476 = vunpack.c.l.b16 %v88
  %v477 = vunpack.c.l.b16 %v89
  %v478 = vunpack.c.l.b16 %v90
  %v479 = vunpack.c.l.b16 %v91
  %v480 = vunpack.c.l.b16 %v92
  %v481 = vunpack.c.l.b16 %v93
  %v482 = vunpack.c.l.b16 %v94
  %v483 = vunpack.c.l.b16 %v95
  %v484 = vunpack.c.l.b16 %v96
  %v485 = vunpack.c.l.b16 %v97
  %v486 = vunpack.c.l.b16 %v98
  %v487 = vunpack.c.l.b16 %v99
  %v488 = vunpack.c.l.b16 %v100
  %v489 = vunpack.c.l.b16 %v101
  %v490 = vunpack.c.l.b16 %v102
  %v491 = vunpack.c.l.b16 %v103
  %v492 = vunpack.c.l.b16 %v104
  %v493 = vunpack.c.l.b16 %v105
  %v494 = vunpack.c.l.b16 %v106
  %v495 = vunpack.c.l.b16 %v107
  %v496 = vunpack.c.l.b16 %v108
  %v497 = vunpack.c.l.b16 %v109
  %v498 = vpack.c.b16 %v467, %v466
  %v499 = vpack.c.b16 %v469, %v468
  %v500 = vpack.c.b16 %v471, %v470
  %v501 = vpack.c.b16 %v473, %v472
  %v502 = vpack.c.b16 %v475, %v474
  %v503 = vpack.c.b16 %v477, %v476
  %v504 = vpack.c.b16 %v479, %v478
  %v505 = vpack.c.b16 %v481, %v480
  %v506 = vpack.c.b16 %v483, %v482
  %v507 = vpack.c.b16 %v485, %v484
  %v508 = vpack.c.b16 %v487, %v486
  %v509 = vpack.c.b16 %v489, %v488
  %v510 = vpack.c.b16 %v491, %v490
  %v511 = vpack.c.b16 %v493, %v492
  %v512 = vpack.c.b16 %v495, %v494
  %v513 = vpack.c.b16 %v497, %v496
  %530 = vmatpush.bf16.msra.mxu0 %v505
  %531 = vmatpush.bf16.msra.mxu0 %v504
  %532 = vmatpush.bf16.msra.mxu0 %v503
  %533 = vmatpush.bf16.msra.mxu0 %v502
  %534 = vmatpush.bf16.msra.mxu0 %v501
  %535 = vmatpush.bf16.msra.mxu0 %v500
  %536 = vmatpush.bf16.msra.mxu0 %v499
  %537 = vmatpush.bf16.msra.mxu0 %v498
  %538 = vmatmul.bf16.gmra.mxu0 %v306
  %v539 = vpop.f32.mrf.mxu0
  %v540 = vadd.f32 %v112, %v539
  %v541 = vpop.f32.mrf.mxu0
  %v542 = vadd.f32 %v112, %v541
  %543 = vmatmul.bf16.gmra.mxu0 %v308
  %v544 = vpop.f32.mrf.mxu0
  %v545 = vadd.f32 %v112, %v544
  %v546 = vpop.f32.mrf.mxu0
  %v547 = vadd.f32 %v112, %v546
  %548 = vmatmul.bf16.gmra.mxu0 %v310
  %v549 = vpop.f32.mrf.mxu0
  %v550 = vadd.f32 %v112, %v549
  %v551 = vpop.f32.mrf.mxu0
  %v552 = vadd.f32 %v112, %v551
  %553 = vmatmul.bf16.gmra.mxu0 %v312
  %v554 = vpop.f32.mrf.mxu0
  %v555 = vadd.f32 %v112, %v554
  %v556 = vpop.f32.mrf.mxu0
  %v557 = vadd.f32 %v112, %v556
  %558 = vmatmul.bf16.gmra.mxu0 %v314
  %v559 = vpop.f32.mrf.mxu0
  %v560 = vadd.f32 %v112, %v559
  %v561 = vpop.f32.mrf.mxu0
  %v562 = vadd.f32 %v112, %v561
  %563 = vmatmul.bf16.gmra.mxu0 %v316
  %v564 = vpop.f32.mrf.mxu0
  %v565 = vadd.f32 %v112, %v564
  %v566 = vpop.f32.mrf.mxu0
  %v567 = vadd.f32 %v112, %v566
  %568 = vmatmul.bf16.gmra.mxu0 %v318
  %v569 = vpop.f32.mrf.mxu0
  %v570 = vadd.f32 %v112, %v569
  %v571 = vpop.f32.mrf.mxu0
  %v572 = vadd.f32 %v112, %v571
  %573 = vmatmul.bf16.gmra.mxu0 %v320
  %v574 = vpop.f32.mrf.mxu0
  %v575 = vadd.f32 %v112, %v574
  %v576 = vpop.f32.mrf.mxu0
  %v577 = vadd.f32 %v112, %v576
  %578 = vmatmul.bf16.gmra.mxu0 %v322
  %v579 = vpop.f32.mrf.mxu0
  %v580 = vadd.f32 %v112, %v579
  %v581 = vpop.f32.mrf.mxu0
  %v582 = vadd.f32 %v112, %v581
  %583 = vmatmul.bf16.gmra.mxu0 %v324
  %v584 = vpop.f32.mrf.mxu0
  %v585 = vadd.f32 %v112, %v584
  %v586 = vpop.f32.mrf.mxu0
  %v587 = vadd.f32 %v112, %v586
  %588 = vmatmul.bf16.gmra.mxu0 %v326
  %v589 = vpop.f32.mrf.mxu0
  %v590 = vadd.f32 %v112, %v589
  %v591 = vpop.f32.mrf.mxu0
  %v592 = vadd.f32 %v112, %v591
  %593 = vmatmul.bf16.gmra.mxu0 %v328
  %v594 = vpop.f32.mrf.mxu0
  %v595 = vadd.f32 %v112, %v594
  %v596 = vpop.f32.mrf.mxu0
  %v597 = vadd.f32 %v112, %v596
  %598 = vmatmul.bf16.gmra.mxu0 %v330
  %v599 = vpop.f32.mrf.mxu0
  %v600 = vadd.f32 %v112, %v599
  %v601 = vpop.f32.mrf.mxu0
  %v602 = vadd.f32 %v112, %v601
  %603 = vmatmul.bf16.gmra.mxu0 %v332
  %v604 = vpop.f32.mrf.mxu0
  %v605 = vadd.f32 %v112, %v604
  %v606 = vpop.f32.mrf.mxu0
  %v607 = vadd.f32 %v112, %v606
  %608 = vmatmul.bf16.gmra.mxu0 %v334
  %v609 = vpop.f32.mrf.mxu0
  %v610 = vadd.f32 %v112, %v609
  %v611 = vpop.f32.mrf.mxu0
  %v612 = vadd.f32 %v112, %v611
  %613 = vmatmul.bf16.gmra.mxu0 %v336
  %v614 = vpop.f32.mrf.mxu0
  %v615 = vadd.f32 %v112, %v614
  %v616 = vpop.f32.mrf.mxu0
  %v617 = vadd.f32 %v112, %v616
  %618 = vmatmul.bf16.gmra.mxu0 %v338
  %v619 = vpop.f32.mrf.mxu0
  %v620 = vadd.f32 %v112, %v619
  %v621 = vpop.f32.mrf.mxu0
  %v622 = vadd.f32 %v112, %v621
  %623 = vmatmul.bf16.gmra.mxu0 %v340
  %v624 = vpop.f32.mrf.mxu0
  %v625 = vadd.f32 %v112, %v624
  %v626 = vpop.f32.mrf.mxu0
  %v627 = vadd.f32 %v112, %v626
  %628 = vmatmul.bf16.gmra.mxu0 %v342
  %v629 = vpop.f32.mrf.mxu0
  %v630 = vadd.f32 %v112, %v629
  %v631 = vpop.f32.mrf.mxu0
  %v632 = vadd.f32 %v112, %v631
  %633 = vmatmul.bf16.gmra.mxu0 %v344
  %v634 = vpop.f32.mrf.mxu0
  %v635 = vadd.f32 %v112, %v634
  %v636 = vpop.f32.mrf.mxu0
  %v637 = vadd.f32 %v112, %v636
  %638 = vmatmul.bf16.gmra.mxu0 %v346
  %v639 = vpop.f32.mrf.mxu0
  %v640 = vadd.f32 %v112, %v639
  %v641 = vpop.f32.mrf.mxu0
  %v642 = vadd.f32 %v112, %v641
  %643 = vmatmul.bf16.gmra.mxu0 %v348
  %v644 = vpop.f32.mrf.mxu0
  %v645 = vadd.f32 %v112, %v644
  %v646 = vpop.f32.mrf.mxu0
  %v647 = vadd.f32 %v112, %v646
  %648 = vmatmul.bf16.gmra.mxu0 %v350
  %v649 = vpop.f32.mrf.mxu0
  %v650 = vadd.f32 %v112, %v649
  %v651 = vpop.f32.mrf.mxu0
  %v652 = vadd.f32 %v112, %v651
  %653 = vmatmul.bf16.gmra.mxu0 %v352
  %v654 = vpop.f32.mrf.mxu0
  %v655 = vadd.f32 %v112, %v654
  %v656 = vpop.f32.mrf.mxu0
  %v657 = vadd.f32 %v112, %v656
  %658 = vmatmul.bf16.gmra.mxu0 %v354
  %v659 = vpop.f32.mrf.mxu0
  %v660 = vadd.f32 %v112, %v659
  %v661 = vpop.f32.mrf.mxu0
  %v662 = vadd.f32 %v112, %v661
  %663 = vmatmul.bf16.gmra.mxu0 %v356
  %v664 = vpop.f32.mrf.mxu0
  %v665 = vadd.f32 %v112, %v664
  %v666 = vpop.f32.mrf.mxu0
  %v667 = vadd.f32 %v112, %v666
  %668 = vmatmul.bf16.gmra.mxu0 %v358
  %v669 = vpop.f32.mrf.mxu0
  %v670 = vadd.f32 %v112, %v669
  %v671 = vpop.f32.mrf.mxu0
  %v672 = vadd.f32 %v112, %v671
  %673 = vmatmul.bf16.gmra.mxu0 %v360
  %v674 = vpop.f32.mrf.mxu0
  %v675 = vadd.f32 %v112, %v674
  %v676 = vpop.f32.mrf.mxu0
  %v677 = vadd.f32 %v112, %v676
  %678 = vmatmul.bf16.gmra.mxu0 %v362
  %v679 = vpop.f32.mrf.mxu0
  %v680 = vadd.f32 %v112, %v679
  %v681 = vpop.f32.mrf.mxu0
  %v682 = vadd.f32 %v112, %v681
  %683 = vmatmul.bf16.gmra.mxu0 %v364
  %v684 = vpop.f32.mrf.mxu0
  %v685 = vadd.f32 %v112, %v684
  %v686 = vpop.f32.mrf.mxu0
  %v687 = vadd.f32 %v112, %v686
  %688 = vmatmul.bf16.gmra.mxu0 %v366
  %v689 = vpop.f32.mrf.mxu0
  %v690 = vadd.f32 %v112, %v689
  %v691 = vpop.f32.mrf.mxu0
  %v692 = vadd.f32 %v112, %v691
  %693 = vmatmul.bf16.gmra.mxu0 %v368
  %v694 = vpop.f32.mrf.mxu0
  %v695 = vadd.f32 %v112, %v694
  %v696 = vpop.f32.mrf.mxu0
  %v697 = vadd.f32 %v112, %v696
  %698 = vdwg.mxu0
  %699 = vmatpush.bf16.msra.mxu0 %v513
  %700 = vmatpush.bf16.msra.mxu0 %v512
  %701 = vmatpush.bf16.msra.mxu0 %v511
  %702 = vmatpush.bf16.msra.mxu0 %v510
  %703 = vmatpush.bf16.msra.mxu0 %v509
  %704 = vmatpush.bf16.msra.mxu0 %v508
  %705 = vmatpush.bf16.msra.mxu0 %v507
  %706 = vmatpush.bf16.msra.mxu0 %v506
  %707 = vmatmul.bf16.gmra.mxu0 %v307
  %v708 = vpop.f32.mrf.mxu0
  %v709 = vadd.f32 %v540, %v708
  %v710 = vpop.f32.mrf.mxu0
  %v711 = vadd.f32 %v542, %v710
  %712 = vmatmul.bf16.gmra.mxu0 %v309
  %v713 = vpop.f32.mrf.mxu0
  %v714 = vadd.f32 %v545, %v713
  %v715 = vpop.f32.mrf.mxu0
  %v716 = vadd.f32 %v547, %v715
  %717 = vmatmul.bf16.gmra.mxu0 %v311
  %v718 = vpop.f32.mrf.mxu0
  %v719 = vadd.f32 %v550, %v718
  %v720 = vpop.f32.mrf.mxu0
  %v721 = vadd.f32 %v552, %v720
  %722 = vmatmul.bf16.gmra.mxu0 %v313
  %v723 = vpop.f32.mrf.mxu0
  %v724 = vadd.f32 %v555, %v723
  %v725 = vpop.f32.mrf.mxu0
  %v726 = vadd.f32 %v557, %v725
  %727 = vmatmul.bf16.gmra.mxu0 %v315
  %v728 = vpop.f32.mrf.mxu0
  %v729 = vadd.f32 %v560, %v728
  %v730 = vpop.f32.mrf.mxu0
  %v731 = vadd.f32 %v562, %v730
  %732 = vmatmul.bf16.gmra.mxu0 %v317
  %v733 = vpop.f32.mrf.mxu0
  %v734 = vadd.f32 %v565, %v733
  %v735 = vpop.f32.mrf.mxu0
  %v736 = vadd.f32 %v567, %v735
  %737 = vmatmul.bf16.gmra.mxu0 %v319
  %v738 = vpop.f32.mrf.mxu0
  %v739 = vadd.f32 %v570, %v738
  %v740 = vpop.f32.mrf.mxu0
  %v741 = vadd.f32 %v572, %v740
  %742 = vmatmul.bf16.gmra.mxu0 %v321
  %v743 = vpop.f32.mrf.mxu0
  %v744 = vadd.f32 %v575, %v743
  %v745 = vpop.f32.mrf.mxu0
  %v746 = vadd.f32 %v577, %v745
  %747 = vmatmul.bf16.gmra.mxu0 %v323
  %v748 = vpop.f32.mrf.mxu0
  %v749 = vadd.f32 %v580, %v748
  %v750 = vpop.f32.mrf.mxu0
  %v751 = vadd.f32 %v582, %v750
  %752 = vmatmul.bf16.gmra.mxu0 %v325
  %v753 = vpop.f32.mrf.mxu0
  %v754 = vadd.f32 %v585, %v753
  %v755 = vpop.f32.mrf.mxu0
  %v756 = vadd.f32 %v587, %v755
  %757 = vmatmul.bf16.gmra.mxu0 %v327
  %v758 = vpop.f32.mrf.mxu0
  %v759 = vadd.f32 %v590, %v758
  %v760 = vpop.f32.mrf.mxu0
  %v761 = vadd.f32 %v592, %v760
  %762 = vmatmul.bf16.gmra.mxu0 %v329
  %v763 = vpop.f32.mrf.mxu0
  %v764 = vadd.f32 %v595, %v763
  %v765 = vpop.f32.mrf.mxu0
  %v766 = vadd.f32 %v597, %v765
  %767 = vmatmul.bf16.gmra.mxu0 %v331
  %v768 = vpop.f32.mrf.mxu0
  %v769 = vadd.f32 %v600, %v768
  %v770 = vpop.f32.mrf.mxu0
  %v771 = vadd.f32 %v602, %v770
  %772 = vmatmul.bf16.gmra.mxu0 %v333
  %v773 = vpop.f32.mrf.mxu0
  %v774 = vadd.f32 %v605, %v773
  %v775 = vpop.f32.mrf.mxu0
  %v776 = vadd.f32 %v607, %v775
  %777 = vmatmul.bf16.gmra.mxu0 %v335
  %v778 = vpop.f32.mrf.mxu0
  %v779 = vadd.f32 %v610, %v778
  %v780 = vpop.f32.mrf.mxu0
  %v781 = vadd.f32 %v612, %v780
  %782 = vmatmul.bf16.gmra.mxu0 %v337
  %v783 = vpop.f32.mrf.mxu0
  %v784 = vadd.f32 %v615, %v783
  %v785 = vpop.f32.mrf.mxu0
  %v786 = vadd.f32 %v617, %v785
  %787 = vmatmul.bf16.gmra.mxu0 %v339
  %v788 = vpop.f32.mrf.mxu0
  %v789 = vadd.f32 %v620, %v788
  %v790 = vpop.f32.mrf.mxu0
  %v791 = vadd.f32 %v622, %v790
  %792 = vmatmul.bf16.gmra.mxu0 %v341
  %v793 = vpop.f32.mrf.mxu0
  %v794 = vadd.f32 %v625, %v793
  %v795 = vpop.f32.mrf.mxu0
  %v796 = vadd.f32 %v627, %v795
  %797 = vmatmul.bf16.gmra.mxu0 %v343
  %v798 = vpop.f32.mrf.mxu0
  %v799 = vadd.f32 %v630, %v798
  %v800 = vpop.f32.mrf.mxu0
  %v801 = vadd.f32 %v632, %v800
  %802 = vmatmul.bf16.gmra.mxu0 %v345
  %v803 = vpop.f32.mrf.mxu0
  %v804 = vadd.f32 %v635, %v803
  %v805 = vpop.f32.mrf.mxu0
  %v806 = vadd.f32 %v637, %v805
  %807 = vmatmul.bf16.gmra.mxu0 %v347
  %v808 = vpop.f32.mrf.mxu0
  %v809 = vadd.f32 %v640, %v808
  %v810 = vpop.f32.mrf.mxu0
  %v811 = vadd.f32 %v642, %v810
  %812 = vmatmul.bf16.gmra.mxu0 %v349
  %v813 = vpop.f32.mrf.mxu0
  %v814 = vadd.f32 %v645, %v813
  %v815 = vpop.f32.mrf.mxu0
  %v816 = vadd.f32 %v647, %v815
  %817 = vmatmul.bf16.gmra.mxu0 %v351
  %v818 = vpop.f32.mrf.mxu0
  %v819 = vadd.f32 %v650, %v818
  %v820 = vpop.f32.mrf.mxu0
  %v821 = vadd.f32 %v652, %v820
  %822 = vmatmul.bf16.gmra.mxu0 %v353
  %v823 = vpop.f32.mrf.mxu0
  %v824 = vadd.f32 %v655, %v823
  %v825 = vpop.f32.mrf.mxu0
  %v826 = vadd.f32 %v657, %v825
  %827 = vmatmul.bf16.gmra.mxu0 %v355
  %v828 = vpop.f32.mrf.mxu0
  %v829 = vadd.f32 %v660, %v828
  %v830 = vpop.f32.mrf.mxu0
  %v831 = vadd.f32 %v662, %v830
  %832 = vmatmul.bf16.gmra.mxu0 %v357
  %v833 = vpop.f32.mrf.mxu0
  %v834 = vadd.f32 %v665, %v833
  %v835 = vpop.f32.mrf.mxu0
  %v836 = vadd.f32 %v667, %v835
  %837 = vmatmul.bf16.gmra.mxu0 %v359
  %v838 = vpop.f32.mrf.mxu0
  %v839 = vadd.f32 %v670, %v838
  %v840 = vpop.f32.mrf.mxu0
  %v841 = vadd.f32 %v672, %v840
  %842 = vmatmul.bf16.gmra.mxu0 %v361
  %v843 = vpop.f32.mrf.mxu0
  %v844 = vadd.f32 %v675, %v843
  %v845 = vpop.f32.mrf.mxu0
  %v846 = vadd.f32 %v677, %v845
  %847 = vmatmul.bf16.gmra.mxu0 %v363
  %v848 = vpop.f32.mrf.mxu0
  %v849 = vadd.f32 %v680, %v848
  %v850 = vpop.f32.mrf.mxu0
  %v851 = vadd.f32 %v682, %v850
  %852 = vmatmul.bf16.gmra.mxu0 %v365
  %v853 = vpop.f32.mrf.mxu0
  %v854 = vadd.f32 %v685, %v853
  %v855 = vpop.f32.mrf.mxu0
  %v856 = vadd.f32 %v687, %v855
  %857 = vmatmul.bf16.gmra.mxu0 %v367
  %v858 = vpop.f32.mrf.mxu0
  %v859 = vadd.f32 %v690, %v858
  %v860 = vpop.f32.mrf.mxu0
  %v861 = vadd.f32 %v692, %v860
  %862 = vmatmul.bf16.gmra.mxu0 %v369
  %v863 = vpop.f32.mrf.mxu0
  %v864 = vadd.f32 %v695, %v863
  %v865 = vpop.f32.mrf.mxu0
  %v866 = vadd.f32 %v697, %v865
  %867 = vdwg.mxu0
  %v868 = vmax.f32 %v709, 0.0
  %v869 = vmax.f32 %v711, 0.0
  %v870 = vmax.f32 %v714, 0.0
  %v871 = vmax.f32 %v716, 0.0
  %v872 = vmax.f32 %v719, 0.0
  %v873 = vmax.f32 %v721, 0.0
  %v874 = vmax.f32 %v724, 0.0
  %v875 = vmax.f32 %v726, 0.0
  %v876 = vmax.f32 %v729, 0.0
  %v877 = vmax.f32 %v731, 0.0
  %v878 = vmax.f32 %v734, 0.0
  %v879 = vmax.f32 %v736, 0.0
  %v880 = vmax.f32 %v739, 0.0
  %v881 = vmax.f32 %v741, 0.0
  %v882 = vmax.f32 %v744, 0.0
  %v883 = vmax.f32 %v746, 0.0
  %v884 = vmax.f32 %v749, 0.0
  %v885 = vmax.f32 %v751, 0.0
  %v886 = vmax.f32 %v754, 0.0
  %v887 = vmax.f32 %v756, 0.0
  %v888 = vmax.f32 %v759, 0.0
  %v889 = vmax.f32 %v761, 0.0
  %v890 = vmax.f32 %v764, 0.0
  %v891 = vmax.f32 %v766, 0.0
  %v892 = vmax.f32 %v769, 0.0
  %v893 = vmax.f32 %v771, 0.0
  %v894 = vmax.f32 %v774, 0.0
  %v895 = vmax.f32 %v776, 0.0
  %v896 = vmax.f32 %v779, 0.0
  %v897 = vmax.f32 %v781, 0.0
  %v898 = vmax.f32 %v784, 0.0
  %v899 = vmax.f32 %v786, 0.0
  %v900 = vmax.f32 %v789, 0.0
  %v901 = vmax.f32 %v791, 0.0
  %v902 = vmax.f32 %v794, 0.0
  %v903 = vmax.f32 %v796, 0.0
  %v904 = vmax.f32 %v799, 0.0
  %v905 = vmax.f32 %v801, 0.0
  %v906 = vmax.f32 %v804, 0.0
  %v907 = vmax.f32 %v806, 0.0
  %v908 = vmax.f32 %v809, 0.0
  %v909 = vmax.f32 %v811, 0.0
  %v910 = vmax.f32 %v814, 0.0
  %v911 = vmax.f32 %v816, 0.0
  %v912 = vmax.f32 %v819, 0.0
  %v913 = vmax.f32 %v821, 0.0
  %v914 = vmax.f32 %v824, 0.0
  %v915 = vmax.f32 %v826, 0.0
  %v916 = vmax.f32 %v829, 0.0
  %v917 = vmax.f32 %v831, 0.0
  %v918 = vmax.f32 %v834, 0.0
  %v919 = vmax.f32 %v836, 0.0
  %v920 = vmax.f32 %v839, 0.0
  %v921 = vmax.f32 %v841, 0.0
  %v922 = vmax.f32 %v844, 0.0
  %v923 = vmax.f32 %v846, 0.0
  %v924 = vmax.f32 %v849, 0.0
  %v925 = vmax.f32 %v851, 0.0
  %v926 = vmax.f32 %v854, 0.0
  %v927 = vmax.f32 %v856, 0.0
  %v928 = vmax.f32 %v859, 0.0
  %v929 = vmax.f32 %v861, 0.0
  %v930 = vmax.f32 %v864, 0.0
  %v931 = vmax.f32 %v866, 0.0
  %932 = vst [vmem:[%s3] sm:$0xff] %v868
  %933 = vst [vmem:[%s3 + $0x8] sm:$0xff] %v869
  %934 = vst [vmem:[%s3 + $0x10] sm:$0xff] %v870
  %935 = vst [vmem:[%s3 + $0x18] sm:$0xff] %v871
  %936 = vst [vmem:[%s3 + $0x20] sm:$0xff] %v872
  %937 = vst [vmem:[%s3 + $0x28] sm:$0xff] %v873
  %938 = vst [vmem:[%s3 + $0x30] sm:$0xff] %v874
  %939 = vst [vmem:[%s3 + $0x38] sm:$0xff] %v875
  %940 = vst [vmem:[%s3 + $0x40] sm:$0xff] %v876
  %941 = vst [vmem:[%s3 + $0x48] sm:$0xff] %v877
  %942 = vst [vmem:[%s3 + $0x50] sm:$0xff] %v878
  %943 = vst [vmem:[%s3 + $0x58] sm:$0xff] %v879
  %944 = vst [vmem:[%s3 + $0x60] sm:$0xff] %v880
  %945 = vst [vmem:[%s3 + $0x68] sm:$0xff] %v881
  %946 = vst [vmem:[%s3 + $0x70] sm:$0xff] %v882
  %947 = vst [vmem:[%s3 + $0x78] sm:$0xff] %v883
  %948 = vst [vmem:[%s3 + $0x80] sm:$0xff] %v884
  %949 = vst [vmem:[%s3 + $0x88] sm:$0xff] %v885
  %950 = vst [vmem:[%s3 + $0x90] sm:$0xff] %v886
  %951 = vst [vmem:[%s3 + $0x98] sm:$0xff] %v887
  %952 = vst [vmem:[%s3 + $0xa0] sm:$0xff] %v888
  %953 = vst [vmem:[%s3 + $0xa8] sm:$0xff] %v889
  %954 = vst [vmem:[%s3 + $0xb0] sm:$0xff] %v890
  %955 = vst [vmem:[%s3 + $0xb8] sm:$0xff] %v891
  %956 = vst [vmem:[%s3 + $0xc0] sm:$0xff] %v892
  %957 = vst [vmem:[%s3 + $0xc8] sm:$0xff] %v893
  %958 = vst [vmem:[%s3 + $0xd0] sm:$0xff] %v894
  %959 = vst [vmem:[%s3 + $0xd8] sm:$0xff] %v895
  %960 = vst [vmem:[%s3 + $0xe0] sm:$0xff] %v896
  %961 = vst [vmem:[%s3 + $0xe8] sm:$0xff] %v897
  %962 = vst [vmem:[%s3 + $0xf0] sm:$0xff] %v898
  %963 = vst [vmem:[%s3 + $0xf8] sm:$0xff] %v899
  %964 = vst [vmem:[%s3 + $0x100] sm:$0xff] %v900
  %965 = vst [vmem:[%s3 + $0x108] sm:$0xff] %v901
  %966 = vst [vmem:[%s3 + $0x110] sm:$0xff] %v902
  %967 = vst [vmem:[%s3 + $0x118] sm:$0xff] %v903
  %968 = vst [vmem:[%s3 + $0x120] sm:$0xff] %v904
  %969 = vst [vmem:[%s3 + $0x128] sm:$0xff] %v905
  %970 = vst [vmem:[%s3 + $0x130] sm:$0xff] %v906
  %971 = vst [vmem:[%s3 + $0x138] sm:$0xff] %v907
  %972 = vst [vmem:[%s3 + $0x140] sm:$0xff] %v908
  %973 = vst [vmem:[%s3 + $0x148] sm:$0xff] %v909
  %974 = vst [vmem:[%s3 + $0x150] sm:$0xff] %v910
  %975 = vst [vmem:[%s3 + $0x158] sm:$0xff] %v911
  %976 = vst [vmem:[%s3 + $0x160] sm:$0xff] %v912
  %977 = vst [vmem:[%s3 + $0x168] sm:$0xff] %v913
  %978 = vst [vmem:[%s3 + $0x170] sm:$0xff] %v914
  %979 = vst [vmem:[%s3 + $0x178] sm:$0xff] %v915
  %980 = vst [vmem:[%s3 + $0x180] sm:$0xff] %v916
  %981 = vst [vmem:[%s3 + $0x188] sm:$0xff] %v917
  %982 = vst [vmem:[%s3 + $0x190] sm:$0xff] %v918
  %983 = vst [vmem:[%s3 + $0x198] sm:$0xff] %v919
  %984 = vst [vmem:[%s3 + $0x1a0] sm:$0xff] %v920
  %985 = vst [vmem:[%s3 + $0x1a8] sm:$0xff] %v921
  %986 = vst [vmem:[%s3 + $0x1b0] sm:$0xff] %v922
  %987 = vst [vmem:[%s3 + $0x1b8] sm:$0xff] %v923
  %988 = vst [vmem:[%s3 + $0x1c0] sm:$0xff] %v924
  %989 = vst [vmem:[%s3 + $0x1c8] sm:$0xff] %v925
  %990 = vst [vmem:[%s3 + $0x1d0] sm:$0xff] %v926
  %991 = vst [vmem:[%s3 + $0x1d8] sm:$0xff] %v927
  %992 = vst [vmem:[%s3 + $0x1e0] sm:$0xff] %v928
  %993 = vst [vmem:[%s3 + $0x1e8] sm:$0xff] %v929
  %994 = vst [vmem:[%s3 + $0x1f0] sm:$0xff] %v930
  %995 = vst [vmem:[%s3 + $0x1f8] sm:$0xff] %v931
  // Predicated region
  $region14: #{vae_forward.16} parent=0 // pred_check
    _
  $region15: #{vae_forward.16} parent=0 // pred_check_branch
    %997 = sbr.rel (0) target = $region17
  $region16: #{vae_forward.16} parent=0 // pred_region
    _
  $region17: #{vae_forward.16} parent=0 // pred_fallthru
    _
  // Predicated region
  $region18: #{vae_forward.16} parent=0 // pred_check
    _
  $region19: #{vae_forward.16} parent=0 // pred_check_branch
    %999 = sbr.rel (0) target = $region21
  $region20: #{vae_forward.16} parent=0 // pred_region
    _
  $region21: #{vae_forward.16} parent=0 // pred_fallthru
    _

// kernel: vae_forward.17
$region0: #{vae_forward.17}
  #allocation0 [shape = 'u32[]', space=smem, size = 0x4, offset = 0x4, fixed_abs, tag = 'smem constant byte address 0x4 - core index']
  #allocation1 [shape = 'u32[72,128]{1,0:T(1,128)}', space=vmem, size = 0x9000, scoped, tag = 'internal scratch']
  %s0 = inlined_call_operand.vmem [shape: bf16[2048,288], index: 0, kind: input, shape index: {}]
  %s1 = inlined_call_operand.vmem [shape: bf16[288,128], index: 1, kind: input, shape index: {}]
  %s2 = inlined_call_operand.vmem [shape: f32[1,128], index: 2, kind: input, shape index: {}]
  %s3 = inlined_call_operand.vmem [shape: f32[2048,128], index: 3, kind: output, shape index: {}]
  %s4 = sld [smem:[#allocation0]]
  $region45: #{vae_forward.17} parent=0
    _
  %s6 = ssub.s32 1, %s4
  %s7 = scalar_select 0, %s6, %s4
  loop: start=0, step=1, limit=6
  $region2: #{vae_forward.17} parent=0 // loop_pre_header
    _
  $region3: #{vae_forward.17} parent=0 // loop_header
    %s9 = sphi 0, %s13
    %p10 = scmp.ge.s32.totalorder %s9, 6
    %s16 = sphi 0, %s28
    %s17 = sphi 0, %s24
    %s18 = sphi 0, %s16
    %s19 = sphi 0, %s17
    %s20 = sphi 0, %s18
    %s21 = sphi 0, %s19
    %s31 = sphi 0, %s33
    %s34 = sphi 0, %s31
    %s35 = sphi 0, %s34
    %s51 = sphi 0, %s35
    %s57 = sphi 0, %s59
    %s60 = sphi 0, %s57
    %s61 = sphi 0, %s60
    %s77 = sphi 0, %s61
    %s83 = sphi 0, %s85
    %s86 = sphi 0, %s83
    %s87 = sphi 0, %s86
    %s103 = sphi 0, %s87
    %s111 = sphi 0, %s113
    %s114 = sphi 0, %s111
    %s115 = sphi 0, %s114
    %s131 = sphi 0, %s115
  $region4: #{vae_forward.17} parent=0 // loop_header_branch
    %12 = sbr.rel (%p10) target = $region8
  $region5: #{vae_forward.17} parent=0 // loop_body
    %s14 = ssub.s32 %s9, 1
    %s15 = ssub.s32 %s9, 2
    %s22 = sadd.s32 1, %s17
    %p23 = scmp.ge.s32.totalorder %s22, 1
    %s24 = scalar_select %p23, 0, %s22
    %s25 = sadd.s32 1, %s16
    %s26 = scalar_select %p23, %s25, %s16
    %p27 = scmp.ge.s32.totalorder %s26, 4
    %s28 = scalar_select %p27, 0, %s26
    %s29 = ssub.s32 %s16, %s28
    %p30 = scmp.eq.s32.totalorder %s29, 0
    %s32 = sadd.s32 %s31, 1
    %s33 = scalar_select %p30, %s31, %s32
    %p36 = pneg %p30
    %p37 = scmp.eq.s32.totalorder %s9, 3
    %p38 = por %p36, %p37
    %p39 = scmp.ne.s32.totalorder %s31, %s34
    %p40 = scmp.eq.s32.totalorder %s9, 0
    %p41 = por %p39, %p40
    %p42 = scmp.ne.s32.totalorder %s31, %s34
    %p43 = scmp.eq.s32.totalorder %s14, 3
    %p44 = por %p42, %p43
    %p45 = scmp.ne.s32.totalorder %s34, %s35
    %p46 = scmp.eq.s32.totalorder %s14, 0
    %p47 = por %p45, %p46
    %p48 = scmp.ne.s32.totalorder %s34, %s35
    %p49 = scmp.eq.s32.totalorder %s15, 3
    %p50 = por %p48, %p49
    %p52 = scmp.ne.s32.totalorder %s35, %s51
    %p53 = scmp.eq.s32.totalorder %s15, 0
    %p54 = por %p52, %p53
    %s55 = ssub.s32 %s17, %s24
    %p56 = scmp.eq.s32.totalorder %s55, 0
    %s58 = sadd.s32 %s57, 1
    %s59 = scalar_select %p56, %s57, %s58
    %p62 = pneg %p56
    %p63 = scmp.eq.s32.totalorder %s9, 3
    %p64 = por %p62, %p63
    %p65 = scmp.ne.s32.totalorder %s57, %s60
    %p66 = scmp.eq.s32.totalorder %s9, 0
    %p67 = por %p65, %p66
    %p68 = scmp.ne.s32.totalorder %s57, %s60
    %p69 = scmp.eq.s32.totalorder %s14, 3
    %p70 = por %p68, %p69
    %p71 = scmp.ne.s32.totalorder %s60, %s61
    %p72 = scmp.eq.s32.totalorder %s14, 0
    %p73 = por %p71, %p72
    %p74 = scmp.ne.s32.totalorder %s60, %s61
    %p75 = scmp.eq.s32.totalorder %s15, 3
    %p76 = por %p74, %p75
    %p78 = scmp.ne.s32.totalorder %s61, %s77
    %p79 = scmp.eq.s32.totalorder %s15, 0
    %p80 = por %p78, %p79
    %s81 = ssub.s32 %s17, %s24
    %p82 = scmp.eq.s32.totalorder %s81, 0
    %s84 = sadd.s32 %s83, 1
    %s85 = scalar_select %p82, %s83, %s84
    %p88 = pneg %p82
    %p89 = scmp.eq.s32.totalorder %s9, 3
    %p90 = por %p88, %p89
    %p91 = scmp.ne.s32.totalorder %s83, %s86
    %p92 = scmp.eq.s32.totalorder %s9, 0
    %p93 = por %p91, %p92
    %p94 = scmp.ne.s32.totalorder %s83, %s86
    %p95 = scmp.eq.s32.totalorder %s14, 3
    %p96 = por %p94, %p95
    %p97 = scmp.ne.s32.totalorder %s86, %s87
    %p98 = scmp.eq.s32.totalorder %s14, 0
    %p99 = por %p97, %p98
    %p100 = scmp.ne.s32.totalorder %s86, %s87
    %p101 = scmp.eq.s32.totalorder %s15, 3
    %p102 = por %p100, %p101
    %p104 = scmp.ne.s32.totalorder %s87, %s103
    %p105 = scmp.eq.s32.totalorder %s15, 0
    %p106 = por %p104, %p105
    %s107 = ssub.s32 %s16, %s28
    %s108 = ssub.s32 %s17, %s24
    %s109 = sor.u32 %s107, %s108
    %p110 = scmp.eq.s32.totalorder %s109, 0
    %s112 = sadd.s32 %s111, 1
    %s113 = scalar_select %p110, %s111, %s112
    %p116 = pneg %p110
    %p117 = scmp.eq.s32.totalorder %s9, 3
    %p118 = por %p116, %p117
    %p119 = scmp.ne.s32.totalorder %s111, %s114
    %p120 = scmp.eq.s32.totalorder %s9, 0
    %p121 = por %p119, %p120
    %p122 = scmp.ne.s32.totalorder %s111, %s114
    %p123 = scmp.eq.s32.totalorder %s14, 3
    %p124 = por %p122, %p123
    %p125 = scmp.ne.s32.totalorder %s114, %s115
    %p126 = scmp.eq.s32.totalorder %s14, 0
    %p127 = por %p125, %p126
    %p128 = scmp.ne.s32.totalorder %s114, %s115
    %p129 = scmp.eq.s32.totalorder %s15, 3
    %p130 = por %p128, %p129
    %p132 = scmp.ne.s32.totalorder %s115, %s131
    %p133 = scmp.eq.s32.totalorder %s15, 0
    %p134 = por %p132, %p133
    %p135 = scmp.le.s32.totalorder 1, %s9
    %p136 = scmp.lt.s32.totalorder %s9, 5
    %p137 = pnand %p135, %p136
    %p138 = pneg %p137
    // Predicated region
    $region9: #{vae_forward.17} parent=5 // pred_check
      _
    $region10: #{vae_forward.17} parent=5 // pred_check_branch
      %140 = sbr.rel (%p137) target = $region12
    $region11: #{vae_forward.17} parent=5 // pred_region
      %s141 = ssub.s32 %s9, 1
      // Predicated region
      $region13: #{vae_forward.17} parent=11 // pred_check
        %p142 = pneg %p73
      $region14: #{vae_forward.17} parent=11 // pred_check_branch
        %144 = sbr.rel (%p142) target = $region16
      $region15: #{vae_forward.17} parent=11 // pred_region
        %p145 = scmp.lt.s32.totalorder %s19, 0
        %s146 = scalar_select %p145, %s19, 0
        %s147 = smul.addr %s146, 4
        %s148 = scalar_lea.vmem %s1, %s147
      $region16: #{vae_forward.17} parent=11 // pred_fallthru
        _
      // Predicated region
      $region17: #{vae_forward.17} parent=11 // pred_check
        %p149 = pneg %p99
      $region18: #{vae_forward.17} parent=11 // pred_check_branch
        %151 = sbr.rel (%p149) target = $region20
      $region19: #{vae_forward.17} parent=11 // pred_region
        %p152 = scmp.lt.s32.totalorder %s19, 0
        %s153 = scalar_select %p152, %s19, 0
        %s154 = scalar_lea.vmem %s2, %s153
      $region20: #{vae_forward.17} parent=11 // pred_fallthru
        _
    $region12: #{vae_forward.17} parent=5 // pred_fallthru
      _
    %p155 = scmp.lt.s32.totalorder %s9, 4
    // Predicated region
    $region21: #{vae_forward.17} parent=5 // pred_check
      %p156 = pneg %p155
    $region22: #{vae_forward.17} parent=5 // pred_check_branch
      %158 = sbr.rel (%p156) target = $region24
    $region23: #{vae_forward.17} parent=5 // pred_region
      // Predicated region
      $region25: #{vae_forward.17} parent=23 // pred_check
        %p159 = pneg %p41
      $region26: #{vae_forward.17} parent=23 // pred_check_branch
        %161 = sbr.rel (%p159) target = $region28
      $region27: #{vae_forward.17} parent=23 // pred_region
        %s162 = smul.u32 64, %s16
        %p163 = scmp.lt.s32.totalorder %s162, 255
        %s164 = scalar_select %p163, %s162, 255
        %s165 = smul.addr %s164, 3
        %s166 = smul.addr %s165, 4
        %s167 = scalar_lea.vmem %s0, %s166
        %s168 = smul.u32 64, %s16
      $region28: #{vae_forward.17} parent=23 // pred_fallthru
        _
    $region24: #{vae_forward.17} parent=5 // pred_fallthru
      _
    %p169 = scmp.le.s32.totalorder 1, %s9
    %p170 = scmp.lt.s32.totalorder %s9, 5
    %p171 = pnand %p169, %p170
    %p172 = pneg %p171
    // Predicated region
    $region29: #{vae_forward.17} parent=5 // pred_check
      _
    $region30: #{vae_forward.17} parent=5 // pred_check_branch
      %174 = sbr.rel (%p171) target = $region32
    $region31: #{vae_forward.17} parent=5 // pred_region
      %s175 = ssub.s32 %s9, 1
      %s176 = smul.u32 64, %s18
      %p177 = scmp.lt.s32.totalorder %s176, 255
      %s178 = scalar_select %p177, %s176, 255
      %s179 = smul.addr %s178, 3
      %s180 = smul.addr %s179, 4
      %s181 = scalar_lea.vmem %s0, %s180
      %p182 = pneg %p47
      %p183 = pneg %p44
      %p184 = scmp.lt.s32.totalorder %s19, 0
      %s185 = scalar_select %p184, %s19, 0
      %s186 = smul.addr %s185, 4
      %s187 = scalar_lea.vmem %s1, %s186
      %p188 = pneg %p73
      %p189 = pneg %p70
      %p190 = scmp.lt.s32.totalorder %s19, 0
      %s191 = scalar_select %p190, %s19, 0
      %s192 = scalar_lea.vmem %s2, %s191
      %p193 = pneg %p99
      %p194 = pneg %p96
      %p195 = pneg %p127
      %p196 = pneg %p124
      %s197 = smul.u32 64, %s18
      %p198 = scmp.lt.s32.totalorder %s197, 255
      %s199 = scalar_select %p198, %s197, 255
      %p200 = scmp.lt.s32.totalorder %s19, 0
      %s201 = scalar_select %p200, %s19, 0
      %s202 = sadd.s32 %s201, %s199
      %s203 = smul.addr %s202, 8
      %s204 = scalar_lea.vmem %s3, %s203
      %s205 = smul.u32 64, %s18
      %p206 = scmp.lt.s32.totalorder %s205, 255
      %s207 = scalar_select %p206, %s205, 255
      %s208 = smul.addr %s207, 3
      %s209 = smul.addr %s208, 4
      %s210 = scalar_lea.vmem %s0, %s209
      %s211 = smul.u32 64, %s18
      %p212 = scmp.lt.s32.totalorder %s19, 0
      %s213 = scalar_select %p212, %s19, 0
      %s214 = smul.addr %s213, 4
      %s215 = scalar_lea.vmem %s1, %s214
      %p216 = scmp.lt.s32.totalorder %s19, 0
      %s217 = scalar_select %p216, %s19, 0
      %s218 = scalar_lea.vmem %s2, %s217
      %s219 = smul.u32 64, %s18
      %p220 = scmp.lt.s32.totalorder %s219, 255
      %s221 = scalar_select %p220, %s219, 255
      %p222 = scmp.lt.s32.totalorder %s19, 0
      %s223 = scalar_select %p222, %s19, 0
      %s224 = sadd.s32 %s223, %s221
      %s225 = smul.addr %s224, 8
      %s226 = scalar_lea.vmem %s3, %s225
      %s227 = smul.u32 64, %s18
      %v229 = vld [vmem:[%s210] sm:$0xff]
      %v230 = vld [vmem:[%s210 + $0x8] sm:$0xf]
      %v231 = vld [vmem:[%s210 + $0xc] sm:$0xff]
      %v232 = vld [vmem:[%s210 + $0x14] sm:$0xf]
      %v233 = vld [vmem:[%s210 + $0x18] sm:$0xff]
      %v234 = vld [vmem:[%s210 + $0x20] sm:$0xf]
      %v235 = vld [vmem:[%s210 + $0x24] sm:$0xff]
      %v236 = vld [vmem:[%s210 + $0x2c] sm:$0xf]
      %v237 = vld [vmem:[%s210 + $0x30] sm:$0xff]
      %v238 = vld [vmem:[%s210 + $0x38] sm:$0xf]
      %v239 = vld [vmem:[%s210 + $0x3c] sm:$0xff]
      %v240 = vld [vmem:[%s210 + $0x44] sm:$0xf]
      %v241 = vld [vmem:[%s210 + $0x48] sm:$0xff]
      %v242 = vld [vmem:[%s210 + $0x50] sm:$0xf]
      %v243 = vld [vmem:[%s210 + $0x54] sm:$0xff]
      %v244 = vld [vmem:[%s210 + $0x5c] sm:$0xf]
      %v245 = vld [vmem:[%s210 + $0x60] sm:$0xff]
      %v246 = vld [vmem:[%s210 + $0x68] sm:$0xf]
      %v247 = vld [vmem:[%s210 + $0x6c] sm:$0xff]
      %v248 = vld [vmem:[%s210 + $0x74] sm:$0xf]
      %v249 = vld [vmem:[%s210 + $0x78] sm:$0xff]
      %v250 = vld [vmem:[%s210 + $0x80] sm:$0xf]
      %v251 = vld [vmem:[%s210 + $0x84] sm:$0xff]
      %v252 = vld [vmem:[%s210 + $0x8c] sm:$0xf]
      %v253 = vld [vmem:[%s210 + $0x90] sm:$0xff]
      %v254 = vld [vmem:[%s210 + $0x98] sm:$0xf]
      %v255 = vld [vmem:[%s210 + $0x9c] sm:$0xff]
      %v256 = vld [vmem:[%s210 + $0xa4] sm:$0xf]
      %v257 = vld [vmem:[%s210 + $0xa8] sm:$0xff]
      %v258 = vld [vmem:[%s210 + $0xb0] sm:$0xf]
      %v259 = vld [vmem:[%s210 + $0xb4] sm:$0xff]
      %v260 = vld [vmem:[%s210 + $0xbc] sm:$0xf]
      %v261 = vld [vmem:[%s210 + $0xc0] sm:$0xff]
      %v262 = vld [vmem:[%s210 + $0xc8] sm:$0xf]
      %v263 = vld [vmem:[%s210 + $0xcc] sm:$0xff]
      %v264 = vld [vmem:[%s210 + $0xd4] sm:$0xf]
      %v265 = vld [vmem:[%s210 + $0xd8] sm:$0xff]
      %v266 = vld [vmem:[%s210 + $0xe0] sm:$0xf]
      %v267 = vld [vmem:[%s210 + $0xe4] sm:$0xff]
      %v268 = vld [vmem:[%s210 + $0xec] sm:$0xf]
      %v269 = vld [vmem:[%s210 + $0xf0] sm:$0xff]
      %v270 = vld [vmem:[%s210 + $0xf8] sm:$0xf]
      %v271 = vld [vmem:[%s210 + $0xfc] sm:$0xff]
      %v272 = vld [vmem:[%s210 + $0x104] sm:$0xf]
      %v273 = vld [vmem:[%s210 + $0x108] sm:$0xff]
      %v274 = vld [vmem:[%s210 + $0x110] sm:$0xf]
      %v275 = vld [vmem:[%s210 + $0x114] sm:$0xff]
      %v276 = vld [vmem:[%s210 + $0x11c] sm:$0xf]
      %v277 = vld [vmem:[%s210 + $0x120] sm:$0xff]
      %v278 = vld [vmem:[%s210 + $0x128] sm:$0xf]
      %v279 = vld [vmem:[%s210 + $0x12c] sm:$0xff]
      %v280 = vld [vmem:[%s210 + $0x134] sm:$0xf]
      %v281 = vld [vmem:[%s210 + $0x138] sm:$0xff]
      %v282 = vld [vmem:[%s210 + $0x140] sm:$0xf]
      %v283 = vld [vmem:[%s210 + $0x144] sm:$0xff]
      %v284 = vld [vmem:[%s210 + $0x14c] sm:$0xf]
      %v285 = vld [vmem:[%s210 + $0x150] sm:$0xff]
      %v286 = vld [vmem:[%s210 + $0x158] sm:$0xf]
      %v287 = vld [vmem:[%s210 + $0x15c] sm:$0xff]
      %v288 = vld [vmem:[%s210 + $0x164] sm:$0xf]
      %v289 = vld [vmem:[%s210 + $0x168] sm:$0xff]
      %v290 = vld [vmem:[%s210 + $0x170] sm:$0xf]
      %v291 = vld [vmem:[%s210 + $0x174] sm:$0xff]
      %v292 = vld [vmem:[%s210 + $0x17c] sm:$0xf]
      %v293 = vld [vmem:[%s210 + $0x180] sm:$0xff]
      %v294 = vld [vmem:[%s210 + $0x188] sm:$0xf]
      %v295 = vld [vmem:[%s210 + $0x18c] sm:$0xff]
      %v296 = vld [vmem:[%s210 + $0x194] sm:$0xf]
      %v297 = vld [vmem:[%s210 + $0x198] sm:$0xff]
      %v298 = vld [vmem:[%s210 + $0x1a0] sm:$0xf]
      %v299 = vld [vmem:[%s210 + $0x1a4] sm:$0xff]
      %v300 = vld [vmem:[%s210 + $0x1ac] sm:$0xf]
      %v301 = vld [vmem:[%s210 + $0x1b0] sm:$0xff]
      %v302 = vld [vmem:[%s210 + $0x1b8] sm:$0xf]
      %v303 = vld [vmem:[%s210 + $0x1bc] sm:$0xff]
      %v304 = vld [vmem:[%s210 + $0x1c4] sm:$0xf]
      %v305 = vld [vmem:[%s210 + $0x1c8] sm:$0xff]
      %v306 = vld [vmem:[%s210 + $0x1d0] sm:$0xf]
      %v307 = vld [vmem:[%s210 + $0x1d4] sm:$0xff]
      %v308 = vld [vmem:[%s210 + $0x1dc] sm:$0xf]
      %v309 = vld [vmem:[%s210 + $0x1e0] sm:$0xff]
      %v310 = vld [vmem:[%s210 + $0x1e8] sm:$0xf]
      %v311 = vld [vmem:[%s210 + $0x1ec] sm:$0xff]
      %v312 = vld [vmem:[%s210 + $0x1f4] sm:$0xf]
      %v313 = vld [vmem:[%s210 + $0x1f8] sm:$0xff]
      %v314 = vld [vmem:[%s210 + $0x200] sm:$0xf]
      %v315 = vld [vmem:[%s210 + $0x204] sm:$0xff]
      %v316 = vld [vmem:[%s210 + $0x20c] sm:$0xf]
      %v317 = vld [vmem:[%s210 + $0x210] sm:$0xff]
      %v318 = vld [vmem:[%s210 + $0x218] sm:$0xf]
      %v319 = vld [vmem:[%s210 + $0x21c] sm:$0xff]
      %v320 = vld [vmem:[%s210 + $0x224] sm:$0xf]
      %v321 = vld [vmem:[%s210 + $0x228] sm:$0xff]
      %v322 = vld [vmem:[%s210 + $0x230] sm:$0xf]
      %v323 = vld [vmem:[%s210 + $0x234] sm:$0xff]
      %v324 = vld [vmem:[%s210 + $0x23c] sm:$0xf]
      %v325 = vld [vmem:[%s210 + $0x240] sm:$0xff]
      %v326 = vld [vmem:[%s210 + $0x248] sm:$0xf]
      %v327 = vld [vmem:[%s210 + $0x24c] sm:$0xff]
      %v328 = vld [vmem:[%s210 + $0x254] sm:$0xf]
      %v329 = vld [vmem:[%s210 + $0x258] sm:$0xff]
      %v330 = vld [vmem:[%s210 + $0x260] sm:$0xf]
      %v331 = vld [vmem:[%s210 + $0x264] sm:$0xff]
      %v332 = vld [vmem:[%s210 + $0x26c] sm:$0xf]
      %v333 = vld [vmem:[%s210 + $0x270] sm:$0xff]
      %v334 = vld [vmem:[%s210 + $0x278] sm:$0xf]
      %v335 = vld [vmem:[%s210 + $0x27c] sm:$0xff]
      %v336 = vld [vmem:[%s210 + $0x284] sm:$0xf]
      %v337 = vld [vmem:[%s210 + $0x288] sm:$0xff]
      %v338 = vld [vmem:[%s210 + $0x290] sm:$0xf]
      %v339 = vld [vmem:[%s210 + $0x294] sm:$0xff]
      %v340 = vld [vmem:[%s210 + $0x29c] sm:$0xf]
      %v341 = vld [vmem:[%s210 + $0x2a0] sm:$0xff]
      %v342 = vld [vmem:[%s210 + $0x2a8] sm:$0xf]
      %v343 = vld [vmem:[%s210 + $0x2ac] sm:$0xff]
      %v344 = vld [vmem:[%s210 + $0x2b4] sm:$0xf]
      %v345 = vld [vmem:[%s210 + $0x2b8] sm:$0xff]
      %v346 = vld [vmem:[%s210 + $0x2c0] sm:$0xf]
      %v347 = vld [vmem:[%s210 + $0x2c4] sm:$0xff]
      %v348 = vld [vmem:[%s210 + $0x2cc] sm:$0xf]
      %v349 = vld [vmem:[%s210 + $0x2d0] sm:$0xff]
      %v350 = vld [vmem:[%s210 + $0x2d8] sm:$0xf]
      %v351 = vld [vmem:[%s210 + $0x2dc] sm:$0xff]
      %v352 = vld [vmem:[%s210 + $0x2e4] sm:$0xf]
      %v353 = vld [vmem:[%s210 + $0x2e8] sm:$0xff]
      %v354 = vld [vmem:[%s210 + $0x2f0] sm:$0xf]
      %v355 = vld [vmem:[%s210 + $0x2f4] sm:$0xff]
      %v356 = vld [vmem:[%s210 + $0x2fc] sm:$0xf]
      %v357 = vld [vmem:[%s215] sm:$0xf]
      %v358 = vld [vmem:[%s215 + $0x4] sm:$0xf]
      %v359 = vld [vmem:[%s215 + $0x8] sm:$0xf]
      %v360 = vld [vmem:[%s215 + $0xc] sm:$0xf]
      %v361 = vld [vmem:[%s215 + $0x10] sm:$0xf]
      %v362 = vld [vmem:[%s215 + $0x14] sm:$0xf]
      %v363 = vld [vmem:[%s215 + $0x18] sm:$0xf]
      %v364 = vld [vmem:[%s215 + $0x1c] sm:$0xf]
      %v365 = vld [vmem:[%s215 + $0x20] sm:$0xf]
      %v366 = vld [vmem:[%s215 + $0x24] sm:$0xf]
      %v367 = vld [vmem:[%s215 + $0x28] sm:$0xf]
      %v368 = vld [vmem:[%s215 + $0x2c] sm:$0xf]
      %v369 = vld [vmem:[%s215 + $0x30] sm:$0xf]
      %v370 = vld [vmem:[%s215 + $0x34] sm:$0xf]
      %v371 = vld [vmem:[%s215 + $0x38] sm:$0xf]
      %v372 = vld [vmem:[%s215 + $0x3c] sm:$0xf]
      %v373 = vld [vmem:[%s215 + $0x40] sm:$0xf]
      %v374 = vld [vmem:[%s215 + $0x44] sm:$0xf]
      %v375 = vld [vmem:[%s215 + $0x48] sm:$0xf]
      %v376 = vld [vmem:[%s215 + $0x4c] sm:$0xf]
      %v377 = vld [vmem:[%s215 + $0x50] sm:$0xf]
      %v378 = vld [vmem:[%s215 + $0x54] sm:$0xf]
      %v379 = vld [vmem:[%s215 + $0x58] sm:$0xf]
      %v380 = vld [vmem:[%s215 + $0x5c] sm:$0xf]
      %v381 = vld [vmem:[%s215 + $0x60] sm:$0xf]
      %v382 = vld [vmem:[%s215 + $0x64] sm:$0xf]
      %v383 = vld [vmem:[%s215 + $0x68] sm:$0xf]
      %v384 = vld [vmem:[%s215 + $0x6c] sm:$0xf]
      %v385 = vld [vmem:[%s215 + $0x70] sm:$0xf]
      %v386 = vld [vmem:[%s215 + $0x74] sm:$0xf]
      %v387 = vld [vmem:[%s215 + $0x78] sm:$0xf]
      %v388 = vld [vmem:[%s215 + $0x7c] sm:$0xf]
      %v389 = vld [vmem:[%s215 + $0x80] sm:$0xf]
      %v390 = vld [vmem:[%s215 + $0x84] sm:$0xf]
      %v391 = vld [vmem:[%s215 + $0x88] sm:$0xf]
      %v392 = vld [vmem:[%s215 + $0x8c] sm:$0xf]
      %v393 = vld [vmem:[%s218] sm:$0x1]
      %v395 = vperm.slane %v393, 0
      %v525 = vunpack.c.l.b16 %v229
      %v526 = vunpack.c.h.b16 %v229
      %v527 = vunpack.c.l.b16 %v230
      %v528 = vunpack.c.l.b16 %v231
      %v529 = vunpack.c.h.b16 %v231
      %v530 = vunpack.c.l.b16 %v232
      %v531 = vunpack.c.l.b16 %v233
      %v532 = vunpack.c.h.b16 %v233
      %v533 = vunpack.c.l.b16 %v234
      %v534 = vunpack.c.l.b16 %v235
      %v535 = vunpack.c.h.b16 %v235
      %v536 = vunpack.c.l.b16 %v236
      %v537 = vunpack.c.l.b16 %v237
      %v538 = vunpack.c.h.b16 %v237
      %v539 = vunpack.c.l.b16 %v238
      %v540 = vunpack.c.l.b16 %v239
      %v541 = vunpack.c.h.b16 %v239
      %v542 = vunpack.c.l.b16 %v240
      %v543 = vunpack.c.l.b16 %v241
      %v544 = vunpack.c.h.b16 %v241
      %v545 = vunpack.c.l.b16 %v242
      %v546 = vunpack.c.l.b16 %v243
      %v547 = vunpack.c.h.b16 %v243
      %v548 = vunpack.c.l.b16 %v244
      %v549 = vunpack.c.l.b16 %v245
      %v550 = vunpack.c.h.b16 %v245
      %v551 = vunpack.c.l.b16 %v246
      %v552 = vunpack.c.l.b16 %v247
      %v553 = vunpack.c.h.b16 %v247
      %v554 = vunpack.c.l.b16 %v248
      %v555 = vunpack.c.l.b16 %v249
      %v556 = vunpack.c.h.b16 %v249
      %v557 = vunpack.c.l.b16 %v250
      %v558 = vunpack.c.l.b16 %v251
      %v559 = vunpack.c.h.b16 %v251
      %v560 = vunpack.c.l.b16 %v252
      %v561 = vunpack.c.l.b16 %v253
      %v562 = vunpack.c.h.b16 %v253
      %v563 = vunpack.c.l.b16 %v254
      %v564 = vunpack.c.l.b16 %v255
      %v565 = vunpack.c.h.b16 %v255
      %v566 = vunpack.c.l.b16 %v256
      %v567 = vunpack.c.l.b16 %v257
      %v568 = vunpack.c.h.b16 %v257
      %v569 = vunpack.c.l.b16 %v258
      %v570 = vunpack.c.l.b16 %v259
      %v571 = vunpack.c.h.b16 %v259
      %v572 = vunpack.c.l.b16 %v260
      %v573 = vunpack.c.l.b16 %v261
      %v574 = vunpack.c.h.b16 %v261
      %v575 = vunpack.c.l.b16 %v262
      %v576 = vunpack.c.l.b16 %v263
      %v577 = vunpack.c.h.b16 %v263
      %v578 = vunpack.c.l.b16 %v264
      %v579 = vunpack.c.l.b16 %v265
      %v580 = vunpack.c.h.b16 %v265
      %v581 = vunpack.c.l.b16 %v266
      %v582 = vunpack.c.l.b16 %v267
      %v583 = vunpack.c.h.b16 %v267
      %v584 = vunpack.c.l.b16 %v268
      %v585 = vunpack.c.l.b16 %v269
      %v586 = vunpack.c.h.b16 %v269
      %v587 = vunpack.c.l.b16 %v270
      %v588 = vunpack.c.l.b16 %v271
      %v589 = vunpack.c.h.b16 %v271
      %v590 = vunpack.c.l.b16 %v272
      %v591 = vunpack.c.l.b16 %v273
      %v592 = vunpack.c.h.b16 %v273
      %v593 = vunpack.c.l.b16 %v274
      %v594 = vunpack.c.l.b16 %v275
      %v595 = vunpack.c.h.b16 %v275
      %v596 = vunpack.c.l.b16 %v276
      %v597 = vunpack.c.l.b16 %v277
      %v598 = vunpack.c.h.b16 %v277
      %v599 = vunpack.c.l.b16 %v278
      %v600 = vunpack.c.l.b16 %v279
      %v601 = vunpack.c.h.b16 %v279
      %v602 = vunpack.c.l.b16 %v280
      %v603 = vunpack.c.l.b16 %v281
      %v604 = vunpack.c.h.b16 %v281
      %v605 = vunpack.c.l.b16 %v282
      %v606 = vunpack.c.l.b16 %v283
      %v607 = vunpack.c.h.b16 %v283
      %v608 = vunpack.c.l.b16 %v284
      %v609 = vunpack.c.l.b16 %v285
      %v610 = vunpack.c.h.b16 %v285
      %v611 = vunpack.c.l.b16 %v286
      %v612 = vunpack.c.l.b16 %v287
      %v613 = vunpack.c.h.b16 %v287
      %v614 = vunpack.c.l.b16 %v288
      %v615 = vunpack.c.l.b16 %v289
      %v616 = vunpack.c.h.b16 %v289
      %v617 = vunpack.c.l.b16 %v290
      %v618 = vunpack.c.l.b16 %v291
      %v619 = vunpack.c.h.b16 %v291
      %v620 = vunpack.c.l.b16 %v292
      %v621 = vunpack.c.l.b16 %v293
      %v622 = vunpack.c.h.b16 %v293
      %v623 = vunpack.c.l.b16 %v294
      %v624 = vunpack.c.l.b16 %v295
      %v625 = vunpack.c.h.b16 %v295
      %v626 = vunpack.c.l.b16 %v296
      %v627 = vunpack.c.l.b16 %v297
      %v628 = vunpack.c.h.b16 %v297
      %v629 = vunpack.c.l.b16 %v298
      %v630 = vunpack.c.l.b16 %v299
      %v631 = vunpack.c.h.b16 %v299
      %v632 = vunpack.c.l.b16 %v300
      %v633 = vunpack.c.l.b16 %v301
      %v634 = vunpack.c.h.b16 %v301
      %v635 = vunpack.c.l.b16 %v302
      %v636 = vunpack.c.l.b16 %v303
      %v637 = vunpack.c.h.b16 %v303
      %v638 = vunpack.c.l.b16 %v304
      %v639 = vunpack.c.l.b16 %v305
      %v640 = vunpack.c.h.b16 %v305
      %v641 = vunpack.c.l.b16 %v306
      %v642 = vunpack.c.l.b16 %v307
      %v643 = vunpack.c.h.b16 %v307
      %v644 = vunpack.c.l.b16 %v308
      %v645 = vunpack.c.l.b16 %v309
      %v646 = vunpack.c.h.b16 %v309
      %v647 = vunpack.c.l.b16 %v310
      %v648 = vunpack.c.l.b16 %v311
      %v649 = vunpack.c.h.b16 %v311
      %v650 = vunpack.c.l.b16 %v312
      %v651 = vunpack.c.l.b16 %v313
      %v652 = vunpack.c.h.b16 %v313
      %v653 = vunpack.c.l.b16 %v314
      %v654 = vunpack.c.l.b16 %v315
      %v655 = vunpack.c.h.b16 %v315
      %v656 = vunpack.c.l.b16 %v316
      %v657 = vunpack.c.l.b16 %v317
      %v658 = vunpack.c.h.b16 %v317
      %v659 = vunpack.c.l.b16 %v318
      %v660 = vunpack.c.l.b16 %v319
      %v661 = vunpack.c.h.b16 %v319
      %v662 = vunpack.c.l.b16 %v320
      %v663 = vunpack.c.l.b16 %v321
      %v664 = vunpack.c.h.b16 %v321
      %v665 = vunpack.c.l.b16 %v322
      %v666 = vunpack.c.l.b16 %v323
      %v667 = vunpack.c.h.b16 %v323
      %v668 = vunpack.c.l.b16 %v324
      %v669 = vunpack.c.l.b16 %v325
      %v670 = vunpack.c.h.b16 %v325
      %v671 = vunpack.c.l.b16 %v326
      %v672 = vunpack.c.l.b16 %v327
      %v673 = vunpack.c.h.b16 %v327
      %v674 = vunpack.c.l.b16 %v328
      %v675 = vunpack.c.l.b16 %v329
      %v676 = vunpack.c.h.b16 %v329
      %v677 = vunpack.c.l.b16 %v330
      %v678 = vunpack.c.l.b16 %v331
      %v679 = vunpack.c.h.b16 %v331
      %v680 = vunpack.c.l.b16 %v332
      %v681 = vunpack.c.l.b16 %v333
      %v682 = vunpack.c.h.b16 %v333
      %v683 = vunpack.c.l.b16 %v334
      %v684 = vunpack.c.l.b16 %v335
      %v685 = vunpack.c.h.b16 %v335
      %v686 = vunpack.c.l.b16 %v336
      %v687 = vunpack.c.l.b16 %v337
      %v688 = vunpack.c.h.b16 %v337
      %v689 = vunpack.c.l.b16 %v338
      %v690 = vunpack.c.l.b16 %v339
      %v691 = vunpack.c.h.b16 %v339
      %v692 = vunpack.c.l.b16 %v340
      %v693 = vunpack.c.l.b16 %v341
      %v694 = vunpack.c.h.b16 %v341
      %v695 = vunpack.c.l.b16 %v342
      %v696 = vunpack.c.l.b16 %v343
      %v697 = vunpack.c.h.b16 %v343
      %v698 = vunpack.c.l.b16 %v344
      %v699 = vunpack.c.l.b16 %v345
      %v700 = vunpack.c.h.b16 %v345
      %v701 = vunpack.c.l.b16 %v346
      %v702 = vunpack.c.l.b16 %v347
      %v703 = vunpack.c.h.b16 %v347
      %v704 = vunpack.c.l.b16 %v348
      %v705 = vunpack.c.l.b16 %v349
      %v706 = vunpack.c.h.b16 %v349
      %v707 = vunpack.c.l.b16 %v350
      %v708 = vunpack.c.l.b16 %v351
      %v709 = vunpack.c.h.b16 %v351
      %v710 = vunpack.c.l.b16 %v352
      %v711 = vunpack.c.l.b16 %v353
      %v712 = vunpack.c.h.b16 %v353
      %v713 = vunpack.c.l.b16 %v354
      %v714 = vunpack.c.l.b16 %v355
      %v715 = vunpack.c.h.b16 %v355
      %v716 = vunpack.c.l.b16 %v356
      %v717 = vpack.c.b16 %v528, %v525
      %v718 = vpack.c.b16 %v529, %v526
      %v719 = vpack.c.b16 %v530, %v527
      %v720 = vpack.c.b16 %v534, %v531
      %v721 = vpack.c.b16 %v535, %v532
      %v722 = vpack.c.b16 %v536, %v533
      %v723 = vpack.c.b16 %v540, %v537
      %v724 = vpack.c.b16 %v541, %v538
      %v725 = vpack.c.b16 %v542, %v539
      %v726 = vpack.c.b16 %v546, %v543
      %v727 = vpack.c.b16 %v547, %v544
      %v728 = vpack.c.b16 %v548, %v545
      %v729 = vpack.c.b16 %v552, %v549
      %v730 = vpack.c.b16 %v553, %v550
      %v731 = vpack.c.b16 %v554, %v551
      %v732 = vpack.c.b16 %v558, %v555
      %v733 = vpack.c.b16 %v559, %v556
      %v734 = vpack.c.b16 %v560, %v557
      %v735 = vpack.c.b16 %v564, %v561
      %v736 = vpack.c.b16 %v565, %v562
      %v737 = vpack.c.b16 %v566, %v563
      %v738 = vpack.c.b16 %v570, %v567
      %v739 = vpack.c.b16 %v571, %v568
      %v740 = vpack.c.b16 %v572, %v569
      %v741 = vpack.c.b16 %v576, %v573
      %v742 = vpack.c.b16 %v577, %v574
      %v743 = vpack.c.b16 %v578, %v575
      %v744 = vpack.c.b16 %v582, %v579
      %v745 = vpack.c.b16 %v583, %v580
      %v746 = vpack.c.b16 %v584, %v581
      %v747 = vpack.c.b16 %v588, %v585
      %v748 = vpack.c.b16 %v589, %v586
      %v749 = vpack.c.b16 %v590, %v587
      %v750 = vpack.c.b16 %v594, %v591
      %v751 = vpack.c.b16 %v595, %v592
      %v752 = vpack.c.b16 %v596, %v593
      %v753 = vpack.c.b16 %v600, %v597
      %v754 = vpack.c.b16 %v601, %v598
      %v755 = vpack.c.b16 %v602, %v599
      %v756 = vpack.c.b16 %v606, %v603
      %v757 = vpack.c.b16 %v607, %v604
      %v758 = vpack.c.b16 %v608, %v605
      %v759 = vpack.c.b16 %v612, %v609
      %v760 = vpack.c.b16 %v613, %v610
      %v761 = vpack.c.b16 %v614, %v611
      %v762 = vpack.c.b16 %v618, %v615
      %v763 = vpack.c.b16 %v619, %v616
      %v764 = vpack.c.b16 %v620, %v617
      %v765 = vpack.c.b16 %v624, %v621
      %v766 = vpack.c.b16 %v625, %v622
      %v767 = vpack.c.b16 %v626, %v623
      %v768 = vpack.c.b16 %v630, %v627
      %v769 = vpack.c.b16 %v631, %v628
      %v770 = vpack.c.b16 %v632, %v629
      %v771 = vpack.c.b16 %v636, %v633
      %v772 = vpack.c.b16 %v637, %v634
      %v773 = vpack.c.b16 %v638, %v635
      %v774 = vpack.c.b16 %v642, %v639
      %v775 = vpack.c.b16 %v643, %v640
      %v776 = vpack.c.b16 %v644, %v641
      %v777 = vpack.c.b16 %v648, %v645
      %v778 = vpack.c.b16 %v649, %v646
      %v779 = vpack.c.b16 %v650, %v647
      %v780 = vpack.c.b16 %v654, %v651
      %v781 = vpack.c.b16 %v655, %v652
      %v782 = vpack.c.b16 %v656, %v653
      %v783 = vpack.c.b16 %v660, %v657
      %v784 = vpack.c.b16 %v661, %v658
      %v785 = vpack.c.b16 %v662, %v659
      %v786 = vpack.c.b16 %v666, %v663
      %v787 = vpack.c.b16 %v667, %v664
      %v788 = vpack.c.b16 %v668, %v665
      %v789 = vpack.c.b16 %v672, %v669
      %v790 = vpack.c.b16 %v673, %v670
      %v791 = vpack.c.b16 %v674, %v671
      %v792 = vpack.c.b16 %v678, %v675
      %v793 = vpack.c.b16 %v679, %v676
      %v794 = vpack.c.b16 %v680, %v677
      %v795 = vpack.c.b16 %v684, %v681
      %v796 = vpack.c.b16 %v685, %v682
      %v797 = vpack.c.b16 %v686, %v683
      %v798 = vpack.c.b16 %v690, %v687
      %v799 = vpack.c.b16 %v691, %v688
      %v800 = vpack.c.b16 %v692, %v689
      %v801 = vpack.c.b16 %v696, %v693
      %v802 = vpack.c.b16 %v697, %v694
      %v803 = vpack.c.b16 %v698, %v695
      %v804 = vpack.c.b16 %v702, %v699
      %v805 = vpack.c.b16 %v703, %v700
      %v806 = vpack.c.b16 %v704, %v701
      %v807 = vpack.c.b16 %v708, %v705
      %v808 = vpack.c.b16 %v709, %v706
      %v809 = vpack.c.b16 %v710, %v707
      %v810 = vpack.c.b16 %v714, %v711
      %v811 = vpack.c.b16 %v715, %v712
      %v812 = vpack.c.b16 %v716, %v713
      %v913 = vunpack.c.l.b16 %v357
      %v914 = vunpack.c.l.b16 %v358
      %v915 = vunpack.c.l.b16 %v359
      %v916 = vunpack.c.l.b16 %v360
      %v917 = vunpack.c.l.b16 %v361
      %v918 = vunpack.c.l.b16 %v362
      %v919 = vunpack.c.l.b16 %v363
      %v920 = vunpack.c.l.b16 %v364
      %v921 = vunpack.c.l.b16 %v365
      %v922 = vunpack.c.l.b16 %v366
      %v923 = vunpack.c.l.b16 %v367
      %v924 = vunpack.c.l.b16 %v368
      %v925 = vunpack.c.l.b16 %v369
      %v926 = vunpack.c.l.b16 %v370
      %v927 = vunpack.c.l.b16 %v371
      %v928 = vunpack.c.l.b16 %v372
      %v929 = vunpack.c.l.b16 %v373
      %v930 = vunpack.c.l.b16 %v374
      %v931 = vunpack.c.l.b16 %v375
      %v932 = vunpack.c.l.b16 %v376
      %v933 = vunpack.c.l.b16 %v377
      %v934 = vunpack.c.l.b16 %v378
      %v935 = vunpack.c.l.b16 %v379
      %v936 = vunpack.c.l.b16 %v380
      %v937 = vunpack.c.l.b16 %v381
      %v938 = vunpack.c.l.b16 %v382
      %v939 = vunpack.c.l.b16 %v383
      %v940 = vunpack.c.l.b16 %v384
      %v941 = vunpack.c.l.b16 %v385
      %v942 = vunpack.c.l.b16 %v386
      %v943 = vunpack.c.l.b16 %v387
      %v944 = vunpack.c.l.b16 %v388
      %v945 = vunpack.c.l.b16 %v389
      %v946 = vunpack.c.l.b16 %v390
      %v947 = vunpack.c.l.b16 %v391
      %v948 = vunpack.c.l.b16 %v392
      %v949 = vpack.c.b16 %v914, %v913
      %v950 = vpack.c.b16 %v916, %v915
      %v951 = vpack.c.b16 %v918, %v917
      %v952 = vpack.c.b16 %v920, %v919
      %v953 = vpack.c.b16 %v922, %v921
      %v954 = vpack.c.b16 %v924, %v923
      %v955 = vpack.c.b16 %v926, %v925
      %v956 = vpack.c.b16 %v928, %v927
      %v957 = vpack.c.b16 %v930, %v929
      %v958 = vpack.c.b16 %v932, %v931
      %v959 = vpack.c.b16 %v934, %v933
      %v960 = vpack.c.b16 %v936, %v935
      %v961 = vpack.c.b16 %v938, %v937
      %v962 = vpack.c.b16 %v940, %v939
      %v963 = vpack.c.b16 %v942, %v941
      %v964 = vpack.c.b16 %v944, %v943
      %v965 = vpack.c.b16 %v946, %v945
      %v966 = vpack.c.b16 %v948, %v947
      %vm985 = vcmask 261120
      %v987 = vsel %vm985, %v719, 0
      %v990 = vsel %vm985, %v722, 0
      %v993 = vsel %vm985, %v725, 0
      %v996 = vsel %vm985, %v728, 0
      %v999 = vsel %vm985, %v731, 0
      %v1002 = vsel %vm985, %v734, 0
      %v1005 = vsel %vm985, %v737, 0
      %v1008 = vsel %vm985, %v740, 0
      %v1011 = vsel %vm985, %v743, 0
      %v1014 = vsel %vm985, %v746, 0
      %v1017 = vsel %vm985, %v749, 0
      %v1020 = vsel %vm985, %v752, 0
      %v1023 = vsel %vm985, %v755, 0
      %v1026 = vsel %vm985, %v758, 0
      %v1029 = vsel %vm985, %v761, 0
      %v1032 = vsel %vm985, %v764, 0
      %v1035 = vsel %vm985, %v767, 0
      %v1038 = vsel %vm985, %v770, 0
      %v1041 = vsel %vm985, %v773, 0
      %v1044 = vsel %vm985, %v776, 0
      %v1047 = vsel %vm985, %v779, 0
      %v1050 = vsel %vm985, %v782, 0
      %v1053 = vsel %vm985, %v785, 0
      %v1056 = vsel %vm985, %v788, 0
      %v1059 = vsel %vm985, %v791, 0
      %v1062 = vsel %vm985, %v794, 0
      %v1065 = vsel %vm985, %v797, 0
      %v1068 = vsel %vm985, %v800, 0
      %v1071 = vsel %vm985, %v803, 0
      %v1074 = vsel %vm985, %v806, 0
      %v1077 = vsel %vm985, %v809, 0
      %v1080 = vsel %vm985, %v812, 0
      %1082 = vmatpush.bf16.msra.mxu0 %v956
      %1083 = vmatpush.bf16.msra.mxu0 %v955
      %1084 = vmatpush.bf16.msra.mxu0 %v954
      %1085 = vmatpush.bf16.msra.mxu0 %v953
      %1086 = vmatpush.bf16.msra.mxu0 %v952
      %1087 = vmatpush.bf16.msra.mxu0 %v951
      %1088 = vmatpush.bf16.msra.mxu0 %v950
      %1089 = vmatpush.bf16.msra.mxu0 %v949
      %1090 = vmatmul.bf16.gmra.mxu0 %v717
      %v1091 = vpop.f32.mrf.mxu0
      %v1092 = vadd.f32 %v395, %v1091
      %v1093 = vpop.f32.mrf.mxu0
      %v1094 = vadd.f32 %v395, %v1093
      %1095 = vmatmul.bf16.gmra.mxu0 %v720
      %v1096 = vpop.f32.mrf.mxu0
      %v1097 = vadd.f32 %v395, %v1096
      %v1098 = vpop.f32.mrf.mxu0
      %v1099 = vadd.f32 %v395, %v1098
      %1100 = vmatmul.bf16.gmra.mxu0 %v723
      %v1101 = vpop.f32.mrf.mxu0
      %v1102 = vadd.f32 %v395, %v1101
      %v1103 = vpop.f32.mrf.mxu0
      %v1104 = vadd.f32 %v395, %v1103
      %1105 = vmatmul.bf16.gmra.mxu0 %v726
      %v1106 = vpop.f32.mrf.mxu0
      %v1107 = vadd.f32 %v395, %v1106
      %v1108 = vpop.f32.mrf.mxu0
      %v1109 = vadd.f32 %v395, %v1108
      %1110 = vmatmul.bf16.gmra.mxu0 %v729
      %v1111 = vpop.f32.mrf.mxu0
      %v1112 = vadd.f32 %v395, %v1111
      %v1113 = vpop.f32.mrf.mxu0
      %v1114 = vadd.f32 %v395, %v1113
      %1115 = vmatmul.bf16.gmra.mxu0 %v732
      %v1116 = vpop.f32.mrf.mxu0
      %v1117 = vadd.f32 %v395, %v1116
      %v1118 = vpop.f32.mrf.mxu0
      %v1119 = vadd.f32 %v395, %v1118
      %1120 = vmatmul.bf16.gmra.mxu0 %v735
      %v1121 = vpop.f32.mrf.mxu0
      %v1122 = vadd.f32 %v395, %v1121
      %v1123 = vpop.f32.mrf.mxu0
      %v1124 = vadd.f32 %v395, %v1123
      %1125 = vmatmul.bf16.gmra.mxu0 %v738
      %v1126 = vpop.f32.mrf.mxu0
      %v1127 = vadd.f32 %v395, %v1126
      %v1128 = vpop.f32.mrf.mxu0
      %v1129 = vadd.f32 %v395, %v1128
      %1130 = vmatmul.bf16.gmra.mxu0 %v741
      %v1131 = vpop.f32.mrf.mxu0
      %v1132 = vadd.f32 %v395, %v1131
      %v1133 = vpop.f32.mrf.mxu0
      %v1134 = vadd.f32 %v395, %v1133
      %1135 = vmatmul.bf16.gmra.mxu0 %v744
      %v1136 = vpop.f32.mrf.mxu0
      %v1137 = vadd.f32 %v395, %v1136
      %v1138 = vpop.f32.mrf.mxu0
      %v1139 = vadd.f32 %v395, %v1138
      %1140 = vmatmul.bf16.gmra.mxu0 %v747
      %v1141 = vpop.f32.mrf.mxu0
      %v1142 = vadd.f32 %v395, %v1141
      %v1143 = vpop.f32.mrf.mxu0
      %v1144 = vadd.f32 %v395, %v1143
      %1145 = vmatmul.bf16.gmra.mxu0 %v750
      %v1146 = vpop.f32.mrf.mxu0
      %v1147 = vadd.f32 %v395, %v1146
      %v1148 = vpop.f32.mrf.mxu0
      %v1149 = vadd.f32 %v395, %v1148
      %1150 = vmatmul.bf16.gmra.mxu0 %v753
      %v1151 = vpop.f32.mrf.mxu0
      %v1152 = vadd.f32 %v395, %v1151
      %v1153 = vpop.f32.mrf.mxu0
      %v1154 = vadd.f32 %v395, %v1153
      %1155 = vmatmul.bf16.gmra.mxu0 %v756
      %v1156 = vpop.f32.mrf.mxu0
      %v1157 = vadd.f32 %v395, %v1156
      %v1158 = vpop.f32.mrf.mxu0
      %v1159 = vadd.f32 %v395, %v1158
      %1160 = vmatmul.bf16.gmra.mxu0 %v759
      %v1161 = vpop.f32.mrf.mxu0
      %v1162 = vadd.f32 %v395, %v1161
      %v1163 = vpop.f32.mrf.mxu0
      %v1164 = vadd.f32 %v395, %v1163
      %1165 = vmatmul.bf16.gmra.mxu0 %v762
      %v1166 = vpop.f32.mrf.mxu0
      %v1167 = vadd.f32 %v395, %v1166
      %v1168 = vpop.f32.mrf.mxu0
      %v1169 = vadd.f32 %v395, %v1168
      %1170 = vmatmul.bf16.gmra.mxu0 %v765
      %v1171 = vpop.f32.mrf.mxu0
      %v1172 = vadd.f32 %v395, %v1171
      %v1173 = vpop.f32.mrf.mxu0
      %v1174 = vadd.f32 %v395, %v1173
      %1175 = vmatmul.bf16.gmra.mxu0 %v768
      %v1176 = vpop.f32.mrf.mxu0
      %v1177 = vadd.f32 %v395, %v1176
      %v1178 = vpop.f32.mrf.mxu0
      %v1179 = vadd.f32 %v395, %v1178
      %1180 = vmatmul.bf16.gmra.mxu0 %v771
      %v1181 = vpop.f32.mrf.mxu0
      %v1182 = vadd.f32 %v395, %v1181
      %v1183 = vpop.f32.mrf.mxu0
      %v1184 = vadd.f32 %v395, %v1183
      %1185 = vmatmul.bf16.gmra.mxu0 %v774
      %v1186 = vpop.f32.mrf.mxu0
      %v1187 = vadd.f32 %v395, %v1186
      %v1188 = vpop.f32.mrf.mxu0
      %v1189 = vadd.f32 %v395, %v1188
      %1190 = vmatmul.bf16.gmra.mxu0 %v777
      %v1191 = vpop.f32.mrf.mxu0
      %v1192 = vadd.f32 %v395, %v1191
      %v1193 = vpop.f32.mrf.mxu0
      %v1194 = vadd.f32 %v395, %v1193
      %1195 = vmatmul.bf16.gmra.mxu0 %v780
      %v1196 = vpop.f32.mrf.mxu0
      %v1197 = vadd.f32 %v395, %v1196
      %v1198 = vpop.f32.mrf.mxu0
      %v1199 = vadd.f32 %v395, %v1198
      %1200 = vmatmul.bf16.gmra.mxu0 %v783
      %v1201 = vpop.f32.mrf.mxu0
      %v1202 = vadd.f32 %v395, %v1201
      %v1203 = vpop.f32.mrf.mxu0
      %v1204 = vadd.f32 %v395, %v1203
      %1205 = vmatmul.bf16.gmra.mxu0 %v786
      %v1206 = vpop.f32.mrf.mxu0
      %v1207 = vadd.f32 %v395, %v1206
      %v1208 = vpop.f32.mrf.mxu0
      %v1209 = vadd.f32 %v395, %v1208
      %1210 = vmatmul.bf16.gmra.mxu0 %v789
      %v1211 = vpop.f32.mrf.mxu0
      %v1212 = vadd.f32 %v395, %v1211
      %v1213 = vpop.f32.mrf.mxu0
      %v1214 = vadd.f32 %v395, %v1213
      %1215 = vmatmul.bf16.gmra.mxu0 %v792
      %v1216 = vpop.f32.mrf.mxu0
      %v1217 = vadd.f32 %v395, %v1216
      %v1218 = vpop.f32.mrf.mxu0
      %v1219 = vadd.f32 %v395, %v1218
      %1220 = vmatmul.bf16.gmra.mxu0 %v795
      %v1221 = vpop.f32.mrf.mxu0
      %v1222 = vadd.f32 %v395, %v1221
      %v1223 = vpop.f32.mrf.mxu0
      %v1224 = vadd.f32 %v395, %v1223
      %1225 = vmatmul.bf16.gmra.mxu0 %v798
      %v1226 = vpop.f32.mrf.mxu0
      %v1227 = vadd.f32 %v395, %v1226
      %v1228 = vpop.f32.mrf.mxu0
      %v1229 = vadd.f32 %v395, %v1228
      %1230 = vmatmul.bf16.gmra.mxu0 %v801
      %v1231 = vpop.f32.mrf.mxu0
      %v1232 = vadd.f32 %v395, %v1231
      %v1233 = vpop.f32.mrf.mxu0
      %v1234 = vadd.f32 %v395, %v1233
      %1235 = vmatmul.bf16.gmra.mxu0 %v804
      %v1236 = vpop.f32.mrf.mxu0
      %v1237 = vadd.f32 %v395, %v1236
      %v1238 = vpop.f32.mrf.mxu0
      %v1239 = vadd.f32 %v395, %v1238
      %1240 = vmatmul.bf16.gmra.mxu0 %v807
      %v1241 = vpop.f32.mrf.mxu0
      %v1242 = vadd.f32 %v395, %v1241
      %v1243 = vpop.f32.mrf.mxu0
      %v1244 = vadd.f32 %v395, %v1243
      %1245 = vmatmul.bf16.gmra.mxu0 %v810
      %v1246 = vpop.f32.mrf.mxu0
      %v1247 = vadd.f32 %v395, %v1246
      %v1248 = vpop.f32.mrf.mxu0
      %v1249 = vadd.f32 %v395, %v1248
      %1250 = vdwg.mxu0
      %1251 = vmatpush.bf16.msra.mxu0 %v964
      %1252 = vmatpush.bf16.msra.mxu0 %v963
      %1253 = vmatpush.bf16.msra.mxu0 %v962
      %1254 = vmatpush.bf16.msra.mxu0 %v961
      %1255 = vmatpush.bf16.msra.mxu0 %v960
      %1256 = vmatpush.bf16.msra.mxu0 %v959
      %1257 = vmatpush.bf16.msra.mxu0 %v958
      %1258 = vmatpush.bf16.msra.mxu0 %v957
      %1259 = vmatmul.bf16.gmra.mxu0 %v718
      %v1260 = vpop.f32.mrf.mxu0
      %v1261 = vadd.f32 %v1092, %v1260
      %v1262 = vpop.f32.mrf.mxu0
      %v1263 = vadd.f32 %v1094, %v1262
      %1264 = vmatmul.bf16.gmra.mxu0 %v721
      %v1265 = vpop.f32.mrf.mxu0
      %v1266 = vadd.f32 %v1097, %v1265
      %v1267 = vpop.f32.mrf.mxu0
      %v1268 = vadd.f32 %v1099, %v1267
      %1269 = vmatmul.bf16.gmra.mxu0 %v724
      %v1270 = vpop.f32.mrf.mxu0
      %v1271 = vadd.f32 %v1102, %v1270
      %v1272 = vpop.f32.mrf.mxu0
      %v1273 = vadd.f32 %v1104, %v1272
      %1274 = vmatmul.bf16.gmra.mxu0 %v727
      %v1275 = vpop.f32.mrf.mxu0
      %v1276 = vadd.f32 %v1107, %v1275
      %v1277 = vpop.f32.mrf.mxu0
      %v1278 = vadd.f32 %v1109, %v1277
      %1279 = vmatmul.bf16.gmra.mxu0 %v730
      %v1280 = vpop.f32.mrf.mxu0
      %v1281 = vadd.f32 %v1112, %v1280
      %v1282 = vpop.f32.mrf.mxu0
      %v1283 = vadd.f32 %v1114, %v1282
      %1284 = vmatmul.bf16.gmra.mxu0 %v733
      %v1285 = vpop.f32.mrf.mxu0
      %v1286 = vadd.f32 %v1117, %v1285
      %v1287 = vpop.f32.mrf.mxu0
      %v1288 = vadd.f32 %v1119, %v1287
      %1289 = vmatmul.bf16.gmra.mxu0 %v736
      %v1290 = vpop.f32.mrf.mxu0
      %v1291 = vadd.f32 %v1122, %v1290
      %v1292 = vpop.f32.mrf.mxu0
      %v1293 = vadd.f32 %v1124, %v1292
      %1294 = vmatmul.bf16.gmra.mxu0 %v739
      %v1295 = vpop.f32.mrf.mxu0
      %v1296 = vadd.f32 %v1127, %v1295
      %v1297 = vpop.f32.mrf.mxu0
      %v1298 = vadd.f32 %v1129, %v1297
      %1299 = vmatmul.bf16.gmra.mxu0 %v742
      %v1300 = vpop.f32.mrf.mxu0
      %v1301 = vadd.f32 %v1132, %v1300
      %v1302 = vpop.f32.mrf.mxu0
      %v1303 = vadd.f32 %v1134, %v1302
      %1304 = vmatmul.bf16.gmra.mxu0 %v745
      %v1305 = vpop.f32.mrf.mxu0
      %v1306 = vadd.f32 %v1137, %v1305
      %v1307 = vpop.f32.mrf.mxu0
      %v1308 = vadd.f32 %v1139, %v1307
      %1309 = vmatmul.bf16.gmra.mxu0 %v748
      %v1310 = vpop.f32.mrf.mxu0
      %v1311 = vadd.f32 %v1142, %v1310
      %v1312 = vpop.f32.mrf.mxu0
      %v1313 = vadd.f32 %v1144, %v1312
      %1314 = vmatmul.bf16.gmra.mxu0 %v751
      %v1315 = vpop.f32.mrf.mxu0
      %v1316 = vadd.f32 %v1147, %v1315
      %v1317 = vpop.f32.mrf.mxu0
      %v1318 = vadd.f32 %v1149, %v1317
      %1319 = vmatmul.bf16.gmra.mxu0 %v754
      %v1320 = vpop.f32.mrf.mxu0
      %v1321 = vadd.f32 %v1152, %v1320
      %v1322 = vpop.f32.mrf.mxu0
      %v1323 = vadd.f32 %v1154, %v1322
      %1324 = vmatmul.bf16.gmra.mxu0 %v757
      %v1325 = vpop.f32.mrf.mxu0
      %v1326 = vadd.f32 %v1157, %v1325
      %v1327 = vpop.f32.mrf.mxu0
      %v1328 = vadd.f32 %v1159, %v1327
      %1329 = vmatmul.bf16.gmra.mxu0 %v760
      %v1330 = vpop.f32.mrf.mxu0
      %v1331 = vadd.f32 %v1162, %v1330
      %v1332 = vpop.f32.mrf.mxu0
      %v1333 = vadd.f32 %v1164, %v1332
      %1334 = vmatmul.bf16.gmra.mxu0 %v763
      %v1335 = vpop.f32.mrf.mxu0
      %v1336 = vadd.f32 %v1167, %v1335
      %v1337 = vpop.f32.mrf.mxu0
      %v1338 = vadd.f32 %v1169, %v1337
      %1339 = vmatmul.bf16.gmra.mxu0 %v766
      %v1340 = vpop.f32.mrf.mxu0
      %v1341 = vadd.f32 %v1172, %v1340
      %v1342 = vpop.f32.mrf.mxu0
      %v1343 = vadd.f32 %v1174, %v1342
      %1344 = vmatmul.bf16.gmra.mxu0 %v769
      %v1345 = vpop.f32.mrf.mxu0
      %v1346 = vadd.f32 %v1177, %v1345
      %v1347 = vpop.f32.mrf.mxu0
      %v1348 = vadd.f32 %v1179, %v1347
      %1349 = vmatmul.bf16.gmra.mxu0 %v772
      %v1350 = vpop.f32.mrf.mxu0
      %v1351 = vadd.f32 %v1182, %v1350
      %v1352 = vpop.f32.mrf.mxu0
      %v1353 = vadd.f32 %v1184, %v1352
      %1354 = vmatmul.bf16.gmra.mxu0 %v775
      %v1355 = vpop.f32.mrf.mxu0
      %v1356 = vadd.f32 %v1187, %v1355
      %v1357 = vpop.f32.mrf.mxu0
      %v1358 = vadd.f32 %v1189, %v1357
      %1359 = vmatmul.bf16.gmra.mxu0 %v778
      %v1360 = vpop.f32.mrf.mxu0
      %v1361 = vadd.f32 %v1192, %v1360
      %v1362 = vpop.f32.mrf.mxu0
      %v1363 = vadd.f32 %v1194, %v1362
      %1364 = vmatmul.bf16.gmra.mxu0 %v781
      %v1365 = vpop.f32.mrf.mxu0
      %v1366 = vadd.f32 %v1197, %v1365
      %v1367 = vpop.f32.mrf.mxu0
      %v1368 = vadd.f32 %v1199, %v1367
      %1369 = vmatmul.bf16.gmra.mxu0 %v784
      %v1370 = vpop.f32.mrf.mxu0
      %v1371 = vadd.f32 %v1202, %v1370
      %v1372 = vpop.f32.mrf.mxu0
      %v1373 = vadd.f32 %v1204, %v1372
      %1374 = vmatmul.bf16.gmra.mxu0 %v787
      %v1375 = vpop.f32.mrf.mxu0
      %v1376 = vadd.f32 %v1207, %v1375
      %v1377 = vpop.f32.mrf.mxu0
      %v1378 = vadd.f32 %v1209, %v1377
      %1379 = vmatmul.bf16.gmra.mxu0 %v790
      %v1380 = vpop.f32.mrf.mxu0
      %v1381 = vadd.f32 %v1212, %v1380
      %v1382 = vpop.f32.mrf.mxu0
      %v1383 = vadd.f32 %v1214, %v1382
      %1384 = vmatmul.bf16.gmra.mxu0 %v793
      %v1385 = vpop.f32.mrf.mxu0
      %v1386 = vadd.f32 %v1217, %v1385
      %v1387 = vpop.f32.mrf.mxu0
      %v1388 = vadd.f32 %v1219, %v1387
      %1389 = vmatmul.bf16.gmra.mxu0 %v796
      %v1390 = vpop.f32.mrf.mxu0
      %v1391 = vadd.f32 %v1222, %v1390
      %v1392 = vpop.f32.mrf.mxu0
      %v1393 = vadd.f32 %v1224, %v1392
      %1394 = vmatmul.bf16.gmra.mxu0 %v799
      %v1395 = vpop.f32.mrf.mxu0
      %v1396 = vadd.f32 %v1227, %v1395
      %v1397 = vpop.f32.mrf.mxu0
      %v1398 = vadd.f32 %v1229, %v1397
      %1399 = vmatmul.bf16.gmra.mxu0 %v802
      %v1400 = vpop.f32.mrf.mxu0
      %v1401 = vadd.f32 %v1232, %v1400
      %v1402 = vpop.f32.mrf.mxu0
      %v1403 = vadd.f32 %v1234, %v1402
      %1404 = vmatmul.bf16.gmra.mxu0 %v805
      %v1405 = vpop.f32.mrf.mxu0
      %v1406 = vadd.f32 %v1237, %v1405
      %v1407 = vpop.f32.mrf.mxu0
      %v1408 = vadd.f32 %v1239, %v1407
      %1409 = vmatmul.bf16.gmra.mxu0 %v808
      %v1410 = vpop.f32.mrf.mxu0
      %v1411 = vadd.f32 %v1242, %v1410
      %v1412 = vpop.f32.mrf.mxu0
      %v1413 = vadd.f32 %v1244, %v1412
      %1414 = vmatmul.bf16.gmra.mxu0 %v811
      %v1415 = vpop.f32.mrf.mxu0
      %v1416 = vadd.f32 %v1247, %v1415
      %v1417 = vpop.f32.mrf.mxu0
      %v1418 = vadd.f32 %v1249, %v1417
      %1419 = vdwg.mxu0
      %1420 = vmatpush.bf16.msra.mxu0 0
      %1421 = vmatpush.bf16.msra.mxu0 0
      %1422 = vmatpush.bf16.msra.mxu0 0
      %1423 = vmatpush.bf16.msra.mxu0 0
      %1424 = vmatpush.bf16.msra.mxu0 0
      %1425 = vmatpush.bf16.msra.mxu0 0
      %1426 = vmatpush.bf16.msra.mxu0 %v966
      %1427 = vmatpush.bf16.msra.mxu0 %v965
      %1428 = vmatmul.bf16.gmra.mxu0 %v987
      %v1429 = vpop.f32.mrf.mxu0
      %v1430 = vadd.f32 %v1261, %v1429
      %v1431 = vpop.f32.mrf.mxu0
      %v1432 = vadd.f32 %v1263, %v1431
      %1433 = vmatmul.bf16.gmra.mxu0 %v990
      %v1434 = vpop.f32.mrf.mxu0
      %v1435 = vadd.f32 %v1266, %v1434
      %v1436 = vpop.f32.mrf.mxu0
      %v1437 = vadd.f32 %v1268, %v1436
      %1438 = vmatmul.bf16.gmra.mxu0 %v993
      %v1439 = vpop.f32.mrf.mxu0
      %v1440 = vadd.f32 %v1271, %v1439
      %v1441 = vpop.f32.mrf.mxu0
      %v1442 = vadd.f32 %v1273, %v1441
      %1443 = vmatmul.bf16.gmra.mxu0 %v996
      %v1444 = vpop.f32.mrf.mxu0
      %v1445 = vadd.f32 %v1276, %v1444
      %v1446 = vpop.f32.mrf.mxu0
      %v1447 = vadd.f32 %v1278, %v1446
      %1448 = vmatmul.bf16.gmra.mxu0 %v999
      %v1449 = vpop.f32.mrf.mxu0
      %v1450 = vadd.f32 %v1281, %v1449
      %v1451 = vpop.f32.mrf.mxu0
      %v1452 = vadd.f32 %v1283, %v1451
      %1453 = vmatmul.bf16.gmra.mxu0 %v1002
      %v1454 = vpop.f32.mrf.mxu0
      %v1455 = vadd.f32 %v1286, %v1454
      %v1456 = vpop.f32.mrf.mxu0
      %v1457 = vadd.f32 %v1288, %v1456
      %1458 = vmatmul.bf16.gmra.mxu0 %v1005
      %v1459 = vpop.f32.mrf.mxu0
      %v1460 = vadd.f32 %v1291, %v1459
      %v1461 = vpop.f32.mrf.mxu0
      %v1462 = vadd.f32 %v1293, %v1461
      %1463 = vmatmul.bf16.gmra.mxu0 %v1008
      %v1464 = vpop.f32.mrf.mxu0
      %v1465 = vadd.f32 %v1296, %v1464
      %v1466 = vpop.f32.mrf.mxu0
      %v1467 = vadd.f32 %v1298, %v1466
      %1468 = vmatmul.bf16.gmra.mxu0 %v1011
      %v1469 = vpop.f32.mrf.mxu0
      %v1470 = vadd.f32 %v1301, %v1469
      %v1471 = vpop.f32.mrf.mxu0
      %v1472 = vadd.f32 %v1303, %v1471
      %1473 = vmatmul.bf16.gmra.mxu0 %v1014
      %v1474 = vpop.f32.mrf.mxu0
      %v1475 = vadd.f32 %v1306, %v1474
      %v1476 = vpop.f32.mrf.mxu0
      %v1477 = vadd.f32 %v1308, %v1476
      %1478 = vmatmul.bf16.gmra.mxu0 %v1017
      %v1479 = vpop.f32.mrf.mxu0
      %v1480 = vadd.f32 %v1311, %v1479
      %v1481 = vpop.f32.mrf.mxu0
      %v1482 = vadd.f32 %v1313, %v1481
      %1483 = vmatmul.bf16.gmra.mxu0 %v1020
      %v1484 = vpop.f32.mrf.mxu0
      %v1485 = vadd.f32 %v1316, %v1484
      %v1486 = vpop.f32.mrf.mxu0
      %v1487 = vadd.f32 %v1318, %v1486
      %1488 = vmatmul.bf16.gmra.mxu0 %v1023
      %v1489 = vpop.f32.mrf.mxu0
      %v1490 = vadd.f32 %v1321, %v1489
      %v1491 = vpop.f32.mrf.mxu0
      %v1492 = vadd.f32 %v1323, %v1491
      %1493 = vmatmul.bf16.gmra.mxu0 %v1026
      %v1494 = vpop.f32.mrf.mxu0
      %v1495 = vadd.f32 %v1326, %v1494
      %v1496 = vpop.f32.mrf.mxu0
      %v1497 = vadd.f32 %v1328, %v1496
      %1498 = vmatmul.bf16.gmra.mxu0 %v1029
      %v1499 = vpop.f32.mrf.mxu0
      %v1500 = vadd.f32 %v1331, %v1499
      %v1501 = vpop.f32.mrf.mxu0
      %v1502 = vadd.f32 %v1333, %v1501
      %1503 = vmatmul.bf16.gmra.mxu0 %v1032
      %v1504 = vpop.f32.mrf.mxu0
      %v1505 = vadd.f32 %v1336, %v1504
      %v1506 = vpop.f32.mrf.mxu0
      %v1507 = vadd.f32 %v1338, %v1506
      %1508 = vmatmul.bf16.gmra.mxu0 %v1035
      %v1509 = vpop.f32.mrf.mxu0
      %v1510 = vadd.f32 %v1341, %v1509
      %v1511 = vpop.f32.mrf.mxu0
      %v1512 = vadd.f32 %v1343, %v1511
      %1513 = vmatmul.bf16.gmra.mxu0 %v1038
      %v1514 = vpop.f32.mrf.mxu0
      %v1515 = vadd.f32 %v1346, %v1514
      %v1516 = vpop.f32.mrf.mxu0
      %v1517 = vadd.f32 %v1348, %v1516
      %1518 = vmatmul.bf16.gmra.mxu0 %v1041
      %v1519 = vpop.f32.mrf.mxu0
      %v1520 = vadd.f32 %v1351, %v1519
      %v1521 = vpop.f32.mrf.mxu0
      %v1522 = vadd.f32 %v1353, %v1521
      %1523 = vmatmul.bf16.gmra.mxu0 %v1044
      %v1524 = vpop.f32.mrf.mxu0
      %v1525 = vadd.f32 %v1356, %v1524
      %v1526 = vpop.f32.mrf.mxu0
      %v1527 = vadd.f32 %v1358, %v1526
      %1528 = vmatmul.bf16.gmra.mxu0 %v1047
      %v1529 = vpop.f32.mrf.mxu0
      %v1530 = vadd.f32 %v1361, %v1529
      %v1531 = vpop.f32.mrf.mxu0
      %v1532 = vadd.f32 %v1363, %v1531
      %1533 = vmatmul.bf16.gmra.mxu0 %v1050
      %v1534 = vpop.f32.mrf.mxu0
      %v1535 = vadd.f32 %v1366, %v1534
      %v1536 = vpop.f32.mrf.mxu0
      %v1537 = vadd.f32 %v1368, %v1536
      %1538 = vmatmul.bf16.gmra.mxu0 %v1053
      %v1539 = vpop.f32.mrf.mxu0
      %v1540 = vadd.f32 %v1371, %v1539
      %v1541 = vpop.f32.mrf.mxu0
      %v1542 = vadd.f32 %v1373, %v1541
      %1543 = vmatmul.bf16.gmra.mxu0 %v1056
      %v1544 = vpop.f32.mrf.mxu0
      %v1545 = vadd.f32 %v1376, %v1544
      %v1546 = vpop.f32.mrf.mxu0
      %v1547 = vadd.f32 %v1378, %v1546
      %1548 = vmatmul.bf16.gmra.mxu0 %v1059
      %v1549 = vpop.f32.mrf.mxu0
      %v1550 = vadd.f32 %v1381, %v1549
      %v1551 = vpop.f32.mrf.mxu0
      %v1552 = vadd.f32 %v1383, %v1551
      %1553 = vmatmul.bf16.gmra.mxu0 %v1062
      %v1554 = vpop.f32.mrf.mxu0
      %v1555 = vadd.f32 %v1386, %v1554
      %v1556 = vpop.f32.mrf.mxu0
      %v1557 = vadd.f32 %v1388, %v1556
      %1558 = vmatmul.bf16.gmra.mxu0 %v1065
      %v1559 = vpop.f32.mrf.mxu0
      %v1560 = vadd.f32 %v1391, %v1559
      %v1561 = vpop.f32.mrf.mxu0
      %v1562 = vadd.f32 %v1393, %v1561
      %1563 = vmatmul.bf16.gmra.mxu0 %v1068
      %v1564 = vpop.f32.mrf.mxu0
      %v1565 = vadd.f32 %v1396, %v1564
      %v1566 = vpop.f32.mrf.mxu0
      %v1567 = vadd.f32 %v1398, %v1566
      %1568 = vmatmul.bf16.gmra.mxu0 %v1071
      %v1569 = vpop.f32.mrf.mxu0
      %v1570 = vadd.f32 %v1401, %v1569
      %v1571 = vpop.f32.mrf.mxu0
      %v1572 = vadd.f32 %v1403, %v1571
      %1573 = vmatmul.bf16.gmra.mxu0 %v1074
      %v1574 = vpop.f32.mrf.mxu0
      %v1575 = vadd.f32 %v1406, %v1574
      %v1576 = vpop.f32.mrf.mxu0
      %v1577 = vadd.f32 %v1408, %v1576
      %1578 = vmatmul.bf16.gmra.mxu0 %v1077
      %v1579 = vpop.f32.mrf.mxu0
      %v1580 = vadd.f32 %v1411, %v1579
      %v1581 = vpop.f32.mrf.mxu0
      %v1582 = vadd.f32 %v1413, %v1581
      %1583 = vmatmul.bf16.gmra.mxu0 %v1080
      %v1584 = vpop.f32.mrf.mxu0
      %v1585 = vadd.f32 %v1416, %v1584
      %v1586 = vpop.f32.mrf.mxu0
      %v1587 = vadd.f32 %v1418, %v1586
      %1588 = vdwg.mxu0
      %1589 = vst [vmem:[%s226] sm:$0xff] %v1430
      %1590 = vst [vmem:[%s226 + $0x8] sm:$0xff] %v1432
      %1591 = vst [vmem:[%s226 + $0x10] sm:$0xff] %v1435
      %1592 = vst [vmem:[%s226 + $0x18] sm:$0xff] %v1437
      %1593 = vst [vmem:[%s226 + $0x20] sm:$0xff] %v1440
      %1594 = vst [vmem:[%s226 + $0x28] sm:$0xff] %v1442
      %1595 = vst [vmem:[%s226 + $0x30] sm:$0xff] %v1445
      %1596 = vst [vmem:[%s226 + $0x38] sm:$0xff] %v1447
      %1597 = vst [vmem:[%s226 + $0x40] sm:$0xff] %v1450
      %1598 = vst [vmem:[%s226 + $0x48] sm:$0xff] %v1452
      %1599 = vst [vmem:[%s226 + $0x50] sm:$0xff] %v1455
      %1600 = vst [vmem:[%s226 + $0x58] sm:$0xff] %v1457
      %1601 = vst [vmem:[%s226 + $0x60] sm:$0xff] %v1460
      %1602 = vst [vmem:[%s226 + $0x68] sm:$0xff] %v1462
      %1603 = vst [vmem:[%s226 + $0x70] sm:$0xff] %v1465
      %1604 = vst [vmem:[%s226 + $0x78] sm:$0xff] %v1467
      %1605 = vst [vmem:[%s226 + $0x80] sm:$0xff] %v1470
      %1606 = vst [vmem:[%s226 + $0x88] sm:$0xff] %v1472
      %1607 = vst [vmem:[%s226 + $0x90] sm:$0xff] %v1475
      %1608 = vst [vmem:[%s226 + $0x98] sm:$0xff] %v1477
      %1609 = vst [vmem:[%s226 + $0xa0] sm:$0xff] %v1480
      %1610 = vst [vmem:[%s226 + $0xa8] sm:$0xff] %v1482
      %1611 = vst [vmem:[%s226 + $0xb0] sm:$0xff] %v1485
      %1612 = vst [vmem:[%s226 + $0xb8] sm:$0xff] %v1487
      %1613 = vst [vmem:[%s226 + $0xc0] sm:$0xff] %v1490
      %1614 = vst [vmem:[%s226 + $0xc8] sm:$0xff] %v1492
      %1615 = vst [vmem:[%s226 + $0xd0] sm:$0xff] %v1495
      %1616 = vst [vmem:[%s226 + $0xd8] sm:$0xff] %v1497
      %1617 = vst [vmem:[%s226 + $0xe0] sm:$0xff] %v1500
      %1618 = vst [vmem:[%s226 + $0xe8] sm:$0xff] %v1502
      %1619 = vst [vmem:[%s226 + $0xf0] sm:$0xff] %v1505
      %1620 = vst [vmem:[%s226 + $0xf8] sm:$0xff] %v1507
      %1621 = vst [vmem:[%s226 + $0x100] sm:$0xff] %v1510
      %1622 = vst [vmem:[%s226 + $0x108] sm:$0xff] %v1512
      %1623 = vst [vmem:[%s226 + $0x110] sm:$0xff] %v1515
      %1624 = vst [vmem:[%s226 + $0x118] sm:$0xff] %v1517
      %1625 = vst [vmem:[%s226 + $0x120] sm:$0xff] %v1520
      %1626 = vst [vmem:[%s226 + $0x128] sm:$0xff] %v1522
      %1627 = vst [vmem:[%s226 + $0x130] sm:$0xff] %v1525
      %1628 = vst [vmem:[%s226 + $0x138] sm:$0xff] %v1527
      %1629 = vst [vmem:[%s226 + $0x140] sm:$0xff] %v1530
      %1630 = vst [vmem:[%s226 + $0x148] sm:$0xff] %v1532
      %1631 = vst [vmem:[%s226 + $0x150] sm:$0xff] %v1535
      %1632 = vst [vmem:[%s226 + $0x158] sm:$0xff] %v1537
      %1633 = vst [vmem:[%s226 + $0x160] sm:$0xff] %v1540
      %1634 = vst [vmem:[%s226 + $0x168] sm:$0xff] %v1542
      %1635 = vst [vmem:[%s226 + $0x170] sm:$0xff] %v1545
      %1636 = vst [vmem:[%s226 + $0x178] sm:$0xff] %v1547
      %1637 = vst [vmem:[%s226 + $0x180] sm:$0xff] %v1550
      %1638 = vst [vmem:[%s226 + $0x188] sm:$0xff] %v1552
      %1639 = vst [vmem:[%s226 + $0x190] sm:$0xff] %v1555
      %1640 = vst [vmem:[%s226 + $0x198] sm:$0xff] %v1557
      %1641 = vst [vmem:[%s226 + $0x1a0] sm:$0xff] %v1560
      %1642 = vst [vmem:[%s226 + $0x1a8] sm:$0xff] %v1562
      %1643 = vst [vmem:[%s226 + $0x1b0] sm:$0xff] %v1565
      %1644 = vst [vmem:[%s226 + $0x1b8] sm:$0xff] %v1567
      %1645 = vst [vmem:[%s226 + $0x1c0] sm:$0xff] %v1570
      %1646 = vst [vmem:[%s226 + $0x1c8] sm:$0xff] %v1572
      %1647 = vst [vmem:[%s226 + $0x1d0] sm:$0xff] %v1575
      %1648 = vst [vmem:[%s226 + $0x1d8] sm:$0xff] %v1577
      %1649 = vst [vmem:[%s226 + $0x1e0] sm:$0xff] %v1580
      %1650 = vst [vmem:[%s226 + $0x1e8] sm:$0xff] %v1582
      %1651 = vst [vmem:[%s226 + $0x1f0] sm:$0xff] %v1585
      %1652 = vst [vmem:[%s226 + $0x1f8] sm:$0xff] %v1587
      %s1653 = smul.u32 64, %s18
      %p1654 = scmp.lt.s32.totalorder %s1653, 255
      %s1655 = scalar_select %p1654, %s1653, 255
      %p1656 = scmp.lt.s32.totalorder %s19, 0
      %s1657 = scalar_select %p1656, %s19, 0
      %s1658 = sadd.s32 %s1657, %s1655
      %s1659 = smul.addr %s1658, 8
      %s1660 = scalar_lea.vmem %s3, %s1659
      // Predicated region
      $region33: #{vae_forward.17} parent=31 // pred_check
        %p1661 = pneg %p124
      $region34: #{vae_forward.17} parent=31 // pred_check_branch
        %1663 = sbr.rel (%p1661) target = $region36
      $region35: #{vae_forward.17} parent=31 // pred_region
        %s1664 = smul.u32 64, %s18
      $region36: #{vae_forward.17} parent=31 // pred_fallthru
        _
    $region32: #{vae_forward.17} parent=5 // pred_fallthru
      _
    %p1665 = scmp.le.s32.totalorder 2, %s9
    // Predicated region
    $region37: #{vae_forward.17} parent=5 // pred_check
      %p1666 = pneg %p1665
    $region38: #{vae_forward.17} parent=5 // pred_check_branch
      %1668 = sbr.rel (%p1666) target = $region40
    $region39: #{vae_forward.17} parent=5 // pred_region
      %s1669 = ssub.s32 %s9, 2
      // Predicated region
      $region41: #{vae_forward.17} parent=39 // pred_check
        %p1670 = pneg %p130
      $region42: #{vae_forward.17} parent=39 // pred_check_branch
        %1672 = sbr.rel (%p1670) target = $region44
      $region43: #{vae_forward.17} parent=39 // pred_region
        %s1673 = smul.u32 64, %s20
        %p1674 = scmp.lt.s32.totalorder %s1673, 255
        %s1675 = scalar_select %p1674, %s1673, 255
        %p1676 = scmp.lt.s32.totalorder %s21, 0
        %s1677 = scalar_select %p1676, %s21, 0
        %s1678 = sadd.s32 %s1677, %s1675
        %s1679 = smul.addr %s1678, 8
        %s1680 = scalar_lea.vmem %s3, %s1679
      $region44: #{vae_forward.17} parent=39 // pred_fallthru
        _
    $region40: #{vae_forward.17} parent=5 // pred_fallthru
      _
  $region6: #{vae_forward.17} parent=0 // loop_footer
    %s13 = sadd.s32 1, %s9
  $region7: #{vae_forward.17} parent=0 // loop_footer_branch
    %8 = sbr.rel target = $region3
  $region8: #{vae_forward.17} parent=0 // loop_exit
    _

</llo_original>
